<compile_context>
chip_gen: v7x
topology: tpu7x:2x2x1
jax: 0.10.0
libtpu: 0.0.40
codegen_flags: <defaults>
</compile_context>

<pallas_src>
import jax
import jax.numpy as jnp
from jax.experimental import pallas as pl
from jax.experimental.pallas import tpu as pltpu

BN_EPS = 1e-5


def _make_convblock_kernel(H, W, lpad):
    HW = H * W

    def kernel(x_ref, w1_ref, w2_ref, off_ref, out_ref, xpad1_ref, xpad2_ref):
        """One batch element of the full ConvBlock.

        x_ref    : (1, Cin, H*W)        NCHW-flat input tile
        w1_ref   : (9, Cout, Cin)       BN-folded conv1 weights, tap-major
        w2_ref   : (9, Cout, Cout)      BN-folded conv2 weights, tap-major
        off_ref  : (2, Cout, 1)         BN-folded biases (row 0: conv1, 1: conv2)
        out_ref  : (1, Cout, H*W)       NCHW-flat output tile (lane-dense store)
        xpad1_ref: (Cin,  lpad+HW+W+1)  flat zero-padded scratch, layer 1
        xpad2_ref: (Cout, lpad+HW+W+1)  flat zero-padded scratch, layer 2
        """
        # Column-validity masks (computed once, shared by both layers): they
        # zero the row-wrapped contributions of the dx = -1 / dx = +1 taps.
        col = jax.lax.broadcasted_iota(jnp.int32, (1, HW), 1) % W
        not_first_col = (col != 0).astype(jnp.float32)       # kills dx = -1 wrap
        not_last_col = (col != (W - 1)).astype(jnp.float32)  # kills dx = +1 wrap

        def conv3x3_bn_relu(pad_ref, w_ref, off):
            acc = None
            for t in range(9):
                dy = t // 3 - 1
                dx = t % 3 - 1
                start = lpad + dy * W + dx            # static per-tap lane offset
                xt = pad_ref[:, start:start + HW]     # (C, H*W) shifted view
                if dx == -1:
                    xt = xt * not_first_col
                elif dx == 1:
                    xt = xt * not_last_col
                y = jnp.dot(w_ref[t], xt,
                            preferred_element_type=jnp.float32,
                            precision=jax.lax.Precision.HIGHEST)
                acc = y if acc is None else acc + y
            return jnp.maximum(acc + off, 0.0)        # (Cout, H*W)

        # ---- layer 1: zero pads + lane-aligned interior store, conv+BN+ReLU --
        xpad1_ref[...] = jnp.zeros_like(xpad1_ref)    # halo must be zero
        xpad1_ref[:, lpad:lpad + HW] = x_ref[0]
        y1 = conv3x3_bn_relu(xpad1_ref, w1_ref, off_ref[0])

        # ---- layer 2: intermediate activation never leaves VMEM --------------
        xpad2_ref[...] = jnp.zeros_like(xpad2_ref)
        xpad2_ref[:, lpad:lpad + HW] = y1
        y2 = conv3x3_bn_relu(xpad2_ref, w2_ref, off_ref[1])

        # Channels-major, lane-dense store: already NCHW (flattened spatial).
        out_ref[0] = y2

    return kernel


def conv_block_fused(x_flat, w1, w2, off, H, W):
    """x_flat: (N, Cin, H*W) f32; returns (N, Cout, H, W) (NCHW)."""
    N, Cin, HW = x_flat.shape
    Cout = w1.shape[1]
    lpad = pl.cdiv(W + 1, 128) * 128          # lane-tile aligned left pad
    padlen = lpad + HW + (W + 1)              # right pad covers dy=+1 overreach

    out = pl.pallas_call(
        _make_convblock_kernel(H, W, lpad),
        out_shape=jax.ShapeDtypeStruct((N, Cout, HW), jnp.float32),
        grid=(N,),
        in_specs=[
            pl.BlockSpec((1, Cin, HW), lambda n: (n, 0, 0)),
            pl.BlockSpec((9, Cout, Cin), lambda n: (0, 0, 0)),
            pl.BlockSpec((9, Cout, Cout), lambda n: (0, 0, 0)),
            pl.BlockSpec((2, Cout, 1), lambda n: (0, 0, 0)),
        ],
        out_specs=pl.BlockSpec((1, Cout, HW), lambda n: (n, 0, 0)),
        scratch_shapes=[
            pltpu.VMEM((Cin, padlen), jnp.float32),
            pltpu.VMEM((Cout, padlen), jnp.float32),
        ],
        compiler_params=pltpu.CompilerParams(
            dimension_semantics=("parallel",)),
    )(x_flat, w1, w2, off)
    return out.reshape(N, Cout, H, W)         # free reshape, already NCHW


def fold_conv_bn(w_oihw, bias, gamma, beta, mean, var):
    """Fold BN(eval) into conv: returns ((9, Cout, Cin) weights, (Cout, 1) offset)."""
    cout, cin = w_oihw.shape[0], w_oihw.shape[1]
    scale = gamma * jax.lax.rsqrt(var + BN_EPS)                        # (Cout,)
    # Tap-major weights: w_taps[t] = W[:, :, ky, kx] with t = ky*3 + kx.
    w_taps = jnp.transpose(w_oihw, (2, 3, 0, 1)).reshape(9, cout, cin)
    w_folded = (w_taps * scale[None, :, None]).astype(jnp.float32)
    off = ((bias - mean) * scale + beta).astype(jnp.float32).reshape(cout, 1)
    return w_folded, off


def init_conv_block_params(key, in_channels, out_channels):
    """Deterministic parameter init (shapes match the PyTorch module)."""
    ks = jax.random.split(key, 12)
    params = {}
    cins = (in_channels, out_channels)
    for i in range(2):
        cin = cins[i]
        bound = 1.0 / jnp.sqrt(cin * 9.0)
        k = ks[6 * i:6 * (i + 1)]
        params[f"w{i}"] = jax.random.uniform(
            k[0], (out_channels, cin, 3, 3), jnp.float32, -bound, bound)
        params[f"b{i}"] = jax.random.uniform(
            k[1], (out_channels,), jnp.float32, -bound, bound)
        params[f"gamma{i}"] = 1.0 + 0.1 * jax.random.normal(
            k[2], (out_channels,), jnp.float32)
        params[f"beta{i}"] = 0.1 * jax.random.normal(
            k[3], (out_channels,), jnp.float32)
        params[f"mean{i}"] = 0.1 * jax.random.normal(
            k[4], (out_channels,), jnp.float32)
        params[f"var{i}"] = jnp.abs(1.0 + 0.1 * jax.random.normal(
            k[5], (out_channels,), jnp.float32))
    return params


@jax.jit
def conv_block_forward(x_nchw, params):
    """Full ConvBlock forward. Input/output in NCHW like PyTorch."""
    # TODO(synk): training-mode BatchNorm (batch statistics + running-stat
    # update) is not implemented; eval-mode BN is folded into the convs.
    w1, off1 = fold_conv_bn(params["w0"], params["b0"], params["gamma0"],
                            params["beta0"], params["mean0"], params["var0"])
    w2, off2 = fold_conv_bn(params["w1"], params["b1"], params["gamma1"],
                            params["beta1"], params["mean1"], params["var1"])
    off = jnp.stack([off1, off2], axis=0)                       # (2, Cout, 1)
    N, Cin, H, W = x_nchw.shape
    x_flat = x_nchw.astype(jnp.float32).reshape(N, Cin, H * W)  # free reshape
    return conv_block_fused(x_flat, w1, w2, off, H, W)


# ---- plain-JAX reference (for correctness check only) -----------------------
def ref_forward(x_nchw, params):
    x = x_nchw.astype(jnp.float32)
    for i in range(2):
        y = jax.lax.conv_general_dilated(
            x, params[f"w{i}"], window_strides=(1, 1),
            padding=((1, 1), (1, 1)),
            dimension_numbers=("NCHW", "OIHW", "NCHW"),
            precision=jax.lax.Precision.HIGHEST)
        y = y + params[f"b{i}"][None, :, None, None]
        inv = jax.lax.rsqrt(params[f"var{i}"] + BN_EPS)
        y = (y - params[f"mean{i}"][None, :, None, None]) * (
            params[f"gamma{i}"] * inv)[None, :, None, None] + \
            params[f"beta{i}"][None, :, None, None]
        x = jnp.maximum(y, 0.0)
    return x


if __name__ == "__main__":
    key = jax.random.PRNGKey(0)
    k_x, k_p = jax.random.split(key)

    N, Cin, H, W = 2, 4, 16, 16
    Cout = 8
    x = jax.random.normal(k_x, (N, Cin, H, W), jnp.float32)
    params = init_conv_block_params(k_p, Cin, Cout)

    out = jax.block_until_ready(conv_block_forward(x, params))
    assert out.shape == (N, Cout, H, W), out.shape

    ref = jax.block_until_ready(ref_forward(x, params))
    max_err = float(jnp.max(jnp.abs(out - ref)))
    assert jnp.allclose(out, ref, atol=5e-4, rtol=5e-4), max_err

    print("KERNEL_OK")
</pallas_src>

<mosaic_0001>
module attributes {stable_mosaic.version = 11 : i64} {
  func.func @kernel(%arg0: i32, %arg1: memref<1x4x256xf32, #tpu.memory_space<vmem>>, %arg2: memref<9x8x4xf32, #tpu.memory_space<vmem>>, %arg3: memref<9x8x8xf32, #tpu.memory_space<vmem>>, %arg4: memref<2x8x1xf32, #tpu.memory_space<vmem>>, %arg5: memref<1x8x256xf32, #tpu.memory_space<vmem>>, %arg6: memref<4x401xf32, #tpu.memory_space<vmem>>, %arg7: memref<8x401xf32, #tpu.memory_space<vmem>>) attributes {dimension_semantics = [#tpu.dimension_semantics<parallel>], iteration_bounds = array<i64: 2>, scalar_prefetch = 0 : i64, scratch_operands = 2 : i64, tpu.core_type = #tpu.core_type<tc>, window_params = [{transform_indices = @transform_0, window_bounds = array<i64: 1, 4, 256>}, {pipeline_mode = #tpu.pipeline_mode<synchronous>, transform_indices = @transform_1, window_bounds = array<i64: 9, 8, 4>}, {pipeline_mode = #tpu.pipeline_mode<synchronous>, transform_indices = @transform_2, window_bounds = array<i64: 9, 8, 8>}, {pipeline_mode = #tpu.pipeline_mode<synchronous>, transform_indices = @transform_3, window_bounds = array<i64: 2, 8, 1>}, {transform_indices = @transform_4, window_bounds = array<i64: 1, 8, 256>}]} {
    %0 = tpu.iota {dimensions = array<i32: 1>} : vector<1x256xi32>
    %c16_i32 = arith.constant 16 : i32
    %c0_i32 = arith.constant 0 : i32
    %1 = arith.cmpi eq, %c16_i32, %c0_i32 : i32
    %c1_i32 = arith.constant 1 : i32
    %2 = arith.select %1, %c1_i32, %c16_i32 : i32
    %3 = vector.broadcast %2 : i32 to vector<1x256xi32>
    %4 = arith.remsi %0, %3 : vector<1x256xi32>
    %c0_i32_0 = arith.constant 0 : i32
    %5 = vector.broadcast %c0_i32_0 : i32 to vector<1x256xi32>
    %6 = arith.cmpi ne, %4, %5 : vector<1x256xi32>
    %c0_i32_1 = arith.constant 0 : i32
    %7 = vector.broadcast %c0_i32_1 : i32 to vector<1x256xi32>
    %8 = arith.cmpi slt, %4, %7 : vector<1x256xi32>
    %c0_i32_2 = arith.constant 0 : i32
    %9 = arith.cmpi slt, %2, %c0_i32_2 : i32
    %10 = vector.broadcast %9 : i1 to vector<1x256xi1>
    %11 = vector.broadcast %10 : vector<1x256xi1> to vector<1x256xi1>
    %12 = arith.xori %8, %11 : vector<1x256xi1>
    %13 = arith.andi %12, %6 : vector<1x256xi1>
    %14 = vector.broadcast %2 : i32 to vector<1x256xi32>
    %15 = arith.addi %4, %14 : vector<1x256xi32>
    %16 = arith.select %13, %15, %4 : vector<1x256xi1>, vector<1x256xi32>
    %c0_i32_3 = arith.constant 0 : i32
    %17 = vector.broadcast %c0_i32_3 : i32 to vector<1x256xi32>
    %18 = arith.cmpi ne, %16, %17 : vector<1x256xi32>
    %19 = arith.extui %18 : vector<1x256xi1> to vector<1x256xi32>
    %20 = arith.sitofp %19 : vector<1x256xi32> to vector<1x256xf32>
    %c15_i32 = arith.constant 15 : i32
    %21 = vector.broadcast %c15_i32 : i32 to vector<1x256xi32>
    %22 = arith.cmpi ne, %16, %21 : vector<1x256xi32>
    %23 = arith.extui %22 : vector<1x256xi1> to vector<1x256xi32>
    %24 = arith.sitofp %23 : vector<1x256xi32> to vector<1x256xf32>
    %cst = arith.constant 0.000000e+00 : f32
    %25 = vector.broadcast %cst : f32 to vector<4x401xf32>
    %c0 = arith.constant 0 : index
    %c0_4 = arith.constant 0 : index
    %26 = vector.load %arg6[%c0, %c0_4] : memref<4x401xf32, #tpu.memory_space<vmem>>, vector<4x401xf32>
    tpu.vector_store %arg6[%c0, %c0_4], %25 {strides = array<i32>} : memref<4x401xf32, #tpu.memory_space<vmem>>, vector<4x401xf32>,
    %c0_5 = arith.constant 0 : index
    %c0_6 = arith.constant 0 : index
    %c0_7 = arith.constant 0 : index
    %27 = vector.load %arg1[%c0_5, %c0_6, %c0_7] : memref<1x4x256xf32, #tpu.memory_space<vmem>>, vector<1x4x256xf32>
    %28 = vector.shape_cast %27 : vector<1x4x256xf32> to vector<4x256xf32>
    %c0_8 = arith.constant 0 : index
    %c128 = arith.constant 128 : index
    %29 = vector.load %arg6[%c0_8, %c128] : memref<4x401xf32, #tpu.memory_space<vmem>>, vector<4x256xf32>
    tpu.vector_store %arg6[%c0_8, %c128], %28 {strides = array<i32>} : memref<4x401xf32, #tpu.memory_space<vmem>>, vector<4x256xf32>,
    %c0_9 = arith.constant 0 : index
    %c0_10 = arith.constant 0 : index
    %c0_11 = arith.constant 0 : index
    %30 = vector.load %arg4[%c0_9, %c0_10, %c0_11] : memref<2x8x1xf32, #tpu.memory_space<vmem>>, vector<1x8x1xf32>
    %31 = vector.shape_cast %30 : vector<1x8x1xf32> to vector<8x1xf32>
    %c0_12 = arith.constant 0 : index
    %c111 = arith.constant 111 : index
    %32 = vector.load %arg6[%c0_12, %c111] : memref<4x401xf32, #tpu.memory_space<vmem>>, vector<4x256xf32>
    %33 = vector.broadcast %20 : vector<1x256xf32> to vector<4x256xf32>
    %34 = arith.mulf %32, %33 : vector<4x256xf32>
    %c0_13 = arith.constant 0 : index
    %c0_14 = arith.constant 0 : index
    %c0_15 = arith.constant 0 : index
    %35 = vector.load %arg2[%c0_13, %c0_14, %c0_15] : memref<9x8x4xf32, #tpu.memory_space<vmem>>, vector<1x8x4xf32>
    %36 = vector.shape_cast %35 : vector<1x8x4xf32> to vector<8x4xf32>
    %cst_16 = arith.constant dense<0.000000e+00> : vector<8x256xf32>
    %37 = tpu.matmul %36, %34, %cst_16 {dimension_numbers = #tpu.dot_dimension_numbers<[1], [0], [0], [1], [0, 0, 1, 1], [], []>, precision = #tpu.contract_precision<fp32>} : vector<8x4xf32>, vector<4x256xf32>, vector<8x256xf32> -> vector<8x256xf32>
    %c0_17 = arith.constant 0 : index
    %c112 = arith.constant 112 : index
    %38 = vector.load %arg6[%c0_17, %c112] : memref<4x401xf32, #tpu.memory_space<vmem>>, vector<4x256xf32>
    %c1 = arith.constant 1 : index
    %c0_18 = arith.constant 0 : index
    %c0_19 = arith.constant 0 : index
    %39 = vector.load %arg2[%c1, %c0_18, %c0_19] : memref<9x8x4xf32, #tpu.memory_space<vmem>>, vector<1x8x4xf32>
    %40 = vector.shape_cast %39 : vector<1x8x4xf32> to vector<8x4xf32>
    %cst_20 = arith.constant dense<0.000000e+00> : vector<8x256xf32>
    %41 = tpu.matmul %40, %38, %cst_20 {dimension_numbers = #tpu.dot_dimension_numbers<[1], [0], [0], [1], [0, 0, 1, 1], [], []>, precision = #tpu.contract_precision<fp32>} : vector<8x4xf32>, vector<4x256xf32>, vector<8x256xf32> -> vector<8x256xf32>
    %42 = arith.addf %37, %41 : vector<8x256xf32>
    %c0_21 = arith.constant 0 : index
    %c113 = arith.constant 113 : index
    %43 = vector.load %arg6[%c0_21, %c113] : memref<4x401xf32, #tpu.memory_space<vmem>>, vector<4x256xf32>
    %44 = vector.broadcast %24 : vector<1x256xf32> to vector<4x256xf32>
    %45 = arith.mulf %43, %44 : vector<4x256xf32>
    %c2 = arith.constant 2 : index
    %c0_22 = arith.constant 0 : index
    %c0_23 = arith.constant 0 : index
    %46 = vector.load %arg2[%c2, %c0_22, %c0_23] : memref<9x8x4xf32, #tpu.memory_space<vmem>>, vector<1x8x4xf32>
    %47 = vector.shape_cast %46 : vector<1x8x4xf32> to vector<8x4xf32>
    %cst_24 = arith.constant dense<0.000000e+00> : vector<8x256xf32>
    %48 = tpu.matmul %47, %45, %cst_24 {dimension_numbers = #tpu.dot_dimension_numbers<[1], [0], [0], [1], [0, 0, 1, 1], [], []>, precision = #tpu.contract_precision<fp32>} : vector<8x4xf32>, vector<4x256xf32>, vector<8x256xf32> -> vector<8x256xf32>
    %49 = arith.addf %42, %48 : vector<8x256xf32>
    %c0_25 = arith.constant 0 : index
    %c127 = arith.constant 127 : index
    %50 = vector.load %arg6[%c0_25, %c127] : memref<4x401xf32, #tpu.memory_space<vmem>>, vector<4x256xf32>
    %51 = vector.broadcast %20 : vector<1x256xf32> to vector<4x256xf32>
    %52 = arith.mulf %50, %51 : vector<4x256xf32>
    %c3 = arith.constant 3 : index
    %c0_26 = arith.constant 0 : index
    %c0_27 = arith.constant 0 : index
    %53 = vector.load %arg2[%c3, %c0_26, %c0_27] : memref<9x8x4xf32, #tpu.memory_space<vmem>>, vector<1x8x4xf32>
    %54 = vector.shape_cast %53 : vector<1x8x4xf32> to vector<8x4xf32>
    %cst_28 = arith.constant dense<0.000000e+00> : vector<8x256xf32>
    %55 = tpu.matmul %54, %52, %cst_28 {dimension_numbers = #tpu.dot_dimension_numbers<[1], [0], [0], [1], [0, 0, 1, 1], [], []>, precision = #tpu.contract_precision<fp32>} : vector<8x4xf32>, vector<4x256xf32>, vector<8x256xf32> -> vector<8x256xf32>
    %56 = arith.addf %49, %55 : vector<8x256xf32>
    %c0_29 = arith.constant 0 : index
    %c128_30 = arith.constant 128 : index
    %57 = vector.load %arg6[%c0_29, %c128_30] : memref<4x401xf32, #tpu.memory_space<vmem>>, vector<4x256xf32>
    %c4 = arith.constant 4 : index
    %c0_31 = arith.constant 0 : index
    %c0_32 = arith.constant 0 : index
    %58 = vector.load %arg2[%c4, %c0_31, %c0_32] : memref<9x8x4xf32, #tpu.memory_space<vmem>>, vector<1x8x4xf32>
    %59 = vector.shape_cast %58 : vector<1x8x4xf32> to vector<8x4xf32>
    %cst_33 = arith.constant dense<0.000000e+00> : vector<8x256xf32>
    %60 = tpu.matmul %59, %57, %cst_33 {dimension_numbers = #tpu.dot_dimension_numbers<[1], [0], [0], [1], [0, 0, 1, 1], [], []>, precision = #tpu.contract_precision<fp32>} : vector<8x4xf32>, vector<4x256xf32>, vector<8x256xf32> -> vector<8x256xf32>
    %61 = arith.addf %56, %60 : vector<8x256xf32>
    %c0_34 = arith.constant 0 : index
    %c129 = arith.constant 129 : index
    %62 = vector.load %arg6[%c0_34, %c129] : memref<4x401xf32, #tpu.memory_space<vmem>>, vector<4x256xf32>
    %63 = vector.broadcast %24 : vector<1x256xf32> to vector<4x256xf32>
    %64 = arith.mulf %62, %63 : vector<4x256xf32>
    %c5 = arith.constant 5 : index
    %c0_35 = arith.constant 0 : index
    %c0_36 = arith.constant 0 : index
    %65 = vector.load %arg2[%c5, %c0_35, %c0_36] : memref<9x8x4xf32, #tpu.memory_space<vmem>>, vector<1x8x4xf32>
    %66 = vector.shape_cast %65 : vector<1x8x4xf32> to vector<8x4xf32>
    %cst_37 = arith.constant dense<0.000000e+00> : vector<8x256xf32>
    %67 = tpu.matmul %66, %64, %cst_37 {dimension_numbers = #tpu.dot_dimension_numbers<[1], [0], [0], [1], [0, 0, 1, 1], [], []>, precision = #tpu.contract_precision<fp32>} : vector<8x4xf32>, vector<4x256xf32>, vector<8x256xf32> -> vector<8x256xf32>
    %68 = arith.addf %61, %67 : vector<8x256xf32>
    %c0_38 = arith.constant 0 : index
    %c143 = arith.constant 143 : index
    %69 = vector.load %arg6[%c0_38, %c143] : memref<4x401xf32, #tpu.memory_space<vmem>>, vector<4x256xf32>
    %70 = vector.broadcast %20 : vector<1x256xf32> to vector<4x256xf32>
    %71 = arith.mulf %69, %70 : vector<4x256xf32>
    %c6 = arith.constant 6 : index
    %c0_39 = arith.constant 0 : index
    %c0_40 = arith.constant 0 : index
    %72 = vector.load %arg2[%c6, %c0_39, %c0_40] : memref<9x8x4xf32, #tpu.memory_space<vmem>>, vector<1x8x4xf32>
    %73 = vector.shape_cast %72 : vector<1x8x4xf32> to vector<8x4xf32>
    %cst_41 = arith.constant dense<0.000000e+00> : vector<8x256xf32>
    %74 = tpu.matmul %73, %71, %cst_41 {dimension_numbers = #tpu.dot_dimension_numbers<[1], [0], [0], [1], [0, 0, 1, 1], [], []>, precision = #tpu.contract_precision<fp32>} : vector<8x4xf32>, vector<4x256xf32>, vector<8x256xf32> -> vector<8x256xf32>
    %75 = arith.addf %68, %74 : vector<8x256xf32>
    %c0_42 = arith.constant 0 : index
    %c144 = arith.constant 144 : index
    %76 = vector.load %arg6[%c0_42, %c144] : memref<4x401xf32, #tpu.memory_space<vmem>>, vector<4x256xf32>
    %c7 = arith.constant 7 : index
    %c0_43 = arith.constant 0 : index
    %c0_44 = arith.constant 0 : index
    %77 = vector.load %arg2[%c7, %c0_43, %c0_44] : memref<9x8x4xf32, #tpu.memory_space<vmem>>, vector<1x8x4xf32>
    %78 = vector.shape_cast %77 : vector<1x8x4xf32> to vector<8x4xf32>
    %cst_45 = arith.constant dense<0.000000e+00> : vector<8x256xf32>
    %79 = tpu.matmul %78, %76, %cst_45 {dimension_numbers = #tpu.dot_dimension_numbers<[1], [0], [0], [1], [0, 0, 1, 1], [], []>, precision = #tpu.contract_precision<fp32>} : vector<8x4xf32>, vector<4x256xf32>, vector<8x256xf32> -> vector<8x256xf32>
    %80 = arith.addf %75, %79 : vector<8x256xf32>
    %c0_46 = arith.constant 0 : index
    %c145 = arith.constant 145 : index
    %81 = vector.load %arg6[%c0_46, %c145] : memref<4x401xf32, #tpu.memory_space<vmem>>, vector<4x256xf32>
    %82 = vector.broadcast %24 : vector<1x256xf32> to vector<4x256xf32>
    %83 = arith.mulf %81, %82 : vector<4x256xf32>
    %c8 = arith.constant 8 : index
    %c0_47 = arith.constant 0 : index
    %c0_48 = arith.constant 0 : index
    %84 = vector.load %arg2[%c8, %c0_47, %c0_48] : memref<9x8x4xf32, #tpu.memory_space<vmem>>, vector<1x8x4xf32>
    %85 = vector.shape_cast %84 : vector<1x8x4xf32> to vector<8x4xf32>
    %cst_49 = arith.constant dense<0.000000e+00> : vector<8x256xf32>
    %86 = tpu.matmul %85, %83, %cst_49 {dimension_numbers = #tpu.dot_dimension_numbers<[1], [0], [0], [1], [0, 0, 1, 1], [], []>, precision = #tpu.contract_precision<fp32>} : vector<8x4xf32>, vector<4x256xf32>, vector<8x256xf32> -> vector<8x256xf32>
    %87 = arith.addf %80, %86 : vector<8x256xf32>
    %88 = vector.broadcast %31 : vector<8x1xf32> to vector<8x256xf32>
    %89 = arith.addf %87, %88 : vector<8x256xf32>
    %cst_50 = arith.constant 0.000000e+00 : f32
    %90 = vector.broadcast %cst_50 : f32 to vector<8x256xf32>
    %91 = arith.maximumf %89, %90 : vector<8x256xf32>
    %cst_51 = arith.constant 0.000000e+00 : f32
    %92 = vector.broadcast %cst_51 : f32 to vector<8x401xf32>
    %c0_52 = arith.constant 0 : index
    %c0_53 = arith.constant 0 : index
    %93 = vector.load %arg7[%c0_52, %c0_53] : memref<8x401xf32, #tpu.memory_space<vmem>>, vector<8x401xf32>
    tpu.vector_store %arg7[%c0_52, %c0_53], %92 {strides = array<i32>} : memref<8x401xf32, #tpu.memory_space<vmem>>, vector<8x401xf32>,
    %c0_54 = arith.constant 0 : index
    %c128_55 = arith.constant 128 : index
    %94 = vector.load %arg7[%c0_54, %c128_55] : memref<8x401xf32, #tpu.memory_space<vmem>>, vector<8x256xf32>
    tpu.vector_store %arg7[%c0_54, %c128_55], %91 {strides = array<i32>} : memref<8x401xf32, #tpu.memory_space<vmem>>, vector<8x256xf32>,
    %c1_56 = arith.constant 1 : index
    %c0_57 = arith.constant 0 : index
    %c0_58 = arith.constant 0 : index
    %95 = vector.load %arg4[%c1_56, %c0_57, %c0_58] : memref<2x8x1xf32, #tpu.memory_space<vmem>>, vector<1x8x1xf32>
    %96 = vector.shape_cast %95 : vector<1x8x1xf32> to vector<8x1xf32>
    %c0_59 = arith.constant 0 : index
    %c111_60 = arith.constant 111 : index
    %97 = vector.load %arg7[%c0_59, %c111_60] : memref<8x401xf32, #tpu.memory_space<vmem>>, vector<8x256xf32>
    %98 = vector.broadcast %20 : vector<1x256xf32> to vector<8x256xf32>
    %99 = arith.mulf %97, %98 : vector<8x256xf32>
    %c0_61 = arith.constant 0 : index
    %c0_62 = arith.constant 0 : index
    %c0_63 = arith.constant 0 : index
    %100 = vector.load %arg3[%c0_61, %c0_62, %c0_63] : memref<9x8x8xf32, #tpu.memory_space<vmem>>, vector<1x8x8xf32>
    %101 = vector.shape_cast %100 : vector<1x8x8xf32> to vector<8x8xf32>
    %cst_64 = arith.constant dense<0.000000e+00> : vector<8x256xf32>
    %102 = tpu.matmul %101, %99, %cst_64 {dimension_numbers = #tpu.dot_dimension_numbers<[1], [0], [0], [1], [0, 0, 1, 1], [], []>, precision = #tpu.contract_precision<fp32>} : vector<8x8xf32>, vector<8x256xf32>, vector<8x256xf32> -> vector<8x256xf32>
    %c0_65 = arith.constant 0 : index
    %c112_66 = arith.constant 112 : index
    %103 = vector.load %arg7[%c0_65, %c112_66] : memref<8x401xf32, #tpu.memory_space<vmem>>, vector<8x256xf32>
    %c1_67 = arith.constant 1 : index
    %c0_68 = arith.constant 0 : index
    %c0_69 = arith.constant 0 : index
    %104 = vector.load %arg3[%c1_67, %c0_68, %c0_69] : memref<9x8x8xf32, #tpu.memory_space<vmem>>, vector<1x8x8xf32>
    %105 = vector.shape_cast %104 : vector<1x8x8xf32> to vector<8x8xf32>
    %cst_70 = arith.constant dense<0.000000e+00> : vector<8x256xf32>
    %106 = tpu.matmul %105, %103, %cst_70 {dimension_numbers = #tpu.dot_dimension_numbers<[1], [0], [0], [1], [0, 0, 1, 1], [], []>, precision = #tpu.contract_precision<fp32>} : vector<8x8xf32>, vector<8x256xf32>, vector<8x256xf32> -> vector<8x256xf32>
    %107 = arith.addf %102, %106 : vector<8x256xf32>
    %c0_71 = arith.constant 0 : index
    %c113_72 = arith.constant 113 : index
    %108 = vector.load %arg7[%c0_71, %c113_72] : memref<8x401xf32, #tpu.memory_space<vmem>>, vector<8x256xf32>
    %109 = vector.broadcast %24 : vector<1x256xf32> to vector<8x256xf32>
    %110 = arith.mulf %108, %109 : vector<8x256xf32>
    %c2_73 = arith.constant 2 : index
    %c0_74 = arith.constant 0 : index
    %c0_75 = arith.constant 0 : index
    %111 = vector.load %arg3[%c2_73, %c0_74, %c0_75] : memref<9x8x8xf32, #tpu.memory_space<vmem>>, vector<1x8x8xf32>
    %112 = vector.shape_cast %111 : vector<1x8x8xf32> to vector<8x8xf32>
    %cst_76 = arith.constant dense<0.000000e+00> : vector<8x256xf32>
    %113 = tpu.matmul %112, %110, %cst_76 {dimension_numbers = #tpu.dot_dimension_numbers<[1], [0], [0], [1], [0, 0, 1, 1], [], []>, precision = #tpu.contract_precision<fp32>} : vector<8x8xf32>, vector<8x256xf32>, vector<8x256xf32> -> vector<8x256xf32>
    %114 = arith.addf %107, %113 : vector<8x256xf32>
    %c0_77 = arith.constant 0 : index
    %c127_78 = arith.constant 127 : index
    %115 = vector.load %arg7[%c0_77, %c127_78] : memref<8x401xf32, #tpu.memory_space<vmem>>, vector<8x256xf32>
    %116 = vector.broadcast %20 : vector<1x256xf32> to vector<8x256xf32>
    %117 = arith.mulf %115, %116 : vector<8x256xf32>
    %c3_79 = arith.constant 3 : index
    %c0_80 = arith.constant 0 : index
    %c0_81 = arith.constant 0 : index
    %118 = vector.load %arg3[%c3_79, %c0_80, %c0_81] : memref<9x8x8xf32, #tpu.memory_space<vmem>>, vector<1x8x8xf32>
    %119 = vector.shape_cast %118 : vector<1x8x8xf32> to vector<8x8xf32>
    %cst_82 = arith.constant dense<0.000000e+00> : vector<8x256xf32>
    %120 = tpu.matmul %119, %117, %cst_82 {dimension_numbers = #tpu.dot_dimension_numbers<[1], [0], [0], [1], [0, 0, 1, 1], [], []>, precision = #tpu.contract_precision<fp32>} : vector<8x8xf32>, vector<8x256xf32>, vector<8x256xf32> -> vector<8x256xf32>
    %121 = arith.addf %114, %120 : vector<8x256xf32>
    %c0_83 = arith.constant 0 : index
    %c128_84 = arith.constant 128 : index
    %122 = vector.load %arg7[%c0_83, %c128_84] : memref<8x401xf32, #tpu.memory_space<vmem>>, vector<8x256xf32>
    %c4_85 = arith.constant 4 : index
    %c0_86 = arith.constant 0 : index
    %c0_87 = arith.constant 0 : index
    %123 = vector.load %arg3[%c4_85, %c0_86, %c0_87] : memref<9x8x8xf32, #tpu.memory_space<vmem>>, vector<1x8x8xf32>
    %124 = vector.shape_cast %123 : vector<1x8x8xf32> to vector<8x8xf32>
    %cst_88 = arith.constant dense<0.000000e+00> : vector<8x256xf32>
    %125 = tpu.matmul %124, %122, %cst_88 {dimension_numbers = #tpu.dot_dimension_numbers<[1], [0], [0], [1], [0, 0, 1, 1], [], []>, precision = #tpu.contract_precision<fp32>} : vector<8x8xf32>, vector<8x256xf32>, vector<8x256xf32> -> vector<8x256xf32>
    %126 = arith.addf %121, %125 : vector<8x256xf32>
    %c0_89 = arith.constant 0 : index
    %c129_90 = arith.constant 129 : index
    %127 = vector.load %arg7[%c0_89, %c129_90] : memref<8x401xf32, #tpu.memory_space<vmem>>, vector<8x256xf32>
    %128 = vector.broadcast %24 : vector<1x256xf32> to vector<8x256xf32>
    %129 = arith.mulf %127, %128 : vector<8x256xf32>
    %c5_91 = arith.constant 5 : index
    %c0_92 = arith.constant 0 : index
    %c0_93 = arith.constant 0 : index
    %130 = vector.load %arg3[%c5_91, %c0_92, %c0_93] : memref<9x8x8xf32, #tpu.memory_space<vmem>>, vector<1x8x8xf32>
    %131 = vector.shape_cast %130 : vector<1x8x8xf32> to vector<8x8xf32>
    %cst_94 = arith.constant dense<0.000000e+00> : vector<8x256xf32>
    %132 = tpu.matmul %131, %129, %cst_94 {dimension_numbers = #tpu.dot_dimension_numbers<[1], [0], [0], [1], [0, 0, 1, 1], [], []>, precision = #tpu.contract_precision<fp32>} : vector<8x8xf32>, vector<8x256xf32>, vector<8x256xf32> -> vector<8x256xf32>
    %133 = arith.addf %126, %132 : vector<8x256xf32>
    %c0_95 = arith.constant 0 : index
    %c143_96 = arith.constant 143 : index
    %134 = vector.load %arg7[%c0_95, %c143_96] : memref<8x401xf32, #tpu.memory_space<vmem>>, vector<8x256xf32>
    %135 = vector.broadcast %20 : vector<1x256xf32> to vector<8x256xf32>
    %136 = arith.mulf %134, %135 : vector<8x256xf32>
    %c6_97 = arith.constant 6 : index
    %c0_98 = arith.constant 0 : index
    %c0_99 = arith.constant 0 : index
    %137 = vector.load %arg3[%c6_97, %c0_98, %c0_99] : memref<9x8x8xf32, #tpu.memory_space<vmem>>, vector<1x8x8xf32>
    %138 = vector.shape_cast %137 : vector<1x8x8xf32> to vector<8x8xf32>
    %cst_100 = arith.constant dense<0.000000e+00> : vector<8x256xf32>
    %139 = tpu.matmul %138, %136, %cst_100 {dimension_numbers = #tpu.dot_dimension_numbers<[1], [0], [0], [1], [0, 0, 1, 1], [], []>, precision = #tpu.contract_precision<fp32>} : vector<8x8xf32>, vector<8x256xf32>, vector<8x256xf32> -> vector<8x256xf32>
    %140 = arith.addf %133, %139 : vector<8x256xf32>
    %c0_101 = arith.constant 0 : index
    %c144_102 = arith.constant 144 : index
    %141 = vector.load %arg7[%c0_101, %c144_102] : memref<8x401xf32, #tpu.memory_space<vmem>>, vector<8x256xf32>
    %c7_103 = arith.constant 7 : index
    %c0_104 = arith.constant 0 : index
    %c0_105 = arith.constant 0 : index
    %142 = vector.load %arg3[%c7_103, %c0_104, %c0_105] : memref<9x8x8xf32, #tpu.memory_space<vmem>>, vector<1x8x8xf32>
    %143 = vector.shape_cast %142 : vector<1x8x8xf32> to vector<8x8xf32>
    %cst_106 = arith.constant dense<0.000000e+00> : vector<8x256xf32>
    %144 = tpu.matmul %143, %141, %cst_106 {dimension_numbers = #tpu.dot_dimension_numbers<[1], [0], [0], [1], [0, 0, 1, 1], [], []>, precision = #tpu.contract_precision<fp32>} : vector<8x8xf32>, vector<8x256xf32>, vector<8x256xf32> -> vector<8x256xf32>
    %145 = arith.addf %140, %144 : vector<8x256xf32>
    %c0_107 = arith.constant 0 : index
    %c145_108 = arith.constant 145 : index
    %146 = vector.load %arg7[%c0_107, %c145_108] : memref<8x401xf32, #tpu.memory_space<vmem>>, vector<8x256xf32>
    %147 = vector.broadcast %24 : vector<1x256xf32> to vector<8x256xf32>
    %148 = arith.mulf %146, %147 : vector<8x256xf32>
    %c8_109 = arith.constant 8 : index
    %c0_110 = arith.constant 0 : index
    %c0_111 = arith.constant 0 : index
    %149 = vector.load %arg3[%c8_109, %c0_110, %c0_111] : memref<9x8x8xf32, #tpu.memory_space<vmem>>, vector<1x8x8xf32>
    %150 = vector.shape_cast %149 : vector<1x8x8xf32> to vector<8x8xf32>
    %cst_112 = arith.constant dense<0.000000e+00> : vector<8x256xf32>
    %151 = tpu.matmul %150, %148, %cst_112 {dimension_numbers = #tpu.dot_dimension_numbers<[1], [0], [0], [1], [0, 0, 1, 1], [], []>, precision = #tpu.contract_precision<fp32>} : vector<8x8xf32>, vector<8x256xf32>, vector<8x256xf32> -> vector<8x256xf32>
    %152 = arith.addf %145, %151 : vector<8x256xf32>
    %153 = vector.broadcast %96 : vector<8x1xf32> to vector<8x256xf32>
    %154 = arith.addf %152, %153 : vector<8x256xf32>
    %cst_113 = arith.constant 0.000000e+00 : f32
    %155 = vector.broadcast %cst_113 : f32 to vector<8x256xf32>
    %156 = arith.maximumf %154, %155 : vector<8x256xf32>
    %c0_114 = arith.constant 0 : index
    %c0_115 = arith.constant 0 : index
    %c0_116 = arith.constant 0 : index
    %157 = vector.load %arg5[%c0_114, %c0_115, %c0_116] : memref<1x8x256xf32, #tpu.memory_space<vmem>>, vector<1x8x256xf32>
    %158 = vector.shape_cast %157 : vector<1x8x256xf32> to vector<8x256xf32>
    %159 = vector.shape_cast %156 : vector<8x256xf32> to vector<1x8x256xf32>
    tpu.vector_store %arg5[%c0_114, %c0_115, %c0_116], %159 {strides = array<i32>} : memref<1x8x256xf32, #tpu.memory_space<vmem>>, vector<1x8x256xf32>,
    return
  }
  func.func @transform_0(%arg0: i32) -> (i32, i32, i32) {
    %c0_i32 = arith.constant 0 : i32
    %c0_i32_0 = arith.constant 0 : i32
    %c0_i32_1 = arith.constant 0 : i32
    return %arg0, %c0_i32, %c0_i32_0 : i32, i32, i32
  }
  func.func @transform_1(%arg0: i32) -> (i32, i32, i32) {
    %c0_i32 = arith.constant 0 : i32
    %c0_i32_0 = arith.constant 0 : i32
    %c0_i32_1 = arith.constant 0 : i32
    %c0_i32_2 = arith.constant 0 : i32
    return %c0_i32, %c0_i32_0, %c0_i32_1 : i32, i32, i32
  }
  func.func @transform_2(%arg0: i32) -> (i32, i32, i32) {
    %c0_i32 = arith.constant 0 : i32
    %c0_i32_0 = arith.constant 0 : i32
    %c0_i32_1 = arith.constant 0 : i32
    %c0_i32_2 = arith.constant 0 : i32
    return %c0_i32, %c0_i32_0, %c0_i32_1 : i32, i32, i32
  }
  func.func @transform_3(%arg0: i32) -> (i32, i32, i32) {
    %c0_i32 = arith.constant 0 : i32
    %c0_i32_0 = arith.constant 0 : i32
    %c0_i32_1 = arith.constant 0 : i32
    %c0_i32_2 = arith.constant 0 : i32
    return %c0_i32, %c0_i32_0, %c0_i32_1 : i32, i32, i32
  }
  func.func @transform_4(%arg0: i32) -> (i32, i32, i32) {
    %c0_i32 = arith.constant 0 : i32
    %c0_i32_0 = arith.constant 0 : i32
    %c0_i32_1 = arith.constant 0 : i32
    return %arg0, %c0_i32, %c0_i32_0 : i32, i32, i32
  }
}

</mosaic_0001>

<llo_original>
// kernel: conv_block_forward.1
$region0: #{conv_block_forward.1}
  #allocation0 [shape = 'u32[]', space=smem, size = 0x4, offset = 0x4, fixed_abs, tag = 'smem constant byte address 0x4 - core index']
  #allocation1 [shape = 'u32[144,128]{1,0:T(1,128)}', space=vmem, size = 0x12000, scoped, tag = 'internal scratch']
  #allocation2 [shape = 'f32[4,401]{1,0:T(4,128)}', space=vmem, size = 0x2000, scoped, tag = 'scratch operand']
  #allocation3 [shape = 'f32[8,401]{1,0:T(8,128)}', space=vmem, size = 0x4000, scoped, tag = 'scratch operand']
  %s0 = inlined_call_operand.vmem [shape: f32[2,4,256], index: 0, kind: input, shape index: {}]
  %s1 = inlined_call_operand.vmem [shape: f32[9,8,4], index: 1, kind: input, shape index: {}]
  %s2 = inlined_call_operand.vmem [shape: f32[9,8,8], index: 2, kind: input, shape index: {}]
  %s3 = inlined_call_operand.vmem [shape: f32[2,8,1], index: 3, kind: input, shape index: {}]
  %s4 = inlined_call_operand.vmem [shape: f32[2,8,256], index: 4, kind: output, shape index: {}]
  %s5 = sld [smem:[#allocation0]]
  $region49: #{conv_block_forward.1} parent=0
    _
  %s7 = ssub.s32 1, %s5
  %s8 = scalar_select 0, %s7, %s5
  loop: start=0, step=1, limit=4
  $region2: #{conv_block_forward.1} parent=0 // loop_pre_header
    _
  $region3: #{conv_block_forward.1} parent=0 // loop_header
    %s10 = sphi 0, %s14
    %p11 = scmp.ge.s32.totalorder %s10, 4
    %s20 = sphi 0, %s22
    %s23 = sphi 0, %s20
    %s24 = sphi 0, %s23
    %s40 = sphi 0, %s24
    %s44 = sphi 0, %s44
    %s46 = sphi 0, %s44
    %s47 = sphi 0, %s46
    %s61 = sphi 0, %s47
    %s65 = sphi 0, %s65
    %s67 = sphi 0, %s65
    %s68 = sphi 0, %s67
    %s82 = sphi 0, %s68
    %s86 = sphi 0, %s86
    %s88 = sphi 0, %s86
    %s89 = sphi 0, %s88
    %s103 = sphi 0, %s89
    %s109 = sphi 0, %s111
    %s112 = sphi 0, %s109
    %s113 = sphi 0, %s112
    %s129 = sphi 0, %s113
  $region4: #{conv_block_forward.1} parent=0 // loop_header_branch
    %13 = sbr.rel (%p11) target = $region8
  $region5: #{conv_block_forward.1} parent=0 // loop_body
    %s15 = ssub.s32 %s10, 1
    %s16 = ssub.s32 %s10, 2
    %s17 = sadd.s32 %s10, 1
    %s18 = ssub.s32 %s10, %s17
    %p19 = scmp.eq.s32.totalorder %s18, 0
    %s21 = sadd.s32 %s20, 1
    %s22 = scalar_select %p19, %s20, %s21
    %p25 = pneg %p19
    %p26 = scmp.eq.s32.totalorder %s10, 1
    %p27 = por %p25, %p26
    %p28 = scmp.ne.s32.totalorder %s20, %s23
    %p29 = scmp.eq.s32.totalorder %s10, 0
    %p30 = por %p28, %p29
    %p31 = scmp.ne.s32.totalorder %s20, %s23
    %p32 = scmp.eq.s32.totalorder %s15, 1
    %p33 = por %p31, %p32
    %p34 = scmp.ne.s32.totalorder %s23, %s24
    %p35 = scmp.eq.s32.totalorder %s15, 0
    %p36 = por %p34, %p35
    %p37 = scmp.ne.s32.totalorder %s23, %s24
    %p38 = scmp.eq.s32.totalorder %s16, 1
    %p39 = por %p37, %p38
    %p41 = scmp.ne.s32.totalorder %s24, %s40
    %p42 = scmp.eq.s32.totalorder %s16, 0
    %p43 = por %p41, %p42
    %s45 = sadd.s32 %s44, 1
    %p48 = scmp.eq.s32.totalorder %s10, 1
    %p49 = scmp.ne.s32.totalorder %s44, %s46
    %p50 = scmp.eq.s32.totalorder %s10, 0
    %p51 = por %p49, %p50
    %p52 = scmp.ne.s32.totalorder %s44, %s46
    %p53 = scmp.eq.s32.totalorder %s15, 1
    %p54 = por %p52, %p53
    %p55 = scmp.ne.s32.totalorder %s46, %s47
    %p56 = scmp.eq.s32.totalorder %s15, 0
    %p57 = por %p55, %p56
    %p58 = scmp.ne.s32.totalorder %s46, %s47
    %p59 = scmp.eq.s32.totalorder %s16, 1
    %p60 = por %p58, %p59
    %p62 = scmp.ne.s32.totalorder %s47, %s61
    %p63 = scmp.eq.s32.totalorder %s16, 0
    %p64 = por %p62, %p63
    %s66 = sadd.s32 %s65, 1
    %p69 = scmp.eq.s32.totalorder %s10, 1
    %p70 = scmp.ne.s32.totalorder %s65, %s67
    %p71 = scmp.eq.s32.totalorder %s10, 0
    %p72 = por %p70, %p71
    %p73 = scmp.ne.s32.totalorder %s65, %s67
    %p74 = scmp.eq.s32.totalorder %s15, 1
    %p75 = por %p73, %p74
    %p76 = scmp.ne.s32.totalorder %s67, %s68
    %p77 = scmp.eq.s32.totalorder %s15, 0
    %p78 = por %p76, %p77
    %p79 = scmp.ne.s32.totalorder %s67, %s68
    %p80 = scmp.eq.s32.totalorder %s16, 1
    %p81 = por %p79, %p80
    %p83 = scmp.ne.s32.totalorder %s68, %s82
    %p84 = scmp.eq.s32.totalorder %s16, 0
    %p85 = por %p83, %p84
    %s87 = sadd.s32 %s86, 1
    %p90 = scmp.eq.s32.totalorder %s10, 1
    %p91 = scmp.ne.s32.totalorder %s86, %s88
    %p92 = scmp.eq.s32.totalorder %s10, 0
    %p93 = por %p91, %p92
    %p94 = scmp.ne.s32.totalorder %s86, %s88
    %p95 = scmp.eq.s32.totalorder %s15, 1
    %p96 = por %p94, %p95
    %p97 = scmp.ne.s32.totalorder %s88, %s89
    %p98 = scmp.eq.s32.totalorder %s15, 0
    %p99 = por %p97, %p98
    %p100 = scmp.ne.s32.totalorder %s88, %s89
    %p101 = scmp.eq.s32.totalorder %s16, 1
    %p102 = por %p100, %p101
    %p104 = scmp.ne.s32.totalorder %s89, %s103
    %p105 = scmp.eq.s32.totalorder %s16, 0
    %p106 = por %p104, %p105
    %s107 = ssub.s32 %s10, %s17
    %p108 = scmp.eq.s32.totalorder %s107, 0
    %s110 = sadd.s32 %s109, 1
    %s111 = scalar_select %p108, %s109, %s110
    %p114 = pneg %p108
    %p115 = scmp.eq.s32.totalorder %s10, 1
    %p116 = por %p114, %p115
    %p117 = scmp.ne.s32.totalorder %s109, %s112
    %p118 = scmp.eq.s32.totalorder %s10, 0
    %p119 = por %p117, %p118
    %p120 = scmp.ne.s32.totalorder %s109, %s112
    %p121 = scmp.eq.s32.totalorder %s15, 1
    %p122 = por %p120, %p121
    %p123 = scmp.ne.s32.totalorder %s112, %s113
    %p124 = scmp.eq.s32.totalorder %s15, 0
    %p125 = por %p123, %p124
    %p126 = scmp.ne.s32.totalorder %s112, %s113
    %p127 = scmp.eq.s32.totalorder %s16, 1
    %p128 = por %p126, %p127
    %p130 = scmp.ne.s32.totalorder %s113, %s129
    %p131 = scmp.eq.s32.totalorder %s16, 0
    %p132 = por %p130, %p131
    %p133 = scmp.le.s32.totalorder 1, %s10
    %p134 = scmp.lt.s32.totalorder %s10, 3
    %p135 = pnand %p133, %p134
    %p136 = pneg %p135
    // Predicated region
    $region9: #{conv_block_forward.1} parent=5 // pred_check
      _
    $region10: #{conv_block_forward.1} parent=5 // pred_check_branch
      %138 = sbr.rel (%p135) target = $region12
    $region11: #{conv_block_forward.1} parent=5 // pred_region
      %s139 = ssub.s32 %s10, 1
      // Predicated region
      $region13: #{conv_block_forward.1} parent=11 // pred_check
        %p140 = pneg %p57
      $region14: #{conv_block_forward.1} parent=11 // pred_check_branch
        %142 = sbr.rel (%p140) target = $region16
      $region15: #{conv_block_forward.1} parent=11 // pred_region
        _
      $region16: #{conv_block_forward.1} parent=11 // pred_fallthru
        _
      // Predicated region
      $region17: #{conv_block_forward.1} parent=11 // pred_check
        %p143 = pneg %p78
      $region18: #{conv_block_forward.1} parent=11 // pred_check_branch
        %145 = sbr.rel (%p143) target = $region20
      $region19: #{conv_block_forward.1} parent=11 // pred_region
        _
      $region20: #{conv_block_forward.1} parent=11 // pred_fallthru
        _
      // Predicated region
      $region21: #{conv_block_forward.1} parent=11 // pred_check
        %p146 = pneg %p99
      $region22: #{conv_block_forward.1} parent=11 // pred_check_branch
        %148 = sbr.rel (%p146) target = $region24
      $region23: #{conv_block_forward.1} parent=11 // pred_region
        _
      $region24: #{conv_block_forward.1} parent=11 // pred_fallthru
        _
    $region12: #{conv_block_forward.1} parent=5 // pred_fallthru
      _
    %p149 = scmp.lt.s32.totalorder %s10, 2
    // Predicated region
    $region25: #{conv_block_forward.1} parent=5 // pred_check
      %p150 = pneg %p149
    $region26: #{conv_block_forward.1} parent=5 // pred_check_branch
      %152 = sbr.rel (%p150) target = $region28
    $region27: #{conv_block_forward.1} parent=5 // pred_region
      // Predicated region
      $region29: #{conv_block_forward.1} parent=27 // pred_check
        %p153 = pneg %p30
      $region30: #{conv_block_forward.1} parent=27 // pred_check_branch
        %155 = sbr.rel (%p153) target = $region32
      $region31: #{conv_block_forward.1} parent=27 // pred_region
        %p156 = scmp.lt.s32.totalorder %s10, 1
        %s157 = scalar_select %p156, %s10, 1
        %s158 = smul.addr %s157, 2
        %s159 = smul.addr %s158, 4
        %s160 = scalar_lea.vmem %s0, %s159
      $region32: #{conv_block_forward.1} parent=27 // pred_fallthru
        _
    $region28: #{conv_block_forward.1} parent=5 // pred_fallthru
      _
    %p161 = scmp.le.s32.totalorder 1, %s10
    %p162 = scmp.lt.s32.totalorder %s10, 3
    %p163 = pnand %p161, %p162
    %p164 = pneg %p163
    // Predicated region
    $region33: #{conv_block_forward.1} parent=5 // pred_check
      _
    $region34: #{conv_block_forward.1} parent=5 // pred_check_branch
      %166 = sbr.rel (%p163) target = $region36
    $region35: #{conv_block_forward.1} parent=5 // pred_region
      %s167 = ssub.s32 %s10, 1
      %p168 = scmp.lt.s32.totalorder %s15, 1
      %s169 = scalar_select %p168, %s15, 1
      %s170 = smul.addr %s169, 2
      %s171 = smul.addr %s170, 4
      %s172 = scalar_lea.vmem %s0, %s171
      %p173 = pneg %p36
      %p174 = pneg %p33
      %p175 = pneg %p57
      %p176 = pneg %p54
      %p177 = pneg %p78
      %p178 = pneg %p75
      %p179 = pneg %p99
      %p180 = pneg %p96
      %p181 = pneg %p125
      %p182 = pneg %p122
      %p183 = scmp.lt.s32.totalorder %s15, 1
      %s184 = scalar_select %p183, %s15, 1
      %s185 = smul.addr %s184, 2
      %s186 = smul.addr %s185, 8
      %s187 = scalar_lea.vmem %s4, %s186
      %p188 = scmp.lt.s32.totalorder %s15, 1
      %s189 = scalar_select %p188, %s15, 1
      %s190 = smul.addr %s189, 2
      %s191 = smul.addr %s190, 4
      %s192 = scalar_lea.vmem %s0, %s191
      %p193 = scmp.lt.s32.totalorder %s15, 1
      %s194 = scalar_select %p193, %s15, 1
      %s195 = smul.addr %s194, 2
      %s196 = smul.addr %s195, 8
      %s197 = scalar_lea.vmem %s4, %s196
      %v198 = vlaneseq
      %v199 = vand.u32 %v198, 127
      %v200 = vadd.s32 %v199, 128
      %vm201 = vcmp.lt.s32.totalorder %v199, 0
      %v202 = vsub.s32 0, %v199
      %v203 = vsel %vm201, %v202, %v199
      %v204 = vshrl.u32 %v203, 4
      %v205 = vand.u32 %v203, 15
      %v206 = vsub.s32 0, %v205
      %v207 = vsel %vm201, %v206, %v205
      %vm208 = vcmp.lt.s32.totalorder %v200, 0
      %v209 = vsub.s32 0, %v200
      %v210 = vsel %vm208, %v209, %v200
      %v211 = vshrl.u32 %v210, 4
      %v212 = vand.u32 %v210, 15
      %v213 = vsub.s32 0, %v212
      %v214 = vsel %vm208, %v213, %v212
      %vm215 = vcmp.ne.s32.totalorder %v207, 0
      %vm216 = vcmp.ne.s32.totalorder %v214, 0
      %vm217 = vcmp.lt.s32.totalorder %v207, 0
      %vm218 = vcmp.lt.s32.totalorder %v214, 0
      %vm219 = vmand %vm217, %vm215
      %vm220 = vmand %vm218, %vm216
      %v221 = vadd.s32 %v207, 16
      %v222 = vadd.s32 %v214, 16
      %v223 = vsel %vm219, %v221, %v207
      %v224 = vsel %vm220, %v222, %v214
      %vm225 = vcmp.ne.s32.totalorder %v223, 0
      %vm226 = vcmp.ne.s32.totalorder %v224, 0
      %v227 = vsel %vm225, 1, 0
      %v228 = vsel %vm226, 1, 0
      %v229 = vcvt.s32.f32 %v227
      %v230 = vcvt.s32.f32 %v228
      %vm231 = vcmp.ne.s32.totalorder %v223, 15
      %vm232 = vcmp.ne.s32.totalorder %v224, 15
      %v233 = vsel %vm231, 1, 0
      %v234 = vsel %vm232, 1, 0
      %v235 = vcvt.s32.f32 %v233
      %v236 = vcvt.s32.f32 %v234
      %237 = vst [vmem:[#allocation2] sm:$0xff] 0.0
      %vm238 = vcmask 1043456
      %vm239 = vcmask 138244
      %vm240 = vmor %vm239, %vm238
      %241 = vst.msk [vmem:[#allocation2 + $0x8] sm:$0xff] %vm240, 0.0
      %v242 = vld [vmem:[%s192] sm:$0xff]
      %243 = vst [vmem:[#allocation2 + $0x4] sm:$0xff] %v242
      %v244 = vld [vmem:[%s3] sm:$0xff]
      %v245 = vld [vmem:[#allocation2] sm:$0xff]
      %v246 = vld [vmem:[#allocation2 + $0x8] sm:$0xf]
      %v249 = vcombine.low %v229, %v230
      %250 = vrot.lane.b32.xlu0 %v249, 111
      %v251 = vpop.permute.xlu0 %250
      %v252 = vrot.slane %v251, 4
      %vm253 = vcmask 908288
      %v254 = vsel %vm253, %v252, %v251
      %v257 = vmul.f32 %v245, %v254
      %v258 = vmul.f32 %v246, %v252
      %v259 = vld [vmem:[%s1] sm:$0xff]
      %s260 = scalar_lea.vmem %s1, 8
      %v261 = vld [vmem:[%s260] sm:$0xff]
      %v264 = vcombine.high %v245, %v245
      %265 = vrot.lane.b32.xlu0 %v245, 16
      %v266 = vpop.permute.xlu0 %265
      %267 = vrot.lane.b32.xlu0 %v264, 16
      %v268 = vpop.permute.xlu0 %267
      %269 = vrot.lane.b32.xlu0 %v246, 16
      %v270 = vpop.permute.xlu0 %269
      %vm271 = vcmask 130048
      %v272 = vsel %vm271, %v266, %v268
      %v273 = vsel %vm271, %v268, %v270
      %vm274 = vcmask 31744
      %v276 = vsel %vm274, %v261, 0
      %v278 = vsel %vm238, %v272, 0
      %v280 = vsel %vm238, %v273, 0
      %v282 = vand.u32 %v280, 4294901760
      %283 = vmatprep.subr.mxu0 %v282
      %v284 = vand.u32 %v278, 4294901760
      %285 = vmatpush1.msra.mxu0 %v284
      %286 = vmatprep.subr.mxu0 0.0
      %287 = vmatpush1.msra.mxu0 0.0
      %288 = vmatprep.subr.mxu0 0.0
      %289 = vmatpush1.msra.mxu0 0.0
      %290 = vmatprep.subr.mxu0 0.0
      %291 = vmatpush1.msra.mxu0 0.0
      %292 = vmatprep.subr.mxu0 0.0
      %293 = vmatpush1.msra.mxu0 0.0
      %294 = vmatprep.subr.mxu0 0.0
      %295 = vmatpush1.msra.mxu0 0.0
      %296 = vmatprep.subr.mxu0 0.0
      %297 = vmatpush1.msra.mxu0 0.0
      %298 = vmatprep.subr.mxu0 0.0
      %299 = vmatpush1.msra.mxu0 0.0
      %300 = vmatprep.subr.mxu0 0.0
      %301 = vmatpush1.msra.mxu0 0.0
      %302 = vmatprep.subr.mxu0 0.0
      %303 = vmatpush1.msra.mxu0 0.0
      %304 = vmatprep.subr.mxu0 0.0
      %305 = vmatpush1.msra.mxu0 0.0
      %306 = vmatprep.subr.mxu0 0.0
      %307 = vmatpush1.msra.mxu0 0.0
      %308 = vmatprep.subr.mxu0 0.0
      %309 = vmatpush1.msra.mxu0 0.0
      %310 = vmatprep.subr.mxu0 0.0
      %311 = vmatpush1.msra.mxu0 0.0
      %312 = vmatprep.subr.mxu0 0.0
      %313 = vmatpush1.msra.mxu0 0.0
      %314 = vmatprep.subr.mxu0 0.0
      %315 = vmatpush1.msra.mxu0 0.0
      %316 = vmatprep.subr.mxu0 0.0
      %317 = vmatpush1.msra.mxu0 0.0
      %318 = vmatprep.subr.mxu0 0.0
      %319 = vmatpush1.msra.mxu0 0.0
      %320 = vmatprep.subr.mxu0 0.0
      %321 = vmatpush1.msra.mxu0 0.0
      %322 = vmatprep.subr.mxu0 0.0
      %323 = vmatpush1.msra.mxu0 0.0
      %324 = vmatprep.subr.mxu0 0.0
      %325 = vmatpush1.msra.mxu0 0.0
      %326 = vmatprep.subr.mxu0 0.0
      %327 = vmatpush1.msra.mxu0 0.0
      %328 = vmatprep.subr.mxu0 0.0
      %329 = vmatpush1.msra.mxu0 0.0
      %330 = vmatprep.subr.mxu0 0.0
      %331 = vmatpush1.msra.mxu0 0.0
      %332 = vmatprep.subr.mxu0 0.0
      %333 = vmatpush1.msra.mxu0 0.0
      %334 = vmatprep.subr.mxu0 0.0
      %335 = vmatpush1.msra.mxu0 0.0
      %336 = vmatprep.subr.mxu0 0.0
      %337 = vmatpush1.msra.mxu0 0.0
      %338 = vmatprep.subr.mxu0 0.0
      %339 = vmatpush1.msra.mxu0 0.0
      %340 = vmatprep.subr.mxu0 0.0
      %341 = vmatpush1.msra.mxu0 0.0
      %342 = vmatprep.subr.mxu0 0.0
      %343 = vmatpush1.msra.mxu0 0.0
      %344 = vmatprep.subr.mxu0 0.0
      %345 = vmatpush1.msra.mxu0 0.0
      %346 = vmatprep.subr.mxu0 0.0
      %347 = vmatpush1.msra.mxu0 0.0
      %348 = vmatprep.mubr.f32.mxu0 0.0
      %v349 = vand.u32 %v276, 4294901760
      %v350 = vsub.f32 %v276, %v349
      %v351 = vand.u32 %v350, 4294901760
      %v352 = vsub.f32 %v350, %v351
      %v353 = vand.u32 %v352, 4294901760
      %354 = vmatmul.mubr.f32.gmra.mrb[0].mxu0 %v353
      %v355 = vpop.f32.mrb[0].mxu0
      %v356 = vadd.f32 0.0, %v355
      %v357 = vpop.f32.mrb[0].mxu0
      %v358 = vadd.f32 0.0, %v357
      %359 = vdwg.mxu0
      %v360 = vand.u32 %v280, 4294901760
      %v361 = vsub.f32 %v280, %v360
      %v362 = vand.u32 %v361, 4294901760
      %v363 = vsub.f32 %v361, %v362
      %v364 = vand.u32 %v363, 4294901760
      %365 = vmatprep.subr.mxu0 %v364
      %v366 = vand.u32 %v278, 4294901760
      %v367 = vsub.f32 %v278, %v366
      %v368 = vand.u32 %v367, 4294901760
      %v369 = vsub.f32 %v367, %v368
      %v370 = vand.u32 %v369, 4294901760
      %371 = vmatpush1.msra.mxu0 %v370
      %372 = vmatprep.subr.mxu0 0.0
      %373 = vmatpush1.msra.mxu0 0.0
      %374 = vmatprep.subr.mxu0 0.0
      %375 = vmatpush1.msra.mxu0 0.0
      %376 = vmatprep.subr.mxu0 0.0
      %377 = vmatpush1.msra.mxu0 0.0
      %378 = vmatprep.subr.mxu0 0.0
      %379 = vmatpush1.msra.mxu0 0.0
      %380 = vmatprep.subr.mxu0 0.0
      %381 = vmatpush1.msra.mxu0 0.0
      %382 = vmatprep.subr.mxu0 0.0
      %383 = vmatpush1.msra.mxu0 0.0
      %384 = vmatprep.subr.mxu0 0.0
      %385 = vmatpush1.msra.mxu0 0.0
      %386 = vmatprep.subr.mxu0 0.0
      %387 = vmatpush1.msra.mxu0 0.0
      %388 = vmatprep.subr.mxu0 0.0
      %389 = vmatpush1.msra.mxu0 0.0
      %390 = vmatprep.subr.mxu0 0.0
      %391 = vmatpush1.msra.mxu0 0.0
      %392 = vmatprep.subr.mxu0 0.0
      %393 = vmatpush1.msra.mxu0 0.0
      %394 = vmatprep.subr.mxu0 0.0
      %395 = vmatpush1.msra.mxu0 0.0
      %396 = vmatprep.subr.mxu0 0.0
      %397 = vmatpush1.msra.mxu0 0.0
      %398 = vmatprep.subr.mxu0 0.0
      %399 = vmatpush1.msra.mxu0 0.0
      %400 = vmatprep.subr.mxu0 0.0
      %401 = vmatpush1.msra.mxu0 0.0
      %402 = vmatprep.subr.mxu0 0.0
      %403 = vmatpush1.msra.mxu0 0.0
      %404 = vmatprep.subr.mxu0 0.0
      %405 = vmatpush1.msra.mxu0 0.0
      %406 = vmatprep.subr.mxu0 0.0
      %407 = vmatpush1.msra.mxu0 0.0
      %408 = vmatprep.subr.mxu0 0.0
      %409 = vmatpush1.msra.mxu0 0.0
      %410 = vmatprep.subr.mxu0 0.0
      %411 = vmatpush1.msra.mxu0 0.0
      %412 = vmatprep.subr.mxu0 0.0
      %413 = vmatpush1.msra.mxu0 0.0
      %414 = vmatprep.subr.mxu0 0.0
      %415 = vmatpush1.msra.mxu0 0.0
      %416 = vmatprep.subr.mxu0 0.0
      %417 = vmatpush1.msra.mxu0 0.0
      %418 = vmatprep.subr.mxu0 0.0
      %419 = vmatpush1.msra.mxu0 0.0
      %420 = vmatprep.subr.mxu0 0.0
      %421 = vmatpush1.msra.mxu0 0.0
      %422 = vmatprep.subr.mxu0 0.0
      %423 = vmatpush1.msra.mxu0 0.0
      %424 = vmatprep.subr.mxu0 0.0
      %425 = vmatpush1.msra.mxu0 0.0
      %426 = vmatprep.subr.mxu0 0.0
      %427 = vmatpush1.msra.mxu0 0.0
      %428 = vmatprep.subr.mxu0 0.0
      %429 = vmatpush1.msra.mxu0 0.0
      %430 = vmatprep.subr.mxu0 0.0
      %431 = vmatpush1.msra.mxu0 0.0
      %432 = vmatprep.subr.mxu0 0.0
      %433 = vmatpush1.msra.mxu0 0.0
      %434 = vmatprep.mubr.f32.mxu0 0.0
      %v435 = vand.u32 %v276, 4294901760
      %436 = vmatmul.mubr.f32.gmra.mrb[0].mxu0 %v435
      %v437 = vpop.f32.mrb[0].mxu0
      %v438 = vadd.f32 %v356, %v437
      %v439 = vpop.f32.mrb[0].mxu0
      %v440 = vadd.f32 %v358, %v439
      %441 = vdwg.mxu0
      %v442 = vand.u32 %v280, 4294901760
      %v443 = vsub.f32 %v280, %v442
      %444 = vmatprep.subr.mxu0 %v443
      %v445 = vand.u32 %v278, 4294901760
      %v446 = vsub.f32 %v278, %v445
      %447 = vmatpush1.msra.mxu0 %v446
      %448 = vmatprep.subr.mxu0 0.0
      %449 = vmatpush1.msra.mxu0 0.0
      %450 = vmatprep.subr.mxu0 0.0
      %451 = vmatpush1.msra.mxu0 0.0
      %452 = vmatprep.subr.mxu0 0.0
      %453 = vmatpush1.msra.mxu0 0.0
      %454 = vmatprep.subr.mxu0 0.0
      %455 = vmatpush1.msra.mxu0 0.0
      %456 = vmatprep.subr.mxu0 0.0
      %457 = vmatpush1.msra.mxu0 0.0
      %458 = vmatprep.subr.mxu0 0.0
      %459 = vmatpush1.msra.mxu0 0.0
      %460 = vmatprep.subr.mxu0 0.0
      %461 = vmatpush1.msra.mxu0 0.0
      %462 = vmatprep.subr.mxu0 0.0
      %463 = vmatpush1.msra.mxu0 0.0
      %464 = vmatprep.subr.mxu0 0.0
      %465 = vmatpush1.msra.mxu0 0.0
      %466 = vmatprep.subr.mxu0 0.0
      %467 = vmatpush1.msra.mxu0 0.0
      %468 = vmatprep.subr.mxu0 0.0
      %469 = vmatpush1.msra.mxu0 0.0
      %470 = vmatprep.subr.mxu0 0.0
      %471 = vmatpush1.msra.mxu0 0.0
      %472 = vmatprep.subr.mxu0 0.0
      %473 = vmatpush1.msra.mxu0 0.0
      %474 = vmatprep.subr.mxu0 0.0
      %475 = vmatpush1.msra.mxu0 0.0
      %476 = vmatprep.subr.mxu0 0.0
      %477 = vmatpush1.msra.mxu0 0.0
      %478 = vmatprep.subr.mxu0 0.0
      %479 = vmatpush1.msra.mxu0 0.0
      %480 = vmatprep.subr.mxu0 0.0
      %481 = vmatpush1.msra.mxu0 0.0
      %482 = vmatprep.subr.mxu0 0.0
      %483 = vmatpush1.msra.mxu0 0.0
      %484 = vmatprep.subr.mxu0 0.0
      %485 = vmatpush1.msra.mxu0 0.0
      %486 = vmatprep.subr.mxu0 0.0
      %487 = vmatpush1.msra.mxu0 0.0
      %488 = vmatprep.subr.mxu0 0.0
      %489 = vmatpush1.msra.mxu0 0.0
      %490 = vmatprep.subr.mxu0 0.0
      %491 = vmatpush1.msra.mxu0 0.0
      %492 = vmatprep.subr.mxu0 0.0
      %493 = vmatpush1.msra.mxu0 0.0
      %494 = vmatprep.subr.mxu0 0.0
      %495 = vmatpush1.msra.mxu0 0.0
      %496 = vmatprep.subr.mxu0 0.0
      %497 = vmatpush1.msra.mxu0 0.0
      %498 = vmatprep.subr.mxu0 0.0
      %499 = vmatpush1.msra.mxu0 0.0
      %500 = vmatprep.subr.mxu0 0.0
      %501 = vmatpush1.msra.mxu0 0.0
      %502 = vmatprep.subr.mxu0 0.0
      %503 = vmatpush1.msra.mxu0 0.0
      %504 = vmatprep.subr.mxu0 0.0
      %505 = vmatpush1.msra.mxu0 0.0
      %506 = vmatprep.subr.mxu0 0.0
      %507 = vmatpush1.msra.mxu0 0.0
      %508 = vmatprep.subr.mxu0 0.0
      %509 = vmatpush1.msra.mxu0 0.0
      %510 = vmatprep.mubr.f32.mxu0 0.0
      %v511 = vand.u32 %v276, 4294901760
      %v512 = vsub.f32 %v276, %v511
      %513 = vmatmul.mubr.f32.gmra.mrb[0].mxu0 %v512
      %v514 = vpop.f32.mrb[0].mxu0
      %v515 = vadd.f32 %v438, %v514
      %v516 = vpop.f32.mrb[0].mxu0
      %v517 = vadd.f32 %v440, %v516
      %518 = vdwg.mxu0
      %v519 = vand.u32 %v280, 4294901760
      %520 = vmatprep.subr.mxu0 %v519
      %v521 = vand.u32 %v278, 4294901760
      %522 = vmatpush1.msra.mxu0 %v521
      %523 = vmatprep.subr.mxu0 0.0
      %524 = vmatpush1.msra.mxu0 0.0
      %525 = vmatprep.subr.mxu0 0.0
      %526 = vmatpush1.msra.mxu0 0.0
      %527 = vmatprep.subr.mxu0 0.0
      %528 = vmatpush1.msra.mxu0 0.0
      %529 = vmatprep.subr.mxu0 0.0
      %530 = vmatpush1.msra.mxu0 0.0
      %531 = vmatprep.subr.mxu0 0.0
      %532 = vmatpush1.msra.mxu0 0.0
      %533 = vmatprep.subr.mxu0 0.0
      %534 = vmatpush1.msra.mxu0 0.0
      %535 = vmatprep.subr.mxu0 0.0
      %536 = vmatpush1.msra.mxu0 0.0
      %537 = vmatprep.subr.mxu0 0.0
      %538 = vmatpush1.msra.mxu0 0.0
      %539 = vmatprep.subr.mxu0 0.0
      %540 = vmatpush1.msra.mxu0 0.0
      %541 = vmatprep.subr.mxu0 0.0
      %542 = vmatpush1.msra.mxu0 0.0
      %543 = vmatprep.subr.mxu0 0.0
      %544 = vmatpush1.msra.mxu0 0.0
      %545 = vmatprep.subr.mxu0 0.0
      %546 = vmatpush1.msra.mxu0 0.0
      %547 = vmatprep.subr.mxu0 0.0
      %548 = vmatpush1.msra.mxu0 0.0
      %549 = vmatprep.subr.mxu0 0.0
      %550 = vmatpush1.msra.mxu0 0.0
      %551 = vmatprep.subr.mxu0 0.0
      %552 = vmatpush1.msra.mxu0 0.0
      %553 = vmatprep.subr.mxu0 0.0
      %554 = vmatpush1.msra.mxu0 0.0
      %555 = vmatprep.subr.mxu0 0.0
      %556 = vmatpush1.msra.mxu0 0.0
      %557 = vmatprep.subr.mxu0 0.0
      %558 = vmatpush1.msra.mxu0 0.0
      %559 = vmatprep.subr.mxu0 0.0
      %560 = vmatpush1.msra.mxu0 0.0
      %561 = vmatprep.subr.mxu0 0.0
      %562 = vmatpush1.msra.mxu0 0.0
      %563 = vmatprep.subr.mxu0 0.0
      %564 = vmatpush1.msra.mxu0 0.0
      %565 = vmatprep.subr.mxu0 0.0
      %566 = vmatpush1.msra.mxu0 0.0
      %567 = vmatprep.subr.mxu0 0.0
      %568 = vmatpush1.msra.mxu0 0.0
      %569 = vmatprep.subr.mxu0 0.0
      %570 = vmatpush1.msra.mxu0 0.0
      %571 = vmatprep.subr.mxu0 0.0
      %572 = vmatpush1.msra.mxu0 0.0
      %573 = vmatprep.subr.mxu0 0.0
      %574 = vmatpush1.msra.mxu0 0.0
      %575 = vmatprep.subr.mxu0 0.0
      %576 = vmatpush1.msra.mxu0 0.0
      %577 = vmatprep.subr.mxu0 0.0
      %578 = vmatpush1.msra.mxu0 0.0
      %579 = vmatprep.subr.mxu0 0.0
      %580 = vmatpush1.msra.mxu0 0.0
      %581 = vmatprep.subr.mxu0 0.0
      %582 = vmatpush1.msra.mxu0 0.0
      %583 = vmatprep.subr.mxu0 0.0
      %584 = vmatpush1.msra.mxu0 0.0
      %585 = vmatprep.mubr.f32.mxu0 0.0
      %v586 = vand.u32 %v276, 4294901760
      %v587 = vsub.f32 %v276, %v586
      %v588 = vand.u32 %v587, 4294901760
      %589 = vmatmul.mubr.f32.gmra.mrb[0].mxu0 %v588
      %v590 = vpop.f32.mrb[0].mxu0
      %v591 = vadd.f32 %v515, %v590
      %v592 = vpop.f32.mrb[0].mxu0
      %v593 = vadd.f32 %v517, %v592
      %594 = vdwg.mxu0
      %v595 = vand.u32 %v280, 4294901760
      %v596 = vsub.f32 %v280, %v595
      %v597 = vand.u32 %v596, 4294901760
      %598 = vmatprep.subr.mxu0 %v597
      %v599 = vand.u32 %v278, 4294901760
      %v600 = vsub.f32 %v278, %v599
      %v601 = vand.u32 %v600, 4294901760
      %602 = vmatpush1.msra.mxu0 %v601
      %603 = vmatprep.subr.mxu0 0.0
      %604 = vmatpush1.msra.mxu0 0.0
      %605 = vmatprep.subr.mxu0 0.0
      %606 = vmatpush1.msra.mxu0 0.0
      %607 = vmatprep.subr.mxu0 0.0
      %608 = vmatpush1.msra.mxu0 0.0
      %609 = vmatprep.subr.mxu0 0.0
      %610 = vmatpush1.msra.mxu0 0.0
      %611 = vmatprep.subr.mxu0 0.0
      %612 = vmatpush1.msra.mxu0 0.0
      %613 = vmatprep.subr.mxu0 0.0
      %614 = vmatpush1.msra.mxu0 0.0
      %615 = vmatprep.subr.mxu0 0.0
      %616 = vmatpush1.msra.mxu0 0.0
      %617 = vmatprep.subr.mxu0 0.0
      %618 = vmatpush1.msra.mxu0 0.0
      %619 = vmatprep.subr.mxu0 0.0
      %620 = vmatpush1.msra.mxu0 0.0
      %621 = vmatprep.subr.mxu0 0.0
      %622 = vmatpush1.msra.mxu0 0.0
      %623 = vmatprep.subr.mxu0 0.0
      %624 = vmatpush1.msra.mxu0 0.0
      %625 = vmatprep.subr.mxu0 0.0
      %626 = vmatpush1.msra.mxu0 0.0
      %627 = vmatprep.subr.mxu0 0.0
      %628 = vmatpush1.msra.mxu0 0.0
      %629 = vmatprep.subr.mxu0 0.0
      %630 = vmatpush1.msra.mxu0 0.0
      %631 = vmatprep.subr.mxu0 0.0
      %632 = vmatpush1.msra.mxu0 0.0
      %633 = vmatprep.subr.mxu0 0.0
      %634 = vmatpush1.msra.mxu0 0.0
      %635 = vmatprep.subr.mxu0 0.0
      %636 = vmatpush1.msra.mxu0 0.0
      %637 = vmatprep.subr.mxu0 0.0
      %638 = vmatpush1.msra.mxu0 0.0
      %639 = vmatprep.subr.mxu0 0.0
      %640 = vmatpush1.msra.mxu0 0.0
      %641 = vmatprep.subr.mxu0 0.0
      %642 = vmatpush1.msra.mxu0 0.0
      %643 = vmatprep.subr.mxu0 0.0
      %644 = vmatpush1.msra.mxu0 0.0
      %645 = vmatprep.subr.mxu0 0.0
      %646 = vmatpush1.msra.mxu0 0.0
      %647 = vmatprep.subr.mxu0 0.0
      %648 = vmatpush1.msra.mxu0 0.0
      %649 = vmatprep.subr.mxu0 0.0
      %650 = vmatpush1.msra.mxu0 0.0
      %651 = vmatprep.subr.mxu0 0.0
      %652 = vmatpush1.msra.mxu0 0.0
      %653 = vmatprep.subr.mxu0 0.0
      %654 = vmatpush1.msra.mxu0 0.0
      %655 = vmatprep.subr.mxu0 0.0
      %656 = vmatpush1.msra.mxu0 0.0
      %657 = vmatprep.subr.mxu0 0.0
      %658 = vmatpush1.msra.mxu0 0.0
      %659 = vmatprep.subr.mxu0 0.0
      %660 = vmatpush1.msra.mxu0 0.0
      %661 = vmatprep.subr.mxu0 0.0
      %662 = vmatpush1.msra.mxu0 0.0
      %663 = vmatprep.subr.mxu0 0.0
      %664 = vmatpush1.msra.mxu0 0.0
      %665 = vmatprep.mubr.f32.mxu0 0.0
      %v666 = vand.u32 %v276, 4294901760
      %667 = vmatmul.mubr.f32.gmra.mrb[0].mxu0 %v666
      %v668 = vpop.f32.mrb[0].mxu0
      %v669 = vadd.f32 %v591, %v668
      %v670 = vpop.f32.mrb[0].mxu0
      %v671 = vadd.f32 %v593, %v670
      %672 = vdwg.mxu0
      %v673 = vand.u32 %v280, 4294901760
      %674 = vmatprep.subr.mxu0 %v673
      %v675 = vand.u32 %v278, 4294901760
      %676 = vmatpush1.msra.mxu0 %v675
      %677 = vmatprep.subr.mxu0 0.0
      %678 = vmatpush1.msra.mxu0 0.0
      %679 = vmatprep.subr.mxu0 0.0
      %680 = vmatpush1.msra.mxu0 0.0
      %681 = vmatprep.subr.mxu0 0.0
      %682 = vmatpush1.msra.mxu0 0.0
      %683 = vmatprep.subr.mxu0 0.0
      %684 = vmatpush1.msra.mxu0 0.0
      %685 = vmatprep.subr.mxu0 0.0
      %686 = vmatpush1.msra.mxu0 0.0
      %687 = vmatprep.subr.mxu0 0.0
      %688 = vmatpush1.msra.mxu0 0.0
      %689 = vmatprep.subr.mxu0 0.0
      %690 = vmatpush1.msra.mxu0 0.0
      %691 = vmatprep.subr.mxu0 0.0
      %692 = vmatpush1.msra.mxu0 0.0
      %693 = vmatprep.subr.mxu0 0.0
      %694 = vmatpush1.msra.mxu0 0.0
      %695 = vmatprep.subr.mxu0 0.0
      %696 = vmatpush1.msra.mxu0 0.0
      %697 = vmatprep.subr.mxu0 0.0
      %698 = vmatpush1.msra.mxu0 0.0
      %699 = vmatprep.subr.mxu0 0.0
      %700 = vmatpush1.msra.mxu0 0.0
      %701 = vmatprep.subr.mxu0 0.0
      %702 = vmatpush1.msra.mxu0 0.0
      %703 = vmatprep.subr.mxu0 0.0
      %704 = vmatpush1.msra.mxu0 0.0
      %705 = vmatprep.subr.mxu0 0.0
      %706 = vmatpush1.msra.mxu0 0.0
      %707 = vmatprep.subr.mxu0 0.0
      %708 = vmatpush1.msra.mxu0 0.0
      %709 = vmatprep.subr.mxu0 0.0
      %710 = vmatpush1.msra.mxu0 0.0
      %711 = vmatprep.subr.mxu0 0.0
      %712 = vmatpush1.msra.mxu0 0.0
      %713 = vmatprep.subr.mxu0 0.0
      %714 = vmatpush1.msra.mxu0 0.0
      %715 = vmatprep.subr.mxu0 0.0
      %716 = vmatpush1.msra.mxu0 0.0
      %717 = vmatprep.subr.mxu0 0.0
      %718 = vmatpush1.msra.mxu0 0.0
      %719 = vmatprep.subr.mxu0 0.0
      %720 = vmatpush1.msra.mxu0 0.0
      %721 = vmatprep.subr.mxu0 0.0
      %722 = vmatpush1.msra.mxu0 0.0
      %723 = vmatprep.subr.mxu0 0.0
      %724 = vmatpush1.msra.mxu0 0.0
      %725 = vmatprep.subr.mxu0 0.0
      %726 = vmatpush1.msra.mxu0 0.0
      %727 = vmatprep.subr.mxu0 0.0
      %728 = vmatpush1.msra.mxu0 0.0
      %729 = vmatprep.subr.mxu0 0.0
      %730 = vmatpush1.msra.mxu0 0.0
      %731 = vmatprep.subr.mxu0 0.0
      %732 = vmatpush1.msra.mxu0 0.0
      %733 = vmatprep.subr.mxu0 0.0
      %734 = vmatpush1.msra.mxu0 0.0
      %735 = vmatprep.subr.mxu0 0.0
      %736 = vmatpush1.msra.mxu0 0.0
      %737 = vmatprep.subr.mxu0 0.0
      %738 = vmatpush1.msra.mxu0 0.0
      %739 = vmatprep.mubr.f32.mxu0 0.0
      %v740 = vand.u32 %v276, 4294901760
      %741 = vmatmul.mubr.f32.gmra.mrb[0].mxu0 %v740
      %v742 = vpop.f32.mrb[0].mxu0
      %v743 = vadd.f32 %v669, %v742
      %v744 = vpop.f32.mrb[0].mxu0
      %v745 = vadd.f32 %v671, %v744
      %746 = vdwg.mxu0
      %v749 = vcombine.high %v257, %v257
      %750 = vrot.lane.b32.xlu0 %v257, 17
      %v751 = vpop.permute.xlu0 %750
      %752 = vrot.lane.b32.xlu0 %v749, 17
      %v753 = vpop.permute.xlu0 %752
      %754 = vrot.lane.b32.xlu0 %v258, 17
      %v755 = vpop.permute.xlu0 %754
      %vm756 = vcmask 138240
      %v757 = vsel %vm756, %v751, %v753
      %v758 = vsel %vm756, %v753, %v755
      %v760 = vsel %vm274, %v259, 0
      %v762 = vsel %vm238, %v757, 0
      %v764 = vsel %vm238, %v758, 0
      %v766 = vand.u32 %v764, 4294901760
      %767 = vmatprep.subr.mxu0 %v766
      %v768 = vand.u32 %v762, 4294901760
      %769 = vmatpush1.msra.mxu0 %v768
      %770 = vmatprep.subr.mxu0 0.0
      %771 = vmatpush1.msra.mxu0 0.0
      %772 = vmatprep.subr.mxu0 0.0
      %773 = vmatpush1.msra.mxu0 0.0
      %774 = vmatprep.subr.mxu0 0.0
      %775 = vmatpush1.msra.mxu0 0.0
      %776 = vmatprep.subr.mxu0 0.0
      %777 = vmatpush1.msra.mxu0 0.0
      %778 = vmatprep.subr.mxu0 0.0
      %779 = vmatpush1.msra.mxu0 0.0
      %780 = vmatprep.subr.mxu0 0.0
      %781 = vmatpush1.msra.mxu0 0.0
      %782 = vmatprep.subr.mxu0 0.0
      %783 = vmatpush1.msra.mxu0 0.0
      %784 = vmatprep.subr.mxu0 0.0
      %785 = vmatpush1.msra.mxu0 0.0
      %786 = vmatprep.subr.mxu0 0.0
      %787 = vmatpush1.msra.mxu0 0.0
      %788 = vmatprep.subr.mxu0 0.0
      %789 = vmatpush1.msra.mxu0 0.0
      %790 = vmatprep.subr.mxu0 0.0
      %791 = vmatpush1.msra.mxu0 0.0
      %792 = vmatprep.subr.mxu0 0.0
      %793 = vmatpush1.msra.mxu0 0.0
      %794 = vmatprep.subr.mxu0 0.0
      %795 = vmatpush1.msra.mxu0 0.0
      %796 = vmatprep.subr.mxu0 0.0
      %797 = vmatpush1.msra.mxu0 0.0
      %798 = vmatprep.subr.mxu0 0.0
      %799 = vmatpush1.msra.mxu0 0.0
      %800 = vmatprep.subr.mxu0 0.0
      %801 = vmatpush1.msra.mxu0 0.0
      %802 = vmatprep.subr.mxu0 0.0
      %803 = vmatpush1.msra.mxu0 0.0
      %804 = vmatprep.subr.mxu0 0.0
      %805 = vmatpush1.msra.mxu0 0.0
      %806 = vmatprep.subr.mxu0 0.0
      %807 = vmatpush1.msra.mxu0 0.0
      %808 = vmatprep.subr.mxu0 0.0
      %809 = vmatpush1.msra.mxu0 0.0
      %810 = vmatprep.subr.mxu0 0.0
      %811 = vmatpush1.msra.mxu0 0.0
      %812 = vmatprep.subr.mxu0 0.0
      %813 = vmatpush1.msra.mxu0 0.0
      %814 = vmatprep.subr.mxu0 0.0
      %815 = vmatpush1.msra.mxu0 0.0
      %816 = vmatprep.subr.mxu0 0.0
      %817 = vmatpush1.msra.mxu0 0.0
      %818 = vmatprep.subr.mxu0 0.0
      %819 = vmatpush1.msra.mxu0 0.0
      %820 = vmatprep.subr.mxu0 0.0
      %821 = vmatpush1.msra.mxu0 0.0
      %822 = vmatprep.subr.mxu0 0.0
      %823 = vmatpush1.msra.mxu0 0.0
      %824 = vmatprep.subr.mxu0 0.0
      %825 = vmatpush1.msra.mxu0 0.0
      %826 = vmatprep.subr.mxu0 0.0
      %827 = vmatpush1.msra.mxu0 0.0
      %828 = vmatprep.subr.mxu0 0.0
      %829 = vmatpush1.msra.mxu0 0.0
      %830 = vmatprep.subr.mxu0 0.0
      %831 = vmatpush1.msra.mxu0 0.0
      %832 = vmatprep.mubr.f32.mxu0 0.0
      %v833 = vand.u32 %v760, 4294901760
      %v834 = vsub.f32 %v760, %v833
      %v835 = vand.u32 %v834, 4294901760
      %v836 = vsub.f32 %v834, %v835
      %v837 = vand.u32 %v836, 4294901760
      %838 = vmatmul.mubr.f32.gmra.mrb[0].mxu0 %v837
      %v839 = vpop.f32.mrb[0].mxu0
      %v840 = vadd.f32 %v743, %v839
      %v841 = vpop.f32.mrb[0].mxu0
      %v842 = vadd.f32 %v745, %v841
      %843 = vdwg.mxu0
      %v844 = vand.u32 %v764, 4294901760
      %v845 = vsub.f32 %v764, %v844
      %v846 = vand.u32 %v845, 4294901760
      %v847 = vsub.f32 %v845, %v846
      %v848 = vand.u32 %v847, 4294901760
      %849 = vmatprep.subr.mxu0 %v848
      %v850 = vand.u32 %v762, 4294901760
      %v851 = vsub.f32 %v762, %v850
      %v852 = vand.u32 %v851, 4294901760
      %v853 = vsub.f32 %v851, %v852
      %v854 = vand.u32 %v853, 4294901760
      %855 = vmatpush1.msra.mxu0 %v854
      %856 = vmatprep.subr.mxu0 0.0
      %857 = vmatpush1.msra.mxu0 0.0
      %858 = vmatprep.subr.mxu0 0.0
      %859 = vmatpush1.msra.mxu0 0.0
      %860 = vmatprep.subr.mxu0 0.0
      %861 = vmatpush1.msra.mxu0 0.0
      %862 = vmatprep.subr.mxu0 0.0
      %863 = vmatpush1.msra.mxu0 0.0
      %864 = vmatprep.subr.mxu0 0.0
      %865 = vmatpush1.msra.mxu0 0.0
      %866 = vmatprep.subr.mxu0 0.0
      %867 = vmatpush1.msra.mxu0 0.0
      %868 = vmatprep.subr.mxu0 0.0
      %869 = vmatpush1.msra.mxu0 0.0
      %870 = vmatprep.subr.mxu0 0.0
      %871 = vmatpush1.msra.mxu0 0.0
      %872 = vmatprep.subr.mxu0 0.0
      %873 = vmatpush1.msra.mxu0 0.0
      %874 = vmatprep.subr.mxu0 0.0
      %875 = vmatpush1.msra.mxu0 0.0
      %876 = vmatprep.subr.mxu0 0.0
      %877 = vmatpush1.msra.mxu0 0.0
      %878 = vmatprep.subr.mxu0 0.0
      %879 = vmatpush1.msra.mxu0 0.0
      %880 = vmatprep.subr.mxu0 0.0
      %881 = vmatpush1.msra.mxu0 0.0
      %882 = vmatprep.subr.mxu0 0.0
      %883 = vmatpush1.msra.mxu0 0.0
      %884 = vmatprep.subr.mxu0 0.0
      %885 = vmatpush1.msra.mxu0 0.0
      %886 = vmatprep.subr.mxu0 0.0
      %887 = vmatpush1.msra.mxu0 0.0
      %888 = vmatprep.subr.mxu0 0.0
      %889 = vmatpush1.msra.mxu0 0.0
      %890 = vmatprep.subr.mxu0 0.0
      %891 = vmatpush1.msra.mxu0 0.0
      %892 = vmatprep.subr.mxu0 0.0
      %893 = vmatpush1.msra.mxu0 0.0
      %894 = vmatprep.subr.mxu0 0.0
      %895 = vmatpush1.msra.mxu0 0.0
      %896 = vmatprep.subr.mxu0 0.0
      %897 = vmatpush1.msra.mxu0 0.0
      %898 = vmatprep.subr.mxu0 0.0
      %899 = vmatpush1.msra.mxu0 0.0
      %900 = vmatprep.subr.mxu0 0.0
      %901 = vmatpush1.msra.mxu0 0.0
      %902 = vmatprep.subr.mxu0 0.0
      %903 = vmatpush1.msra.mxu0 0.0
      %904 = vmatprep.subr.mxu0 0.0
      %905 = vmatpush1.msra.mxu0 0.0
      %906 = vmatprep.subr.mxu0 0.0
      %907 = vmatpush1.msra.mxu0 0.0
      %908 = vmatprep.subr.mxu0 0.0
      %909 = vmatpush1.msra.mxu0 0.0
      %910 = vmatprep.subr.mxu0 0.0
      %911 = vmatpush1.msra.mxu0 0.0
      %912 = vmatprep.subr.mxu0 0.0
      %913 = vmatpush1.msra.mxu0 0.0
      %914 = vmatprep.subr.mxu0 0.0
      %915 = vmatpush1.msra.mxu0 0.0
      %916 = vmatprep.subr.mxu0 0.0
      %917 = vmatpush1.msra.mxu0 0.0
      %918 = vmatprep.mubr.f32.mxu0 0.0
      %v919 = vand.u32 %v760, 4294901760
      %920 = vmatmul.mubr.f32.gmra.mrb[0].mxu0 %v919
      %v921 = vpop.f32.mrb[0].mxu0
      %v922 = vadd.f32 %v840, %v921
      %v923 = vpop.f32.mrb[0].mxu0
      %v924 = vadd.f32 %v842, %v923
      %925 = vdwg.mxu0
      %v926 = vand.u32 %v764, 4294901760
      %v927 = vsub.f32 %v764, %v926
      %928 = vmatprep.subr.mxu0 %v927
      %v929 = vand.u32 %v762, 4294901760
      %v930 = vsub.f32 %v762, %v929
      %931 = vmatpush1.msra.mxu0 %v930
      %932 = vmatprep.subr.mxu0 0.0
      %933 = vmatpush1.msra.mxu0 0.0
      %934 = vmatprep.subr.mxu0 0.0
      %935 = vmatpush1.msra.mxu0 0.0
      %936 = vmatprep.subr.mxu0 0.0
      %937 = vmatpush1.msra.mxu0 0.0
      %938 = vmatprep.subr.mxu0 0.0
      %939 = vmatpush1.msra.mxu0 0.0
      %940 = vmatprep.subr.mxu0 0.0
      %941 = vmatpush1.msra.mxu0 0.0
      %942 = vmatprep.subr.mxu0 0.0
      %943 = vmatpush1.msra.mxu0 0.0
      %944 = vmatprep.subr.mxu0 0.0
      %945 = vmatpush1.msra.mxu0 0.0
      %946 = vmatprep.subr.mxu0 0.0
      %947 = vmatpush1.msra.mxu0 0.0
      %948 = vmatprep.subr.mxu0 0.0
      %949 = vmatpush1.msra.mxu0 0.0
      %950 = vmatprep.subr.mxu0 0.0
      %951 = vmatpush1.msra.mxu0 0.0
      %952 = vmatprep.subr.mxu0 0.0
      %953 = vmatpush1.msra.mxu0 0.0
      %954 = vmatprep.subr.mxu0 0.0
      %955 = vmatpush1.msra.mxu0 0.0
      %956 = vmatprep.subr.mxu0 0.0
      %957 = vmatpush1.msra.mxu0 0.0
      %958 = vmatprep.subr.mxu0 0.0
      %959 = vmatpush1.msra.mxu0 0.0
      %960 = vmatprep.subr.mxu0 0.0
      %961 = vmatpush1.msra.mxu0 0.0
      %962 = vmatprep.subr.mxu0 0.0
      %963 = vmatpush1.msra.mxu0 0.0
      %964 = vmatprep.subr.mxu0 0.0
      %965 = vmatpush1.msra.mxu0 0.0
      %966 = vmatprep.subr.mxu0 0.0
      %967 = vmatpush1.msra.mxu0 0.0
      %968 = vmatprep.subr.mxu0 0.0
      %969 = vmatpush1.msra.mxu0 0.0
      %970 = vmatprep.subr.mxu0 0.0
      %971 = vmatpush1.msra.mxu0 0.0
      %972 = vmatprep.subr.mxu0 0.0
      %973 = vmatpush1.msra.mxu0 0.0
      %974 = vmatprep.subr.mxu0 0.0
      %975 = vmatpush1.msra.mxu0 0.0
      %976 = vmatprep.subr.mxu0 0.0
      %977 = vmatpush1.msra.mxu0 0.0
      %978 = vmatprep.subr.mxu0 0.0
      %979 = vmatpush1.msra.mxu0 0.0
      %980 = vmatprep.subr.mxu0 0.0
      %981 = vmatpush1.msra.mxu0 0.0
      %982 = vmatprep.subr.mxu0 0.0
      %983 = vmatpush1.msra.mxu0 0.0
      %984 = vmatprep.subr.mxu0 0.0
      %985 = vmatpush1.msra.mxu0 0.0
      %986 = vmatprep.subr.mxu0 0.0
      %987 = vmatpush1.msra.mxu0 0.0
      %988 = vmatprep.subr.mxu0 0.0
      %989 = vmatpush1.msra.mxu0 0.0
      %990 = vmatprep.subr.mxu0 0.0
      %991 = vmatpush1.msra.mxu0 0.0
      %992 = vmatprep.subr.mxu0 0.0
      %993 = vmatpush1.msra.mxu0 0.0
      %994 = vmatprep.mubr.f32.mxu0 0.0
      %v995 = vand.u32 %v760, 4294901760
      %v996 = vsub.f32 %v760, %v995
      %997 = vmatmul.mubr.f32.gmra.mrb[0].mxu0 %v996
      %v998 = vpop.f32.mrb[0].mxu0
      %v999 = vadd.f32 %v922, %v998
      %v1000 = vpop.f32.mrb[0].mxu0
      %v1001 = vadd.f32 %v924, %v1000
      %1002 = vdwg.mxu0
      %v1003 = vand.u32 %v764, 4294901760
      %1004 = vmatprep.subr.mxu0 %v1003
      %v1005 = vand.u32 %v762, 4294901760
      %1006 = vmatpush1.msra.mxu0 %v1005
      %1007 = vmatprep.subr.mxu0 0.0
      %1008 = vmatpush1.msra.mxu0 0.0
      %1009 = vmatprep.subr.mxu0 0.0
      %1010 = vmatpush1.msra.mxu0 0.0
      %1011 = vmatprep.subr.mxu0 0.0
      %1012 = vmatpush1.msra.mxu0 0.0
      %1013 = vmatprep.subr.mxu0 0.0
      %1014 = vmatpush1.msra.mxu0 0.0
      %1015 = vmatprep.subr.mxu0 0.0
      %1016 = vmatpush1.msra.mxu0 0.0
      %1017 = vmatprep.subr.mxu0 0.0
      %1018 = vmatpush1.msra.mxu0 0.0
      %1019 = vmatprep.subr.mxu0 0.0
      %1020 = vmatpush1.msra.mxu0 0.0
      %1021 = vmatprep.subr.mxu0 0.0
      %1022 = vmatpush1.msra.mxu0 0.0
      %1023 = vmatprep.subr.mxu0 0.0
      %1024 = vmatpush1.msra.mxu0 0.0
      %1025 = vmatprep.subr.mxu0 0.0
      %1026 = vmatpush1.msra.mxu0 0.0
      %1027 = vmatprep.subr.mxu0 0.0
      %1028 = vmatpush1.msra.mxu0 0.0
      %1029 = vmatprep.subr.mxu0 0.0
      %1030 = vmatpush1.msra.mxu0 0.0
      %1031 = vmatprep.subr.mxu0 0.0
      %1032 = vmatpush1.msra.mxu0 0.0
      %1033 = vmatprep.subr.mxu0 0.0
      %1034 = vmatpush1.msra.mxu0 0.0
      %1035 = vmatprep.subr.mxu0 0.0
      %1036 = vmatpush1.msra.mxu0 0.0
      %1037 = vmatprep.subr.mxu0 0.0
      %1038 = vmatpush1.msra.mxu0 0.0
      %1039 = vmatprep.subr.mxu0 0.0
      %1040 = vmatpush1.msra.mxu0 0.0
      %1041 = vmatprep.subr.mxu0 0.0
      %1042 = vmatpush1.msra.mxu0 0.0
      %1043 = vmatprep.subr.mxu0 0.0
      %1044 = vmatpush1.msra.mxu0 0.0
      %1045 = vmatprep.subr.mxu0 0.0
      %1046 = vmatpush1.msra.mxu0 0.0
      %1047 = vmatprep.subr.mxu0 0.0
      %1048 = vmatpush1.msra.mxu0 0.0
      %1049 = vmatprep.subr.mxu0 0.0
      %1050 = vmatpush1.msra.mxu0 0.0
      %1051 = vmatprep.subr.mxu0 0.0
      %1052 = vmatpush1.msra.mxu0 0.0
      %1053 = vmatprep.subr.mxu0 0.0
      %1054 = vmatpush1.msra.mxu0 0.0
      %1055 = vmatprep.subr.mxu0 0.0
      %1056 = vmatpush1.msra.mxu0 0.0
      %1057 = vmatprep.subr.mxu0 0.0
      %1058 = vmatpush1.msra.mxu0 0.0
      %1059 = vmatprep.subr.mxu0 0.0
      %1060 = vmatpush1.msra.mxu0 0.0
      %1061 = vmatprep.subr.mxu0 0.0
      %1062 = vmatpush1.msra.mxu0 0.0
      %1063 = vmatprep.subr.mxu0 0.0
      %1064 = vmatpush1.msra.mxu0 0.0
      %1065 = vmatprep.subr.mxu0 0.0
      %1066 = vmatpush1.msra.mxu0 0.0
      %1067 = vmatprep.subr.mxu0 0.0
      %1068 = vmatpush1.msra.mxu0 0.0
      %1069 = vmatprep.mubr.f32.mxu0 0.0
      %v1070 = vand.u32 %v760, 4294901760
      %v1071 = vsub.f32 %v760, %v1070
      %v1072 = vand.u32 %v1071, 4294901760
      %1073 = vmatmul.mubr.f32.gmra.mrb[0].mxu0 %v1072
      %v1074 = vpop.f32.mrb[0].mxu0
      %v1075 = vadd.f32 %v999, %v1074
      %v1076 = vpop.f32.mrb[0].mxu0
      %v1077 = vadd.f32 %v1001, %v1076
      %1078 = vdwg.mxu0
      %v1079 = vand.u32 %v764, 4294901760
      %v1080 = vsub.f32 %v764, %v1079
      %v1081 = vand.u32 %v1080, 4294901760
      %1082 = vmatprep.subr.mxu0 %v1081
      %v1083 = vand.u32 %v762, 4294901760
      %v1084 = vsub.f32 %v762, %v1083
      %v1085 = vand.u32 %v1084, 4294901760
      %1086 = vmatpush1.msra.mxu0 %v1085
      %1087 = vmatprep.subr.mxu0 0.0
      %1088 = vmatpush1.msra.mxu0 0.0
      %1089 = vmatprep.subr.mxu0 0.0
      %1090 = vmatpush1.msra.mxu0 0.0
      %1091 = vmatprep.subr.mxu0 0.0
      %1092 = vmatpush1.msra.mxu0 0.0
      %1093 = vmatprep.subr.mxu0 0.0
      %1094 = vmatpush1.msra.mxu0 0.0
      %1095 = vmatprep.subr.mxu0 0.0
      %1096 = vmatpush1.msra.mxu0 0.0
      %1097 = vmatprep.subr.mxu0 0.0
      %1098 = vmatpush1.msra.mxu0 0.0
      %1099 = vmatprep.subr.mxu0 0.0
      %1100 = vmatpush1.msra.mxu0 0.0
      %1101 = vmatprep.subr.mxu0 0.0
      %1102 = vmatpush1.msra.mxu0 0.0
      %1103 = vmatprep.subr.mxu0 0.0
      %1104 = vmatpush1.msra.mxu0 0.0
      %1105 = vmatprep.subr.mxu0 0.0
      %1106 = vmatpush1.msra.mxu0 0.0
      %1107 = vmatprep.subr.mxu0 0.0
      %1108 = vmatpush1.msra.mxu0 0.0
      %1109 = vmatprep.subr.mxu0 0.0
      %1110 = vmatpush1.msra.mxu0 0.0
      %1111 = vmatprep.subr.mxu0 0.0
      %1112 = vmatpush1.msra.mxu0 0.0
      %1113 = vmatprep.subr.mxu0 0.0
      %1114 = vmatpush1.msra.mxu0 0.0
      %1115 = vmatprep.subr.mxu0 0.0
      %1116 = vmatpush1.msra.mxu0 0.0
      %1117 = vmatprep.subr.mxu0 0.0
      %1118 = vmatpush1.msra.mxu0 0.0
      %1119 = vmatprep.subr.mxu0 0.0
      %1120 = vmatpush1.msra.mxu0 0.0
      %1121 = vmatprep.subr.mxu0 0.0
      %1122 = vmatpush1.msra.mxu0 0.0
      %1123 = vmatprep.subr.mxu0 0.0
      %1124 = vmatpush1.msra.mxu0 0.0
      %1125 = vmatprep.subr.mxu0 0.0
      %1126 = vmatpush1.msra.mxu0 0.0
      %1127 = vmatprep.subr.mxu0 0.0
      %1128 = vmatpush1.msra.mxu0 0.0
      %1129 = vmatprep.subr.mxu0 0.0
      %1130 = vmatpush1.msra.mxu0 0.0
      %1131 = vmatprep.subr.mxu0 0.0
      %1132 = vmatpush1.msra.mxu0 0.0
      %1133 = vmatprep.subr.mxu0 0.0
      %1134 = vmatpush1.msra.mxu0 0.0
      %1135 = vmatprep.subr.mxu0 0.0
      %1136 = vmatpush1.msra.mxu0 0.0
      %1137 = vmatprep.subr.mxu0 0.0
      %1138 = vmatpush1.msra.mxu0 0.0
      %1139 = vmatprep.subr.mxu0 0.0
      %1140 = vmatpush1.msra.mxu0 0.0
      %1141 = vmatprep.subr.mxu0 0.0
      %1142 = vmatpush1.msra.mxu0 0.0
      %1143 = vmatprep.subr.mxu0 0.0
      %1144 = vmatpush1.msra.mxu0 0.0
      %1145 = vmatprep.subr.mxu0 0.0
      %1146 = vmatpush1.msra.mxu0 0.0
      %1147 = vmatprep.subr.mxu0 0.0
      %1148 = vmatpush1.msra.mxu0 0.0
      %1149 = vmatprep.mubr.f32.mxu0 0.0
      %v1150 = vand.u32 %v760, 4294901760
      %1151 = vmatmul.mubr.f32.gmra.mrb[0].mxu0 %v1150
      %v1152 = vpop.f32.mrb[0].mxu0
      %v1153 = vadd.f32 %v1075, %v1152
      %v1154 = vpop.f32.mrb[0].mxu0
      %v1155 = vadd.f32 %v1077, %v1154
      %1156 = vdwg.mxu0
      %v1157 = vand.u32 %v764, 4294901760
      %1158 = vmatprep.subr.mxu0 %v1157
      %v1159 = vand.u32 %v762, 4294901760
      %1160 = vmatpush1.msra.mxu0 %v1159
      %1161 = vmatprep.subr.mxu0 0.0
      %1162 = vmatpush1.msra.mxu0 0.0
      %1163 = vmatprep.subr.mxu0 0.0
      %1164 = vmatpush1.msra.mxu0 0.0
      %1165 = vmatprep.subr.mxu0 0.0
      %1166 = vmatpush1.msra.mxu0 0.0
      %1167 = vmatprep.subr.mxu0 0.0
      %1168 = vmatpush1.msra.mxu0 0.0
      %1169 = vmatprep.subr.mxu0 0.0
      %1170 = vmatpush1.msra.mxu0 0.0
      %1171 = vmatprep.subr.mxu0 0.0
      %1172 = vmatpush1.msra.mxu0 0.0
      %1173 = vmatprep.subr.mxu0 0.0
      %1174 = vmatpush1.msra.mxu0 0.0
      %1175 = vmatprep.subr.mxu0 0.0
      %1176 = vmatpush1.msra.mxu0 0.0
      %1177 = vmatprep.subr.mxu0 0.0
      %1178 = vmatpush1.msra.mxu0 0.0
      %1179 = vmatprep.subr.mxu0 0.0
      %1180 = vmatpush1.msra.mxu0 0.0
      %1181 = vmatprep.subr.mxu0 0.0
      %1182 = vmatpush1.msra.mxu0 0.0
      %1183 = vmatprep.subr.mxu0 0.0
      %1184 = vmatpush1.msra.mxu0 0.0
      %1185 = vmatprep.subr.mxu0 0.0
      %1186 = vmatpush1.msra.mxu0 0.0
      %1187 = vmatprep.subr.mxu0 0.0
      %1188 = vmatpush1.msra.mxu0 0.0
      %1189 = vmatprep.subr.mxu0 0.0
      %1190 = vmatpush1.msra.mxu0 0.0
      %1191 = vmatprep.subr.mxu0 0.0
      %1192 = vmatpush1.msra.mxu0 0.0
      %1193 = vmatprep.subr.mxu0 0.0
      %1194 = vmatpush1.msra.mxu0 0.0
      %1195 = vmatprep.subr.mxu0 0.0
      %1196 = vmatpush1.msra.mxu0 0.0
      %1197 = vmatprep.subr.mxu0 0.0
      %1198 = vmatpush1.msra.mxu0 0.0
      %1199 = vmatprep.subr.mxu0 0.0
      %1200 = vmatpush1.msra.mxu0 0.0
      %1201 = vmatprep.subr.mxu0 0.0
      %1202 = vmatpush1.msra.mxu0 0.0
      %1203 = vmatprep.subr.mxu0 0.0
      %1204 = vmatpush1.msra.mxu0 0.0
      %1205 = vmatprep.subr.mxu0 0.0
      %1206 = vmatpush1.msra.mxu0 0.0
      %1207 = vmatprep.subr.mxu0 0.0
      %1208 = vmatpush1.msra.mxu0 0.0
      %1209 = vmatprep.subr.mxu0 0.0
      %1210 = vmatpush1.msra.mxu0 0.0
      %1211 = vmatprep.subr.mxu0 0.0
      %1212 = vmatpush1.msra.mxu0 0.0
      %1213 = vmatprep.subr.mxu0 0.0
      %1214 = vmatpush1.msra.mxu0 0.0
      %1215 = vmatprep.subr.mxu0 0.0
      %1216 = vmatpush1.msra.mxu0 0.0
      %1217 = vmatprep.subr.mxu0 0.0
      %1218 = vmatpush1.msra.mxu0 0.0
      %1219 = vmatprep.subr.mxu0 0.0
      %1220 = vmatpush1.msra.mxu0 0.0
      %1221 = vmatprep.subr.mxu0 0.0
      %1222 = vmatpush1.msra.mxu0 0.0
      %1223 = vmatprep.mubr.f32.mxu0 0.0
      %v1224 = vand.u32 %v760, 4294901760
      %1225 = vmatmul.mubr.f32.gmra.mrb[0].mxu0 %v1224
      %v1226 = vpop.f32.mrb[0].mxu0
      %v1227 = vadd.f32 %v1153, %v1226
      %v1228 = vpop.f32.mrb[0].mxu0
      %v1229 = vadd.f32 %v1155, %v1228
      %1230 = vdwg.mxu0
      %v1231 = vld [vmem:[#allocation2] sm:$0xff]
      %v1232 = vld [vmem:[#allocation2 + $0x8] sm:$0xf]
      %v1235 = vcombine.low %v235, %v236
      %1236 = vrot.lane.b32.xlu0 %v1235, 113
      %v1237 = vpop.permute.xlu0 %1236
      %v1238 = vrot.slane %v1237, 4
      %vm1239 = vcmask 924672
      %v1240 = vsel %vm1239, %v1238, %v1237
      %v1243 = vmul.f32 %v1231, %v1240
      %v1244 = vmul.f32 %v1232, %v1238
      %s1245 = scalar_lea.vmem %s1, 16
      %v1246 = vld [vmem:[%s1245] sm:$0xff]
      %v1249 = vcombine.high %v1243, %v1243
      %1250 = vrot.lane.b32.xlu0 %v1243, 15
      %v1251 = vpop.permute.xlu0 %1250
      %1252 = vrot.lane.b32.xlu0 %v1249, 15
      %v1253 = vpop.permute.xlu0 %1252
      %1254 = vrot.lane.b32.xlu0 %v1244, 15
      %v1255 = vpop.permute.xlu0 %1254
      %vm1256 = vcmask 121856
      %v1257 = vsel %vm1256, %v1251, %v1253
      %v1258 = vsel %vm1256, %v1253, %v1255
      %v1260 = vsel %vm274, %v1246, 0
      %v1262 = vsel %vm238, %v1257, 0
      %v1264 = vsel %vm238, %v1258, 0
      %v1266 = vand.u32 %v1264, 4294901760
      %1267 = vmatprep.subr.mxu0 %v1266
      %v1268 = vand.u32 %v1262, 4294901760
      %1269 = vmatpush1.msra.mxu0 %v1268
      %1270 = vmatprep.subr.mxu0 0.0
      %1271 = vmatpush1.msra.mxu0 0.0
      %1272 = vmatprep.subr.mxu0 0.0
      %1273 = vmatpush1.msra.mxu0 0.0
      %1274 = vmatprep.subr.mxu0 0.0
      %1275 = vmatpush1.msra.mxu0 0.0
      %1276 = vmatprep.subr.mxu0 0.0
      %1277 = vmatpush1.msra.mxu0 0.0
      %1278 = vmatprep.subr.mxu0 0.0
      %1279 = vmatpush1.msra.mxu0 0.0
      %1280 = vmatprep.subr.mxu0 0.0
      %1281 = vmatpush1.msra.mxu0 0.0
      %1282 = vmatprep.subr.mxu0 0.0
      %1283 = vmatpush1.msra.mxu0 0.0
      %1284 = vmatprep.subr.mxu0 0.0
      %1285 = vmatpush1.msra.mxu0 0.0
      %1286 = vmatprep.subr.mxu0 0.0
      %1287 = vmatpush1.msra.mxu0 0.0
      %1288 = vmatprep.subr.mxu0 0.0
      %1289 = vmatpush1.msra.mxu0 0.0
      %1290 = vmatprep.subr.mxu0 0.0
      %1291 = vmatpush1.msra.mxu0 0.0
      %1292 = vmatprep.subr.mxu0 0.0
      %1293 = vmatpush1.msra.mxu0 0.0
      %1294 = vmatprep.subr.mxu0 0.0
      %1295 = vmatpush1.msra.mxu0 0.0
      %1296 = vmatprep.subr.mxu0 0.0
      %1297 = vmatpush1.msra.mxu0 0.0
      %1298 = vmatprep.subr.mxu0 0.0
      %1299 = vmatpush1.msra.mxu0 0.0
      %1300 = vmatprep.subr.mxu0 0.0
      %1301 = vmatpush1.msra.mxu0 0.0
      %1302 = vmatprep.subr.mxu0 0.0
      %1303 = vmatpush1.msra.mxu0 0.0
      %1304 = vmatprep.subr.mxu0 0.0
      %1305 = vmatpush1.msra.mxu0 0.0
      %1306 = vmatprep.subr.mxu0 0.0
      %1307 = vmatpush1.msra.mxu0 0.0
      %1308 = vmatprep.subr.mxu0 0.0
      %1309 = vmatpush1.msra.mxu0 0.0
      %1310 = vmatprep.subr.mxu0 0.0
      %1311 = vmatpush1.msra.mxu0 0.0
      %1312 = vmatprep.subr.mxu0 0.0
      %1313 = vmatpush1.msra.mxu0 0.0
      %1314 = vmatprep.subr.mxu0 0.0
      %1315 = vmatpush1.msra.mxu0 0.0
      %1316 = vmatprep.subr.mxu0 0.0
      %1317 = vmatpush1.msra.mxu0 0.0
      %1318 = vmatprep.subr.mxu0 0.0
      %1319 = vmatpush1.msra.mxu0 0.0
      %1320 = vmatprep.subr.mxu0 0.0
      %1321 = vmatpush1.msra.mxu0 0.0
      %1322 = vmatprep.subr.mxu0 0.0
      %1323 = vmatpush1.msra.mxu0 0.0
      %1324 = vmatprep.subr.mxu0 0.0
      %1325 = vmatpush1.msra.mxu0 0.0
      %1326 = vmatprep.subr.mxu0 0.0
      %1327 = vmatpush1.msra.mxu0 0.0
      %1328 = vmatprep.subr.mxu0 0.0
      %1329 = vmatpush1.msra.mxu0 0.0
      %1330 = vmatprep.subr.mxu0 0.0
      %1331 = vmatpush1.msra.mxu0 0.0
      %1332 = vmatprep.mubr.f32.mxu0 0.0
      %v1333 = vand.u32 %v1260, 4294901760
      %v1334 = vsub.f32 %v1260, %v1333
      %v1335 = vand.u32 %v1334, 4294901760
      %v1336 = vsub.f32 %v1334, %v1335
      %v1337 = vand.u32 %v1336, 4294901760
      %1338 = vmatmul.mubr.f32.gmra.mrb[0].mxu0 %v1337
      %v1339 = vpop.f32.mrb[0].mxu0
      %v1340 = vadd.f32 0.0, %v1339
      %v1341 = vpop.f32.mrb[0].mxu0
      %v1342 = vadd.f32 0.0, %v1341
      %1343 = vdwg.mxu0
      %v1344 = vand.u32 %v1264, 4294901760
      %v1345 = vsub.f32 %v1264, %v1344
      %v1346 = vand.u32 %v1345, 4294901760
      %v1347 = vsub.f32 %v1345, %v1346
      %v1348 = vand.u32 %v1347, 4294901760
      %1349 = vmatprep.subr.mxu0 %v1348
      %v1350 = vand.u32 %v1262, 4294901760
      %v1351 = vsub.f32 %v1262, %v1350
      %v1352 = vand.u32 %v1351, 4294901760
      %v1353 = vsub.f32 %v1351, %v1352
      %v1354 = vand.u32 %v1353, 4294901760
      %1355 = vmatpush1.msra.mxu0 %v1354
      %1356 = vmatprep.subr.mxu0 0.0
      %1357 = vmatpush1.msra.mxu0 0.0
      %1358 = vmatprep.subr.mxu0 0.0
      %1359 = vmatpush1.msra.mxu0 0.0
      %1360 = vmatprep.subr.mxu0 0.0
      %1361 = vmatpush1.msra.mxu0 0.0
      %1362 = vmatprep.subr.mxu0 0.0
      %1363 = vmatpush1.msra.mxu0 0.0
      %1364 = vmatprep.subr.mxu0 0.0
      %1365 = vmatpush1.msra.mxu0 0.0
      %1366 = vmatprep.subr.mxu0 0.0
      %1367 = vmatpush1.msra.mxu0 0.0
      %1368 = vmatprep.subr.mxu0 0.0
      %1369 = vmatpush1.msra.mxu0 0.0
      %1370 = vmatprep.subr.mxu0 0.0
      %1371 = vmatpush1.msra.mxu0 0.0
      %1372 = vmatprep.subr.mxu0 0.0
      %1373 = vmatpush1.msra.mxu0 0.0
      %1374 = vmatprep.subr.mxu0 0.0
      %1375 = vmatpush1.msra.mxu0 0.0
      %1376 = vmatprep.subr.mxu0 0.0
      %1377 = vmatpush1.msra.mxu0 0.0
      %1378 = vmatprep.subr.mxu0 0.0
      %1379 = vmatpush1.msra.mxu0 0.0
      %1380 = vmatprep.subr.mxu0 0.0
      %1381 = vmatpush1.msra.mxu0 0.0
      %1382 = vmatprep.subr.mxu0 0.0
      %1383 = vmatpush1.msra.mxu0 0.0
      %1384 = vmatprep.subr.mxu0 0.0
      %1385 = vmatpush1.msra.mxu0 0.0
      %1386 = vmatprep.subr.mxu0 0.0
      %1387 = vmatpush1.msra.mxu0 0.0
      %1388 = vmatprep.subr.mxu0 0.0
      %1389 = vmatpush1.msra.mxu0 0.0
      %1390 = vmatprep.subr.mxu0 0.0
      %1391 = vmatpush1.msra.mxu0 0.0
      %1392 = vmatprep.subr.mxu0 0.0
      %1393 = vmatpush1.msra.mxu0 0.0
      %1394 = vmatprep.subr.mxu0 0.0
      %1395 = vmatpush1.msra.mxu0 0.0
      %1396 = vmatprep.subr.mxu0 0.0
      %1397 = vmatpush1.msra.mxu0 0.0
      %1398 = vmatprep.subr.mxu0 0.0
      %1399 = vmatpush1.msra.mxu0 0.0
      %1400 = vmatprep.subr.mxu0 0.0
      %1401 = vmatpush1.msra.mxu0 0.0
      %1402 = vmatprep.subr.mxu0 0.0
      %1403 = vmatpush1.msra.mxu0 0.0
      %1404 = vmatprep.subr.mxu0 0.0
      %1405 = vmatpush1.msra.mxu0 0.0
      %1406 = vmatprep.subr.mxu0 0.0
      %1407 = vmatpush1.msra.mxu0 0.0
      %1408 = vmatprep.subr.mxu0 0.0
      %1409 = vmatpush1.msra.mxu0 0.0
      %1410 = vmatprep.subr.mxu0 0.0
      %1411 = vmatpush1.msra.mxu0 0.0
      %1412 = vmatprep.subr.mxu0 0.0
      %1413 = vmatpush1.msra.mxu0 0.0
      %1414 = vmatprep.subr.mxu0 0.0
      %1415 = vmatpush1.msra.mxu0 0.0
      %1416 = vmatprep.subr.mxu0 0.0
      %1417 = vmatpush1.msra.mxu0 0.0
      %1418 = vmatprep.mubr.f32.mxu0 0.0
      %v1419 = vand.u32 %v1260, 4294901760
      %1420 = vmatmul.mubr.f32.gmra.mrb[0].mxu0 %v1419
      %v1421 = vpop.f32.mrb[0].mxu0
      %v1422 = vadd.f32 %v1340, %v1421
      %v1423 = vpop.f32.mrb[0].mxu0
      %v1424 = vadd.f32 %v1342, %v1423
      %1425 = vdwg.mxu0
      %v1426 = vand.u32 %v1264, 4294901760
      %v1427 = vsub.f32 %v1264, %v1426
      %1428 = vmatprep.subr.mxu0 %v1427
      %v1429 = vand.u32 %v1262, 4294901760
      %v1430 = vsub.f32 %v1262, %v1429
      %1431 = vmatpush1.msra.mxu0 %v1430
      %1432 = vmatprep.subr.mxu0 0.0
      %1433 = vmatpush1.msra.mxu0 0.0
      %1434 = vmatprep.subr.mxu0 0.0
      %1435 = vmatpush1.msra.mxu0 0.0
      %1436 = vmatprep.subr.mxu0 0.0
      %1437 = vmatpush1.msra.mxu0 0.0
      %1438 = vmatprep.subr.mxu0 0.0
      %1439 = vmatpush1.msra.mxu0 0.0
      %1440 = vmatprep.subr.mxu0 0.0
      %1441 = vmatpush1.msra.mxu0 0.0
      %1442 = vmatprep.subr.mxu0 0.0
      %1443 = vmatpush1.msra.mxu0 0.0
      %1444 = vmatprep.subr.mxu0 0.0
      %1445 = vmatpush1.msra.mxu0 0.0
      %1446 = vmatprep.subr.mxu0 0.0
      %1447 = vmatpush1.msra.mxu0 0.0
      %1448 = vmatprep.subr.mxu0 0.0
      %1449 = vmatpush1.msra.mxu0 0.0
      %1450 = vmatprep.subr.mxu0 0.0
      %1451 = vmatpush1.msra.mxu0 0.0
      %1452 = vmatprep.subr.mxu0 0.0
      %1453 = vmatpush1.msra.mxu0 0.0
      %1454 = vmatprep.subr.mxu0 0.0
      %1455 = vmatpush1.msra.mxu0 0.0
      %1456 = vmatprep.subr.mxu0 0.0
      %1457 = vmatpush1.msra.mxu0 0.0
      %1458 = vmatprep.subr.mxu0 0.0
      %1459 = vmatpush1.msra.mxu0 0.0
      %1460 = vmatprep.subr.mxu0 0.0
      %1461 = vmatpush1.msra.mxu0 0.0
      %1462 = vmatprep.subr.mxu0 0.0
      %1463 = vmatpush1.msra.mxu0 0.0
      %1464 = vmatprep.subr.mxu0 0.0
      %1465 = vmatpush1.msra.mxu0 0.0
      %1466 = vmatprep.subr.mxu0 0.0
      %1467 = vmatpush1.msra.mxu0 0.0
      %1468 = vmatprep.subr.mxu0 0.0
      %1469 = vmatpush1.msra.mxu0 0.0
      %1470 = vmatprep.subr.mxu0 0.0
      %1471 = vmatpush1.msra.mxu0 0.0
      %1472 = vmatprep.subr.mxu0 0.0
      %1473 = vmatpush1.msra.mxu0 0.0
      %1474 = vmatprep.subr.mxu0 0.0
      %1475 = vmatpush1.msra.mxu0 0.0
      %1476 = vmatprep.subr.mxu0 0.0
      %1477 = vmatpush1.msra.mxu0 0.0
      %1478 = vmatprep.subr.mxu0 0.0
      %1479 = vmatpush1.msra.mxu0 0.0
      %1480 = vmatprep.subr.mxu0 0.0
      %1481 = vmatpush1.msra.mxu0 0.0
      %1482 = vmatprep.subr.mxu0 0.0
      %1483 = vmatpush1.msra.mxu0 0.0
      %1484 = vmatprep.subr.mxu0 0.0
      %1485 = vmatpush1.msra.mxu0 0.0
      %1486 = vmatprep.subr.mxu0 0.0
      %1487 = vmatpush1.msra.mxu0 0.0
      %1488 = vmatprep.subr.mxu0 0.0
      %1489 = vmatpush1.msra.mxu0 0.0
      %1490 = vmatprep.subr.mxu0 0.0
      %1491 = vmatpush1.msra.mxu0 0.0
      %1492 = vmatprep.subr.mxu0 0.0
      %1493 = vmatpush1.msra.mxu0 0.0
      %1494 = vmatprep.mubr.f32.mxu0 0.0
      %v1495 = vand.u32 %v1260, 4294901760
      %v1496 = vsub.f32 %v1260, %v1495
      %1497 = vmatmul.mubr.f32.gmra.mrb[0].mxu0 %v1496
      %v1498 = vpop.f32.mrb[0].mxu0
      %v1499 = vadd.f32 %v1422, %v1498
      %v1500 = vpop.f32.mrb[0].mxu0
      %v1501 = vadd.f32 %v1424, %v1500
      %1502 = vdwg.mxu0
      %v1503 = vand.u32 %v1264, 4294901760
      %1504 = vmatprep.subr.mxu0 %v1503
      %v1505 = vand.u32 %v1262, 4294901760
      %1506 = vmatpush1.msra.mxu0 %v1505
      %1507 = vmatprep.subr.mxu0 0.0
      %1508 = vmatpush1.msra.mxu0 0.0
      %1509 = vmatprep.subr.mxu0 0.0
      %1510 = vmatpush1.msra.mxu0 0.0
      %1511 = vmatprep.subr.mxu0 0.0
      %1512 = vmatpush1.msra.mxu0 0.0
      %1513 = vmatprep.subr.mxu0 0.0
      %1514 = vmatpush1.msra.mxu0 0.0
      %1515 = vmatprep.subr.mxu0 0.0
      %1516 = vmatpush1.msra.mxu0 0.0
      %1517 = vmatprep.subr.mxu0 0.0
      %1518 = vmatpush1.msra.mxu0 0.0
      %1519 = vmatprep.subr.mxu0 0.0
      %1520 = vmatpush1.msra.mxu0 0.0
      %1521 = vmatprep.subr.mxu0 0.0
      %1522 = vmatpush1.msra.mxu0 0.0
      %1523 = vmatprep.subr.mxu0 0.0
      %1524 = vmatpush1.msra.mxu0 0.0
      %1525 = vmatprep.subr.mxu0 0.0
      %1526 = vmatpush1.msra.mxu0 0.0
      %1527 = vmatprep.subr.mxu0 0.0
      %1528 = vmatpush1.msra.mxu0 0.0
      %1529 = vmatprep.subr.mxu0 0.0
      %1530 = vmatpush1.msra.mxu0 0.0
      %1531 = vmatprep.subr.mxu0 0.0
      %1532 = vmatpush1.msra.mxu0 0.0
      %1533 = vmatprep.subr.mxu0 0.0
      %1534 = vmatpush1.msra.mxu0 0.0
      %1535 = vmatprep.subr.mxu0 0.0
      %1536 = vmatpush1.msra.mxu0 0.0
      %1537 = vmatprep.subr.mxu0 0.0
      %1538 = vmatpush1.msra.mxu0 0.0
      %1539 = vmatprep.subr.mxu0 0.0
      %1540 = vmatpush1.msra.mxu0 0.0
      %1541 = vmatprep.subr.mxu0 0.0
      %1542 = vmatpush1.msra.mxu0 0.0
      %1543 = vmatprep.subr.mxu0 0.0
      %1544 = vmatpush1.msra.mxu0 0.0
      %1545 = vmatprep.subr.mxu0 0.0
      %1546 = vmatpush1.msra.mxu0 0.0
      %1547 = vmatprep.subr.mxu0 0.0
      %1548 = vmatpush1.msra.mxu0 0.0
      %1549 = vmatprep.subr.mxu0 0.0
      %1550 = vmatpush1.msra.mxu0 0.0
      %1551 = vmatprep.subr.mxu0 0.0
      %1552 = vmatpush1.msra.mxu0 0.0
      %1553 = vmatprep.subr.mxu0 0.0
      %1554 = vmatpush1.msra.mxu0 0.0
      %1555 = vmatprep.subr.mxu0 0.0
      %1556 = vmatpush1.msra.mxu0 0.0
      %1557 = vmatprep.subr.mxu0 0.0
      %1558 = vmatpush1.msra.mxu0 0.0
      %1559 = vmatprep.subr.mxu0 0.0
      %1560 = vmatpush1.msra.mxu0 0.0
      %1561 = vmatprep.subr.mxu0 0.0
      %1562 = vmatpush1.msra.mxu0 0.0
      %1563 = vmatprep.subr.mxu0 0.0
      %1564 = vmatpush1.msra.mxu0 0.0
      %1565 = vmatprep.subr.mxu0 0.0
      %1566 = vmatpush1.msra.mxu0 0.0
      %1567 = vmatprep.subr.mxu0 0.0
      %1568 = vmatpush1.msra.mxu0 0.0
      %1569 = vmatprep.mubr.f32.mxu0 0.0
      %v1570 = vand.u32 %v1260, 4294901760
      %v1571 = vsub.f32 %v1260, %v1570
      %v1572 = vand.u32 %v1571, 4294901760
      %1573 = vmatmul.mubr.f32.gmra.mrb[0].mxu0 %v1572
      %v1574 = vpop.f32.mrb[0].mxu0
      %v1575 = vadd.f32 %v1499, %v1574
      %v1576 = vpop.f32.mrb[0].mxu0
      %v1577 = vadd.f32 %v1501, %v1576
      %1578 = vdwg.mxu0
      %v1579 = vand.u32 %v1264, 4294901760
      %v1580 = vsub.f32 %v1264, %v1579
      %v1581 = vand.u32 %v1580, 4294901760
      %1582 = vmatprep.subr.mxu0 %v1581
      %v1583 = vand.u32 %v1262, 4294901760
      %v1584 = vsub.f32 %v1262, %v1583
      %v1585 = vand.u32 %v1584, 4294901760
      %1586 = vmatpush1.msra.mxu0 %v1585
      %1587 = vmatprep.subr.mxu0 0.0
      %1588 = vmatpush1.msra.mxu0 0.0
      %1589 = vmatprep.subr.mxu0 0.0
      %1590 = vmatpush1.msra.mxu0 0.0
      %1591 = vmatprep.subr.mxu0 0.0
      %1592 = vmatpush1.msra.mxu0 0.0
      %1593 = vmatprep.subr.mxu0 0.0
      %1594 = vmatpush1.msra.mxu0 0.0
      %1595 = vmatprep.subr.mxu0 0.0
      %1596 = vmatpush1.msra.mxu0 0.0
      %1597 = vmatprep.subr.mxu0 0.0
      %1598 = vmatpush1.msra.mxu0 0.0
      %1599 = vmatprep.subr.mxu0 0.0
      %1600 = vmatpush1.msra.mxu0 0.0
      %1601 = vmatprep.subr.mxu0 0.0
      %1602 = vmatpush1.msra.mxu0 0.0
      %1603 = vmatprep.subr.mxu0 0.0
      %1604 = vmatpush1.msra.mxu0 0.0
      %1605 = vmatprep.subr.mxu0 0.0
      %1606 = vmatpush1.msra.mxu0 0.0
      %1607 = vmatprep.subr.mxu0 0.0
      %1608 = vmatpush1.msra.mxu0 0.0
      %1609 = vmatprep.subr.mxu0 0.0
      %1610 = vmatpush1.msra.mxu0 0.0
      %1611 = vmatprep.subr.mxu0 0.0
      %1612 = vmatpush1.msra.mxu0 0.0
      %1613 = vmatprep.subr.mxu0 0.0
      %1614 = vmatpush1.msra.mxu0 0.0
      %1615 = vmatprep.subr.mxu0 0.0
      %1616 = vmatpush1.msra.mxu0 0.0
      %1617 = vmatprep.subr.mxu0 0.0
      %1618 = vmatpush1.msra.mxu0 0.0
      %1619 = vmatprep.subr.mxu0 0.0
      %1620 = vmatpush1.msra.mxu0 0.0
      %1621 = vmatprep.subr.mxu0 0.0
      %1622 = vmatpush1.msra.mxu0 0.0
      %1623 = vmatprep.subr.mxu0 0.0
      %1624 = vmatpush1.msra.mxu0 0.0
      %1625 = vmatprep.subr.mxu0 0.0
      %1626 = vmatpush1.msra.mxu0 0.0
      %1627 = vmatprep.subr.mxu0 0.0
      %1628 = vmatpush1.msra.mxu0 0.0
      %1629 = vmatprep.subr.mxu0 0.0
      %1630 = vmatpush1.msra.mxu0 0.0
      %1631 = vmatprep.subr.mxu0 0.0
      %1632 = vmatpush1.msra.mxu0 0.0
      %1633 = vmatprep.subr.mxu0 0.0
      %1634 = vmatpush1.msra.mxu0 0.0
      %1635 = vmatprep.subr.mxu0 0.0
      %1636 = vmatpush1.msra.mxu0 0.0
      %1637 = vmatprep.subr.mxu0 0.0
      %1638 = vmatpush1.msra.mxu0 0.0
      %1639 = vmatprep.subr.mxu0 0.0
      %1640 = vmatpush1.msra.mxu0 0.0
      %1641 = vmatprep.subr.mxu0 0.0
      %1642 = vmatpush1.msra.mxu0 0.0
      %1643 = vmatprep.subr.mxu0 0.0
      %1644 = vmatpush1.msra.mxu0 0.0
      %1645 = vmatprep.subr.mxu0 0.0
      %1646 = vmatpush1.msra.mxu0 0.0
      %1647 = vmatprep.subr.mxu0 0.0
      %1648 = vmatpush1.msra.mxu0 0.0
      %1649 = vmatprep.mubr.f32.mxu0 0.0
      %v1650 = vand.u32 %v1260, 4294901760
      %1651 = vmatmul.mubr.f32.gmra.mrb[0].mxu0 %v1650
      %v1652 = vpop.f32.mrb[0].mxu0
      %v1653 = vadd.f32 %v1575, %v1652
      %v1654 = vpop.f32.mrb[0].mxu0
      %v1655 = vadd.f32 %v1577, %v1654
      %1656 = vdwg.mxu0
      %v1657 = vand.u32 %v1264, 4294901760
      %1658 = vmatprep.subr.mxu0 %v1657
      %v1659 = vand.u32 %v1262, 4294901760
      %1660 = vmatpush1.msra.mxu0 %v1659
      %1661 = vmatprep.subr.mxu0 0.0
      %1662 = vmatpush1.msra.mxu0 0.0
      %1663 = vmatprep.subr.mxu0 0.0
      %1664 = vmatpush1.msra.mxu0 0.0
      %1665 = vmatprep.subr.mxu0 0.0
      %1666 = vmatpush1.msra.mxu0 0.0
      %1667 = vmatprep.subr.mxu0 0.0
      %1668 = vmatpush1.msra.mxu0 0.0
      %1669 = vmatprep.subr.mxu0 0.0
      %1670 = vmatpush1.msra.mxu0 0.0
      %1671 = vmatprep.subr.mxu0 0.0
      %1672 = vmatpush1.msra.mxu0 0.0
      %1673 = vmatprep.subr.mxu0 0.0
      %1674 = vmatpush1.msra.mxu0 0.0
      %1675 = vmatprep.subr.mxu0 0.0
      %1676 = vmatpush1.msra.mxu0 0.0
      %1677 = vmatprep.subr.mxu0 0.0
      %1678 = vmatpush1.msra.mxu0 0.0
      %1679 = vmatprep.subr.mxu0 0.0
      %1680 = vmatpush1.msra.mxu0 0.0
      %1681 = vmatprep.subr.mxu0 0.0
      %1682 = vmatpush1.msra.mxu0 0.0
      %1683 = vmatprep.subr.mxu0 0.0
      %1684 = vmatpush1.msra.mxu0 0.0
      %1685 = vmatprep.subr.mxu0 0.0
      %1686 = vmatpush1.msra.mxu0 0.0
      %1687 = vmatprep.subr.mxu0 0.0
      %1688 = vmatpush1.msra.mxu0 0.0
      %1689 = vmatprep.subr.mxu0 0.0
      %1690 = vmatpush1.msra.mxu0 0.0
      %1691 = vmatprep.subr.mxu0 0.0
      %1692 = vmatpush1.msra.mxu0 0.0
      %1693 = vmatprep.subr.mxu0 0.0
      %1694 = vmatpush1.msra.mxu0 0.0
      %1695 = vmatprep.subr.mxu0 0.0
      %1696 = vmatpush1.msra.mxu0 0.0
      %1697 = vmatprep.subr.mxu0 0.0
      %1698 = vmatpush1.msra.mxu0 0.0
      %1699 = vmatprep.subr.mxu0 0.0
      %1700 = vmatpush1.msra.mxu0 0.0
      %1701 = vmatprep.subr.mxu0 0.0
      %1702 = vmatpush1.msra.mxu0 0.0
      %1703 = vmatprep.subr.mxu0 0.0
      %1704 = vmatpush1.msra.mxu0 0.0
      %1705 = vmatprep.subr.mxu0 0.0
      %1706 = vmatpush1.msra.mxu0 0.0
      %1707 = vmatprep.subr.mxu0 0.0
      %1708 = vmatpush1.msra.mxu0 0.0
      %1709 = vmatprep.subr.mxu0 0.0
      %1710 = vmatpush1.msra.mxu0 0.0
      %1711 = vmatprep.subr.mxu0 0.0
      %1712 = vmatpush1.msra.mxu0 0.0
      %1713 = vmatprep.subr.mxu0 0.0
      %1714 = vmatpush1.msra.mxu0 0.0
      %1715 = vmatprep.subr.mxu0 0.0
      %1716 = vmatpush1.msra.mxu0 0.0
      %1717 = vmatprep.subr.mxu0 0.0
      %1718 = vmatpush1.msra.mxu0 0.0
      %1719 = vmatprep.subr.mxu0 0.0
      %1720 = vmatpush1.msra.mxu0 0.0
      %1721 = vmatprep.subr.mxu0 0.0
      %1722 = vmatpush1.msra.mxu0 0.0
      %1723 = vmatprep.mubr.f32.mxu0 0.0
      %v1724 = vand.u32 %v1260, 4294901760
      %1725 = vmatmul.mubr.f32.gmra.mrb[0].mxu0 %v1724
      %v1726 = vpop.f32.mrb[0].mxu0
      %v1727 = vadd.f32 %v1653, %v1726
      %v1728 = vpop.f32.mrb[0].mxu0
      %v1729 = vadd.f32 %v1655, %v1728
      %1730 = vdwg.mxu0
      %v1731 = vadd.f32 %v1227, %v1727
      %v1732 = vadd.f32 %v1229, %v1729
      %v1733 = vld [vmem:[#allocation2] sm:$0xff]
      %v1734 = vld [vmem:[#allocation2 + $0x8] sm:$0xf]
      %1735 = vrot.lane.b32.xlu0 %v249, 127
      %v1736 = vpop.permute.xlu0 %1735
      %v1737 = vrot.slane %v1736, 4
      %vm1738 = vcmask 1039360
      %v1739 = vsel %vm1738, %v1737, %v1736
      %v1742 = vmul.f32 %v1733, %v1739
      %v1743 = vmul.f32 %v1734, %v1737
      %s1744 = scalar_lea.vmem %s1, 24
      %v1745 = vld [vmem:[%s1744] sm:$0xff]
      %v1748 = vcombine.high %v1742, %v1742
      %1749 = vrot.lane.b32.xlu0 %v1742, 1
      %v1750 = vpop.permute.xlu0 %1749
      %1751 = vrot.lane.b32.xlu0 %v1748, 1
      %v1752 = vpop.permute.xlu0 %1751
      %1753 = vrot.lane.b32.xlu0 %v1743, 1
      %v1754 = vpop.permute.xlu0 %1753
      %vm1755 = vcmask 7168
      %v1756 = vsel %vm1755, %v1750, %v1752
      %v1757 = vsel %vm1755, %v1752, %v1754
      %v1759 = vsel %vm274, %v1745, 0
      %v1761 = vsel %vm238, %v1756, 0
      %v1763 = vsel %vm238, %v1757, 0
      %v1765 = vand.u32 %v1763, 4294901760
      %1766 = vmatprep.subr.mxu0 %v1765
      %v1767 = vand.u32 %v1761, 4294901760
      %1768 = vmatpush1.msra.mxu0 %v1767
      %1769 = vmatprep.subr.mxu0 0.0
      %1770 = vmatpush1.msra.mxu0 0.0
      %1771 = vmatprep.subr.mxu0 0.0
      %1772 = vmatpush1.msra.mxu0 0.0
      %1773 = vmatprep.subr.mxu0 0.0
      %1774 = vmatpush1.msra.mxu0 0.0
      %1775 = vmatprep.subr.mxu0 0.0
      %1776 = vmatpush1.msra.mxu0 0.0
      %1777 = vmatprep.subr.mxu0 0.0
      %1778 = vmatpush1.msra.mxu0 0.0
      %1779 = vmatprep.subr.mxu0 0.0
      %1780 = vmatpush1.msra.mxu0 0.0
      %1781 = vmatprep.subr.mxu0 0.0
      %1782 = vmatpush1.msra.mxu0 0.0
      %1783 = vmatprep.subr.mxu0 0.0
      %1784 = vmatpush1.msra.mxu0 0.0
      %1785 = vmatprep.subr.mxu0 0.0
      %1786 = vmatpush1.msra.mxu0 0.0
      %1787 = vmatprep.subr.mxu0 0.0
      %1788 = vmatpush1.msra.mxu0 0.0
      %1789 = vmatprep.subr.mxu0 0.0
      %1790 = vmatpush1.msra.mxu0 0.0
      %1791 = vmatprep.subr.mxu0 0.0
      %1792 = vmatpush1.msra.mxu0 0.0
      %1793 = vmatprep.subr.mxu0 0.0
      %1794 = vmatpush1.msra.mxu0 0.0
      %1795 = vmatprep.subr.mxu0 0.0
      %1796 = vmatpush1.msra.mxu0 0.0
      %1797 = vmatprep.subr.mxu0 0.0
      %1798 = vmatpush1.msra.mxu0 0.0
      %1799 = vmatprep.subr.mxu0 0.0
      %1800 = vmatpush1.msra.mxu0 0.0
      %1801 = vmatprep.subr.mxu0 0.0
      %1802 = vmatpush1.msra.mxu0 0.0
      %1803 = vmatprep.subr.mxu0 0.0
      %1804 = vmatpush1.msra.mxu0 0.0
      %1805 = vmatprep.subr.mxu0 0.0
      %1806 = vmatpush1.msra.mxu0 0.0
      %1807 = vmatprep.subr.mxu0 0.0
      %1808 = vmatpush1.msra.mxu0 0.0
      %1809 = vmatprep.subr.mxu0 0.0
      %1810 = vmatpush1.msra.mxu0 0.0
      %1811 = vmatprep.subr.mxu0 0.0
      %1812 = vmatpush1.msra.mxu0 0.0
      %1813 = vmatprep.subr.mxu0 0.0
      %1814 = vmatpush1.msra.mxu0 0.0
      %1815 = vmatprep.subr.mxu0 0.0
      %1816 = vmatpush1.msra.mxu0 0.0
      %1817 = vmatprep.subr.mxu0 0.0
      %1818 = vmatpush1.msra.mxu0 0.0
      %1819 = vmatprep.subr.mxu0 0.0
      %1820 = vmatpush1.msra.mxu0 0.0
      %1821 = vmatprep.subr.mxu0 0.0
      %1822 = vmatpush1.msra.mxu0 0.0
      %1823 = vmatprep.subr.mxu0 0.0
      %1824 = vmatpush1.msra.mxu0 0.0
      %1825 = vmatprep.subr.mxu0 0.0
      %1826 = vmatpush1.msra.mxu0 0.0
      %1827 = vmatprep.subr.mxu0 0.0
      %1828 = vmatpush1.msra.mxu0 0.0
      %1829 = vmatprep.subr.mxu0 0.0
      %1830 = vmatpush1.msra.mxu0 0.0
      %1831 = vmatprep.mubr.f32.mxu0 0.0
      %v1832 = vand.u32 %v1759, 4294901760
      %v1833 = vsub.f32 %v1759, %v1832
      %v1834 = vand.u32 %v1833, 4294901760
      %v1835 = vsub.f32 %v1833, %v1834
      %v1836 = vand.u32 %v1835, 4294901760
      %1837 = vmatmul.mubr.f32.gmra.mrb[0].mxu0 %v1836
      %v1838 = vpop.f32.mrb[0].mxu0
      %v1839 = vadd.f32 0.0, %v1838
      %v1840 = vpop.f32.mrb[0].mxu0
      %v1841 = vadd.f32 0.0, %v1840
      %1842 = vdwg.mxu0
      %v1843 = vand.u32 %v1763, 4294901760
      %v1844 = vsub.f32 %v1763, %v1843
      %v1845 = vand.u32 %v1844, 4294901760
      %v1846 = vsub.f32 %v1844, %v1845
      %v1847 = vand.u32 %v1846, 4294901760
      %1848 = vmatprep.subr.mxu0 %v1847
      %v1849 = vand.u32 %v1761, 4294901760
      %v1850 = vsub.f32 %v1761, %v1849
      %v1851 = vand.u32 %v1850, 4294901760
      %v1852 = vsub.f32 %v1850, %v1851
      %v1853 = vand.u32 %v1852, 4294901760
      %1854 = vmatpush1.msra.mxu0 %v1853
      %1855 = vmatprep.subr.mxu0 0.0
      %1856 = vmatpush1.msra.mxu0 0.0
      %1857 = vmatprep.subr.mxu0 0.0
      %1858 = vmatpush1.msra.mxu0 0.0
      %1859 = vmatprep.subr.mxu0 0.0
      %1860 = vmatpush1.msra.mxu0 0.0
      %1861 = vmatprep.subr.mxu0 0.0
      %1862 = vmatpush1.msra.mxu0 0.0
      %1863 = vmatprep.subr.mxu0 0.0
      %1864 = vmatpush1.msra.mxu0 0.0
      %1865 = vmatprep.subr.mxu0 0.0
      %1866 = vmatpush1.msra.mxu0 0.0
      %1867 = vmatprep.subr.mxu0 0.0
      %1868 = vmatpush1.msra.mxu0 0.0
      %1869 = vmatprep.subr.mxu0 0.0
      %1870 = vmatpush1.msra.mxu0 0.0
      %1871 = vmatprep.subr.mxu0 0.0
      %1872 = vmatpush1.msra.mxu0 0.0
      %1873 = vmatprep.subr.mxu0 0.0
      %1874 = vmatpush1.msra.mxu0 0.0
      %1875 = vmatprep.subr.mxu0 0.0
      %1876 = vmatpush1.msra.mxu0 0.0
      %1877 = vmatprep.subr.mxu0 0.0
      %1878 = vmatpush1.msra.mxu0 0.0
      %1879 = vmatprep.subr.mxu0 0.0
      %1880 = vmatpush1.msra.mxu0 0.0
      %1881 = vmatprep.subr.mxu0 0.0
      %1882 = vmatpush1.msra.mxu0 0.0
      %1883 = vmatprep.subr.mxu0 0.0
      %1884 = vmatpush1.msra.mxu0 0.0
      %1885 = vmatprep.subr.mxu0 0.0
      %1886 = vmatpush1.msra.mxu0 0.0
      %1887 = vmatprep.subr.mxu0 0.0
      %1888 = vmatpush1.msra.mxu0 0.0
      %1889 = vmatprep.subr.mxu0 0.0
      %1890 = vmatpush1.msra.mxu0 0.0
      %1891 = vmatprep.subr.mxu0 0.0
      %1892 = vmatpush1.msra.mxu0 0.0
      %1893 = vmatprep.subr.mxu0 0.0
      %1894 = vmatpush1.msra.mxu0 0.0
      %1895 = vmatprep.subr.mxu0 0.0
      %1896 = vmatpush1.msra.mxu0 0.0
      %1897 = vmatprep.subr.mxu0 0.0
      %1898 = vmatpush1.msra.mxu0 0.0
      %1899 = vmatprep.subr.mxu0 0.0
      %1900 = vmatpush1.msra.mxu0 0.0
      %1901 = vmatprep.subr.mxu0 0.0
      %1902 = vmatpush1.msra.mxu0 0.0
      %1903 = vmatprep.subr.mxu0 0.0
      %1904 = vmatpush1.msra.mxu0 0.0
      %1905 = vmatprep.subr.mxu0 0.0
      %1906 = vmatpush1.msra.mxu0 0.0
      %1907 = vmatprep.subr.mxu0 0.0
      %1908 = vmatpush1.msra.mxu0 0.0
      %1909 = vmatprep.subr.mxu0 0.0
      %1910 = vmatpush1.msra.mxu0 0.0
      %1911 = vmatprep.subr.mxu0 0.0
      %1912 = vmatpush1.msra.mxu0 0.0
      %1913 = vmatprep.subr.mxu0 0.0
      %1914 = vmatpush1.msra.mxu0 0.0
      %1915 = vmatprep.subr.mxu0 0.0
      %1916 = vmatpush1.msra.mxu0 0.0
      %1917 = vmatprep.mubr.f32.mxu0 0.0
      %v1918 = vand.u32 %v1759, 4294901760
      %1919 = vmatmul.mubr.f32.gmra.mrb[0].mxu0 %v1918
      %v1920 = vpop.f32.mrb[0].mxu0
      %v1921 = vadd.f32 %v1839, %v1920
      %v1922 = vpop.f32.mrb[0].mxu0
      %v1923 = vadd.f32 %v1841, %v1922
      %1924 = vdwg.mxu0
      %v1925 = vand.u32 %v1763, 4294901760
      %v1926 = vsub.f32 %v1763, %v1925
      %1927 = vmatprep.subr.mxu0 %v1926
      %v1928 = vand.u32 %v1761, 4294901760
      %v1929 = vsub.f32 %v1761, %v1928
      %1930 = vmatpush1.msra.mxu0 %v1929
      %1931 = vmatprep.subr.mxu0 0.0
      %1932 = vmatpush1.msra.mxu0 0.0
      %1933 = vmatprep.subr.mxu0 0.0
      %1934 = vmatpush1.msra.mxu0 0.0
      %1935 = vmatprep.subr.mxu0 0.0
      %1936 = vmatpush1.msra.mxu0 0.0
      %1937 = vmatprep.subr.mxu0 0.0
      %1938 = vmatpush1.msra.mxu0 0.0
      %1939 = vmatprep.subr.mxu0 0.0
      %1940 = vmatpush1.msra.mxu0 0.0
      %1941 = vmatprep.subr.mxu0 0.0
      %1942 = vmatpush1.msra.mxu0 0.0
      %1943 = vmatprep.subr.mxu0 0.0
      %1944 = vmatpush1.msra.mxu0 0.0
      %1945 = vmatprep.subr.mxu0 0.0
      %1946 = vmatpush1.msra.mxu0 0.0
      %1947 = vmatprep.subr.mxu0 0.0
      %1948 = vmatpush1.msra.mxu0 0.0
      %1949 = vmatprep.subr.mxu0 0.0
      %1950 = vmatpush1.msra.mxu0 0.0
      %1951 = vmatprep.subr.mxu0 0.0
      %1952 = vmatpush1.msra.mxu0 0.0
      %1953 = vmatprep.subr.mxu0 0.0
      %1954 = vmatpush1.msra.mxu0 0.0
      %1955 = vmatprep.subr.mxu0 0.0
      %1956 = vmatpush1.msra.mxu0 0.0
      %1957 = vmatprep.subr.mxu0 0.0
      %1958 = vmatpush1.msra.mxu0 0.0
      %1959 = vmatprep.subr.mxu0 0.0
      %1960 = vmatpush1.msra.mxu0 0.0
      %1961 = vmatprep.subr.mxu0 0.0
      %1962 = vmatpush1.msra.mxu0 0.0
      %1963 = vmatprep.subr.mxu0 0.0
      %1964 = vmatpush1.msra.mxu0 0.0
      %1965 = vmatprep.subr.mxu0 0.0
      %1966 = vmatpush1.msra.mxu0 0.0
      %1967 = vmatprep.subr.mxu0 0.0
      %1968 = vmatpush1.msra.mxu0 0.0
      %1969 = vmatprep.subr.mxu0 0.0
      %1970 = vmatpush1.msra.mxu0 0.0
      %1971 = vmatprep.subr.mxu0 0.0
      %1972 = vmatpush1.msra.mxu0 0.0
      %1973 = vmatprep.subr.mxu0 0.0
      %1974 = vmatpush1.msra.mxu0 0.0
      %1975 = vmatprep.subr.mxu0 0.0
      %1976 = vmatpush1.msra.mxu0 0.0
      %1977 = vmatprep.subr.mxu0 0.0
      %1978 = vmatpush1.msra.mxu0 0.0
      %1979 = vmatprep.subr.mxu0 0.0
      %1980 = vmatpush1.msra.mxu0 0.0
      %1981 = vmatprep.subr.mxu0 0.0
      %1982 = vmatpush1.msra.mxu0 0.0
      %1983 = vmatprep.subr.mxu0 0.0
      %1984 = vmatpush1.msra.mxu0 0.0
      %1985 = vmatprep.subr.mxu0 0.0
      %1986 = vmatpush1.msra.mxu0 0.0
      %1987 = vmatprep.subr.mxu0 0.0
      %1988 = vmatpush1.msra.mxu0 0.0
      %1989 = vmatprep.subr.mxu0 0.0
      %1990 = vmatpush1.msra.mxu0 0.0
      %1991 = vmatprep.subr.mxu0 0.0
      %1992 = vmatpush1.msra.mxu0 0.0
      %1993 = vmatprep.mubr.f32.mxu0 0.0
      %v1994 = vand.u32 %v1759, 4294901760
      %v1995 = vsub.f32 %v1759, %v1994
      %1996 = vmatmul.mubr.f32.gmra.mrb[0].mxu0 %v1995
      %v1997 = vpop.f32.mrb[0].mxu0
      %v1998 = vadd.f32 %v1921, %v1997
      %v1999 = vpop.f32.mrb[0].mxu0
      %v2000 = vadd.f32 %v1923, %v1999
      %2001 = vdwg.mxu0
      %v2002 = vand.u32 %v1763, 4294901760
      %2003 = vmatprep.subr.mxu0 %v2002
      %v2004 = vand.u32 %v1761, 4294901760
      %2005 = vmatpush1.msra.mxu0 %v2004
      %2006 = vmatprep.subr.mxu0 0.0
      %2007 = vmatpush1.msra.mxu0 0.0
      %2008 = vmatprep.subr.mxu0 0.0
      %2009 = vmatpush1.msra.mxu0 0.0
      %2010 = vmatprep.subr.mxu0 0.0
      %2011 = vmatpush1.msra.mxu0 0.0
      %2012 = vmatprep.subr.mxu0 0.0
      %2013 = vmatpush1.msra.mxu0 0.0
      %2014 = vmatprep.subr.mxu0 0.0
      %2015 = vmatpush1.msra.mxu0 0.0
      %2016 = vmatprep.subr.mxu0 0.0
      %2017 = vmatpush1.msra.mxu0 0.0
      %2018 = vmatprep.subr.mxu0 0.0
      %2019 = vmatpush1.msra.mxu0 0.0
      %2020 = vmatprep.subr.mxu0 0.0
      %2021 = vmatpush1.msra.mxu0 0.0
      %2022 = vmatprep.subr.mxu0 0.0
      %2023 = vmatpush1.msra.mxu0 0.0
      %2024 = vmatprep.subr.mxu0 0.0
      %2025 = vmatpush1.msra.mxu0 0.0
      %2026 = vmatprep.subr.mxu0 0.0
      %2027 = vmatpush1.msra.mxu0 0.0
      %2028 = vmatprep.subr.mxu0 0.0
      %2029 = vmatpush1.msra.mxu0 0.0
      %2030 = vmatprep.subr.mxu0 0.0
      %2031 = vmatpush1.msra.mxu0 0.0
      %2032 = vmatprep.subr.mxu0 0.0
      %2033 = vmatpush1.msra.mxu0 0.0
      %2034 = vmatprep.subr.mxu0 0.0
      %2035 = vmatpush1.msra.mxu0 0.0
      %2036 = vmatprep.subr.mxu0 0.0
      %2037 = vmatpush1.msra.mxu0 0.0
      %2038 = vmatprep.subr.mxu0 0.0
      %2039 = vmatpush1.msra.mxu0 0.0
      %2040 = vmatprep.subr.mxu0 0.0
      %2041 = vmatpush1.msra.mxu0 0.0
      %2042 = vmatprep.subr.mxu0 0.0
      %2043 = vmatpush1.msra.mxu0 0.0
      %2044 = vmatprep.subr.mxu0 0.0
      %2045 = vmatpush1.msra.mxu0 0.0
      %2046 = vmatprep.subr.mxu0 0.0
      %2047 = vmatpush1.msra.mxu0 0.0
      %2048 = vmatprep.subr.mxu0 0.0
      %2049 = vmatpush1.msra.mxu0 0.0
      %2050 = vmatprep.subr.mxu0 0.0
      %2051 = vmatpush1.msra.mxu0 0.0
      %2052 = vmatprep.subr.mxu0 0.0
      %2053 = vmatpush1.msra.mxu0 0.0
      %2054 = vmatprep.subr.mxu0 0.0
      %2055 = vmatpush1.msra.mxu0 0.0
      %2056 = vmatprep.subr.mxu0 0.0
      %2057 = vmatpush1.msra.mxu0 0.0
      %2058 = vmatprep.subr.mxu0 0.0
      %2059 = vmatpush1.msra.mxu0 0.0
      %2060 = vmatprep.subr.mxu0 0.0
      %2061 = vmatpush1.msra.mxu0 0.0
      %2062 = vmatprep.subr.mxu0 0.0
      %2063 = vmatpush1.msra.mxu0 0.0
      %2064 = vmatprep.subr.mxu0 0.0
      %2065 = vmatpush1.msra.mxu0 0.0
      %2066 = vmatprep.subr.mxu0 0.0
      %2067 = vmatpush1.msra.mxu0 0.0
      %2068 = vmatprep.mubr.f32.mxu0 0.0
      %v2069 = vand.u32 %v1759, 4294901760
      %v2070 = vsub.f32 %v1759, %v2069
      %v2071 = vand.u32 %v2070, 4294901760
      %2072 = vmatmul.mubr.f32.gmra.mrb[0].mxu0 %v2071
      %v2073 = vpop.f32.mrb[0].mxu0
      %v2074 = vadd.f32 %v1998, %v2073
      %v2075 = vpop.f32.mrb[0].mxu0
      %v2076 = vadd.f32 %v2000, %v2075
      %2077 = vdwg.mxu0
      %v2078 = vand.u32 %v1763, 4294901760
      %v2079 = vsub.f32 %v1763, %v2078
      %v2080 = vand.u32 %v2079, 4294901760
      %2081 = vmatprep.subr.mxu0 %v2080
      %v2082 = vand.u32 %v1761, 4294901760
      %v2083 = vsub.f32 %v1761, %v2082
      %v2084 = vand.u32 %v2083, 4294901760
      %2085 = vmatpush1.msra.mxu0 %v2084
      %2086 = vmatprep.subr.mxu0 0.0
      %2087 = vmatpush1.msra.mxu0 0.0
      %2088 = vmatprep.subr.mxu0 0.0
      %2089 = vmatpush1.msra.mxu0 0.0
      %2090 = vmatprep.subr.mxu0 0.0
      %2091 = vmatpush1.msra.mxu0 0.0
      %2092 = vmatprep.subr.mxu0 0.0
      %2093 = vmatpush1.msra.mxu0 0.0
      %2094 = vmatprep.subr.mxu0 0.0
      %2095 = vmatpush1.msra.mxu0 0.0
      %2096 = vmatprep.subr.mxu0 0.0
      %2097 = vmatpush1.msra.mxu0 0.0
      %2098 = vmatprep.subr.mxu0 0.0
      %2099 = vmatpush1.msra.mxu0 0.0
      %2100 = vmatprep.subr.mxu0 0.0
      %2101 = vmatpush1.msra.mxu0 0.0
      %2102 = vmatprep.subr.mxu0 0.0
      %2103 = vmatpush1.msra.mxu0 0.0
      %2104 = vmatprep.subr.mxu0 0.0
      %2105 = vmatpush1.msra.mxu0 0.0
      %2106 = vmatprep.subr.mxu0 0.0
      %2107 = vmatpush1.msra.mxu0 0.0
      %2108 = vmatprep.subr.mxu0 0.0
      %2109 = vmatpush1.msra.mxu0 0.0
      %2110 = vmatprep.subr.mxu0 0.0
      %2111 = vmatpush1.msra.mxu0 0.0
      %2112 = vmatprep.subr.mxu0 0.0
      %2113 = vmatpush1.msra.mxu0 0.0
      %2114 = vmatprep.subr.mxu0 0.0
      %2115 = vmatpush1.msra.mxu0 0.0
      %2116 = vmatprep.subr.mxu0 0.0
      %2117 = vmatpush1.msra.mxu0 0.0
      %2118 = vmatprep.subr.mxu0 0.0
      %2119 = vmatpush1.msra.mxu0 0.0
      %2120 = vmatprep.subr.mxu0 0.0
      %2121 = vmatpush1.msra.mxu0 0.0
      %2122 = vmatprep.subr.mxu0 0.0
      %2123 = vmatpush1.msra.mxu0 0.0
      %2124 = vmatprep.subr.mxu0 0.0
      %2125 = vmatpush1.msra.mxu0 0.0
      %2126 = vmatprep.subr.mxu0 0.0
      %2127 = vmatpush1.msra.mxu0 0.0
      %2128 = vmatprep.subr.mxu0 0.0
      %2129 = vmatpush1.msra.mxu0 0.0
      %2130 = vmatprep.subr.mxu0 0.0
      %2131 = vmatpush1.msra.mxu0 0.0
      %2132 = vmatprep.subr.mxu0 0.0
      %2133 = vmatpush1.msra.mxu0 0.0
      %2134 = vmatprep.subr.mxu0 0.0
      %2135 = vmatpush1.msra.mxu0 0.0
      %2136 = vmatprep.subr.mxu0 0.0
      %2137 = vmatpush1.msra.mxu0 0.0
      %2138 = vmatprep.subr.mxu0 0.0
      %2139 = vmatpush1.msra.mxu0 0.0
      %2140 = vmatprep.subr.mxu0 0.0
      %2141 = vmatpush1.msra.mxu0 0.0
      %2142 = vmatprep.subr.mxu0 0.0
      %2143 = vmatpush1.msra.mxu0 0.0
      %2144 = vmatprep.subr.mxu0 0.0
      %2145 = vmatpush1.msra.mxu0 0.0
      %2146 = vmatprep.subr.mxu0 0.0
      %2147 = vmatpush1.msra.mxu0 0.0
      %2148 = vmatprep.mubr.f32.mxu0 0.0
      %v2149 = vand.u32 %v1759, 4294901760
      %2150 = vmatmul.mubr.f32.gmra.mrb[0].mxu0 %v2149
      %v2151 = vpop.f32.mrb[0].mxu0
      %v2152 = vadd.f32 %v2074, %v2151
      %v2153 = vpop.f32.mrb[0].mxu0
      %v2154 = vadd.f32 %v2076, %v2153
      %2155 = vdwg.mxu0
      %v2156 = vand.u32 %v1763, 4294901760
      %2157 = vmatprep.subr.mxu0 %v2156
      %v2158 = vand.u32 %v1761, 4294901760
      %2159 = vmatpush1.msra.mxu0 %v2158
      %2160 = vmatprep.subr.mxu0 0.0
      %2161 = vmatpush1.msra.mxu0 0.0
      %2162 = vmatprep.subr.mxu0 0.0
      %2163 = vmatpush1.msra.mxu0 0.0
      %2164 = vmatprep.subr.mxu0 0.0
      %2165 = vmatpush1.msra.mxu0 0.0
      %2166 = vmatprep.subr.mxu0 0.0
      %2167 = vmatpush1.msra.mxu0 0.0
      %2168 = vmatprep.subr.mxu0 0.0
      %2169 = vmatpush1.msra.mxu0 0.0
      %2170 = vmatprep.subr.mxu0 0.0
      %2171 = vmatpush1.msra.mxu0 0.0
      %2172 = vmatprep.subr.mxu0 0.0
      %2173 = vmatpush1.msra.mxu0 0.0
      %2174 = vmatprep.subr.mxu0 0.0
      %2175 = vmatpush1.msra.mxu0 0.0
      %2176 = vmatprep.subr.mxu0 0.0
      %2177 = vmatpush1.msra.mxu0 0.0
      %2178 = vmatprep.subr.mxu0 0.0
      %2179 = vmatpush1.msra.mxu0 0.0
      %2180 = vmatprep.subr.mxu0 0.0
      %2181 = vmatpush1.msra.mxu0 0.0
      %2182 = vmatprep.subr.mxu0 0.0
      %2183 = vmatpush1.msra.mxu0 0.0
      %2184 = vmatprep.subr.mxu0 0.0
      %2185 = vmatpush1.msra.mxu0 0.0
      %2186 = vmatprep.subr.mxu0 0.0
      %2187 = vmatpush1.msra.mxu0 0.0
      %2188 = vmatprep.subr.mxu0 0.0
      %2189 = vmatpush1.msra.mxu0 0.0
      %2190 = vmatprep.subr.mxu0 0.0
      %2191 = vmatpush1.msra.mxu0 0.0
      %2192 = vmatprep.subr.mxu0 0.0
      %2193 = vmatpush1.msra.mxu0 0.0
      %2194 = vmatprep.subr.mxu0 0.0
      %2195 = vmatpush1.msra.mxu0 0.0
      %2196 = vmatprep.subr.mxu0 0.0
      %2197 = vmatpush1.msra.mxu0 0.0
      %2198 = vmatprep.subr.mxu0 0.0
      %2199 = vmatpush1.msra.mxu0 0.0
      %2200 = vmatprep.subr.mxu0 0.0
      %2201 = vmatpush1.msra.mxu0 0.0
      %2202 = vmatprep.subr.mxu0 0.0
      %2203 = vmatpush1.msra.mxu0 0.0
      %2204 = vmatprep.subr.mxu0 0.0
      %2205 = vmatpush1.msra.mxu0 0.0
      %2206 = vmatprep.subr.mxu0 0.0
      %2207 = vmatpush1.msra.mxu0 0.0
      %2208 = vmatprep.subr.mxu0 0.0
      %2209 = vmatpush1.msra.mxu0 0.0
      %2210 = vmatprep.subr.mxu0 0.0
      %2211 = vmatpush1.msra.mxu0 0.0
      %2212 = vmatprep.subr.mxu0 0.0
      %2213 = vmatpush1.msra.mxu0 0.0
      %2214 = vmatprep.subr.mxu0 0.0
      %2215 = vmatpush1.msra.mxu0 0.0
      %2216 = vmatprep.subr.mxu0 0.0
      %2217 = vmatpush1.msra.mxu0 0.0
      %2218 = vmatprep.subr.mxu0 0.0
      %2219 = vmatpush1.msra.mxu0 0.0
      %2220 = vmatprep.subr.mxu0 0.0
      %2221 = vmatpush1.msra.mxu0 0.0
      %2222 = vmatprep.mubr.f32.mxu0 0.0
      %v2223 = vand.u32 %v1759, 4294901760
      %2224 = vmatmul.mubr.f32.gmra.mrb[0].mxu0 %v2223
      %v2225 = vpop.f32.mrb[0].mxu0
      %v2226 = vadd.f32 %v2152, %v2225
      %v2227 = vpop.f32.mrb[0].mxu0
      %v2228 = vadd.f32 %v2154, %v2227
      %2229 = vdwg.mxu0
      %v2230 = vadd.f32 %v1731, %v2226
      %v2231 = vadd.f32 %v1732, %v2228
      %v2232 = vld [vmem:[#allocation2 + $0x4] sm:$0xff]
      %s2233 = scalar_lea.vmem %s1, 32
      %v2234 = vld [vmem:[%s2233] sm:$0xff]
      %v2236 = vcombine.high %v2232, %v2232
      %v2238 = vsel %vm274, %v2234, 0
      %v2240 = vsel %vm238, %v2232, 0
      %v2242 = vsel %vm238, %v2236, 0
      %v2244 = vand.u32 %v2242, 4294901760
      %2245 = vmatprep.subr.mxu0 %v2244
      %v2246 = vand.u32 %v2240, 4294901760
      %2247 = vmatpush1.msra.mxu0 %v2246
      %2248 = vmatprep.subr.mxu0 0.0
      %2249 = vmatpush1.msra.mxu0 0.0
      %2250 = vmatprep.subr.mxu0 0.0
      %2251 = vmatpush1.msra.mxu0 0.0
      %2252 = vmatprep.subr.mxu0 0.0
      %2253 = vmatpush1.msra.mxu0 0.0
      %2254 = vmatprep.subr.mxu0 0.0
      %2255 = vmatpush1.msra.mxu0 0.0
      %2256 = vmatprep.subr.mxu0 0.0
      %2257 = vmatpush1.msra.mxu0 0.0
      %2258 = vmatprep.subr.mxu0 0.0
      %2259 = vmatpush1.msra.mxu0 0.0
      %2260 = vmatprep.subr.mxu0 0.0
      %2261 = vmatpush1.msra.mxu0 0.0
      %2262 = vmatprep.subr.mxu0 0.0
      %2263 = vmatpush1.msra.mxu0 0.0
      %2264 = vmatprep.subr.mxu0 0.0
      %2265 = vmatpush1.msra.mxu0 0.0
      %2266 = vmatprep.subr.mxu0 0.0
      %2267 = vmatpush1.msra.mxu0 0.0
      %2268 = vmatprep.subr.mxu0 0.0
      %2269 = vmatpush1.msra.mxu0 0.0
      %2270 = vmatprep.subr.mxu0 0.0
      %2271 = vmatpush1.msra.mxu0 0.0
      %2272 = vmatprep.subr.mxu0 0.0
      %2273 = vmatpush1.msra.mxu0 0.0
      %2274 = vmatprep.subr.mxu0 0.0
      %2275 = vmatpush1.msra.mxu0 0.0
      %2276 = vmatprep.subr.mxu0 0.0
      %2277 = vmatpush1.msra.mxu0 0.0
      %2278 = vmatprep.subr.mxu0 0.0
      %2279 = vmatpush1.msra.mxu0 0.0
      %2280 = vmatprep.subr.mxu0 0.0
      %2281 = vmatpush1.msra.mxu0 0.0
      %2282 = vmatprep.subr.mxu0 0.0
      %2283 = vmatpush1.msra.mxu0 0.0
      %2284 = vmatprep.subr.mxu0 0.0
      %2285 = vmatpush1.msra.mxu0 0.0
      %2286 = vmatprep.subr.mxu0 0.0
      %2287 = vmatpush1.msra.mxu0 0.0
      %2288 = vmatprep.subr.mxu0 0.0
      %2289 = vmatpush1.msra.mxu0 0.0
      %2290 = vmatprep.subr.mxu0 0.0
      %2291 = vmatpush1.msra.mxu0 0.0
      %2292 = vmatprep.subr.mxu0 0.0
      %2293 = vmatpush1.msra.mxu0 0.0
      %2294 = vmatprep.subr.mxu0 0.0
      %2295 = vmatpush1.msra.mxu0 0.0
      %2296 = vmatprep.subr.mxu0 0.0
      %2297 = vmatpush1.msra.mxu0 0.0
      %2298 = vmatprep.subr.mxu0 0.0
      %2299 = vmatpush1.msra.mxu0 0.0
      %2300 = vmatprep.subr.mxu0 0.0
      %2301 = vmatpush1.msra.mxu0 0.0
      %2302 = vmatprep.subr.mxu0 0.0
      %2303 = vmatpush1.msra.mxu0 0.0
      %2304 = vmatprep.subr.mxu0 0.0
      %2305 = vmatpush1.msra.mxu0 0.0
      %2306 = vmatprep.subr.mxu0 0.0
      %2307 = vmatpush1.msra.mxu0 0.0
      %2308 = vmatprep.subr.mxu0 0.0
      %2309 = vmatpush1.msra.mxu0 0.0
      %2310 = vmatprep.mubr.f32.mxu0 0.0
      %v2311 = vand.u32 %v2238, 4294901760
      %v2312 = vsub.f32 %v2238, %v2311
      %v2313 = vand.u32 %v2312, 4294901760
      %v2314 = vsub.f32 %v2312, %v2313
      %v2315 = vand.u32 %v2314, 4294901760
      %2316 = vmatmul.mubr.f32.gmra.mrb[0].mxu0 %v2315
      %v2317 = vpop.f32.mrb[0].mxu0
      %v2318 = vadd.f32 0.0, %v2317
      %v2319 = vpop.f32.mrb[0].mxu0
      %v2320 = vadd.f32 0.0, %v2319
      %2321 = vdwg.mxu0
      %v2322 = vand.u32 %v2242, 4294901760
      %v2323 = vsub.f32 %v2242, %v2322
      %v2324 = vand.u32 %v2323, 4294901760
      %v2325 = vsub.f32 %v2323, %v2324
      %v2326 = vand.u32 %v2325, 4294901760
      %2327 = vmatprep.subr.mxu0 %v2326
      %v2328 = vand.u32 %v2240, 4294901760
      %v2329 = vsub.f32 %v2240, %v2328
      %v2330 = vand.u32 %v2329, 4294901760
      %v2331 = vsub.f32 %v2329, %v2330
      %v2332 = vand.u32 %v2331, 4294901760
      %2333 = vmatpush1.msra.mxu0 %v2332
      %2334 = vmatprep.subr.mxu0 0.0
      %2335 = vmatpush1.msra.mxu0 0.0
      %2336 = vmatprep.subr.mxu0 0.0
      %2337 = vmatpush1.msra.mxu0 0.0
      %2338 = vmatprep.subr.mxu0 0.0
      %2339 = vmatpush1.msra.mxu0 0.0
      %2340 = vmatprep.subr.mxu0 0.0
      %2341 = vmatpush1.msra.mxu0 0.0
      %2342 = vmatprep.subr.mxu0 0.0
      %2343 = vmatpush1.msra.mxu0 0.0
      %2344 = vmatprep.subr.mxu0 0.0
      %2345 = vmatpush1.msra.mxu0 0.0
      %2346 = vmatprep.subr.mxu0 0.0
      %2347 = vmatpush1.msra.mxu0 0.0
      %2348 = vmatprep.subr.mxu0 0.0
      %2349 = vmatpush1.msra.mxu0 0.0
      %2350 = vmatprep.subr.mxu0 0.0
      %2351 = vmatpush1.msra.mxu0 0.0
      %2352 = vmatprep.subr.mxu0 0.0
      %2353 = vmatpush1.msra.mxu0 0.0
      %2354 = vmatprep.subr.mxu0 0.0
      %2355 = vmatpush1.msra.mxu0 0.0
      %2356 = vmatprep.subr.mxu0 0.0
      %2357 = vmatpush1.msra.mxu0 0.0
      %2358 = vmatprep.subr.mxu0 0.0
      %2359 = vmatpush1.msra.mxu0 0.0
      %2360 = vmatprep.subr.mxu0 0.0
      %2361 = vmatpush1.msra.mxu0 0.0
      %2362 = vmatprep.subr.mxu0 0.0
      %2363 = vmatpush1.msra.mxu0 0.0
      %2364 = vmatprep.subr.mxu0 0.0
      %2365 = vmatpush1.msra.mxu0 0.0
      %2366 = vmatprep.subr.mxu0 0.0
      %2367 = vmatpush1.msra.mxu0 0.0
      %2368 = vmatprep.subr.mxu0 0.0
      %2369 = vmatpush1.msra.mxu0 0.0
      %2370 = vmatprep.subr.mxu0 0.0
      %2371 = vmatpush1.msra.mxu0 0.0
      %2372 = vmatprep.subr.mxu0 0.0
      %2373 = vmatpush1.msra.mxu0 0.0
      %2374 = vmatprep.subr.mxu0 0.0
      %2375 = vmatpush1.msra.mxu0 0.0
      %2376 = vmatprep.subr.mxu0 0.0
      %2377 = vmatpush1.msra.mxu0 0.0
      %2378 = vmatprep.subr.mxu0 0.0
      %2379 = vmatpush1.msra.mxu0 0.0
      %2380 = vmatprep.subr.mxu0 0.0
      %2381 = vmatpush1.msra.mxu0 0.0
      %2382 = vmatprep.subr.mxu0 0.0
      %2383 = vmatpush1.msra.mxu0 0.0
      %2384 = vmatprep.subr.mxu0 0.0
      %2385 = vmatpush1.msra.mxu0 0.0
      %2386 = vmatprep.subr.mxu0 0.0
      %2387 = vmatpush1.msra.mxu0 0.0
      %2388 = vmatprep.subr.mxu0 0.0
      %2389 = vmatpush1.msra.mxu0 0.0
      %2390 = vmatprep.subr.mxu0 0.0
      %2391 = vmatpush1.msra.mxu0 0.0
      %2392 = vmatprep.subr.mxu0 0.0
      %2393 = vmatpush1.msra.mxu0 0.0
      %2394 = vmatprep.subr.mxu0 0.0
      %2395 = vmatpush1.msra.mxu0 0.0
      %2396 = vmatprep.mubr.f32.mxu0 0.0
      %v2397 = vand.u32 %v2238, 4294901760
      %2398 = vmatmul.mubr.f32.gmra.mrb[0].mxu0 %v2397
      %v2399 = vpop.f32.mrb[0].mxu0
      %v2400 = vadd.f32 %v2318, %v2399
      %v2401 = vpop.f32.mrb[0].mxu0
      %v2402 = vadd.f32 %v2320, %v2401
      %2403 = vdwg.mxu0
      %v2404 = vand.u32 %v2242, 4294901760
      %v2405 = vsub.f32 %v2242, %v2404
      %2406 = vmatprep.subr.mxu0 %v2405
      %v2407 = vand.u32 %v2240, 4294901760
      %v2408 = vsub.f32 %v2240, %v2407
      %2409 = vmatpush1.msra.mxu0 %v2408
      %2410 = vmatprep.subr.mxu0 0.0
      %2411 = vmatpush1.msra.mxu0 0.0
      %2412 = vmatprep.subr.mxu0 0.0
      %2413 = vmatpush1.msra.mxu0 0.0
      %2414 = vmatprep.subr.mxu0 0.0
      %2415 = vmatpush1.msra.mxu0 0.0
      %2416 = vmatprep.subr.mxu0 0.0
      %2417 = vmatpush1.msra.mxu0 0.0
      %2418 = vmatprep.subr.mxu0 0.0
      %2419 = vmatpush1.msra.mxu0 0.0
      %2420 = vmatprep.subr.mxu0 0.0
      %2421 = vmatpush1.msra.mxu0 0.0
      %2422 = vmatprep.subr.mxu0 0.0
      %2423 = vmatpush1.msra.mxu0 0.0
      %2424 = vmatprep.subr.mxu0 0.0
      %2425 = vmatpush1.msra.mxu0 0.0
      %2426 = vmatprep.subr.mxu0 0.0
      %2427 = vmatpush1.msra.mxu0 0.0
      %2428 = vmatprep.subr.mxu0 0.0
      %2429 = vmatpush1.msra.mxu0 0.0
      %2430 = vmatprep.subr.mxu0 0.0
      %2431 = vmatpush1.msra.mxu0 0.0
      %2432 = vmatprep.subr.mxu0 0.0
      %2433 = vmatpush1.msra.mxu0 0.0
      %2434 = vmatprep.subr.mxu0 0.0
      %2435 = vmatpush1.msra.mxu0 0.0
      %2436 = vmatprep.subr.mxu0 0.0
      %2437 = vmatpush1.msra.mxu0 0.0
      %2438 = vmatprep.subr.mxu0 0.0
      %2439 = vmatpush1.msra.mxu0 0.0
      %2440 = vmatprep.subr.mxu0 0.0
      %2441 = vmatpush1.msra.mxu0 0.0
      %2442 = vmatprep.subr.mxu0 0.0
      %2443 = vmatpush1.msra.mxu0 0.0
      %2444 = vmatprep.subr.mxu0 0.0
      %2445 = vmatpush1.msra.mxu0 0.0
      %2446 = vmatprep.subr.mxu0 0.0
      %2447 = vmatpush1.msra.mxu0 0.0
      %2448 = vmatprep.subr.mxu0 0.0
      %2449 = vmatpush1.msra.mxu0 0.0
      %2450 = vmatprep.subr.mxu0 0.0
      %2451 = vmatpush1.msra.mxu0 0.0
      %2452 = vmatprep.subr.mxu0 0.0
      %2453 = vmatpush1.msra.mxu0 0.0
      %2454 = vmatprep.subr.mxu0 0.0
      %2455 = vmatpush1.msra.mxu0 0.0
      %2456 = vmatprep.subr.mxu0 0.0
      %2457 = vmatpush1.msra.mxu0 0.0
      %2458 = vmatprep.subr.mxu0 0.0
      %2459 = vmatpush1.msra.mxu0 0.0
      %2460 = vmatprep.subr.mxu0 0.0
      %2461 = vmatpush1.msra.mxu0 0.0
      %2462 = vmatprep.subr.mxu0 0.0
      %2463 = vmatpush1.msra.mxu0 0.0
      %2464 = vmatprep.subr.mxu0 0.0
      %2465 = vmatpush1.msra.mxu0 0.0
      %2466 = vmatprep.subr.mxu0 0.0
      %2467 = vmatpush1.msra.mxu0 0.0
      %2468 = vmatprep.subr.mxu0 0.0
      %2469 = vmatpush1.msra.mxu0 0.0
      %2470 = vmatprep.subr.mxu0 0.0
      %2471 = vmatpush1.msra.mxu0 0.0
      %2472 = vmatprep.mubr.f32.mxu0 0.0
      %v2473 = vand.u32 %v2238, 4294901760
      %v2474 = vsub.f32 %v2238, %v2473
      %2475 = vmatmul.mubr.f32.gmra.mrb[0].mxu0 %v2474
      %v2476 = vpop.f32.mrb[0].mxu0
      %v2477 = vadd.f32 %v2400, %v2476
      %v2478 = vpop.f32.mrb[0].mxu0
      %v2479 = vadd.f32 %v2402, %v2478
      %2480 = vdwg.mxu0
      %v2481 = vand.u32 %v2242, 4294901760
      %2482 = vmatprep.subr.mxu0 %v2481
      %v2483 = vand.u32 %v2240, 4294901760
      %2484 = vmatpush1.msra.mxu0 %v2483
      %2485 = vmatprep.subr.mxu0 0.0
      %2486 = vmatpush1.msra.mxu0 0.0
      %2487 = vmatprep.subr.mxu0 0.0
      %2488 = vmatpush1.msra.mxu0 0.0
      %2489 = vmatprep.subr.mxu0 0.0
      %2490 = vmatpush1.msra.mxu0 0.0
      %2491 = vmatprep.subr.mxu0 0.0
      %2492 = vmatpush1.msra.mxu0 0.0
      %2493 = vmatprep.subr.mxu0 0.0
      %2494 = vmatpush1.msra.mxu0 0.0
      %2495 = vmatprep.subr.mxu0 0.0
      %2496 = vmatpush1.msra.mxu0 0.0
      %2497 = vmatprep.subr.mxu0 0.0
      %2498 = vmatpush1.msra.mxu0 0.0
      %2499 = vmatprep.subr.mxu0 0.0
      %2500 = vmatpush1.msra.mxu0 0.0
      %2501 = vmatprep.subr.mxu0 0.0
      %2502 = vmatpush1.msra.mxu0 0.0
      %2503 = vmatprep.subr.mxu0 0.0
      %2504 = vmatpush1.msra.mxu0 0.0
      %2505 = vmatprep.subr.mxu0 0.0
      %2506 = vmatpush1.msra.mxu0 0.0
      %2507 = vmatprep.subr.mxu0 0.0
      %2508 = vmatpush1.msra.mxu0 0.0
      %2509 = vmatprep.subr.mxu0 0.0
      %2510 = vmatpush1.msra.mxu0 0.0
      %2511 = vmatprep.subr.mxu0 0.0
      %2512 = vmatpush1.msra.mxu0 0.0
      %2513 = vmatprep.subr.mxu0 0.0
      %2514 = vmatpush1.msra.mxu0 0.0
      %2515 = vmatprep.subr.mxu0 0.0
      %2516 = vmatpush1.msra.mxu0 0.0
      %2517 = vmatprep.subr.mxu0 0.0
      %2518 = vmatpush1.msra.mxu0 0.0
      %2519 = vmatprep.subr.mxu0 0.0
      %2520 = vmatpush1.msra.mxu0 0.0
      %2521 = vmatprep.subr.mxu0 0.0
      %2522 = vmatpush1.msra.mxu0 0.0
      %2523 = vmatprep.subr.mxu0 0.0
      %2524 = vmatpush1.msra.mxu0 0.0
      %2525 = vmatprep.subr.mxu0 0.0
      %2526 = vmatpush1.msra.mxu0 0.0
      %2527 = vmatprep.subr.mxu0 0.0
      %2528 = vmatpush1.msra.mxu0 0.0
      %2529 = vmatprep.subr.mxu0 0.0
      %2530 = vmatpush1.msra.mxu0 0.0
      %2531 = vmatprep.subr.mxu0 0.0
      %2532 = vmatpush1.msra.mxu0 0.0
      %2533 = vmatprep.subr.mxu0 0.0
      %2534 = vmatpush1.msra.mxu0 0.0
      %2535 = vmatprep.subr.mxu0 0.0
      %2536 = vmatpush1.msra.mxu0 0.0
      %2537 = vmatprep.subr.mxu0 0.0
      %2538 = vmatpush1.msra.mxu0 0.0
      %2539 = vmatprep.subr.mxu0 0.0
      %2540 = vmatpush1.msra.mxu0 0.0
      %2541 = vmatprep.subr.mxu0 0.0
      %2542 = vmatpush1.msra.mxu0 0.0
      %2543 = vmatprep.subr.mxu0 0.0
      %2544 = vmatpush1.msra.mxu0 0.0
      %2545 = vmatprep.subr.mxu0 0.0
      %2546 = vmatpush1.msra.mxu0 0.0
      %2547 = vmatprep.mubr.f32.mxu0 0.0
      %v2548 = vand.u32 %v2238, 4294901760
      %v2549 = vsub.f32 %v2238, %v2548
      %v2550 = vand.u32 %v2549, 4294901760
      %2551 = vmatmul.mubr.f32.gmra.mrb[0].mxu0 %v2550
      %v2552 = vpop.f32.mrb[0].mxu0
      %v2553 = vadd.f32 %v2477, %v2552
      %v2554 = vpop.f32.mrb[0].mxu0
      %v2555 = vadd.f32 %v2479, %v2554
      %2556 = vdwg.mxu0
      %v2557 = vand.u32 %v2242, 4294901760
      %v2558 = vsub.f32 %v2242, %v2557
      %v2559 = vand.u32 %v2558, 4294901760
      %2560 = vmatprep.subr.mxu0 %v2559
      %v2561 = vand.u32 %v2240, 4294901760
      %v2562 = vsub.f32 %v2240, %v2561
      %v2563 = vand.u32 %v2562, 4294901760
      %2564 = vmatpush1.msra.mxu0 %v2563
      %2565 = vmatprep.subr.mxu0 0.0
      %2566 = vmatpush1.msra.mxu0 0.0
      %2567 = vmatprep.subr.mxu0 0.0
      %2568 = vmatpush1.msra.mxu0 0.0
      %2569 = vmatprep.subr.mxu0 0.0
      %2570 = vmatpush1.msra.mxu0 0.0
      %2571 = vmatprep.subr.mxu0 0.0
      %2572 = vmatpush1.msra.mxu0 0.0
      %2573 = vmatprep.subr.mxu0 0.0
      %2574 = vmatpush1.msra.mxu0 0.0
      %2575 = vmatprep.subr.mxu0 0.0
      %2576 = vmatpush1.msra.mxu0 0.0
      %2577 = vmatprep.subr.mxu0 0.0
      %2578 = vmatpush1.msra.mxu0 0.0
      %2579 = vmatprep.subr.mxu0 0.0
      %2580 = vmatpush1.msra.mxu0 0.0
      %2581 = vmatprep.subr.mxu0 0.0
      %2582 = vmatpush1.msra.mxu0 0.0
      %2583 = vmatprep.subr.mxu0 0.0
      %2584 = vmatpush1.msra.mxu0 0.0
      %2585 = vmatprep.subr.mxu0 0.0
      %2586 = vmatpush1.msra.mxu0 0.0
      %2587 = vmatprep.subr.mxu0 0.0
      %2588 = vmatpush1.msra.mxu0 0.0
      %2589 = vmatprep.subr.mxu0 0.0
      %2590 = vmatpush1.msra.mxu0 0.0
      %2591 = vmatprep.subr.mxu0 0.0
      %2592 = vmatpush1.msra.mxu0 0.0
      %2593 = vmatprep.subr.mxu0 0.0
      %2594 = vmatpush1.msra.mxu0 0.0
      %2595 = vmatprep.subr.mxu0 0.0
      %2596 = vmatpush1.msra.mxu0 0.0
      %2597 = vmatprep.subr.mxu0 0.0
      %2598 = vmatpush1.msra.mxu0 0.0
      %2599 = vmatprep.subr.mxu0 0.0
      %2600 = vmatpush1.msra.mxu0 0.0
      %2601 = vmatprep.subr.mxu0 0.0
      %2602 = vmatpush1.msra.mxu0 0.0
      %2603 = vmatprep.subr.mxu0 0.0
      %2604 = vmatpush1.msra.mxu0 0.0
      %2605 = vmatprep.subr.mxu0 0.0
      %2606 = vmatpush1.msra.mxu0 0.0
      %2607 = vmatprep.subr.mxu0 0.0
      %2608 = vmatpush1.msra.mxu0 0.0
      %2609 = vmatprep.subr.mxu0 0.0
      %2610 = vmatpush1.msra.mxu0 0.0
      %2611 = vmatprep.subr.mxu0 0.0
      %2612 = vmatpush1.msra.mxu0 0.0
      %2613 = vmatprep.subr.mxu0 0.0
      %2614 = vmatpush1.msra.mxu0 0.0
      %2615 = vmatprep.subr.mxu0 0.0
      %2616 = vmatpush1.msra.mxu0 0.0
      %2617 = vmatprep.subr.mxu0 0.0
      %2618 = vmatpush1.msra.mxu0 0.0
      %2619 = vmatprep.subr.mxu0 0.0
      %2620 = vmatpush1.msra.mxu0 0.0
      %2621 = vmatprep.subr.mxu0 0.0
      %2622 = vmatpush1.msra.mxu0 0.0
      %2623 = vmatprep.subr.mxu0 0.0
      %2624 = vmatpush1.msra.mxu0 0.0
      %2625 = vmatprep.subr.mxu0 0.0
      %2626 = vmatpush1.msra.mxu0 0.0
      %2627 = vmatprep.mubr.f32.mxu0 0.0
      %v2628 = vand.u32 %v2238, 4294901760
      %2629 = vmatmul.mubr.f32.gmra.mrb[0].mxu0 %v2628
      %v2630 = vpop.f32.mrb[0].mxu0
      %v2631 = vadd.f32 %v2553, %v2630
      %v2632 = vpop.f32.mrb[0].mxu0
      %v2633 = vadd.f32 %v2555, %v2632
      %2634 = vdwg.mxu0
      %v2635 = vand.u32 %v2242, 4294901760
      %2636 = vmatprep.subr.mxu0 %v2635
      %v2637 = vand.u32 %v2240, 4294901760
      %2638 = vmatpush1.msra.mxu0 %v2637
      %2639 = vmatprep.subr.mxu0 0.0
      %2640 = vmatpush1.msra.mxu0 0.0
      %2641 = vmatprep.subr.mxu0 0.0
      %2642 = vmatpush1.msra.mxu0 0.0
      %2643 = vmatprep.subr.mxu0 0.0
      %2644 = vmatpush1.msra.mxu0 0.0
      %2645 = vmatprep.subr.mxu0 0.0
      %2646 = vmatpush1.msra.mxu0 0.0
      %2647 = vmatprep.subr.mxu0 0.0
      %2648 = vmatpush1.msra.mxu0 0.0
      %2649 = vmatprep.subr.mxu0 0.0
      %2650 = vmatpush1.msra.mxu0 0.0
      %2651 = vmatprep.subr.mxu0 0.0
      %2652 = vmatpush1.msra.mxu0 0.0
      %2653 = vmatprep.subr.mxu0 0.0
      %2654 = vmatpush1.msra.mxu0 0.0
      %2655 = vmatprep.subr.mxu0 0.0
      %2656 = vmatpush1.msra.mxu0 0.0
      %2657 = vmatprep.subr.mxu0 0.0
      %2658 = vmatpush1.msra.mxu0 0.0
      %2659 = vmatprep.subr.mxu0 0.0
      %2660 = vmatpush1.msra.mxu0 0.0
      %2661 = vmatprep.subr.mxu0 0.0
      %2662 = vmatpush1.msra.mxu0 0.0
      %2663 = vmatprep.subr.mxu0 0.0
      %2664 = vmatpush1.msra.mxu0 0.0
      %2665 = vmatprep.subr.mxu0 0.0
      %2666 = vmatpush1.msra.mxu0 0.0
      %2667 = vmatprep.subr.mxu0 0.0
      %2668 = vmatpush1.msra.mxu0 0.0
      %2669 = vmatprep.subr.mxu0 0.0
      %2670 = vmatpush1.msra.mxu0 0.0
      %2671 = vmatprep.subr.mxu0 0.0
      %2672 = vmatpush1.msra.mxu0 0.0
      %2673 = vmatprep.subr.mxu0 0.0
      %2674 = vmatpush1.msra.mxu0 0.0
      %2675 = vmatprep.subr.mxu0 0.0
      %2676 = vmatpush1.msra.mxu0 0.0
      %2677 = vmatprep.subr.mxu0 0.0
      %2678 = vmatpush1.msra.mxu0 0.0
      %2679 = vmatprep.subr.mxu0 0.0
      %2680 = vmatpush1.msra.mxu0 0.0
      %2681 = vmatprep.subr.mxu0 0.0
      %2682 = vmatpush1.msra.mxu0 0.0
      %2683 = vmatprep.subr.mxu0 0.0
      %2684 = vmatpush1.msra.mxu0 0.0
      %2685 = vmatprep.subr.mxu0 0.0
      %2686 = vmatpush1.msra.mxu0 0.0
      %2687 = vmatprep.subr.mxu0 0.0
      %2688 = vmatpush1.msra.mxu0 0.0
      %2689 = vmatprep.subr.mxu0 0.0
      %2690 = vmatpush1.msra.mxu0 0.0
      %2691 = vmatprep.subr.mxu0 0.0
      %2692 = vmatpush1.msra.mxu0 0.0
      %2693 = vmatprep.subr.mxu0 0.0
      %2694 = vmatpush1.msra.mxu0 0.0
      %2695 = vmatprep.subr.mxu0 0.0
      %2696 = vmatpush1.msra.mxu0 0.0
      %2697 = vmatprep.subr.mxu0 0.0
      %2698 = vmatpush1.msra.mxu0 0.0
      %2699 = vmatprep.subr.mxu0 0.0
      %2700 = vmatpush1.msra.mxu0 0.0
      %2701 = vmatprep.mubr.f32.mxu0 0.0
      %v2702 = vand.u32 %v2238, 4294901760
      %2703 = vmatmul.mubr.f32.gmra.mrb[0].mxu0 %v2702
      %v2704 = vpop.f32.mrb[0].mxu0
      %v2705 = vadd.f32 %v2631, %v2704
      %v2706 = vpop.f32.mrb[0].mxu0
      %v2707 = vadd.f32 %v2633, %v2706
      %2708 = vdwg.mxu0
      %v2709 = vadd.f32 %v2230, %v2705
      %v2710 = vadd.f32 %v2231, %v2707
      %v2711 = vld [vmem:[#allocation2 + $0x4] sm:$0xff]
      %v2712 = vld [vmem:[#allocation2 + $0xc] sm:$0xf]
      %2713 = vrot.lane.b32.xlu0 %v1235, 1
      %v2714 = vpop.permute.xlu0 %2713
      %v2715 = vrot.slane %v2714, 4
      %v2716 = vsel %vm1755, %v2715, %v2714
      %v2719 = vmul.f32 %v2711, %v2716
      %v2720 = vmul.f32 %v2712, %v2715
      %s2721 = scalar_lea.vmem %s1, 40
      %v2722 = vld [vmem:[%s2721] sm:$0xff]
      %v2725 = vcombine.high %v2719, %v2719
      %2726 = vrot.lane.b32.xlu0 %v2719, 127
      %v2727 = vpop.permute.xlu0 %2726
      %2728 = vrot.lane.b32.xlu0 %v2725, 127
      %v2729 = vpop.permute.xlu0 %2728
      %2730 = vrot.lane.b32.xlu0 %v2720, 127
      %v2731 = vpop.permute.xlu0 %2730
      %v2732 = vsel %vm1738, %v2727, %v2729
      %v2733 = vsel %vm1738, %v2729, %v2731
      %v2735 = vsel %vm274, %v2722, 0
      %v2737 = vsel %vm238, %v2732, 0
      %v2739 = vsel %vm238, %v2733, 0
      %v2741 = vand.u32 %v2739, 4294901760
      %2742 = vmatprep.subr.mxu0 %v2741
      %v2743 = vand.u32 %v2737, 4294901760
      %2744 = vmatpush1.msra.mxu0 %v2743
      %2745 = vmatprep.subr.mxu0 0.0
      %2746 = vmatpush1.msra.mxu0 0.0
      %2747 = vmatprep.subr.mxu0 0.0
      %2748 = vmatpush1.msra.mxu0 0.0
      %2749 = vmatprep.subr.mxu0 0.0
      %2750 = vmatpush1.msra.mxu0 0.0
      %2751 = vmatprep.subr.mxu0 0.0
      %2752 = vmatpush1.msra.mxu0 0.0
      %2753 = vmatprep.subr.mxu0 0.0
      %2754 = vmatpush1.msra.mxu0 0.0
      %2755 = vmatprep.subr.mxu0 0.0
      %2756 = vmatpush1.msra.mxu0 0.0
      %2757 = vmatprep.subr.mxu0 0.0
      %2758 = vmatpush1.msra.mxu0 0.0
      %2759 = vmatprep.subr.mxu0 0.0
      %2760 = vmatpush1.msra.mxu0 0.0
      %2761 = vmatprep.subr.mxu0 0.0
      %2762 = vmatpush1.msra.mxu0 0.0
      %2763 = vmatprep.subr.mxu0 0.0
      %2764 = vmatpush1.msra.mxu0 0.0
      %2765 = vmatprep.subr.mxu0 0.0
      %2766 = vmatpush1.msra.mxu0 0.0
      %2767 = vmatprep.subr.mxu0 0.0
      %2768 = vmatpush1.msra.mxu0 0.0
      %2769 = vmatprep.subr.mxu0 0.0
      %2770 = vmatpush1.msra.mxu0 0.0
      %2771 = vmatprep.subr.mxu0 0.0
      %2772 = vmatpush1.msra.mxu0 0.0
      %2773 = vmatprep.subr.mxu0 0.0
      %2774 = vmatpush1.msra.mxu0 0.0
      %2775 = vmatprep.subr.mxu0 0.0
      %2776 = vmatpush1.msra.mxu0 0.0
      %2777 = vmatprep.subr.mxu0 0.0
      %2778 = vmatpush1.msra.mxu0 0.0
      %2779 = vmatprep.subr.mxu0 0.0
      %2780 = vmatpush1.msra.mxu0 0.0
      %2781 = vmatprep.subr.mxu0 0.0
      %2782 = vmatpush1.msra.mxu0 0.0
      %2783 = vmatprep.subr.mxu0 0.0
      %2784 = vmatpush1.msra.mxu0 0.0
      %2785 = vmatprep.subr.mxu0 0.0
      %2786 = vmatpush1.msra.mxu0 0.0
      %2787 = vmatprep.subr.mxu0 0.0
      %2788 = vmatpush1.msra.mxu0 0.0
      %2789 = vmatprep.subr.mxu0 0.0
      %2790 = vmatpush1.msra.mxu0 0.0
      %2791 = vmatprep.subr.mxu0 0.0
      %2792 = vmatpush1.msra.mxu0 0.0
      %2793 = vmatprep.subr.mxu0 0.0
      %2794 = vmatpush1.msra.mxu0 0.0
      %2795 = vmatprep.subr.mxu0 0.0
      %2796 = vmatpush1.msra.mxu0 0.0
      %2797 = vmatprep.subr.mxu0 0.0
      %2798 = vmatpush1.msra.mxu0 0.0
      %2799 = vmatprep.subr.mxu0 0.0
      %2800 = vmatpush1.msra.mxu0 0.0
      %2801 = vmatprep.subr.mxu0 0.0
      %2802 = vmatpush1.msra.mxu0 0.0
      %2803 = vmatprep.subr.mxu0 0.0
      %2804 = vmatpush1.msra.mxu0 0.0
      %2805 = vmatprep.subr.mxu0 0.0
      %2806 = vmatpush1.msra.mxu0 0.0
      %2807 = vmatprep.mubr.f32.mxu0 0.0
      %v2808 = vand.u32 %v2735, 4294901760
      %v2809 = vsub.f32 %v2735, %v2808
      %v2810 = vand.u32 %v2809, 4294901760
      %v2811 = vsub.f32 %v2809, %v2810
      %v2812 = vand.u32 %v2811, 4294901760
      %2813 = vmatmul.mubr.f32.gmra.mrb[0].mxu0 %v2812
      %v2814 = vpop.f32.mrb[0].mxu0
      %v2815 = vadd.f32 0.0, %v2814
      %v2816 = vpop.f32.mrb[0].mxu0
      %v2817 = vadd.f32 0.0, %v2816
      %2818 = vdwg.mxu0
      %v2819 = vand.u32 %v2739, 4294901760
      %v2820 = vsub.f32 %v2739, %v2819
      %v2821 = vand.u32 %v2820, 4294901760
      %v2822 = vsub.f32 %v2820, %v2821
      %v2823 = vand.u32 %v2822, 4294901760
      %2824 = vmatprep.subr.mxu0 %v2823
      %v2825 = vand.u32 %v2737, 4294901760
      %v2826 = vsub.f32 %v2737, %v2825
      %v2827 = vand.u32 %v2826, 4294901760
      %v2828 = vsub.f32 %v2826, %v2827
      %v2829 = vand.u32 %v2828, 4294901760
      %2830 = vmatpush1.msra.mxu0 %v2829
      %2831 = vmatprep.subr.mxu0 0.0
      %2832 = vmatpush1.msra.mxu0 0.0
      %2833 = vmatprep.subr.mxu0 0.0
      %2834 = vmatpush1.msra.mxu0 0.0
      %2835 = vmatprep.subr.mxu0 0.0
      %2836 = vmatpush1.msra.mxu0 0.0
      %2837 = vmatprep.subr.mxu0 0.0
      %2838 = vmatpush1.msra.mxu0 0.0
      %2839 = vmatprep.subr.mxu0 0.0
      %2840 = vmatpush1.msra.mxu0 0.0
      %2841 = vmatprep.subr.mxu0 0.0
      %2842 = vmatpush1.msra.mxu0 0.0
      %2843 = vmatprep.subr.mxu0 0.0
      %2844 = vmatpush1.msra.mxu0 0.0
      %2845 = vmatprep.subr.mxu0 0.0
      %2846 = vmatpush1.msra.mxu0 0.0
      %2847 = vmatprep.subr.mxu0 0.0
      %2848 = vmatpush1.msra.mxu0 0.0
      %2849 = vmatprep.subr.mxu0 0.0
      %2850 = vmatpush1.msra.mxu0 0.0
      %2851 = vmatprep.subr.mxu0 0.0
      %2852 = vmatpush1.msra.mxu0 0.0
      %2853 = vmatprep.subr.mxu0 0.0
      %2854 = vmatpush1.msra.mxu0 0.0
      %2855 = vmatprep.subr.mxu0 0.0
      %2856 = vmatpush1.msra.mxu0 0.0
      %2857 = vmatprep.subr.mxu0 0.0
      %2858 = vmatpush1.msra.mxu0 0.0
      %2859 = vmatprep.subr.mxu0 0.0
      %2860 = vmatpush1.msra.mxu0 0.0
      %2861 = vmatprep.subr.mxu0 0.0
      %2862 = vmatpush1.msra.mxu0 0.0
      %2863 = vmatprep.subr.mxu0 0.0
      %2864 = vmatpush1.msra.mxu0 0.0
      %2865 = vmatprep.subr.mxu0 0.0
      %2866 = vmatpush1.msra.mxu0 0.0
      %2867 = vmatprep.subr.mxu0 0.0
      %2868 = vmatpush1.msra.mxu0 0.0
      %2869 = vmatprep.subr.mxu0 0.0
      %2870 = vmatpush1.msra.mxu0 0.0
      %2871 = vmatprep.subr.mxu0 0.0
      %2872 = vmatpush1.msra.mxu0 0.0
      %2873 = vmatprep.subr.mxu0 0.0
      %2874 = vmatpush1.msra.mxu0 0.0
      %2875 = vmatprep.subr.mxu0 0.0
      %2876 = vmatpush1.msra.mxu0 0.0
      %2877 = vmatprep.subr.mxu0 0.0
      %2878 = vmatpush1.msra.mxu0 0.0
      %2879 = vmatprep.subr.mxu0 0.0
      %2880 = vmatpush1.msra.mxu0 0.0
      %2881 = vmatprep.subr.mxu0 0.0
      %2882 = vmatpush1.msra.mxu0 0.0
      %2883 = vmatprep.subr.mxu0 0.0
      %2884 = vmatpush1.msra.mxu0 0.0
      %2885 = vmatprep.subr.mxu0 0.0
      %2886 = vmatpush1.msra.mxu0 0.0
      %2887 = vmatprep.subr.mxu0 0.0
      %2888 = vmatpush1.msra.mxu0 0.0
      %2889 = vmatprep.subr.mxu0 0.0
      %2890 = vmatpush1.msra.mxu0 0.0
      %2891 = vmatprep.subr.mxu0 0.0
      %2892 = vmatpush1.msra.mxu0 0.0
      %2893 = vmatprep.mubr.f32.mxu0 0.0
      %v2894 = vand.u32 %v2735, 4294901760
      %2895 = vmatmul.mubr.f32.gmra.mrb[0].mxu0 %v2894
      %v2896 = vpop.f32.mrb[0].mxu0
      %v2897 = vadd.f32 %v2815, %v2896
      %v2898 = vpop.f32.mrb[0].mxu0
      %v2899 = vadd.f32 %v2817, %v2898
      %2900 = vdwg.mxu0
      %v2901 = vand.u32 %v2739, 4294901760
      %v2902 = vsub.f32 %v2739, %v2901
      %2903 = vmatprep.subr.mxu0 %v2902
      %v2904 = vand.u32 %v2737, 4294901760
      %v2905 = vsub.f32 %v2737, %v2904
      %2906 = vmatpush1.msra.mxu0 %v2905
      %2907 = vmatprep.subr.mxu0 0.0
      %2908 = vmatpush1.msra.mxu0 0.0
      %2909 = vmatprep.subr.mxu0 0.0
      %2910 = vmatpush1.msra.mxu0 0.0
      %2911 = vmatprep.subr.mxu0 0.0
      %2912 = vmatpush1.msra.mxu0 0.0
      %2913 = vmatprep.subr.mxu0 0.0
      %2914 = vmatpush1.msra.mxu0 0.0
      %2915 = vmatprep.subr.mxu0 0.0
      %2916 = vmatpush1.msra.mxu0 0.0
      %2917 = vmatprep.subr.mxu0 0.0
      %2918 = vmatpush1.msra.mxu0 0.0
      %2919 = vmatprep.subr.mxu0 0.0
      %2920 = vmatpush1.msra.mxu0 0.0
      %2921 = vmatprep.subr.mxu0 0.0
      %2922 = vmatpush1.msra.mxu0 0.0
      %2923 = vmatprep.subr.mxu0 0.0
      %2924 = vmatpush1.msra.mxu0 0.0
      %2925 = vmatprep.subr.mxu0 0.0
      %2926 = vmatpush1.msra.mxu0 0.0
      %2927 = vmatprep.subr.mxu0 0.0
      %2928 = vmatpush1.msra.mxu0 0.0
      %2929 = vmatprep.subr.mxu0 0.0
      %2930 = vmatpush1.msra.mxu0 0.0
      %2931 = vmatprep.subr.mxu0 0.0
      %2932 = vmatpush1.msra.mxu0 0.0
      %2933 = vmatprep.subr.mxu0 0.0
      %2934 = vmatpush1.msra.mxu0 0.0
      %2935 = vmatprep.subr.mxu0 0.0
      %2936 = vmatpush1.msra.mxu0 0.0
      %2937 = vmatprep.subr.mxu0 0.0
      %2938 = vmatpush1.msra.mxu0 0.0
      %2939 = vmatprep.subr.mxu0 0.0
      %2940 = vmatpush1.msra.mxu0 0.0
      %2941 = vmatprep.subr.mxu0 0.0
      %2942 = vmatpush1.msra.mxu0 0.0
      %2943 = vmatprep.subr.mxu0 0.0
      %2944 = vmatpush1.msra.mxu0 0.0
      %2945 = vmatprep.subr.mxu0 0.0
      %2946 = vmatpush1.msra.mxu0 0.0
      %2947 = vmatprep.subr.mxu0 0.0
      %2948 = vmatpush1.msra.mxu0 0.0
      %2949 = vmatprep.subr.mxu0 0.0
      %2950 = vmatpush1.msra.mxu0 0.0
      %2951 = vmatprep.subr.mxu0 0.0
      %2952 = vmatpush1.msra.mxu0 0.0
      %2953 = vmatprep.subr.mxu0 0.0
      %2954 = vmatpush1.msra.mxu0 0.0
      %2955 = vmatprep.subr.mxu0 0.0
      %2956 = vmatpush1.msra.mxu0 0.0
      %2957 = vmatprep.subr.mxu0 0.0
      %2958 = vmatpush1.msra.mxu0 0.0
      %2959 = vmatprep.subr.mxu0 0.0
      %2960 = vmatpush1.msra.mxu0 0.0
      %2961 = vmatprep.subr.mxu0 0.0
      %2962 = vmatpush1.msra.mxu0 0.0
      %2963 = vmatprep.subr.mxu0 0.0
      %2964 = vmatpush1.msra.mxu0 0.0
      %2965 = vmatprep.subr.mxu0 0.0
      %2966 = vmatpush1.msra.mxu0 0.0
      %2967 = vmatprep.subr.mxu0 0.0
      %2968 = vmatpush1.msra.mxu0 0.0
      %2969 = vmatprep.mubr.f32.mxu0 0.0
      %v2970 = vand.u32 %v2735, 4294901760
      %v2971 = vsub.f32 %v2735, %v2970
      %2972 = vmatmul.mubr.f32.gmra.mrb[0].mxu0 %v2971
      %v2973 = vpop.f32.mrb[0].mxu0
      %v2974 = vadd.f32 %v2897, %v2973
      %v2975 = vpop.f32.mrb[0].mxu0
      %v2976 = vadd.f32 %v2899, %v2975
      %2977 = vdwg.mxu0
      %v2978 = vand.u32 %v2739, 4294901760
      %2979 = vmatprep.subr.mxu0 %v2978
      %v2980 = vand.u32 %v2737, 4294901760
      %2981 = vmatpush1.msra.mxu0 %v2980
      %2982 = vmatprep.subr.mxu0 0.0
      %2983 = vmatpush1.msra.mxu0 0.0
      %2984 = vmatprep.subr.mxu0 0.0
      %2985 = vmatpush1.msra.mxu0 0.0
      %2986 = vmatprep.subr.mxu0 0.0
      %2987 = vmatpush1.msra.mxu0 0.0
      %2988 = vmatprep.subr.mxu0 0.0
      %2989 = vmatpush1.msra.mxu0 0.0
      %2990 = vmatprep.subr.mxu0 0.0
      %2991 = vmatpush1.msra.mxu0 0.0
      %2992 = vmatprep.subr.mxu0 0.0
      %2993 = vmatpush1.msra.mxu0 0.0
      %2994 = vmatprep.subr.mxu0 0.0
      %2995 = vmatpush1.msra.mxu0 0.0
      %2996 = vmatprep.subr.mxu0 0.0
      %2997 = vmatpush1.msra.mxu0 0.0
      %2998 = vmatprep.subr.mxu0 0.0
      %2999 = vmatpush1.msra.mxu0 0.0
      %3000 = vmatprep.subr.mxu0 0.0
      %3001 = vmatpush1.msra.mxu0 0.0
      %3002 = vmatprep.subr.mxu0 0.0
      %3003 = vmatpush1.msra.mxu0 0.0
      %3004 = vmatprep.subr.mxu0 0.0
      %3005 = vmatpush1.msra.mxu0 0.0
      %3006 = vmatprep.subr.mxu0 0.0
      %3007 = vmatpush1.msra.mxu0 0.0
      %3008 = vmatprep.subr.mxu0 0.0
      %3009 = vmatpush1.msra.mxu0 0.0
      %3010 = vmatprep.subr.mxu0 0.0
      %3011 = vmatpush1.msra.mxu0 0.0
      %3012 = vmatprep.subr.mxu0 0.0
      %3013 = vmatpush1.msra.mxu0 0.0
      %3014 = vmatprep.subr.mxu0 0.0
      %3015 = vmatpush1.msra.mxu0 0.0
      %3016 = vmatprep.subr.mxu0 0.0
      %3017 = vmatpush1.msra.mxu0 0.0
      %3018 = vmatprep.subr.mxu0 0.0
      %3019 = vmatpush1.msra.mxu0 0.0
      %3020 = vmatprep.subr.mxu0 0.0
      %3021 = vmatpush1.msra.mxu0 0.0
      %3022 = vmatprep.subr.mxu0 0.0
      %3023 = vmatpush1.msra.mxu0 0.0
      %3024 = vmatprep.subr.mxu0 0.0
      %3025 = vmatpush1.msra.mxu0 0.0
      %3026 = vmatprep.subr.mxu0 0.0
      %3027 = vmatpush1.msra.mxu0 0.0
      %3028 = vmatprep.subr.mxu0 0.0
      %3029 = vmatpush1.msra.mxu0 0.0
      %3030 = vmatprep.subr.mxu0 0.0
      %3031 = vmatpush1.msra.mxu0 0.0
      %3032 = vmatprep.subr.mxu0 0.0
      %3033 = vmatpush1.msra.mxu0 0.0
      %3034 = vmatprep.subr.mxu0 0.0
      %3035 = vmatpush1.msra.mxu0 0.0
      %3036 = vmatprep.subr.mxu0 0.0
      %3037 = vmatpush1.msra.mxu0 0.0
      %3038 = vmatprep.subr.mxu0 0.0
      %3039 = vmatpush1.msra.mxu0 0.0
      %3040 = vmatprep.subr.mxu0 0.0
      %3041 = vmatpush1.msra.mxu0 0.0
      %3042 = vmatprep.subr.mxu0 0.0
      %3043 = vmatpush1.msra.mxu0 0.0
      %3044 = vmatprep.mubr.f32.mxu0 0.0
      %v3045 = vand.u32 %v2735, 4294901760
      %v3046 = vsub.f32 %v2735, %v3045
      %v3047 = vand.u32 %v3046, 4294901760
      %3048 = vmatmul.mubr.f32.gmra.mrb[0].mxu0 %v3047
      %v3049 = vpop.f32.mrb[0].mxu0
      %v3050 = vadd.f32 %v2974, %v3049
      %v3051 = vpop.f32.mrb[0].mxu0
      %v3052 = vadd.f32 %v2976, %v3051
      %3053 = vdwg.mxu0
      %v3054 = vand.u32 %v2739, 4294901760
      %v3055 = vsub.f32 %v2739, %v3054
      %v3056 = vand.u32 %v3055, 4294901760
      %3057 = vmatprep.subr.mxu0 %v3056
      %v3058 = vand.u32 %v2737, 4294901760
      %v3059 = vsub.f32 %v2737, %v3058
      %v3060 = vand.u32 %v3059, 4294901760
      %3061 = vmatpush1.msra.mxu0 %v3060
      %3062 = vmatprep.subr.mxu0 0.0
      %3063 = vmatpush1.msra.mxu0 0.0
      %3064 = vmatprep.subr.mxu0 0.0
      %3065 = vmatpush1.msra.mxu0 0.0
      %3066 = vmatprep.subr.mxu0 0.0
      %3067 = vmatpush1.msra.mxu0 0.0
      %3068 = vmatprep.subr.mxu0 0.0
      %3069 = vmatpush1.msra.mxu0 0.0
      %3070 = vmatprep.subr.mxu0 0.0
      %3071 = vmatpush1.msra.mxu0 0.0
      %3072 = vmatprep.subr.mxu0 0.0
      %3073 = vmatpush1.msra.mxu0 0.0
      %3074 = vmatprep.subr.mxu0 0.0
      %3075 = vmatpush1.msra.mxu0 0.0
      %3076 = vmatprep.subr.mxu0 0.0
      %3077 = vmatpush1.msra.mxu0 0.0
      %3078 = vmatprep.subr.mxu0 0.0
      %3079 = vmatpush1.msra.mxu0 0.0
      %3080 = vmatprep.subr.mxu0 0.0
      %3081 = vmatpush1.msra.mxu0 0.0
      %3082 = vmatprep.subr.mxu0 0.0
      %3083 = vmatpush1.msra.mxu0 0.0
      %3084 = vmatprep.subr.mxu0 0.0
      %3085 = vmatpush1.msra.mxu0 0.0
      %3086 = vmatprep.subr.mxu0 0.0
      %3087 = vmatpush1.msra.mxu0 0.0
      %3088 = vmatprep.subr.mxu0 0.0
      %3089 = vmatpush1.msra.mxu0 0.0
      %3090 = vmatprep.subr.mxu0 0.0
      %3091 = vmatpush1.msra.mxu0 0.0
      %3092 = vmatprep.subr.mxu0 0.0
      %3093 = vmatpush1.msra.mxu0 0.0
      %3094 = vmatprep.subr.mxu0 0.0
      %3095 = vmatpush1.msra.mxu0 0.0
      %3096 = vmatprep.subr.mxu0 0.0
      %3097 = vmatpush1.msra.mxu0 0.0
      %3098 = vmatprep.subr.mxu0 0.0
      %3099 = vmatpush1.msra.mxu0 0.0
      %3100 = vmatprep.subr.mxu0 0.0
      %3101 = vmatpush1.msra.mxu0 0.0
      %3102 = vmatprep.subr.mxu0 0.0
      %3103 = vmatpush1.msra.mxu0 0.0
      %3104 = vmatprep.subr.mxu0 0.0
      %3105 = vmatpush1.msra.mxu0 0.0
      %3106 = vmatprep.subr.mxu0 0.0
      %3107 = vmatpush1.msra.mxu0 0.0
      %3108 = vmatprep.subr.mxu0 0.0
      %3109 = vmatpush1.msra.mxu0 0.0
      %3110 = vmatprep.subr.mxu0 0.0
      %3111 = vmatpush1.msra.mxu0 0.0
      %3112 = vmatprep.subr.mxu0 0.0
      %3113 = vmatpush1.msra.mxu0 0.0
      %3114 = vmatprep.subr.mxu0 0.0
      %3115 = vmatpush1.msra.mxu0 0.0
      %3116 = vmatprep.subr.mxu0 0.0
      %3117 = vmatpush1.msra.mxu0 0.0
      %3118 = vmatprep.subr.mxu0 0.0
      %3119 = vmatpush1.msra.mxu0 0.0
      %3120 = vmatprep.subr.mxu0 0.0
      %3121 = vmatpush1.msra.mxu0 0.0
      %3122 = vmatprep.subr.mxu0 0.0
      %3123 = vmatpush1.msra.mxu0 0.0
      %3124 = vmatprep.mubr.f32.mxu0 0.0
      %v3125 = vand.u32 %v2735, 4294901760
      %3126 = vmatmul.mubr.f32.gmra.mrb[0].mxu0 %v3125
      %v3127 = vpop.f32.mrb[0].mxu0
      %v3128 = vadd.f32 %v3050, %v3127
      %v3129 = vpop.f32.mrb[0].mxu0
      %v3130 = vadd.f32 %v3052, %v3129
      %3131 = vdwg.mxu0
      %v3132 = vand.u32 %v2739, 4294901760
      %3133 = vmatprep.subr.mxu0 %v3132
      %v3134 = vand.u32 %v2737, 4294901760
      %3135 = vmatpush1.msra.mxu0 %v3134
      %3136 = vmatprep.subr.mxu0 0.0
      %3137 = vmatpush1.msra.mxu0 0.0
      %3138 = vmatprep.subr.mxu0 0.0
      %3139 = vmatpush1.msra.mxu0 0.0
      %3140 = vmatprep.subr.mxu0 0.0
      %3141 = vmatpush1.msra.mxu0 0.0
      %3142 = vmatprep.subr.mxu0 0.0
      %3143 = vmatpush1.msra.mxu0 0.0
      %3144 = vmatprep.subr.mxu0 0.0
      %3145 = vmatpush1.msra.mxu0 0.0
      %3146 = vmatprep.subr.mxu0 0.0
      %3147 = vmatpush1.msra.mxu0 0.0
      %3148 = vmatprep.subr.mxu0 0.0
      %3149 = vmatpush1.msra.mxu0 0.0
      %3150 = vmatprep.subr.mxu0 0.0
      %3151 = vmatpush1.msra.mxu0 0.0
      %3152 = vmatprep.subr.mxu0 0.0
      %3153 = vmatpush1.msra.mxu0 0.0
      %3154 = vmatprep.subr.mxu0 0.0
      %3155 = vmatpush1.msra.mxu0 0.0
      %3156 = vmatprep.subr.mxu0 0.0
      %3157 = vmatpush1.msra.mxu0 0.0
      %3158 = vmatprep.subr.mxu0 0.0
      %3159 = vmatpush1.msra.mxu0 0.0
      %3160 = vmatprep.subr.mxu0 0.0
      %3161 = vmatpush1.msra.mxu0 0.0
      %3162 = vmatprep.subr.mxu0 0.0
      %3163 = vmatpush1.msra.mxu0 0.0
      %3164 = vmatprep.subr.mxu0 0.0
      %3165 = vmatpush1.msra.mxu0 0.0
      %3166 = vmatprep.subr.mxu0 0.0
      %3167 = vmatpush1.msra.mxu0 0.0
      %3168 = vmatprep.subr.mxu0 0.0
      %3169 = vmatpush1.msra.mxu0 0.0
      %3170 = vmatprep.subr.mxu0 0.0
      %3171 = vmatpush1.msra.mxu0 0.0
      %3172 = vmatprep.subr.mxu0 0.0
      %3173 = vmatpush1.msra.mxu0 0.0
      %3174 = vmatprep.subr.mxu0 0.0
      %3175 = vmatpush1.msra.mxu0 0.0
      %3176 = vmatprep.subr.mxu0 0.0
      %3177 = vmatpush1.msra.mxu0 0.0
      %3178 = vmatprep.subr.mxu0 0.0
      %3179 = vmatpush1.msra.mxu0 0.0
      %3180 = vmatprep.subr.mxu0 0.0
      %3181 = vmatpush1.msra.mxu0 0.0
      %3182 = vmatprep.subr.mxu0 0.0
      %3183 = vmatpush1.msra.mxu0 0.0
      %3184 = vmatprep.subr.mxu0 0.0
      %3185 = vmatpush1.msra.mxu0 0.0
      %3186 = vmatprep.subr.mxu0 0.0
      %3187 = vmatpush1.msra.mxu0 0.0
      %3188 = vmatprep.subr.mxu0 0.0
      %3189 = vmatpush1.msra.mxu0 0.0
      %3190 = vmatprep.subr.mxu0 0.0
      %3191 = vmatpush1.msra.mxu0 0.0
      %3192 = vmatprep.subr.mxu0 0.0
      %3193 = vmatpush1.msra.mxu0 0.0
      %3194 = vmatprep.subr.mxu0 0.0
      %3195 = vmatpush1.msra.mxu0 0.0
      %3196 = vmatprep.subr.mxu0 0.0
      %3197 = vmatpush1.msra.mxu0 0.0
      %3198 = vmatprep.mubr.f32.mxu0 0.0
      %v3199 = vand.u32 %v2735, 4294901760
      %3200 = vmatmul.mubr.f32.gmra.mrb[0].mxu0 %v3199
      %v3201 = vpop.f32.mrb[0].mxu0
      %v3202 = vadd.f32 %v3128, %v3201
      %v3203 = vpop.f32.mrb[0].mxu0
      %v3204 = vadd.f32 %v3130, %v3203
      %3205 = vdwg.mxu0
      %v3206 = vadd.f32 %v2709, %v3202
      %v3207 = vadd.f32 %v2710, %v3204
      %v3208 = vld [vmem:[#allocation2 + $0x4] sm:$0xff]
      %v3209 = vld [vmem:[#allocation2 + $0xc] sm:$0xf]
      %3210 = vrot.lane.b32.xlu0 %v249, 15
      %v3211 = vpop.permute.xlu0 %3210
      %v3212 = vrot.slane %v3211, 4
      %v3213 = vsel %vm1256, %v3212, %v3211
      %v3216 = vmul.f32 %v3208, %v3213
      %v3217 = vmul.f32 %v3209, %v3212
      %s3218 = scalar_lea.vmem %s1, 48
      %v3219 = vld [vmem:[%s3218] sm:$0xff]
      %v3222 = vcombine.high %v3216, %v3216
      %3223 = vrot.lane.b32.xlu0 %v3216, 113
      %v3224 = vpop.permute.xlu0 %3223
      %3225 = vrot.lane.b32.xlu0 %v3222, 113
      %v3226 = vpop.permute.xlu0 %3225
      %3227 = vrot.lane.b32.xlu0 %v3217, 113
      %v3228 = vpop.permute.xlu0 %3227
      %v3229 = vsel %vm1239, %v3224, %v3226
      %v3230 = vsel %vm1239, %v3226, %v3228
      %v3232 = vsel %vm274, %v3219, 0
      %v3234 = vsel %vm238, %v3229, 0
      %v3236 = vsel %vm238, %v3230, 0
      %v3238 = vand.u32 %v3236, 4294901760
      %3239 = vmatprep.subr.mxu0 %v3238
      %v3240 = vand.u32 %v3234, 4294901760
      %3241 = vmatpush1.msra.mxu0 %v3240
      %3242 = vmatprep.subr.mxu0 0.0
      %3243 = vmatpush1.msra.mxu0 0.0
      %3244 = vmatprep.subr.mxu0 0.0
      %3245 = vmatpush1.msra.mxu0 0.0
      %3246 = vmatprep.subr.mxu0 0.0
      %3247 = vmatpush1.msra.mxu0 0.0
      %3248 = vmatprep.subr.mxu0 0.0
      %3249 = vmatpush1.msra.mxu0 0.0
      %3250 = vmatprep.subr.mxu0 0.0
      %3251 = vmatpush1.msra.mxu0 0.0
      %3252 = vmatprep.subr.mxu0 0.0
      %3253 = vmatpush1.msra.mxu0 0.0
      %3254 = vmatprep.subr.mxu0 0.0
      %3255 = vmatpush1.msra.mxu0 0.0
      %3256 = vmatprep.subr.mxu0 0.0
      %3257 = vmatpush1.msra.mxu0 0.0
      %3258 = vmatprep.subr.mxu0 0.0
      %3259 = vmatpush1.msra.mxu0 0.0
      %3260 = vmatprep.subr.mxu0 0.0
      %3261 = vmatpush1.msra.mxu0 0.0
      %3262 = vmatprep.subr.mxu0 0.0
      %3263 = vmatpush1.msra.mxu0 0.0
      %3264 = vmatprep.subr.mxu0 0.0
      %3265 = vmatpush1.msra.mxu0 0.0
      %3266 = vmatprep.subr.mxu0 0.0
      %3267 = vmatpush1.msra.mxu0 0.0
      %3268 = vmatprep.subr.mxu0 0.0
      %3269 = vmatpush1.msra.mxu0 0.0
      %3270 = vmatprep.subr.mxu0 0.0
      %3271 = vmatpush1.msra.mxu0 0.0
      %3272 = vmatprep.subr.mxu0 0.0
      %3273 = vmatpush1.msra.mxu0 0.0
      %3274 = vmatprep.subr.mxu0 0.0
      %3275 = vmatpush1.msra.mxu0 0.0
      %3276 = vmatprep.subr.mxu0 0.0
      %3277 = vmatpush1.msra.mxu0 0.0
      %3278 = vmatprep.subr.mxu0 0.0
      %3279 = vmatpush1.msra.mxu0 0.0
      %3280 = vmatprep.subr.mxu0 0.0
      %3281 = vmatpush1.msra.mxu0 0.0
      %3282 = vmatprep.subr.mxu0 0.0
      %3283 = vmatpush1.msra.mxu0 0.0
      %3284 = vmatprep.subr.mxu0 0.0
      %3285 = vmatpush1.msra.mxu0 0.0
      %3286 = vmatprep.subr.mxu0 0.0
      %3287 = vmatpush1.msra.mxu0 0.0
      %3288 = vmatprep.subr.mxu0 0.0
      %3289 = vmatpush1.msra.mxu0 0.0
      %3290 = vmatprep.subr.mxu0 0.0
      %3291 = vmatpush1.msra.mxu0 0.0
      %3292 = vmatprep.subr.mxu0 0.0
      %3293 = vmatpush1.msra.mxu0 0.0
      %3294 = vmatprep.subr.mxu0 0.0
      %3295 = vmatpush1.msra.mxu0 0.0
      %3296 = vmatprep.subr.mxu0 0.0
      %3297 = vmatpush1.msra.mxu0 0.0
      %3298 = vmatprep.subr.mxu0 0.0
      %3299 = vmatpush1.msra.mxu0 0.0
      %3300 = vmatprep.subr.mxu0 0.0
      %3301 = vmatpush1.msra.mxu0 0.0
      %3302 = vmatprep.subr.mxu0 0.0
      %3303 = vmatpush1.msra.mxu0 0.0
      %3304 = vmatprep.mubr.f32.mxu0 0.0
      %v3305 = vand.u32 %v3232, 4294901760
      %v3306 = vsub.f32 %v3232, %v3305
      %v3307 = vand.u32 %v3306, 4294901760
      %v3308 = vsub.f32 %v3306, %v3307
      %v3309 = vand.u32 %v3308, 4294901760
      %3310 = vmatmul.mubr.f32.gmra.mrb[0].mxu0 %v3309
      %v3311 = vpop.f32.mrb[0].mxu0
      %v3312 = vadd.f32 0.0, %v3311
      %v3313 = vpop.f32.mrb[0].mxu0
      %v3314 = vadd.f32 0.0, %v3313
      %3315 = vdwg.mxu0
      %v3316 = vand.u32 %v3236, 4294901760
      %v3317 = vsub.f32 %v3236, %v3316
      %v3318 = vand.u32 %v3317, 4294901760
      %v3319 = vsub.f32 %v3317, %v3318
      %v3320 = vand.u32 %v3319, 4294901760
      %3321 = vmatprep.subr.mxu0 %v3320
      %v3322 = vand.u32 %v3234, 4294901760
      %v3323 = vsub.f32 %v3234, %v3322
      %v3324 = vand.u32 %v3323, 4294901760
      %v3325 = vsub.f32 %v3323, %v3324
      %v3326 = vand.u32 %v3325, 4294901760
      %3327 = vmatpush1.msra.mxu0 %v3326
      %3328 = vmatprep.subr.mxu0 0.0
      %3329 = vmatpush1.msra.mxu0 0.0
      %3330 = vmatprep.subr.mxu0 0.0
      %3331 = vmatpush1.msra.mxu0 0.0
      %3332 = vmatprep.subr.mxu0 0.0
      %3333 = vmatpush1.msra.mxu0 0.0
      %3334 = vmatprep.subr.mxu0 0.0
      %3335 = vmatpush1.msra.mxu0 0.0
      %3336 = vmatprep.subr.mxu0 0.0
      %3337 = vmatpush1.msra.mxu0 0.0
      %3338 = vmatprep.subr.mxu0 0.0
      %3339 = vmatpush1.msra.mxu0 0.0
      %3340 = vmatprep.subr.mxu0 0.0
      %3341 = vmatpush1.msra.mxu0 0.0
      %3342 = vmatprep.subr.mxu0 0.0
      %3343 = vmatpush1.msra.mxu0 0.0
      %3344 = vmatprep.subr.mxu0 0.0
      %3345 = vmatpush1.msra.mxu0 0.0
      %3346 = vmatprep.subr.mxu0 0.0
      %3347 = vmatpush1.msra.mxu0 0.0
      %3348 = vmatprep.subr.mxu0 0.0
      %3349 = vmatpush1.msra.mxu0 0.0
      %3350 = vmatprep.subr.mxu0 0.0
      %3351 = vmatpush1.msra.mxu0 0.0
      %3352 = vmatprep.subr.mxu0 0.0
      %3353 = vmatpush1.msra.mxu0 0.0
      %3354 = vmatprep.subr.mxu0 0.0
      %3355 = vmatpush1.msra.mxu0 0.0
      %3356 = vmatprep.subr.mxu0 0.0
      %3357 = vmatpush1.msra.mxu0 0.0
      %3358 = vmatprep.subr.mxu0 0.0
      %3359 = vmatpush1.msra.mxu0 0.0
      %3360 = vmatprep.subr.mxu0 0.0
      %3361 = vmatpush1.msra.mxu0 0.0
      %3362 = vmatprep.subr.mxu0 0.0
      %3363 = vmatpush1.msra.mxu0 0.0
      %3364 = vmatprep.subr.mxu0 0.0
      %3365 = vmatpush1.msra.mxu0 0.0
      %3366 = vmatprep.subr.mxu0 0.0
      %3367 = vmatpush1.msra.mxu0 0.0
      %3368 = vmatprep.subr.mxu0 0.0
      %3369 = vmatpush1.msra.mxu0 0.0
      %3370 = vmatprep.subr.mxu0 0.0
      %3371 = vmatpush1.msra.mxu0 0.0
      %3372 = vmatprep.subr.mxu0 0.0
      %3373 = vmatpush1.msra.mxu0 0.0
      %3374 = vmatprep.subr.mxu0 0.0
      %3375 = vmatpush1.msra.mxu0 0.0
      %3376 = vmatprep.subr.mxu0 0.0
      %3377 = vmatpush1.msra.mxu0 0.0
      %3378 = vmatprep.subr.mxu0 0.0
      %3379 = vmatpush1.msra.mxu0 0.0
      %3380 = vmatprep.subr.mxu0 0.0
      %3381 = vmatpush1.msra.mxu0 0.0
      %3382 = vmatprep.subr.mxu0 0.0
      %3383 = vmatpush1.msra.mxu0 0.0
      %3384 = vmatprep.subr.mxu0 0.0
      %3385 = vmatpush1.msra.mxu0 0.0
      %3386 = vmatprep.subr.mxu0 0.0
      %3387 = vmatpush1.msra.mxu0 0.0
      %3388 = vmatprep.subr.mxu0 0.0
      %3389 = vmatpush1.msra.mxu0 0.0
      %3390 = vmatprep.mubr.f32.mxu0 0.0
      %v3391 = vand.u32 %v3232, 4294901760
      %3392 = vmatmul.mubr.f32.gmra.mrb[0].mxu0 %v3391
      %v3393 = vpop.f32.mrb[0].mxu0
      %v3394 = vadd.f32 %v3312, %v3393
      %v3395 = vpop.f32.mrb[0].mxu0
      %v3396 = vadd.f32 %v3314, %v3395
      %3397 = vdwg.mxu0
      %v3398 = vand.u32 %v3236, 4294901760
      %v3399 = vsub.f32 %v3236, %v3398
      %3400 = vmatprep.subr.mxu0 %v3399
      %v3401 = vand.u32 %v3234, 4294901760
      %v3402 = vsub.f32 %v3234, %v3401
      %3403 = vmatpush1.msra.mxu0 %v3402
      %3404 = vmatprep.subr.mxu0 0.0
      %3405 = vmatpush1.msra.mxu0 0.0
      %3406 = vmatprep.subr.mxu0 0.0
      %3407 = vmatpush1.msra.mxu0 0.0
      %3408 = vmatprep.subr.mxu0 0.0
      %3409 = vmatpush1.msra.mxu0 0.0
      %3410 = vmatprep.subr.mxu0 0.0
      %3411 = vmatpush1.msra.mxu0 0.0
      %3412 = vmatprep.subr.mxu0 0.0
      %3413 = vmatpush1.msra.mxu0 0.0
      %3414 = vmatprep.subr.mxu0 0.0
      %3415 = vmatpush1.msra.mxu0 0.0
      %3416 = vmatprep.subr.mxu0 0.0
      %3417 = vmatpush1.msra.mxu0 0.0
      %3418 = vmatprep.subr.mxu0 0.0
      %3419 = vmatpush1.msra.mxu0 0.0
      %3420 = vmatprep.subr.mxu0 0.0
      %3421 = vmatpush1.msra.mxu0 0.0
      %3422 = vmatprep.subr.mxu0 0.0
      %3423 = vmatpush1.msra.mxu0 0.0
      %3424 = vmatprep.subr.mxu0 0.0
      %3425 = vmatpush1.msra.mxu0 0.0
      %3426 = vmatprep.subr.mxu0 0.0
      %3427 = vmatpush1.msra.mxu0 0.0
      %3428 = vmatprep.subr.mxu0 0.0
      %3429 = vmatpush1.msra.mxu0 0.0
      %3430 = vmatprep.subr.mxu0 0.0
      %3431 = vmatpush1.msra.mxu0 0.0
      %3432 = vmatprep.subr.mxu0 0.0
      %3433 = vmatpush1.msra.mxu0 0.0
      %3434 = vmatprep.subr.mxu0 0.0
      %3435 = vmatpush1.msra.mxu0 0.0
      %3436 = vmatprep.subr.mxu0 0.0
      %3437 = vmatpush1.msra.mxu0 0.0
      %3438 = vmatprep.subr.mxu0 0.0
      %3439 = vmatpush1.msra.mxu0 0.0
      %3440 = vmatprep.subr.mxu0 0.0
      %3441 = vmatpush1.msra.mxu0 0.0
      %3442 = vmatprep.subr.mxu0 0.0
      %3443 = vmatpush1.msra.mxu0 0.0
      %3444 = vmatprep.subr.mxu0 0.0
      %3445 = vmatpush1.msra.mxu0 0.0
      %3446 = vmatprep.subr.mxu0 0.0
      %3447 = vmatpush1.msra.mxu0 0.0
      %3448 = vmatprep.subr.mxu0 0.0
      %3449 = vmatpush1.msra.mxu0 0.0
      %3450 = vmatprep.subr.mxu0 0.0
      %3451 = vmatpush1.msra.mxu0 0.0
      %3452 = vmatprep.subr.mxu0 0.0
      %3453 = vmatpush1.msra.mxu0 0.0
      %3454 = vmatprep.subr.mxu0 0.0
      %3455 = vmatpush1.msra.mxu0 0.0
      %3456 = vmatprep.subr.mxu0 0.0
      %3457 = vmatpush1.msra.mxu0 0.0
      %3458 = vmatprep.subr.mxu0 0.0
      %3459 = vmatpush1.msra.mxu0 0.0
      %3460 = vmatprep.subr.mxu0 0.0
      %3461 = vmatpush1.msra.mxu0 0.0
      %3462 = vmatprep.subr.mxu0 0.0
      %3463 = vmatpush1.msra.mxu0 0.0
      %3464 = vmatprep.subr.mxu0 0.0
      %3465 = vmatpush1.msra.mxu0 0.0
      %3466 = vmatprep.mubr.f32.mxu0 0.0
      %v3467 = vand.u32 %v3232, 4294901760
      %v3468 = vsub.f32 %v3232, %v3467
      %3469 = vmatmul.mubr.f32.gmra.mrb[0].mxu0 %v3468
      %v3470 = vpop.f32.mrb[0].mxu0
      %v3471 = vadd.f32 %v3394, %v3470
      %v3472 = vpop.f32.mrb[0].mxu0
      %v3473 = vadd.f32 %v3396, %v3472
      %3474 = vdwg.mxu0
      %v3475 = vand.u32 %v3236, 4294901760
      %3476 = vmatprep.subr.mxu0 %v3475
      %v3477 = vand.u32 %v3234, 4294901760
      %3478 = vmatpush1.msra.mxu0 %v3477
      %3479 = vmatprep.subr.mxu0 0.0
      %3480 = vmatpush1.msra.mxu0 0.0
      %3481 = vmatprep.subr.mxu0 0.0
      %3482 = vmatpush1.msra.mxu0 0.0
      %3483 = vmatprep.subr.mxu0 0.0
      %3484 = vmatpush1.msra.mxu0 0.0
      %3485 = vmatprep.subr.mxu0 0.0
      %3486 = vmatpush1.msra.mxu0 0.0
      %3487 = vmatprep.subr.mxu0 0.0
      %3488 = vmatpush1.msra.mxu0 0.0
      %3489 = vmatprep.subr.mxu0 0.0
      %3490 = vmatpush1.msra.mxu0 0.0
      %3491 = vmatprep.subr.mxu0 0.0
      %3492 = vmatpush1.msra.mxu0 0.0
      %3493 = vmatprep.subr.mxu0 0.0
      %3494 = vmatpush1.msra.mxu0 0.0
      %3495 = vmatprep.subr.mxu0 0.0
      %3496 = vmatpush1.msra.mxu0 0.0
      %3497 = vmatprep.subr.mxu0 0.0
      %3498 = vmatpush1.msra.mxu0 0.0
      %3499 = vmatprep.subr.mxu0 0.0
      %3500 = vmatpush1.msra.mxu0 0.0
      %3501 = vmatprep.subr.mxu0 0.0
      %3502 = vmatpush1.msra.mxu0 0.0
      %3503 = vmatprep.subr.mxu0 0.0
      %3504 = vmatpush1.msra.mxu0 0.0
      %3505 = vmatprep.subr.mxu0 0.0
      %3506 = vmatpush1.msra.mxu0 0.0
      %3507 = vmatprep.subr.mxu0 0.0
      %3508 = vmatpush1.msra.mxu0 0.0
      %3509 = vmatprep.subr.mxu0 0.0
      %3510 = vmatpush1.msra.mxu0 0.0
      %3511 = vmatprep.subr.mxu0 0.0
      %3512 = vmatpush1.msra.mxu0 0.0
      %3513 = vmatprep.subr.mxu0 0.0
      %3514 = vmatpush1.msra.mxu0 0.0
      %3515 = vmatprep.subr.mxu0 0.0
      %3516 = vmatpush1.msra.mxu0 0.0
      %3517 = vmatprep.subr.mxu0 0.0
      %3518 = vmatpush1.msra.mxu0 0.0
      %3519 = vmatprep.subr.mxu0 0.0
      %3520 = vmatpush1.msra.mxu0 0.0
      %3521 = vmatprep.subr.mxu0 0.0
      %3522 = vmatpush1.msra.mxu0 0.0
      %3523 = vmatprep.subr.mxu0 0.0
      %3524 = vmatpush1.msra.mxu0 0.0
      %3525 = vmatprep.subr.mxu0 0.0
      %3526 = vmatpush1.msra.mxu0 0.0
      %3527 = vmatprep.subr.mxu0 0.0
      %3528 = vmatpush1.msra.mxu0 0.0
      %3529 = vmatprep.subr.mxu0 0.0
      %3530 = vmatpush1.msra.mxu0 0.0
      %3531 = vmatprep.subr.mxu0 0.0
      %3532 = vmatpush1.msra.mxu0 0.0
      %3533 = vmatprep.subr.mxu0 0.0
      %3534 = vmatpush1.msra.mxu0 0.0
      %3535 = vmatprep.subr.mxu0 0.0
      %3536 = vmatpush1.msra.mxu0 0.0
      %3537 = vmatprep.subr.mxu0 0.0
      %3538 = vmatpush1.msra.mxu0 0.0
      %3539 = vmatprep.subr.mxu0 0.0
      %3540 = vmatpush1.msra.mxu0 0.0
      %3541 = vmatprep.mubr.f32.mxu0 0.0
      %v3542 = vand.u32 %v3232, 4294901760
      %v3543 = vsub.f32 %v3232, %v3542
      %v3544 = vand.u32 %v3543, 4294901760
      %3545 = vmatmul.mubr.f32.gmra.mrb[0].mxu0 %v3544
      %v3546 = vpop.f32.mrb[0].mxu0
      %v3547 = vadd.f32 %v3471, %v3546
      %v3548 = vpop.f32.mrb[0].mxu0
      %v3549 = vadd.f32 %v3473, %v3548
      %3550 = vdwg.mxu0
      %v3551 = vand.u32 %v3236, 4294901760
      %v3552 = vsub.f32 %v3236, %v3551
      %v3553 = vand.u32 %v3552, 4294901760
      %3554 = vmatprep.subr.mxu0 %v3553
      %v3555 = vand.u32 %v3234, 4294901760
      %v3556 = vsub.f32 %v3234, %v3555
      %v3557 = vand.u32 %v3556, 4294901760
      %3558 = vmatpush1.msra.mxu0 %v3557
      %3559 = vmatprep.subr.mxu0 0.0
      %3560 = vmatpush1.msra.mxu0 0.0
      %3561 = vmatprep.subr.mxu0 0.0
      %3562 = vmatpush1.msra.mxu0 0.0
      %3563 = vmatprep.subr.mxu0 0.0
      %3564 = vmatpush1.msra.mxu0 0.0
      %3565 = vmatprep.subr.mxu0 0.0
      %3566 = vmatpush1.msra.mxu0 0.0
      %3567 = vmatprep.subr.mxu0 0.0
      %3568 = vmatpush1.msra.mxu0 0.0
      %3569 = vmatprep.subr.mxu0 0.0
      %3570 = vmatpush1.msra.mxu0 0.0
      %3571 = vmatprep.subr.mxu0 0.0
      %3572 = vmatpush1.msra.mxu0 0.0
      %3573 = vmatprep.subr.mxu0 0.0
      %3574 = vmatpush1.msra.mxu0 0.0
      %3575 = vmatprep.subr.mxu0 0.0
      %3576 = vmatpush1.msra.mxu0 0.0
      %3577 = vmatprep.subr.mxu0 0.0
      %3578 = vmatpush1.msra.mxu0 0.0
      %3579 = vmatprep.subr.mxu0 0.0
      %3580 = vmatpush1.msra.mxu0 0.0
      %3581 = vmatprep.subr.mxu0 0.0
      %3582 = vmatpush1.msra.mxu0 0.0
      %3583 = vmatprep.subr.mxu0 0.0
      %3584 = vmatpush1.msra.mxu0 0.0
      %3585 = vmatprep.subr.mxu0 0.0
      %3586 = vmatpush1.msra.mxu0 0.0
      %3587 = vmatprep.subr.mxu0 0.0
      %3588 = vmatpush1.msra.mxu0 0.0
      %3589 = vmatprep.subr.mxu0 0.0
      %3590 = vmatpush1.msra.mxu0 0.0
      %3591 = vmatprep.subr.mxu0 0.0
      %3592 = vmatpush1.msra.mxu0 0.0
      %3593 = vmatprep.subr.mxu0 0.0
      %3594 = vmatpush1.msra.mxu0 0.0
      %3595 = vmatprep.subr.mxu0 0.0
      %3596 = vmatpush1.msra.mxu0 0.0
      %3597 = vmatprep.subr.mxu0 0.0
      %3598 = vmatpush1.msra.mxu0 0.0
      %3599 = vmatprep.subr.mxu0 0.0
      %3600 = vmatpush1.msra.mxu0 0.0
      %3601 = vmatprep.subr.mxu0 0.0
      %3602 = vmatpush1.msra.mxu0 0.0
      %3603 = vmatprep.subr.mxu0 0.0
      %3604 = vmatpush1.msra.mxu0 0.0
      %3605 = vmatprep.subr.mxu0 0.0
      %3606 = vmatpush1.msra.mxu0 0.0
      %3607 = vmatprep.subr.mxu0 0.0
      %3608 = vmatpush1.msra.mxu0 0.0
      %3609 = vmatprep.subr.mxu0 0.0
      %3610 = vmatpush1.msra.mxu0 0.0
      %3611 = vmatprep.subr.mxu0 0.0
      %3612 = vmatpush1.msra.mxu0 0.0
      %3613 = vmatprep.subr.mxu0 0.0
      %3614 = vmatpush1.msra.mxu0 0.0
      %3615 = vmatprep.subr.mxu0 0.0
      %3616 = vmatpush1.msra.mxu0 0.0
      %3617 = vmatprep.subr.mxu0 0.0
      %3618 = vmatpush1.msra.mxu0 0.0
      %3619 = vmatprep.subr.mxu0 0.0
      %3620 = vmatpush1.msra.mxu0 0.0
      %3621 = vmatprep.mubr.f32.mxu0 0.0
      %v3622 = vand.u32 %v3232, 4294901760
      %3623 = vmatmul.mubr.f32.gmra.mrb[0].mxu0 %v3622
      %v3624 = vpop.f32.mrb[0].mxu0
      %v3625 = vadd.f32 %v3547, %v3624
      %v3626 = vpop.f32.mrb[0].mxu0
      %v3627 = vadd.f32 %v3549, %v3626
      %3628 = vdwg.mxu0
      %v3629 = vand.u32 %v3236, 4294901760
      %3630 = vmatprep.subr.mxu0 %v3629
      %v3631 = vand.u32 %v3234, 4294901760
      %3632 = vmatpush1.msra.mxu0 %v3631
      %3633 = vmatprep.subr.mxu0 0.0
      %3634 = vmatpush1.msra.mxu0 0.0
      %3635 = vmatprep.subr.mxu0 0.0
      %3636 = vmatpush1.msra.mxu0 0.0
      %3637 = vmatprep.subr.mxu0 0.0
      %3638 = vmatpush1.msra.mxu0 0.0
      %3639 = vmatprep.subr.mxu0 0.0
      %3640 = vmatpush1.msra.mxu0 0.0
      %3641 = vmatprep.subr.mxu0 0.0
      %3642 = vmatpush1.msra.mxu0 0.0
      %3643 = vmatprep.subr.mxu0 0.0
      %3644 = vmatpush1.msra.mxu0 0.0
      %3645 = vmatprep.subr.mxu0 0.0
      %3646 = vmatpush1.msra.mxu0 0.0
      %3647 = vmatprep.subr.mxu0 0.0
      %3648 = vmatpush1.msra.mxu0 0.0
      %3649 = vmatprep.subr.mxu0 0.0
      %3650 = vmatpush1.msra.mxu0 0.0
      %3651 = vmatprep.subr.mxu0 0.0
      %3652 = vmatpush1.msra.mxu0 0.0
      %3653 = vmatprep.subr.mxu0 0.0
      %3654 = vmatpush1.msra.mxu0 0.0
      %3655 = vmatprep.subr.mxu0 0.0
      %3656 = vmatpush1.msra.mxu0 0.0
      %3657 = vmatprep.subr.mxu0 0.0
      %3658 = vmatpush1.msra.mxu0 0.0
      %3659 = vmatprep.subr.mxu0 0.0
      %3660 = vmatpush1.msra.mxu0 0.0
      %3661 = vmatprep.subr.mxu0 0.0
      %3662 = vmatpush1.msra.mxu0 0.0
      %3663 = vmatprep.subr.mxu0 0.0
      %3664 = vmatpush1.msra.mxu0 0.0
      %3665 = vmatprep.subr.mxu0 0.0
      %3666 = vmatpush1.msra.mxu0 0.0
      %3667 = vmatprep.subr.mxu0 0.0
      %3668 = vmatpush1.msra.mxu0 0.0
      %3669 = vmatprep.subr.mxu0 0.0
      %3670 = vmatpush1.msra.mxu0 0.0
      %3671 = vmatprep.subr.mxu0 0.0
      %3672 = vmatpush1.msra.mxu0 0.0
      %3673 = vmatprep.subr.mxu0 0.0
      %3674 = vmatpush1.msra.mxu0 0.0
      %3675 = vmatprep.subr.mxu0 0.0
      %3676 = vmatpush1.msra.mxu0 0.0
      %3677 = vmatprep.subr.mxu0 0.0
      %3678 = vmatpush1.msra.mxu0 0.0
      %3679 = vmatprep.subr.mxu0 0.0
      %3680 = vmatpush1.msra.mxu0 0.0
      %3681 = vmatprep.subr.mxu0 0.0
      %3682 = vmatpush1.msra.mxu0 0.0
      %3683 = vmatprep.subr.mxu0 0.0
      %3684 = vmatpush1.msra.mxu0 0.0
      %3685 = vmatprep.subr.mxu0 0.0
      %3686 = vmatpush1.msra.mxu0 0.0
      %3687 = vmatprep.subr.mxu0 0.0
      %3688 = vmatpush1.msra.mxu0 0.0
      %3689 = vmatprep.subr.mxu0 0.0
      %3690 = vmatpush1.msra.mxu0 0.0
      %3691 = vmatprep.subr.mxu0 0.0
      %3692 = vmatpush1.msra.mxu0 0.0
      %3693 = vmatprep.subr.mxu0 0.0
      %3694 = vmatpush1.msra.mxu0 0.0
      %3695 = vmatprep.mubr.f32.mxu0 0.0
      %v3696 = vand.u32 %v3232, 4294901760
      %3697 = vmatmul.mubr.f32.gmra.mrb[0].mxu0 %v3696
      %v3698 = vpop.f32.mrb[0].mxu0
      %v3699 = vadd.f32 %v3625, %v3698
      %v3700 = vpop.f32.mrb[0].mxu0
      %v3701 = vadd.f32 %v3627, %v3700
      %3702 = vdwg.mxu0
      %v3703 = vadd.f32 %v3206, %v3699
      %v3704 = vadd.f32 %v3207, %v3701
      %v3705 = vld [vmem:[#allocation2 + $0x4] sm:$0xff]
      %v3706 = vld [vmem:[#allocation2 + $0xc] sm:$0xf]
      %s3707 = scalar_lea.vmem %s1, 56
      %v3708 = vld [vmem:[%s3707] sm:$0xff]
      %v3711 = vcombine.high %v3705, %v3705
      %3712 = vrot.lane.b32.xlu0 %v3705, 112
      %v3713 = vpop.permute.xlu0 %3712
      %3714 = vrot.lane.b32.xlu0 %v3711, 112
      %v3715 = vpop.permute.xlu0 %3714
      %3716 = vrot.lane.b32.xlu0 %v3706, 112
      %v3717 = vpop.permute.xlu0 %3716
      %vm3718 = vcmask 916480
      %v3719 = vsel %vm3718, %v3713, %v3715
      %v3720 = vsel %vm3718, %v3715, %v3717
      %v3722 = vsel %vm274, %v3708, 0
      %v3724 = vsel %vm238, %v3719, 0
      %v3726 = vsel %vm238, %v3720, 0
      %v3728 = vand.u32 %v3726, 4294901760
      %3729 = vmatprep.subr.mxu0 %v3728
      %v3730 = vand.u32 %v3724, 4294901760
      %3731 = vmatpush1.msra.mxu0 %v3730
      %3732 = vmatprep.subr.mxu0 0.0
      %3733 = vmatpush1.msra.mxu0 0.0
      %3734 = vmatprep.subr.mxu0 0.0
      %3735 = vmatpush1.msra.mxu0 0.0
      %3736 = vmatprep.subr.mxu0 0.0
      %3737 = vmatpush1.msra.mxu0 0.0
      %3738 = vmatprep.subr.mxu0 0.0
      %3739 = vmatpush1.msra.mxu0 0.0
      %3740 = vmatprep.subr.mxu0 0.0
      %3741 = vmatpush1.msra.mxu0 0.0
      %3742 = vmatprep.subr.mxu0 0.0
      %3743 = vmatpush1.msra.mxu0 0.0
      %3744 = vmatprep.subr.mxu0 0.0
      %3745 = vmatpush1.msra.mxu0 0.0
      %3746 = vmatprep.subr.mxu0 0.0
      %3747 = vmatpush1.msra.mxu0 0.0
      %3748 = vmatprep.subr.mxu0 0.0
      %3749 = vmatpush1.msra.mxu0 0.0
      %3750 = vmatprep.subr.mxu0 0.0
      %3751 = vmatpush1.msra.mxu0 0.0
      %3752 = vmatprep.subr.mxu0 0.0
      %3753 = vmatpush1.msra.mxu0 0.0
      %3754 = vmatprep.subr.mxu0 0.0
      %3755 = vmatpush1.msra.mxu0 0.0
      %3756 = vmatprep.subr.mxu0 0.0
      %3757 = vmatpush1.msra.mxu0 0.0
      %3758 = vmatprep.subr.mxu0 0.0
      %3759 = vmatpush1.msra.mxu0 0.0
      %3760 = vmatprep.subr.mxu0 0.0
      %3761 = vmatpush1.msra.mxu0 0.0
      %3762 = vmatprep.subr.mxu0 0.0
      %3763 = vmatpush1.msra.mxu0 0.0
      %3764 = vmatprep.subr.mxu0 0.0
      %3765 = vmatpush1.msra.mxu0 0.0
      %3766 = vmatprep.subr.mxu0 0.0
      %3767 = vmatpush1.msra.mxu0 0.0
      %3768 = vmatprep.subr.mxu0 0.0
      %3769 = vmatpush1.msra.mxu0 0.0
      %3770 = vmatprep.subr.mxu0 0.0
      %3771 = vmatpush1.msra.mxu0 0.0
      %3772 = vmatprep.subr.mxu0 0.0
      %3773 = vmatpush1.msra.mxu0 0.0
      %3774 = vmatprep.subr.mxu0 0.0
      %3775 = vmatpush1.msra.mxu0 0.0
      %3776 = vmatprep.subr.mxu0 0.0
      %3777 = vmatpush1.msra.mxu0 0.0
      %3778 = vmatprep.subr.mxu0 0.0
      %3779 = vmatpush1.msra.mxu0 0.0
      %3780 = vmatprep.subr.mxu0 0.0
      %3781 = vmatpush1.msra.mxu0 0.0
      %3782 = vmatprep.subr.mxu0 0.0
      %3783 = vmatpush1.msra.mxu0 0.0
      %3784 = vmatprep.subr.mxu0 0.0
      %3785 = vmatpush1.msra.mxu0 0.0
      %3786 = vmatprep.subr.mxu0 0.0
      %3787 = vmatpush1.msra.mxu0 0.0
      %3788 = vmatprep.subr.mxu0 0.0
      %3789 = vmatpush1.msra.mxu0 0.0
      %3790 = vmatprep.subr.mxu0 0.0
      %3791 = vmatpush1.msra.mxu0 0.0
      %3792 = vmatprep.subr.mxu0 0.0
      %3793 = vmatpush1.msra.mxu0 0.0
      %3794 = vmatprep.mubr.f32.mxu0 0.0
      %v3795 = vand.u32 %v3722, 4294901760
      %v3796 = vsub.f32 %v3722, %v3795
      %v3797 = vand.u32 %v3796, 4294901760
      %v3798 = vsub.f32 %v3796, %v3797
      %v3799 = vand.u32 %v3798, 4294901760
      %3800 = vmatmul.mubr.f32.gmra.mrb[0].mxu0 %v3799
      %v3801 = vpop.f32.mrb[0].mxu0
      %v3802 = vadd.f32 0.0, %v3801
      %v3803 = vpop.f32.mrb[0].mxu0
      %v3804 = vadd.f32 0.0, %v3803
      %3805 = vdwg.mxu0
      %v3806 = vand.u32 %v3726, 4294901760
      %v3807 = vsub.f32 %v3726, %v3806
      %v3808 = vand.u32 %v3807, 4294901760
      %v3809 = vsub.f32 %v3807, %v3808
      %v3810 = vand.u32 %v3809, 4294901760
      %3811 = vmatprep.subr.mxu0 %v3810
      %v3812 = vand.u32 %v3724, 4294901760
      %v3813 = vsub.f32 %v3724, %v3812
      %v3814 = vand.u32 %v3813, 4294901760
      %v3815 = vsub.f32 %v3813, %v3814
      %v3816 = vand.u32 %v3815, 4294901760
      %3817 = vmatpush1.msra.mxu0 %v3816
      %3818 = vmatprep.subr.mxu0 0.0
      %3819 = vmatpush1.msra.mxu0 0.0
      %3820 = vmatprep.subr.mxu0 0.0
      %3821 = vmatpush1.msra.mxu0 0.0
      %3822 = vmatprep.subr.mxu0 0.0
      %3823 = vmatpush1.msra.mxu0 0.0
      %3824 = vmatprep.subr.mxu0 0.0
      %3825 = vmatpush1.msra.mxu0 0.0
      %3826 = vmatprep.subr.mxu0 0.0
      %3827 = vmatpush1.msra.mxu0 0.0
      %3828 = vmatprep.subr.mxu0 0.0
      %3829 = vmatpush1.msra.mxu0 0.0
      %3830 = vmatprep.subr.mxu0 0.0
      %3831 = vmatpush1.msra.mxu0 0.0
      %3832 = vmatprep.subr.mxu0 0.0
      %3833 = vmatpush1.msra.mxu0 0.0
      %3834 = vmatprep.subr.mxu0 0.0
      %3835 = vmatpush1.msra.mxu0 0.0
      %3836 = vmatprep.subr.mxu0 0.0
      %3837 = vmatpush1.msra.mxu0 0.0
      %3838 = vmatprep.subr.mxu0 0.0
      %3839 = vmatpush1.msra.mxu0 0.0
      %3840 = vmatprep.subr.mxu0 0.0
      %3841 = vmatpush1.msra.mxu0 0.0
      %3842 = vmatprep.subr.mxu0 0.0
      %3843 = vmatpush1.msra.mxu0 0.0
      %3844 = vmatprep.subr.mxu0 0.0
      %3845 = vmatpush1.msra.mxu0 0.0
      %3846 = vmatprep.subr.mxu0 0.0
      %3847 = vmatpush1.msra.mxu0 0.0
      %3848 = vmatprep.subr.mxu0 0.0
      %3849 = vmatpush1.msra.mxu0 0.0
      %3850 = vmatprep.subr.mxu0 0.0
      %3851 = vmatpush1.msra.mxu0 0.0
      %3852 = vmatprep.subr.mxu0 0.0
      %3853 = vmatpush1.msra.mxu0 0.0
      %3854 = vmatprep.subr.mxu0 0.0
      %3855 = vmatpush1.msra.mxu0 0.0
      %3856 = vmatprep.subr.mxu0 0.0
      %3857 = vmatpush1.msra.mxu0 0.0
      %3858 = vmatprep.subr.mxu0 0.0
      %3859 = vmatpush1.msra.mxu0 0.0
      %3860 = vmatprep.subr.mxu0 0.0
      %3861 = vmatpush1.msra.mxu0 0.0
      %3862 = vmatprep.subr.mxu0 0.0
      %3863 = vmatpush1.msra.mxu0 0.0
      %3864 = vmatprep.subr.mxu0 0.0
      %3865 = vmatpush1.msra.mxu0 0.0
      %3866 = vmatprep.subr.mxu0 0.0
      %3867 = vmatpush1.msra.mxu0 0.0
      %3868 = vmatprep.subr.mxu0 0.0
      %3869 = vmatpush1.msra.mxu0 0.0
      %3870 = vmatprep.subr.mxu0 0.0
      %3871 = vmatpush1.msra.mxu0 0.0
      %3872 = vmatprep.subr.mxu0 0.0
      %3873 = vmatpush1.msra.mxu0 0.0
      %3874 = vmatprep.subr.mxu0 0.0
      %3875 = vmatpush1.msra.mxu0 0.0
      %3876 = vmatprep.subr.mxu0 0.0
      %3877 = vmatpush1.msra.mxu0 0.0
      %3878 = vmatprep.subr.mxu0 0.0
      %3879 = vmatpush1.msra.mxu0 0.0
      %3880 = vmatprep.mubr.f32.mxu0 0.0
      %v3881 = vand.u32 %v3722, 4294901760
      %3882 = vmatmul.mubr.f32.gmra.mrb[0].mxu0 %v3881
      %v3883 = vpop.f32.mrb[0].mxu0
      %v3884 = vadd.f32 %v3802, %v3883
      %v3885 = vpop.f32.mrb[0].mxu0
      %v3886 = vadd.f32 %v3804, %v3885
      %3887 = vdwg.mxu0
      %v3888 = vand.u32 %v3726, 4294901760
      %v3889 = vsub.f32 %v3726, %v3888
      %3890 = vmatprep.subr.mxu0 %v3889
      %v3891 = vand.u32 %v3724, 4294901760
      %v3892 = vsub.f32 %v3724, %v3891
      %3893 = vmatpush1.msra.mxu0 %v3892
      %3894 = vmatprep.subr.mxu0 0.0
      %3895 = vmatpush1.msra.mxu0 0.0
      %3896 = vmatprep.subr.mxu0 0.0
      %3897 = vmatpush1.msra.mxu0 0.0
      %3898 = vmatprep.subr.mxu0 0.0
      %3899 = vmatpush1.msra.mxu0 0.0
      %3900 = vmatprep.subr.mxu0 0.0
      %3901 = vmatpush1.msra.mxu0 0.0
      %3902 = vmatprep.subr.mxu0 0.0
      %3903 = vmatpush1.msra.mxu0 0.0
      %3904 = vmatprep.subr.mxu0 0.0
      %3905 = vmatpush1.msra.mxu0 0.0
      %3906 = vmatprep.subr.mxu0 0.0
      %3907 = vmatpush1.msra.mxu0 0.0
      %3908 = vmatprep.subr.mxu0 0.0
      %3909 = vmatpush1.msra.mxu0 0.0
      %3910 = vmatprep.subr.mxu0 0.0
      %3911 = vmatpush1.msra.mxu0 0.0
      %3912 = vmatprep.subr.mxu0 0.0
      %3913 = vmatpush1.msra.mxu0 0.0
      %3914 = vmatprep.subr.mxu0 0.0
      %3915 = vmatpush1.msra.mxu0 0.0
      %3916 = vmatprep.subr.mxu0 0.0
      %3917 = vmatpush1.msra.mxu0 0.0
      %3918 = vmatprep.subr.mxu0 0.0
      %3919 = vmatpush1.msra.mxu0 0.0
      %3920 = vmatprep.subr.mxu0 0.0
      %3921 = vmatpush1.msra.mxu0 0.0
      %3922 = vmatprep.subr.mxu0 0.0
      %3923 = vmatpush1.msra.mxu0 0.0
      %3924 = vmatprep.subr.mxu0 0.0
      %3925 = vmatpush1.msra.mxu0 0.0
      %3926 = vmatprep.subr.mxu0 0.0
      %3927 = vmatpush1.msra.mxu0 0.0
      %3928 = vmatprep.subr.mxu0 0.0
      %3929 = vmatpush1.msra.mxu0 0.0
      %3930 = vmatprep.subr.mxu0 0.0
      %3931 = vmatpush1.msra.mxu0 0.0
      %3932 = vmatprep.subr.mxu0 0.0
      %3933 = vmatpush1.msra.mxu0 0.0
      %3934 = vmatprep.subr.mxu0 0.0
      %3935 = vmatpush1.msra.mxu0 0.0
      %3936 = vmatprep.subr.mxu0 0.0
      %3937 = vmatpush1.msra.mxu0 0.0
      %3938 = vmatprep.subr.mxu0 0.0
      %3939 = vmatpush1.msra.mxu0 0.0
      %3940 = vmatprep.subr.mxu0 0.0
      %3941 = vmatpush1.msra.mxu0 0.0
      %3942 = vmatprep.subr.mxu0 0.0
      %3943 = vmatpush1.msra.mxu0 0.0
      %3944 = vmatprep.subr.mxu0 0.0
      %3945 = vmatpush1.msra.mxu0 0.0
      %3946 = vmatprep.subr.mxu0 0.0
      %3947 = vmatpush1.msra.mxu0 0.0
      %3948 = vmatprep.subr.mxu0 0.0
      %3949 = vmatpush1.msra.mxu0 0.0
      %3950 = vmatprep.subr.mxu0 0.0
      %3951 = vmatpush1.msra.mxu0 0.0
      %3952 = vmatprep.subr.mxu0 0.0
      %3953 = vmatpush1.msra.mxu0 0.0
      %3954 = vmatprep.subr.mxu0 0.0
      %3955 = vmatpush1.msra.mxu0 0.0
      %3956 = vmatprep.mubr.f32.mxu0 0.0
      %v3957 = vand.u32 %v3722, 4294901760
      %v3958 = vsub.f32 %v3722, %v3957
      %3959 = vmatmul.mubr.f32.gmra.mrb[0].mxu0 %v3958
      %v3960 = vpop.f32.mrb[0].mxu0
      %v3961 = vadd.f32 %v3884, %v3960
      %v3962 = vpop.f32.mrb[0].mxu0
      %v3963 = vadd.f32 %v3886, %v3962
      %3964 = vdwg.mxu0
      %v3965 = vand.u32 %v3726, 4294901760
      %3966 = vmatprep.subr.mxu0 %v3965
      %v3967 = vand.u32 %v3724, 4294901760
      %3968 = vmatpush1.msra.mxu0 %v3967
      %3969 = vmatprep.subr.mxu0 0.0
      %3970 = vmatpush1.msra.mxu0 0.0
      %3971 = vmatprep.subr.mxu0 0.0
      %3972 = vmatpush1.msra.mxu0 0.0
      %3973 = vmatprep.subr.mxu0 0.0
      %3974 = vmatpush1.msra.mxu0 0.0
      %3975 = vmatprep.subr.mxu0 0.0
      %3976 = vmatpush1.msra.mxu0 0.0
      %3977 = vmatprep.subr.mxu0 0.0
      %3978 = vmatpush1.msra.mxu0 0.0
      %3979 = vmatprep.subr.mxu0 0.0
      %3980 = vmatpush1.msra.mxu0 0.0
      %3981 = vmatprep.subr.mxu0 0.0
      %3982 = vmatpush1.msra.mxu0 0.0
      %3983 = vmatprep.subr.mxu0 0.0
      %3984 = vmatpush1.msra.mxu0 0.0
      %3985 = vmatprep.subr.mxu0 0.0
      %3986 = vmatpush1.msra.mxu0 0.0
      %3987 = vmatprep.subr.mxu0 0.0
      %3988 = vmatpush1.msra.mxu0 0.0
      %3989 = vmatprep.subr.mxu0 0.0
      %3990 = vmatpush1.msra.mxu0 0.0
      %3991 = vmatprep.subr.mxu0 0.0
      %3992 = vmatpush1.msra.mxu0 0.0
      %3993 = vmatprep.subr.mxu0 0.0
      %3994 = vmatpush1.msra.mxu0 0.0
      %3995 = vmatprep.subr.mxu0 0.0
      %3996 = vmatpush1.msra.mxu0 0.0
      %3997 = vmatprep.subr.mxu0 0.0
      %3998 = vmatpush1.msra.mxu0 0.0
      %3999 = vmatprep.subr.mxu0 0.0
      %4000 = vmatpush1.msra.mxu0 0.0
      %4001 = vmatprep.subr.mxu0 0.0
      %4002 = vmatpush1.msra.mxu0 0.0
      %4003 = vmatprep.subr.mxu0 0.0
      %4004 = vmatpush1.msra.mxu0 0.0
      %4005 = vmatprep.subr.mxu0 0.0
      %4006 = vmatpush1.msra.mxu0 0.0
      %4007 = vmatprep.subr.mxu0 0.0
      %4008 = vmatpush1.msra.mxu0 0.0
      %4009 = vmatprep.subr.mxu0 0.0
      %4010 = vmatpush1.msra.mxu0 0.0
      %4011 = vmatprep.subr.mxu0 0.0
      %4012 = vmatpush1.msra.mxu0 0.0
      %4013 = vmatprep.subr.mxu0 0.0
      %4014 = vmatpush1.msra.mxu0 0.0
      %4015 = vmatprep.subr.mxu0 0.0
      %4016 = vmatpush1.msra.mxu0 0.0
      %4017 = vmatprep.subr.mxu0 0.0
      %4018 = vmatpush1.msra.mxu0 0.0
      %4019 = vmatprep.subr.mxu0 0.0
      %4020 = vmatpush1.msra.mxu0 0.0
      %4021 = vmatprep.subr.mxu0 0.0
      %4022 = vmatpush1.msra.mxu0 0.0
      %4023 = vmatprep.subr.mxu0 0.0
      %4024 = vmatpush1.msra.mxu0 0.0
      %4025 = vmatprep.subr.mxu0 0.0
      %4026 = vmatpush1.msra.mxu0 0.0
      %4027 = vmatprep.subr.mxu0 0.0
      %4028 = vmatpush1.msra.mxu0 0.0
      %4029 = vmatprep.subr.mxu0 0.0
      %4030 = vmatpush1.msra.mxu0 0.0
      %4031 = vmatprep.mubr.f32.mxu0 0.0
      %v4032 = vand.u32 %v3722, 4294901760
      %v4033 = vsub.f32 %v3722, %v4032
      %v4034 = vand.u32 %v4033, 4294901760
      %4035 = vmatmul.mubr.f32.gmra.mrb[0].mxu0 %v4034
      %v4036 = vpop.f32.mrb[0].mxu0
      %v4037 = vadd.f32 %v3961, %v4036
      %v4038 = vpop.f32.mrb[0].mxu0
      %v4039 = vadd.f32 %v3963, %v4038
      %4040 = vdwg.mxu0
      %v4041 = vand.u32 %v3726, 4294901760
      %v4042 = vsub.f32 %v3726, %v4041
      %v4043 = vand.u32 %v4042, 4294901760
      %4044 = vmatprep.subr.mxu0 %v4043
      %v4045 = vand.u32 %v3724, 4294901760
      %v4046 = vsub.f32 %v3724, %v4045
      %v4047 = vand.u32 %v4046, 4294901760
      %4048 = vmatpush1.msra.mxu0 %v4047
      %4049 = vmatprep.subr.mxu0 0.0
      %4050 = vmatpush1.msra.mxu0 0.0
      %4051 = vmatprep.subr.mxu0 0.0
      %4052 = vmatpush1.msra.mxu0 0.0
      %4053 = vmatprep.subr.mxu0 0.0
      %4054 = vmatpush1.msra.mxu0 0.0
      %4055 = vmatprep.subr.mxu0 0.0
      %4056 = vmatpush1.msra.mxu0 0.0
      %4057 = vmatprep.subr.mxu0 0.0
      %4058 = vmatpush1.msra.mxu0 0.0
      %4059 = vmatprep.subr.mxu0 0.0
      %4060 = vmatpush1.msra.mxu0 0.0
      %4061 = vmatprep.subr.mxu0 0.0
      %4062 = vmatpush1.msra.mxu0 0.0
      %4063 = vmatprep.subr.mxu0 0.0
      %4064 = vmatpush1.msra.mxu0 0.0
      %4065 = vmatprep.subr.mxu0 0.0
      %4066 = vmatpush1.msra.mxu0 0.0
      %4067 = vmatprep.subr.mxu0 0.0
      %4068 = vmatpush1.msra.mxu0 0.0
      %4069 = vmatprep.subr.mxu0 0.0
      %4070 = vmatpush1.msra.mxu0 0.0
      %4071 = vmatprep.subr.mxu0 0.0
      %4072 = vmatpush1.msra.mxu0 0.0
      %4073 = vmatprep.subr.mxu0 0.0
      %4074 = vmatpush1.msra.mxu0 0.0
      %4075 = vmatprep.subr.mxu0 0.0
      %4076 = vmatpush1.msra.mxu0 0.0
      %4077 = vmatprep.subr.mxu0 0.0
      %4078 = vmatpush1.msra.mxu0 0.0
      %4079 = vmatprep.subr.mxu0 0.0
      %4080 = vmatpush1.msra.mxu0 0.0
      %4081 = vmatprep.subr.mxu0 0.0
      %4082 = vmatpush1.msra.mxu0 0.0
      %4083 = vmatprep.subr.mxu0 0.0
      %4084 = vmatpush1.msra.mxu0 0.0
      %4085 = vmatprep.subr.mxu0 0.0
      %4086 = vmatpush1.msra.mxu0 0.0
      %4087 = vmatprep.subr.mxu0 0.0
      %4088 = vmatpush1.msra.mxu0 0.0
      %4089 = vmatprep.subr.mxu0 0.0
      %4090 = vmatpush1.msra.mxu0 0.0
      %4091 = vmatprep.subr.mxu0 0.0
      %4092 = vmatpush1.msra.mxu0 0.0
      %4093 = vmatprep.subr.mxu0 0.0
      %4094 = vmatpush1.msra.mxu0 0.0
      %4095 = vmatprep.subr.mxu0 0.0
      %4096 = vmatpush1.msra.mxu0 0.0
      %4097 = vmatprep.subr.mxu0 0.0
      %4098 = vmatpush1.msra.mxu0 0.0
      %4099 = vmatprep.subr.mxu0 0.0
      %4100 = vmatpush1.msra.mxu0 0.0
      %4101 = vmatprep.subr.mxu0 0.0
      %4102 = vmatpush1.msra.mxu0 0.0
      %4103 = vmatprep.subr.mxu0 0.0
      %4104 = vmatpush1.msra.mxu0 0.0
      %4105 = vmatprep.subr.mxu0 0.0
      %4106 = vmatpush1.msra.mxu0 0.0
      %4107 = vmatprep.subr.mxu0 0.0
      %4108 = vmatpush1.msra.mxu0 0.0
      %4109 = vmatprep.subr.mxu0 0.0
      %4110 = vmatpush1.msra.mxu0 0.0
      %4111 = vmatprep.mubr.f32.mxu0 0.0
      %v4112 = vand.u32 %v3722, 4294901760
      %4113 = vmatmul.mubr.f32.gmra.mrb[0].mxu0 %v4112
      %v4114 = vpop.f32.mrb[0].mxu0
      %v4115 = vadd.f32 %v4037, %v4114
      %v4116 = vpop.f32.mrb[0].mxu0
      %v4117 = vadd.f32 %v4039, %v4116
      %4118 = vdwg.mxu0
      %v4119 = vand.u32 %v3726, 4294901760
      %4120 = vmatprep.subr.mxu0 %v4119
      %v4121 = vand.u32 %v3724, 4294901760
      %4122 = vmatpush1.msra.mxu0 %v4121
      %4123 = vmatprep.subr.mxu0 0.0
      %4124 = vmatpush1.msra.mxu0 0.0
      %4125 = vmatprep.subr.mxu0 0.0
      %4126 = vmatpush1.msra.mxu0 0.0
      %4127 = vmatprep.subr.mxu0 0.0
      %4128 = vmatpush1.msra.mxu0 0.0
      %4129 = vmatprep.subr.mxu0 0.0
      %4130 = vmatpush1.msra.mxu0 0.0
      %4131 = vmatprep.subr.mxu0 0.0
      %4132 = vmatpush1.msra.mxu0 0.0
      %4133 = vmatprep.subr.mxu0 0.0
      %4134 = vmatpush1.msra.mxu0 0.0
      %4135 = vmatprep.subr.mxu0 0.0
      %4136 = vmatpush1.msra.mxu0 0.0
      %4137 = vmatprep.subr.mxu0 0.0
      %4138 = vmatpush1.msra.mxu0 0.0
      %4139 = vmatprep.subr.mxu0 0.0
      %4140 = vmatpush1.msra.mxu0 0.0
      %4141 = vmatprep.subr.mxu0 0.0
      %4142 = vmatpush1.msra.mxu0 0.0
      %4143 = vmatprep.subr.mxu0 0.0
      %4144 = vmatpush1.msra.mxu0 0.0
      %4145 = vmatprep.subr.mxu0 0.0
      %4146 = vmatpush1.msra.mxu0 0.0
      %4147 = vmatprep.subr.mxu0 0.0
      %4148 = vmatpush1.msra.mxu0 0.0
      %4149 = vmatprep.subr.mxu0 0.0
      %4150 = vmatpush1.msra.mxu0 0.0
      %4151 = vmatprep.subr.mxu0 0.0
      %4152 = vmatpush1.msra.mxu0 0.0
      %4153 = vmatprep.subr.mxu0 0.0
      %4154 = vmatpush1.msra.mxu0 0.0
      %4155 = vmatprep.subr.mxu0 0.0
      %4156 = vmatpush1.msra.mxu0 0.0
      %4157 = vmatprep.subr.mxu0 0.0
      %4158 = vmatpush1.msra.mxu0 0.0
      %4159 = vmatprep.subr.mxu0 0.0
      %4160 = vmatpush1.msra.mxu0 0.0
      %4161 = vmatprep.subr.mxu0 0.0
      %4162 = vmatpush1.msra.mxu0 0.0
      %4163 = vmatprep.subr.mxu0 0.0
      %4164 = vmatpush1.msra.mxu0 0.0
      %4165 = vmatprep.subr.mxu0 0.0
      %4166 = vmatpush1.msra.mxu0 0.0
      %4167 = vmatprep.subr.mxu0 0.0
      %4168 = vmatpush1.msra.mxu0 0.0
      %4169 = vmatprep.subr.mxu0 0.0
      %4170 = vmatpush1.msra.mxu0 0.0
      %4171 = vmatprep.subr.mxu0 0.0
      %4172 = vmatpush1.msra.mxu0 0.0
      %4173 = vmatprep.subr.mxu0 0.0
      %4174 = vmatpush1.msra.mxu0 0.0
      %4175 = vmatprep.subr.mxu0 0.0
      %4176 = vmatpush1.msra.mxu0 0.0
      %4177 = vmatprep.subr.mxu0 0.0
      %4178 = vmatpush1.msra.mxu0 0.0
      %4179 = vmatprep.subr.mxu0 0.0
      %4180 = vmatpush1.msra.mxu0 0.0
      %4181 = vmatprep.subr.mxu0 0.0
      %4182 = vmatpush1.msra.mxu0 0.0
      %4183 = vmatprep.subr.mxu0 0.0
      %4184 = vmatpush1.msra.mxu0 0.0
      %4185 = vmatprep.mubr.f32.mxu0 0.0
      %v4186 = vand.u32 %v3722, 4294901760
      %4187 = vmatmul.mubr.f32.gmra.mrb[0].mxu0 %v4186
      %v4188 = vpop.f32.mrb[0].mxu0
      %v4189 = vadd.f32 %v4115, %v4188
      %v4190 = vpop.f32.mrb[0].mxu0
      %v4191 = vadd.f32 %v4117, %v4190
      %4192 = vdwg.mxu0
      %v4193 = vadd.f32 %v3703, %v4189
      %v4194 = vadd.f32 %v3704, %v4191
      %v4195 = vld [vmem:[#allocation2 + $0x4] sm:$0xff]
      %v4196 = vld [vmem:[#allocation2 + $0xc] sm:$0xf]
      %4197 = vrot.lane.b32.xlu0 %v1235, 17
      %v4198 = vpop.permute.xlu0 %4197
      %v4199 = vrot.slane %v4198, 4
      %v4200 = vsel %vm756, %v4199, %v4198
      %v4203 = vmul.f32 %v4195, %v4200
      %v4204 = vmul.f32 %v4196, %v4199
      %s4205 = scalar_lea.vmem %s1, 64
      %v4206 = vld [vmem:[%s4205] sm:$0xff]
      %v4209 = vcombine.high %v4203, %v4203
      %4210 = vrot.lane.b32.xlu0 %v4203, 111
      %v4211 = vpop.permute.xlu0 %4210
      %4212 = vrot.lane.b32.xlu0 %v4209, 111
      %v4213 = vpop.permute.xlu0 %4212
      %4214 = vrot.lane.b32.xlu0 %v4204, 111
      %v4215 = vpop.permute.xlu0 %4214
      %v4216 = vsel %vm253, %v4211, %v4213
      %v4217 = vsel %vm253, %v4213, %v4215
      %v4219 = vsel %vm274, %v4206, 0
      %v4221 = vsel %vm238, %v4216, 0
      %v4223 = vsel %vm238, %v4217, 0
      %v4225 = vand.u32 %v4223, 4294901760
      %4226 = vmatprep.subr.mxu0 %v4225
      %v4227 = vand.u32 %v4221, 4294901760
      %4228 = vmatpush1.msra.mxu0 %v4227
      %4229 = vmatprep.subr.mxu0 0.0
      %4230 = vmatpush1.msra.mxu0 0.0
      %4231 = vmatprep.subr.mxu0 0.0
      %4232 = vmatpush1.msra.mxu0 0.0
      %4233 = vmatprep.subr.mxu0 0.0
      %4234 = vmatpush1.msra.mxu0 0.0
      %4235 = vmatprep.subr.mxu0 0.0
      %4236 = vmatpush1.msra.mxu0 0.0
      %4237 = vmatprep.subr.mxu0 0.0
      %4238 = vmatpush1.msra.mxu0 0.0
      %4239 = vmatprep.subr.mxu0 0.0
      %4240 = vmatpush1.msra.mxu0 0.0
      %4241 = vmatprep.subr.mxu0 0.0
      %4242 = vmatpush1.msra.mxu0 0.0
      %4243 = vmatprep.subr.mxu0 0.0
      %4244 = vmatpush1.msra.mxu0 0.0
      %4245 = vmatprep.subr.mxu0 0.0
      %4246 = vmatpush1.msra.mxu0 0.0
      %4247 = vmatprep.subr.mxu0 0.0
      %4248 = vmatpush1.msra.mxu0 0.0
      %4249 = vmatprep.subr.mxu0 0.0
      %4250 = vmatpush1.msra.mxu0 0.0
      %4251 = vmatprep.subr.mxu0 0.0
      %4252 = vmatpush1.msra.mxu0 0.0
      %4253 = vmatprep.subr.mxu0 0.0
      %4254 = vmatpush1.msra.mxu0 0.0
      %4255 = vmatprep.subr.mxu0 0.0
      %4256 = vmatpush1.msra.mxu0 0.0
      %4257 = vmatprep.subr.mxu0 0.0
      %4258 = vmatpush1.msra.mxu0 0.0
      %4259 = vmatprep.subr.mxu0 0.0
      %4260 = vmatpush1.msra.mxu0 0.0
      %4261 = vmatprep.subr.mxu0 0.0
      %4262 = vmatpush1.msra.mxu0 0.0
      %4263 = vmatprep.subr.mxu0 0.0
      %4264 = vmatpush1.msra.mxu0 0.0
      %4265 = vmatprep.subr.mxu0 0.0
      %4266 = vmatpush1.msra.mxu0 0.0
      %4267 = vmatprep.subr.mxu0 0.0
      %4268 = vmatpush1.msra.mxu0 0.0
      %4269 = vmatprep.subr.mxu0 0.0
      %4270 = vmatpush1.msra.mxu0 0.0
      %4271 = vmatprep.subr.mxu0 0.0
      %4272 = vmatpush1.msra.mxu0 0.0
      %4273 = vmatprep.subr.mxu0 0.0
      %4274 = vmatpush1.msra.mxu0 0.0
      %4275 = vmatprep.subr.mxu0 0.0
      %4276 = vmatpush1.msra.mxu0 0.0
      %4277 = vmatprep.subr.mxu0 0.0
      %4278 = vmatpush1.msra.mxu0 0.0
      %4279 = vmatprep.subr.mxu0 0.0
      %4280 = vmatpush1.msra.mxu0 0.0
      %4281 = vmatprep.subr.mxu0 0.0
      %4282 = vmatpush1.msra.mxu0 0.0
      %4283 = vmatprep.subr.mxu0 0.0
      %4284 = vmatpush1.msra.mxu0 0.0
      %4285 = vmatprep.subr.mxu0 0.0
      %4286 = vmatpush1.msra.mxu0 0.0
      %4287 = vmatprep.subr.mxu0 0.0
      %4288 = vmatpush1.msra.mxu0 0.0
      %4289 = vmatprep.subr.mxu0 0.0
      %4290 = vmatpush1.msra.mxu0 0.0
      %4291 = vmatprep.mubr.f32.mxu0 0.0
      %v4292 = vand.u32 %v4219, 4294901760
      %v4293 = vsub.f32 %v4219, %v4292
      %v4294 = vand.u32 %v4293, 4294901760
      %v4295 = vsub.f32 %v4293, %v4294
      %v4296 = vand.u32 %v4295, 4294901760
      %4297 = vmatmul.mubr.f32.gmra.mrb[0].mxu0 %v4296
      %v4298 = vpop.f32.mrb[0].mxu0
      %v4299 = vadd.f32 0.0, %v4298
      %v4300 = vpop.f32.mrb[0].mxu0
      %v4301 = vadd.f32 0.0, %v4300
      %4302 = vdwg.mxu0
      %v4303 = vand.u32 %v4223, 4294901760
      %v4304 = vsub.f32 %v4223, %v4303
      %v4305 = vand.u32 %v4304, 4294901760
      %v4306 = vsub.f32 %v4304, %v4305
      %v4307 = vand.u32 %v4306, 4294901760
      %4308 = vmatprep.subr.mxu0 %v4307
      %v4309 = vand.u32 %v4221, 4294901760
      %v4310 = vsub.f32 %v4221, %v4309
      %v4311 = vand.u32 %v4310, 4294901760
      %v4312 = vsub.f32 %v4310, %v4311
      %v4313 = vand.u32 %v4312, 4294901760
      %4314 = vmatpush1.msra.mxu0 %v4313
      %4315 = vmatprep.subr.mxu0 0.0
      %4316 = vmatpush1.msra.mxu0 0.0
      %4317 = vmatprep.subr.mxu0 0.0
      %4318 = vmatpush1.msra.mxu0 0.0
      %4319 = vmatprep.subr.mxu0 0.0
      %4320 = vmatpush1.msra.mxu0 0.0
      %4321 = vmatprep.subr.mxu0 0.0
      %4322 = vmatpush1.msra.mxu0 0.0
      %4323 = vmatprep.subr.mxu0 0.0
      %4324 = vmatpush1.msra.mxu0 0.0
      %4325 = vmatprep.subr.mxu0 0.0
      %4326 = vmatpush1.msra.mxu0 0.0
      %4327 = vmatprep.subr.mxu0 0.0
      %4328 = vmatpush1.msra.mxu0 0.0
      %4329 = vmatprep.subr.mxu0 0.0
      %4330 = vmatpush1.msra.mxu0 0.0
      %4331 = vmatprep.subr.mxu0 0.0
      %4332 = vmatpush1.msra.mxu0 0.0
      %4333 = vmatprep.subr.mxu0 0.0
      %4334 = vmatpush1.msra.mxu0 0.0
      %4335 = vmatprep.subr.mxu0 0.0
      %4336 = vmatpush1.msra.mxu0 0.0
      %4337 = vmatprep.subr.mxu0 0.0
      %4338 = vmatpush1.msra.mxu0 0.0
      %4339 = vmatprep.subr.mxu0 0.0
      %4340 = vmatpush1.msra.mxu0 0.0
      %4341 = vmatprep.subr.mxu0 0.0
      %4342 = vmatpush1.msra.mxu0 0.0
      %4343 = vmatprep.subr.mxu0 0.0
      %4344 = vmatpush1.msra.mxu0 0.0
      %4345 = vmatprep.subr.mxu0 0.0
      %4346 = vmatpush1.msra.mxu0 0.0
      %4347 = vmatprep.subr.mxu0 0.0
      %4348 = vmatpush1.msra.mxu0 0.0
      %4349 = vmatprep.subr.mxu0 0.0
      %4350 = vmatpush1.msra.mxu0 0.0
      %4351 = vmatprep.subr.mxu0 0.0
      %4352 = vmatpush1.msra.mxu0 0.0
      %4353 = vmatprep.subr.mxu0 0.0
      %4354 = vmatpush1.msra.mxu0 0.0
      %4355 = vmatprep.subr.mxu0 0.0
      %4356 = vmatpush1.msra.mxu0 0.0
      %4357 = vmatprep.subr.mxu0 0.0
      %4358 = vmatpush1.msra.mxu0 0.0
      %4359 = vmatprep.subr.mxu0 0.0
      %4360 = vmatpush1.msra.mxu0 0.0
      %4361 = vmatprep.subr.mxu0 0.0
      %4362 = vmatpush1.msra.mxu0 0.0
      %4363 = vmatprep.subr.mxu0 0.0
      %4364 = vmatpush1.msra.mxu0 0.0
      %4365 = vmatprep.subr.mxu0 0.0
      %4366 = vmatpush1.msra.mxu0 0.0
      %4367 = vmatprep.subr.mxu0 0.0
      %4368 = vmatpush1.msra.mxu0 0.0
      %4369 = vmatprep.subr.mxu0 0.0
      %4370 = vmatpush1.msra.mxu0 0.0
      %4371 = vmatprep.subr.mxu0 0.0
      %4372 = vmatpush1.msra.mxu0 0.0
      %4373 = vmatprep.subr.mxu0 0.0
      %4374 = vmatpush1.msra.mxu0 0.0
      %4375 = vmatprep.subr.mxu0 0.0
      %4376 = vmatpush1.msra.mxu0 0.0
      %4377 = vmatprep.mubr.f32.mxu0 0.0
      %v4378 = vand.u32 %v4219, 4294901760
      %4379 = vmatmul.mubr.f32.gmra.mrb[0].mxu0 %v4378
      %v4380 = vpop.f32.mrb[0].mxu0
      %v4381 = vadd.f32 %v4299, %v4380
      %v4382 = vpop.f32.mrb[0].mxu0
      %v4383 = vadd.f32 %v4301, %v4382
      %4384 = vdwg.mxu0
      %v4385 = vand.u32 %v4223, 4294901760
      %v4386 = vsub.f32 %v4223, %v4385
      %4387 = vmatprep.subr.mxu0 %v4386
      %v4388 = vand.u32 %v4221, 4294901760
      %v4389 = vsub.f32 %v4221, %v4388
      %4390 = vmatpush1.msra.mxu0 %v4389
      %4391 = vmatprep.subr.mxu0 0.0
      %4392 = vmatpush1.msra.mxu0 0.0
      %4393 = vmatprep.subr.mxu0 0.0
      %4394 = vmatpush1.msra.mxu0 0.0
      %4395 = vmatprep.subr.mxu0 0.0
      %4396 = vmatpush1.msra.mxu0 0.0
      %4397 = vmatprep.subr.mxu0 0.0
      %4398 = vmatpush1.msra.mxu0 0.0
      %4399 = vmatprep.subr.mxu0 0.0
      %4400 = vmatpush1.msra.mxu0 0.0
      %4401 = vmatprep.subr.mxu0 0.0
      %4402 = vmatpush1.msra.mxu0 0.0
      %4403 = vmatprep.subr.mxu0 0.0
      %4404 = vmatpush1.msra.mxu0 0.0
      %4405 = vmatprep.subr.mxu0 0.0
      %4406 = vmatpush1.msra.mxu0 0.0
      %4407 = vmatprep.subr.mxu0 0.0
      %4408 = vmatpush1.msra.mxu0 0.0
      %4409 = vmatprep.subr.mxu0 0.0
      %4410 = vmatpush1.msra.mxu0 0.0
      %4411 = vmatprep.subr.mxu0 0.0
      %4412 = vmatpush1.msra.mxu0 0.0
      %4413 = vmatprep.subr.mxu0 0.0
      %4414 = vmatpush1.msra.mxu0 0.0
      %4415 = vmatprep.subr.mxu0 0.0
      %4416 = vmatpush1.msra.mxu0 0.0
      %4417 = vmatprep.subr.mxu0 0.0
      %4418 = vmatpush1.msra.mxu0 0.0
      %4419 = vmatprep.subr.mxu0 0.0
      %4420 = vmatpush1.msra.mxu0 0.0
      %4421 = vmatprep.subr.mxu0 0.0
      %4422 = vmatpush1.msra.mxu0 0.0
      %4423 = vmatprep.subr.mxu0 0.0
      %4424 = vmatpush1.msra.mxu0 0.0
      %4425 = vmatprep.subr.mxu0 0.0
      %4426 = vmatpush1.msra.mxu0 0.0
      %4427 = vmatprep.subr.mxu0 0.0
      %4428 = vmatpush1.msra.mxu0 0.0
      %4429 = vmatprep.subr.mxu0 0.0
      %4430 = vmatpush1.msra.mxu0 0.0
      %4431 = vmatprep.subr.mxu0 0.0
      %4432 = vmatpush1.msra.mxu0 0.0
      %4433 = vmatprep.subr.mxu0 0.0
      %4434 = vmatpush1.msra.mxu0 0.0
      %4435 = vmatprep.subr.mxu0 0.0
      %4436 = vmatpush1.msra.mxu0 0.0
      %4437 = vmatprep.subr.mxu0 0.0
      %4438 = vmatpush1.msra.mxu0 0.0
      %4439 = vmatprep.subr.mxu0 0.0
      %4440 = vmatpush1.msra.mxu0 0.0
      %4441 = vmatprep.subr.mxu0 0.0
      %4442 = vmatpush1.msra.mxu0 0.0
      %4443 = vmatprep.subr.mxu0 0.0
      %4444 = vmatpush1.msra.mxu0 0.0
      %4445 = vmatprep.subr.mxu0 0.0
      %4446 = vmatpush1.msra.mxu0 0.0
      %4447 = vmatprep.subr.mxu0 0.0
      %4448 = vmatpush1.msra.mxu0 0.0
      %4449 = vmatprep.subr.mxu0 0.0
      %4450 = vmatpush1.msra.mxu0 0.0
      %4451 = vmatprep.subr.mxu0 0.0
      %4452 = vmatpush1.msra.mxu0 0.0
      %4453 = vmatprep.mubr.f32.mxu0 0.0
      %v4454 = vand.u32 %v4219, 4294901760
      %v4455 = vsub.f32 %v4219, %v4454
      %4456 = vmatmul.mubr.f32.gmra.mrb[0].mxu0 %v4455
      %v4457 = vpop.f32.mrb[0].mxu0
      %v4458 = vadd.f32 %v4381, %v4457
      %v4459 = vpop.f32.mrb[0].mxu0
      %v4460 = vadd.f32 %v4383, %v4459
      %4461 = vdwg.mxu0
      %v4462 = vand.u32 %v4223, 4294901760
      %4463 = vmatprep.subr.mxu0 %v4462
      %v4464 = vand.u32 %v4221, 4294901760
      %4465 = vmatpush1.msra.mxu0 %v4464
      %4466 = vmatprep.subr.mxu0 0.0
      %4467 = vmatpush1.msra.mxu0 0.0
      %4468 = vmatprep.subr.mxu0 0.0
      %4469 = vmatpush1.msra.mxu0 0.0
      %4470 = vmatprep.subr.mxu0 0.0
      %4471 = vmatpush1.msra.mxu0 0.0
      %4472 = vmatprep.subr.mxu0 0.0
      %4473 = vmatpush1.msra.mxu0 0.0
      %4474 = vmatprep.subr.mxu0 0.0
      %4475 = vmatpush1.msra.mxu0 0.0
      %4476 = vmatprep.subr.mxu0 0.0
      %4477 = vmatpush1.msra.mxu0 0.0
      %4478 = vmatprep.subr.mxu0 0.0
      %4479 = vmatpush1.msra.mxu0 0.0
      %4480 = vmatprep.subr.mxu0 0.0
      %4481 = vmatpush1.msra.mxu0 0.0
      %4482 = vmatprep.subr.mxu0 0.0
      %4483 = vmatpush1.msra.mxu0 0.0
      %4484 = vmatprep.subr.mxu0 0.0
      %4485 = vmatpush1.msra.mxu0 0.0
      %4486 = vmatprep.subr.mxu0 0.0
      %4487 = vmatpush1.msra.mxu0 0.0
      %4488 = vmatprep.subr.mxu0 0.0
      %4489 = vmatpush1.msra.mxu0 0.0
      %4490 = vmatprep.subr.mxu0 0.0
      %4491 = vmatpush1.msra.mxu0 0.0
      %4492 = vmatprep.subr.mxu0 0.0
      %4493 = vmatpush1.msra.mxu0 0.0
      %4494 = vmatprep.subr.mxu0 0.0
      %4495 = vmatpush1.msra.mxu0 0.0
      %4496 = vmatprep.subr.mxu0 0.0
      %4497 = vmatpush1.msra.mxu0 0.0
      %4498 = vmatprep.subr.mxu0 0.0
      %4499 = vmatpush1.msra.mxu0 0.0
      %4500 = vmatprep.subr.mxu0 0.0
      %4501 = vmatpush1.msra.mxu0 0.0
      %4502 = vmatprep.subr.mxu0 0.0
      %4503 = vmatpush1.msra.mxu0 0.0
      %4504 = vmatprep.subr.mxu0 0.0
      %4505 = vmatpush1.msra.mxu0 0.0
      %4506 = vmatprep.subr.mxu0 0.0
      %4507 = vmatpush1.msra.mxu0 0.0
      %4508 = vmatprep.subr.mxu0 0.0
      %4509 = vmatpush1.msra.mxu0 0.0
      %4510 = vmatprep.subr.mxu0 0.0
      %4511 = vmatpush1.msra.mxu0 0.0
      %4512 = vmatprep.subr.mxu0 0.0
      %4513 = vmatpush1.msra.mxu0 0.0
      %4514 = vmatprep.subr.mxu0 0.0
      %4515 = vmatpush1.msra.mxu0 0.0
      %4516 = vmatprep.subr.mxu0 0.0
      %4517 = vmatpush1.msra.mxu0 0.0
      %4518 = vmatprep.subr.mxu0 0.0
      %4519 = vmatpush1.msra.mxu0 0.0
      %4520 = vmatprep.subr.mxu0 0.0
      %4521 = vmatpush1.msra.mxu0 0.0
      %4522 = vmatprep.subr.mxu0 0.0
      %4523 = vmatpush1.msra.mxu0 0.0
      %4524 = vmatprep.subr.mxu0 0.0
      %4525 = vmatpush1.msra.mxu0 0.0
      %4526 = vmatprep.subr.mxu0 0.0
      %4527 = vmatpush1.msra.mxu0 0.0
      %4528 = vmatprep.mubr.f32.mxu0 0.0
      %v4529 = vand.u32 %v4219, 4294901760
      %v4530 = vsub.f32 %v4219, %v4529
      %v4531 = vand.u32 %v4530, 4294901760
      %4532 = vmatmul.mubr.f32.gmra.mrb[0].mxu0 %v4531
      %v4533 = vpop.f32.mrb[0].mxu0
      %v4534 = vadd.f32 %v4458, %v4533
      %v4535 = vpop.f32.mrb[0].mxu0
      %v4536 = vadd.f32 %v4460, %v4535
      %4537 = vdwg.mxu0
      %v4538 = vand.u32 %v4223, 4294901760
      %v4539 = vsub.f32 %v4223, %v4538
      %v4540 = vand.u32 %v4539, 4294901760
      %4541 = vmatprep.subr.mxu0 %v4540
      %v4542 = vand.u32 %v4221, 4294901760
      %v4543 = vsub.f32 %v4221, %v4542
      %v4544 = vand.u32 %v4543, 4294901760
      %4545 = vmatpush1.msra.mxu0 %v4544
      %4546 = vmatprep.subr.mxu0 0.0
      %4547 = vmatpush1.msra.mxu0 0.0
      %4548 = vmatprep.subr.mxu0 0.0
      %4549 = vmatpush1.msra.mxu0 0.0
      %4550 = vmatprep.subr.mxu0 0.0
      %4551 = vmatpush1.msra.mxu0 0.0
      %4552 = vmatprep.subr.mxu0 0.0
      %4553 = vmatpush1.msra.mxu0 0.0
      %4554 = vmatprep.subr.mxu0 0.0
      %4555 = vmatpush1.msra.mxu0 0.0
      %4556 = vmatprep.subr.mxu0 0.0
      %4557 = vmatpush1.msra.mxu0 0.0
      %4558 = vmatprep.subr.mxu0 0.0
      %4559 = vmatpush1.msra.mxu0 0.0
      %4560 = vmatprep.subr.mxu0 0.0
      %4561 = vmatpush1.msra.mxu0 0.0
      %4562 = vmatprep.subr.mxu0 0.0
      %4563 = vmatpush1.msra.mxu0 0.0
      %4564 = vmatprep.subr.mxu0 0.0
      %4565 = vmatpush1.msra.mxu0 0.0
      %4566 = vmatprep.subr.mxu0 0.0
      %4567 = vmatpush1.msra.mxu0 0.0
      %4568 = vmatprep.subr.mxu0 0.0
      %4569 = vmatpush1.msra.mxu0 0.0
      %4570 = vmatprep.subr.mxu0 0.0
      %4571 = vmatpush1.msra.mxu0 0.0
      %4572 = vmatprep.subr.mxu0 0.0
      %4573 = vmatpush1.msra.mxu0 0.0
      %4574 = vmatprep.subr.mxu0 0.0
      %4575 = vmatpush1.msra.mxu0 0.0
      %4576 = vmatprep.subr.mxu0 0.0
      %4577 = vmatpush1.msra.mxu0 0.0
      %4578 = vmatprep.subr.mxu0 0.0
      %4579 = vmatpush1.msra.mxu0 0.0
      %4580 = vmatprep.subr.mxu0 0.0
      %4581 = vmatpush1.msra.mxu0 0.0
      %4582 = vmatprep.subr.mxu0 0.0
      %4583 = vmatpush1.msra.mxu0 0.0
      %4584 = vmatprep.subr.mxu0 0.0
      %4585 = vmatpush1.msra.mxu0 0.0
      %4586 = vmatprep.subr.mxu0 0.0
      %4587 = vmatpush1.msra.mxu0 0.0
      %4588 = vmatprep.subr.mxu0 0.0
      %4589 = vmatpush1.msra.mxu0 0.0
      %4590 = vmatprep.subr.mxu0 0.0
      %4591 = vmatpush1.msra.mxu0 0.0
      %4592 = vmatprep.subr.mxu0 0.0
      %4593 = vmatpush1.msra.mxu0 0.0
      %4594 = vmatprep.subr.mxu0 0.0
      %4595 = vmatpush1.msra.mxu0 0.0
      %4596 = vmatprep.subr.mxu0 0.0
      %4597 = vmatpush1.msra.mxu0 0.0
      %4598 = vmatprep.subr.mxu0 0.0
      %4599 = vmatpush1.msra.mxu0 0.0
      %4600 = vmatprep.subr.mxu0 0.0
      %4601 = vmatpush1.msra.mxu0 0.0
      %4602 = vmatprep.subr.mxu0 0.0
      %4603 = vmatpush1.msra.mxu0 0.0
      %4604 = vmatprep.subr.mxu0 0.0
      %4605 = vmatpush1.msra.mxu0 0.0
      %4606 = vmatprep.subr.mxu0 0.0
      %4607 = vmatpush1.msra.mxu0 0.0
      %4608 = vmatprep.mubr.f32.mxu0 0.0
      %v4609 = vand.u32 %v4219, 4294901760
      %4610 = vmatmul.mubr.f32.gmra.mrb[0].mxu0 %v4609
      %v4611 = vpop.f32.mrb[0].mxu0
      %v4612 = vadd.f32 %v4534, %v4611
      %v4613 = vpop.f32.mrb[0].mxu0
      %v4614 = vadd.f32 %v4536, %v4613
      %4615 = vdwg.mxu0
      %v4616 = vand.u32 %v4223, 4294901760
      %4617 = vmatprep.subr.mxu0 %v4616
      %v4618 = vand.u32 %v4221, 4294901760
      %4619 = vmatpush1.msra.mxu0 %v4618
      %4620 = vmatprep.subr.mxu0 0.0
      %4621 = vmatpush1.msra.mxu0 0.0
      %4622 = vmatprep.subr.mxu0 0.0
      %4623 = vmatpush1.msra.mxu0 0.0
      %4624 = vmatprep.subr.mxu0 0.0
      %4625 = vmatpush1.msra.mxu0 0.0
      %4626 = vmatprep.subr.mxu0 0.0
      %4627 = vmatpush1.msra.mxu0 0.0
      %4628 = vmatprep.subr.mxu0 0.0
      %4629 = vmatpush1.msra.mxu0 0.0
      %4630 = vmatprep.subr.mxu0 0.0
      %4631 = vmatpush1.msra.mxu0 0.0
      %4632 = vmatprep.subr.mxu0 0.0
      %4633 = vmatpush1.msra.mxu0 0.0
      %4634 = vmatprep.subr.mxu0 0.0
      %4635 = vmatpush1.msra.mxu0 0.0
      %4636 = vmatprep.subr.mxu0 0.0
      %4637 = vmatpush1.msra.mxu0 0.0
      %4638 = vmatprep.subr.mxu0 0.0
      %4639 = vmatpush1.msra.mxu0 0.0
      %4640 = vmatprep.subr.mxu0 0.0
      %4641 = vmatpush1.msra.mxu0 0.0
      %4642 = vmatprep.subr.mxu0 0.0
      %4643 = vmatpush1.msra.mxu0 0.0
      %4644 = vmatprep.subr.mxu0 0.0
      %4645 = vmatpush1.msra.mxu0 0.0
      %4646 = vmatprep.subr.mxu0 0.0
      %4647 = vmatpush1.msra.mxu0 0.0
      %4648 = vmatprep.subr.mxu0 0.0
      %4649 = vmatpush1.msra.mxu0 0.0
      %4650 = vmatprep.subr.mxu0 0.0
      %4651 = vmatpush1.msra.mxu0 0.0
      %4652 = vmatprep.subr.mxu0 0.0
      %4653 = vmatpush1.msra.mxu0 0.0
      %4654 = vmatprep.subr.mxu0 0.0
      %4655 = vmatpush1.msra.mxu0 0.0
      %4656 = vmatprep.subr.mxu0 0.0
      %4657 = vmatpush1.msra.mxu0 0.0
      %4658 = vmatprep.subr.mxu0 0.0
      %4659 = vmatpush1.msra.mxu0 0.0
      %4660 = vmatprep.subr.mxu0 0.0
      %4661 = vmatpush1.msra.mxu0 0.0
      %4662 = vmatprep.subr.mxu0 0.0
      %4663 = vmatpush1.msra.mxu0 0.0
      %4664 = vmatprep.subr.mxu0 0.0
      %4665 = vmatpush1.msra.mxu0 0.0
      %4666 = vmatprep.subr.mxu0 0.0
      %4667 = vmatpush1.msra.mxu0 0.0
      %4668 = vmatprep.subr.mxu0 0.0
      %4669 = vmatpush1.msra.mxu0 0.0
      %4670 = vmatprep.subr.mxu0 0.0
      %4671 = vmatpush1.msra.mxu0 0.0
      %4672 = vmatprep.subr.mxu0 0.0
      %4673 = vmatpush1.msra.mxu0 0.0
      %4674 = vmatprep.subr.mxu0 0.0
      %4675 = vmatpush1.msra.mxu0 0.0
      %4676 = vmatprep.subr.mxu0 0.0
      %4677 = vmatpush1.msra.mxu0 0.0
      %4678 = vmatprep.subr.mxu0 0.0
      %4679 = vmatpush1.msra.mxu0 0.0
      %4680 = vmatprep.subr.mxu0 0.0
      %4681 = vmatpush1.msra.mxu0 0.0
      %4682 = vmatprep.mubr.f32.mxu0 0.0
      %v4683 = vand.u32 %v4219, 4294901760
      %4684 = vmatmul.mubr.f32.gmra.mrb[0].mxu0 %v4683
      %v4685 = vpop.f32.mrb[0].mxu0
      %v4686 = vadd.f32 %v4612, %v4685
      %v4687 = vpop.f32.mrb[0].mxu0
      %v4688 = vadd.f32 %v4614, %v4687
      %4689 = vdwg.mxu0
      %v4690 = vadd.f32 %v4193, %v4686
      %v4691 = vadd.f32 %v4194, %v4688
      %4693 = vset.pattern.permute.xlu0 0
      %4694 = vperm.xlu0 %4693, %v244
      %v4695 = vpop.permute.xlu0 %4694
      %v4697 = vadd.f32 %v4690, %v4695
      %v4698 = vadd.f32 %v4691, %v4695
      %v4699 = vmax.f32 %v4697, 0.0
      %v4700 = vmax.f32 %v4698, 0.0
      %4701 = vst [vmem:[#allocation3] sm:$0xff] 0.0
      %4702 = vst [vmem:[#allocation3 + $0x8] sm:$0xff] 0.0
      %4703 = vst [vmem:[#allocation3 + $0x10] sm:$0xff] 0.0
      %4704 = vst.msk [vmem:[#allocation3 + $0x18] sm:$0xff] %vm756, 0.0
      %4705 = vst [vmem:[#allocation3 + $0x8] sm:$0xff] %v4699
      %4706 = vst [vmem:[#allocation3 + $0x10] sm:$0xff] %v4700
      %s4707 = scalar_lea.vmem %s3, 8
      %v4708 = vld [vmem:[%s4707] sm:$0xff]
      %v4709 = vld [vmem:[#allocation3] sm:$0xff]
      %v4710 = vld [vmem:[#allocation3 + $0x8] sm:$0xff]
      %v4711 = vld [vmem:[#allocation3 + $0x10] sm:$0xff]
      %4712 = vrot.lane.b32.xlu0 %v229, 111
      %v4713 = vpop.permute.xlu0 %4712
      %4714 = vrot.lane.b32.xlu0 %v230, 111
      %v4715 = vpop.permute.xlu0 %4714
      %v4716 = vsel %vm253, %v4713, %v4715
      %v4720 = vmul.f32 %v4709, %v4713
      %v4721 = vmul.f32 %v4710, %v4716
      %v4722 = vmul.f32 %v4711, %v4715
      %v4723 = vld [vmem:[%s2] sm:$0xff]
      %s4724 = scalar_lea.vmem %s2, 8
      %v4725 = vld [vmem:[%s4724] sm:$0xff]
      %4729 = vrot.lane.b32.xlu0 %v4709, 16
      %v4730 = vpop.permute.xlu0 %4729
      %4731 = vrot.lane.b32.xlu0 %v4710, 16
      %v4732 = vpop.permute.xlu0 %4731
      %4733 = vrot.lane.b32.xlu0 %v4711, 16
      %v4734 = vpop.permute.xlu0 %4733
      %v4735 = vsel %vm271, %v4730, %v4732
      %v4736 = vsel %vm271, %v4732, %v4734
      %vm4739 = vcmask 64512
      %v4741 = vsel %vm4739, %v4725, 0
      %v4743 = vand.u32 %v4736, 4294901760
      %4744 = vmatprep.subr.mxu0 %v4743
      %v4745 = vand.u32 %v4735, 4294901760
      %4746 = vmatpush1.msra.mxu0 %v4745
      %4747 = vmatprep.subr.mxu0 0.0
      %4748 = vmatpush1.msra.mxu0 0.0
      %4749 = vmatprep.subr.mxu0 0.0
      %4750 = vmatpush1.msra.mxu0 0.0
      %4751 = vmatprep.subr.mxu0 0.0
      %4752 = vmatpush1.msra.mxu0 0.0
      %4753 = vmatprep.subr.mxu0 0.0
      %4754 = vmatpush1.msra.mxu0 0.0
      %4755 = vmatprep.subr.mxu0 0.0
      %4756 = vmatpush1.msra.mxu0 0.0
      %4757 = vmatprep.subr.mxu0 0.0
      %4758 = vmatpush1.msra.mxu0 0.0
      %4759 = vmatprep.subr.mxu0 0.0
      %4760 = vmatpush1.msra.mxu0 0.0
      %4761 = vmatprep.subr.mxu0 0.0
      %4762 = vmatpush1.msra.mxu0 0.0
      %4763 = vmatprep.subr.mxu0 0.0
      %4764 = vmatpush1.msra.mxu0 0.0
      %4765 = vmatprep.subr.mxu0 0.0
      %4766 = vmatpush1.msra.mxu0 0.0
      %4767 = vmatprep.subr.mxu0 0.0
      %4768 = vmatpush1.msra.mxu0 0.0
      %4769 = vmatprep.subr.mxu0 0.0
      %4770 = vmatpush1.msra.mxu0 0.0
      %4771 = vmatprep.subr.mxu0 0.0
      %4772 = vmatpush1.msra.mxu0 0.0
      %4773 = vmatprep.subr.mxu0 0.0
      %4774 = vmatpush1.msra.mxu0 0.0
      %4775 = vmatprep.subr.mxu0 0.0
      %4776 = vmatpush1.msra.mxu0 0.0
      %4777 = vmatprep.subr.mxu0 0.0
      %4778 = vmatpush1.msra.mxu0 0.0
      %4779 = vmatprep.subr.mxu0 0.0
      %4780 = vmatpush1.msra.mxu0 0.0
      %4781 = vmatprep.subr.mxu0 0.0
      %4782 = vmatpush1.msra.mxu0 0.0
      %4783 = vmatprep.subr.mxu0 0.0
      %4784 = vmatpush1.msra.mxu0 0.0
      %4785 = vmatprep.subr.mxu0 0.0
      %4786 = vmatpush1.msra.mxu0 0.0
      %4787 = vmatprep.subr.mxu0 0.0
      %4788 = vmatpush1.msra.mxu0 0.0
      %4789 = vmatprep.subr.mxu0 0.0
      %4790 = vmatpush1.msra.mxu0 0.0
      %4791 = vmatprep.subr.mxu0 0.0
      %4792 = vmatpush1.msra.mxu0 0.0
      %4793 = vmatprep.subr.mxu0 0.0
      %4794 = vmatpush1.msra.mxu0 0.0
      %4795 = vmatprep.subr.mxu0 0.0
      %4796 = vmatpush1.msra.mxu0 0.0
      %4797 = vmatprep.subr.mxu0 0.0
      %4798 = vmatpush1.msra.mxu0 0.0
      %4799 = vmatprep.subr.mxu0 0.0
      %4800 = vmatpush1.msra.mxu0 0.0
      %4801 = vmatprep.subr.mxu0 0.0
      %4802 = vmatpush1.msra.mxu0 0.0
      %4803 = vmatprep.subr.mxu0 0.0
      %4804 = vmatpush1.msra.mxu0 0.0
      %4805 = vmatprep.subr.mxu0 0.0
      %4806 = vmatpush1.msra.mxu0 0.0
      %4807 = vmatprep.subr.mxu0 0.0
      %4808 = vmatpush1.msra.mxu0 0.0
      %4809 = vmatprep.mubr.f32.mxu0 0.0
      %v4810 = vand.u32 %v4741, 4294901760
      %v4811 = vsub.f32 %v4741, %v4810
      %v4812 = vand.u32 %v4811, 4294901760
      %v4813 = vsub.f32 %v4811, %v4812
      %v4814 = vand.u32 %v4813, 4294901760
      %4815 = vmatmul.mubr.f32.gmra.mrb[0].mxu0 %v4814
      %v4816 = vpop.f32.mrb[0].mxu0
      %v4817 = vadd.f32 0.0, %v4816
      %v4818 = vpop.f32.mrb[0].mxu0
      %v4819 = vadd.f32 0.0, %v4818
      %4820 = vdwg.mxu0
      %v4821 = vand.u32 %v4736, 4294901760
      %v4822 = vsub.f32 %v4736, %v4821
      %v4823 = vand.u32 %v4822, 4294901760
      %v4824 = vsub.f32 %v4822, %v4823
      %v4825 = vand.u32 %v4824, 4294901760
      %4826 = vmatprep.subr.mxu0 %v4825
      %v4827 = vand.u32 %v4735, 4294901760
      %v4828 = vsub.f32 %v4735, %v4827
      %v4829 = vand.u32 %v4828, 4294901760
      %v4830 = vsub.f32 %v4828, %v4829
      %v4831 = vand.u32 %v4830, 4294901760
      %4832 = vmatpush1.msra.mxu0 %v4831
      %4833 = vmatprep.subr.mxu0 0.0
      %4834 = vmatpush1.msra.mxu0 0.0
      %4835 = vmatprep.subr.mxu0 0.0
      %4836 = vmatpush1.msra.mxu0 0.0
      %4837 = vmatprep.subr.mxu0 0.0
      %4838 = vmatpush1.msra.mxu0 0.0
      %4839 = vmatprep.subr.mxu0 0.0
      %4840 = vmatpush1.msra.mxu0 0.0
      %4841 = vmatprep.subr.mxu0 0.0
      %4842 = vmatpush1.msra.mxu0 0.0
      %4843 = vmatprep.subr.mxu0 0.0
      %4844 = vmatpush1.msra.mxu0 0.0
      %4845 = vmatprep.subr.mxu0 0.0
      %4846 = vmatpush1.msra.mxu0 0.0
      %4847 = vmatprep.subr.mxu0 0.0
      %4848 = vmatpush1.msra.mxu0 0.0
      %4849 = vmatprep.subr.mxu0 0.0
      %4850 = vmatpush1.msra.mxu0 0.0
      %4851 = vmatprep.subr.mxu0 0.0
      %4852 = vmatpush1.msra.mxu0 0.0
      %4853 = vmatprep.subr.mxu0 0.0
      %4854 = vmatpush1.msra.mxu0 0.0
      %4855 = vmatprep.subr.mxu0 0.0
      %4856 = vmatpush1.msra.mxu0 0.0
      %4857 = vmatprep.subr.mxu0 0.0
      %4858 = vmatpush1.msra.mxu0 0.0
      %4859 = vmatprep.subr.mxu0 0.0
      %4860 = vmatpush1.msra.mxu0 0.0
      %4861 = vmatprep.subr.mxu0 0.0
      %4862 = vmatpush1.msra.mxu0 0.0
      %4863 = vmatprep.subr.mxu0 0.0
      %4864 = vmatpush1.msra.mxu0 0.0
      %4865 = vmatprep.subr.mxu0 0.0
      %4866 = vmatpush1.msra.mxu0 0.0
      %4867 = vmatprep.subr.mxu0 0.0
      %4868 = vmatpush1.msra.mxu0 0.0
      %4869 = vmatprep.subr.mxu0 0.0
      %4870 = vmatpush1.msra.mxu0 0.0
      %4871 = vmatprep.subr.mxu0 0.0
      %4872 = vmatpush1.msra.mxu0 0.0
      %4873 = vmatprep.subr.mxu0 0.0
      %4874 = vmatpush1.msra.mxu0 0.0
      %4875 = vmatprep.subr.mxu0 0.0
      %4876 = vmatpush1.msra.mxu0 0.0
      %4877 = vmatprep.subr.mxu0 0.0
      %4878 = vmatpush1.msra.mxu0 0.0
      %4879 = vmatprep.subr.mxu0 0.0
      %4880 = vmatpush1.msra.mxu0 0.0
      %4881 = vmatprep.subr.mxu0 0.0
      %4882 = vmatpush1.msra.mxu0 0.0
      %4883 = vmatprep.subr.mxu0 0.0
      %4884 = vmatpush1.msra.mxu0 0.0
      %4885 = vmatprep.subr.mxu0 0.0
      %4886 = vmatpush1.msra.mxu0 0.0
      %4887 = vmatprep.subr.mxu0 0.0
      %4888 = vmatpush1.msra.mxu0 0.0
      %4889 = vmatprep.subr.mxu0 0.0
      %4890 = vmatpush1.msra.mxu0 0.0
      %4891 = vmatprep.subr.mxu0 0.0
      %4892 = vmatpush1.msra.mxu0 0.0
      %4893 = vmatprep.subr.mxu0 0.0
      %4894 = vmatpush1.msra.mxu0 0.0
      %4895 = vmatprep.mubr.f32.mxu0 0.0
      %v4896 = vand.u32 %v4741, 4294901760
      %4897 = vmatmul.mubr.f32.gmra.mrb[0].mxu0 %v4896
      %v4898 = vpop.f32.mrb[0].mxu0
      %v4899 = vadd.f32 %v4817, %v4898
      %v4900 = vpop.f32.mrb[0].mxu0
      %v4901 = vadd.f32 %v4819, %v4900
      %4902 = vdwg.mxu0
      %v4903 = vand.u32 %v4736, 4294901760
      %v4904 = vsub.f32 %v4736, %v4903
      %4905 = vmatprep.subr.mxu0 %v4904
      %v4906 = vand.u32 %v4735, 4294901760
      %v4907 = vsub.f32 %v4735, %v4906
      %4908 = vmatpush1.msra.mxu0 %v4907
      %4909 = vmatprep.subr.mxu0 0.0
      %4910 = vmatpush1.msra.mxu0 0.0
      %4911 = vmatprep.subr.mxu0 0.0
      %4912 = vmatpush1.msra.mxu0 0.0
      %4913 = vmatprep.subr.mxu0 0.0
      %4914 = vmatpush1.msra.mxu0 0.0
      %4915 = vmatprep.subr.mxu0 0.0
      %4916 = vmatpush1.msra.mxu0 0.0
      %4917 = vmatprep.subr.mxu0 0.0
      %4918 = vmatpush1.msra.mxu0 0.0
      %4919 = vmatprep.subr.mxu0 0.0
      %4920 = vmatpush1.msra.mxu0 0.0
      %4921 = vmatprep.subr.mxu0 0.0
      %4922 = vmatpush1.msra.mxu0 0.0
      %4923 = vmatprep.subr.mxu0 0.0
      %4924 = vmatpush1.msra.mxu0 0.0
      %4925 = vmatprep.subr.mxu0 0.0
      %4926 = vmatpush1.msra.mxu0 0.0
      %4927 = vmatprep.subr.mxu0 0.0
      %4928 = vmatpush1.msra.mxu0 0.0
      %4929 = vmatprep.subr.mxu0 0.0
      %4930 = vmatpush1.msra.mxu0 0.0
      %4931 = vmatprep.subr.mxu0 0.0
      %4932 = vmatpush1.msra.mxu0 0.0
      %4933 = vmatprep.subr.mxu0 0.0
      %4934 = vmatpush1.msra.mxu0 0.0
      %4935 = vmatprep.subr.mxu0 0.0
      %4936 = vmatpush1.msra.mxu0 0.0
      %4937 = vmatprep.subr.mxu0 0.0
      %4938 = vmatpush1.msra.mxu0 0.0
      %4939 = vmatprep.subr.mxu0 0.0
      %4940 = vmatpush1.msra.mxu0 0.0
      %4941 = vmatprep.subr.mxu0 0.0
      %4942 = vmatpush1.msra.mxu0 0.0
      %4943 = vmatprep.subr.mxu0 0.0
      %4944 = vmatpush1.msra.mxu0 0.0
      %4945 = vmatprep.subr.mxu0 0.0
      %4946 = vmatpush1.msra.mxu0 0.0
      %4947 = vmatprep.subr.mxu0 0.0
      %4948 = vmatpush1.msra.mxu0 0.0
      %4949 = vmatprep.subr.mxu0 0.0
      %4950 = vmatpush1.msra.mxu0 0.0
      %4951 = vmatprep.subr.mxu0 0.0
      %4952 = vmatpush1.msra.mxu0 0.0
      %4953 = vmatprep.subr.mxu0 0.0
      %4954 = vmatpush1.msra.mxu0 0.0
      %4955 = vmatprep.subr.mxu0 0.0
      %4956 = vmatpush1.msra.mxu0 0.0
      %4957 = vmatprep.subr.mxu0 0.0
      %4958 = vmatpush1.msra.mxu0 0.0
      %4959 = vmatprep.subr.mxu0 0.0
      %4960 = vmatpush1.msra.mxu0 0.0
      %4961 = vmatprep.subr.mxu0 0.0
      %4962 = vmatpush1.msra.mxu0 0.0
      %4963 = vmatprep.subr.mxu0 0.0
      %4964 = vmatpush1.msra.mxu0 0.0
      %4965 = vmatprep.subr.mxu0 0.0
      %4966 = vmatpush1.msra.mxu0 0.0
      %4967 = vmatprep.subr.mxu0 0.0
      %4968 = vmatpush1.msra.mxu0 0.0
      %4969 = vmatprep.subr.mxu0 0.0
      %4970 = vmatpush1.msra.mxu0 0.0
      %4971 = vmatprep.mubr.f32.mxu0 0.0
      %v4972 = vand.u32 %v4741, 4294901760
      %v4973 = vsub.f32 %v4741, %v4972
      %4974 = vmatmul.mubr.f32.gmra.mrb[0].mxu0 %v4973
      %v4975 = vpop.f32.mrb[0].mxu0
      %v4976 = vadd.f32 %v4899, %v4975
      %v4977 = vpop.f32.mrb[0].mxu0
      %v4978 = vadd.f32 %v4901, %v4977
      %4979 = vdwg.mxu0
      %v4980 = vand.u32 %v4736, 4294901760
      %4981 = vmatprep.subr.mxu0 %v4980
      %v4982 = vand.u32 %v4735, 4294901760
      %4983 = vmatpush1.msra.mxu0 %v4982
      %4984 = vmatprep.subr.mxu0 0.0
      %4985 = vmatpush1.msra.mxu0 0.0
      %4986 = vmatprep.subr.mxu0 0.0
      %4987 = vmatpush1.msra.mxu0 0.0
      %4988 = vmatprep.subr.mxu0 0.0
      %4989 = vmatpush1.msra.mxu0 0.0
      %4990 = vmatprep.subr.mxu0 0.0
      %4991 = vmatpush1.msra.mxu0 0.0
      %4992 = vmatprep.subr.mxu0 0.0
      %4993 = vmatpush1.msra.mxu0 0.0
      %4994 = vmatprep.subr.mxu0 0.0
      %4995 = vmatpush1.msra.mxu0 0.0
      %4996 = vmatprep.subr.mxu0 0.0
      %4997 = vmatpush1.msra.mxu0 0.0
      %4998 = vmatprep.subr.mxu0 0.0
      %4999 = vmatpush1.msra.mxu0 0.0
      %5000 = vmatprep.subr.mxu0 0.0
      %5001 = vmatpush1.msra.mxu0 0.0
      %5002 = vmatprep.subr.mxu0 0.0
      %5003 = vmatpush1.msra.mxu0 0.0
      %5004 = vmatprep.subr.mxu0 0.0
      %5005 = vmatpush1.msra.mxu0 0.0
      %5006 = vmatprep.subr.mxu0 0.0
      %5007 = vmatpush1.msra.mxu0 0.0
      %5008 = vmatprep.subr.mxu0 0.0
      %5009 = vmatpush1.msra.mxu0 0.0
      %5010 = vmatprep.subr.mxu0 0.0
      %5011 = vmatpush1.msra.mxu0 0.0
      %5012 = vmatprep.subr.mxu0 0.0
      %5013 = vmatpush1.msra.mxu0 0.0
      %5014 = vmatprep.subr.mxu0 0.0
      %5015 = vmatpush1.msra.mxu0 0.0
      %5016 = vmatprep.subr.mxu0 0.0
      %5017 = vmatpush1.msra.mxu0 0.0
      %5018 = vmatprep.subr.mxu0 0.0
      %5019 = vmatpush1.msra.mxu0 0.0
      %5020 = vmatprep.subr.mxu0 0.0
      %5021 = vmatpush1.msra.mxu0 0.0
      %5022 = vmatprep.subr.mxu0 0.0
      %5023 = vmatpush1.msra.mxu0 0.0
      %5024 = vmatprep.subr.mxu0 0.0
      %5025 = vmatpush1.msra.mxu0 0.0
      %5026 = vmatprep.subr.mxu0 0.0
      %5027 = vmatpush1.msra.mxu0 0.0
      %5028 = vmatprep.subr.mxu0 0.0
      %5029 = vmatpush1.msra.mxu0 0.0
      %5030 = vmatprep.subr.mxu0 0.0
      %5031 = vmatpush1.msra.mxu0 0.0
      %5032 = vmatprep.subr.mxu0 0.0
      %5033 = vmatpush1.msra.mxu0 0.0
      %5034 = vmatprep.subr.mxu0 0.0
      %5035 = vmatpush1.msra.mxu0 0.0
      %5036 = vmatprep.subr.mxu0 0.0
      %5037 = vmatpush1.msra.mxu0 0.0
      %5038 = vmatprep.subr.mxu0 0.0
      %5039 = vmatpush1.msra.mxu0 0.0
      %5040 = vmatprep.subr.mxu0 0.0
      %5041 = vmatpush1.msra.mxu0 0.0
      %5042 = vmatprep.subr.mxu0 0.0
      %5043 = vmatpush1.msra.mxu0 0.0
      %5044 = vmatprep.subr.mxu0 0.0
      %5045 = vmatpush1.msra.mxu0 0.0
      %5046 = vmatprep.mubr.f32.mxu0 0.0
      %v5047 = vand.u32 %v4741, 4294901760
      %v5048 = vsub.f32 %v4741, %v5047
      %v5049 = vand.u32 %v5048, 4294901760
      %5050 = vmatmul.mubr.f32.gmra.mrb[0].mxu0 %v5049
      %v5051 = vpop.f32.mrb[0].mxu0
      %v5052 = vadd.f32 %v4976, %v5051
      %v5053 = vpop.f32.mrb[0].mxu0
      %v5054 = vadd.f32 %v4978, %v5053
      %5055 = vdwg.mxu0
      %v5056 = vand.u32 %v4736, 4294901760
      %v5057 = vsub.f32 %v4736, %v5056
      %v5058 = vand.u32 %v5057, 4294901760
      %5059 = vmatprep.subr.mxu0 %v5058
      %v5060 = vand.u32 %v4735, 4294901760
      %v5061 = vsub.f32 %v4735, %v5060
      %v5062 = vand.u32 %v5061, 4294901760
      %5063 = vmatpush1.msra.mxu0 %v5062
      %5064 = vmatprep.subr.mxu0 0.0
      %5065 = vmatpush1.msra.mxu0 0.0
      %5066 = vmatprep.subr.mxu0 0.0
      %5067 = vmatpush1.msra.mxu0 0.0
      %5068 = vmatprep.subr.mxu0 0.0
      %5069 = vmatpush1.msra.mxu0 0.0
      %5070 = vmatprep.subr.mxu0 0.0
      %5071 = vmatpush1.msra.mxu0 0.0
      %5072 = vmatprep.subr.mxu0 0.0
      %5073 = vmatpush1.msra.mxu0 0.0
      %5074 = vmatprep.subr.mxu0 0.0
      %5075 = vmatpush1.msra.mxu0 0.0
      %5076 = vmatprep.subr.mxu0 0.0
      %5077 = vmatpush1.msra.mxu0 0.0
      %5078 = vmatprep.subr.mxu0 0.0
      %5079 = vmatpush1.msra.mxu0 0.0
      %5080 = vmatprep.subr.mxu0 0.0
      %5081 = vmatpush1.msra.mxu0 0.0
      %5082 = vmatprep.subr.mxu0 0.0
      %5083 = vmatpush1.msra.mxu0 0.0
      %5084 = vmatprep.subr.mxu0 0.0
      %5085 = vmatpush1.msra.mxu0 0.0
      %5086 = vmatprep.subr.mxu0 0.0
      %5087 = vmatpush1.msra.mxu0 0.0
      %5088 = vmatprep.subr.mxu0 0.0
      %5089 = vmatpush1.msra.mxu0 0.0
      %5090 = vmatprep.subr.mxu0 0.0
      %5091 = vmatpush1.msra.mxu0 0.0
      %5092 = vmatprep.subr.mxu0 0.0
      %5093 = vmatpush1.msra.mxu0 0.0
      %5094 = vmatprep.subr.mxu0 0.0
      %5095 = vmatpush1.msra.mxu0 0.0
      %5096 = vmatprep.subr.mxu0 0.0
      %5097 = vmatpush1.msra.mxu0 0.0
      %5098 = vmatprep.subr.mxu0 0.0
      %5099 = vmatpush1.msra.mxu0 0.0
      %5100 = vmatprep.subr.mxu0 0.0
      %5101 = vmatpush1.msra.mxu0 0.0
      %5102 = vmatprep.subr.mxu0 0.0
      %5103 = vmatpush1.msra.mxu0 0.0
      %5104 = vmatprep.subr.mxu0 0.0
      %5105 = vmatpush1.msra.mxu0 0.0
      %5106 = vmatprep.subr.mxu0 0.0
      %5107 = vmatpush1.msra.mxu0 0.0
      %5108 = vmatprep.subr.mxu0 0.0
      %5109 = vmatpush1.msra.mxu0 0.0
      %5110 = vmatprep.subr.mxu0 0.0
      %5111 = vmatpush1.msra.mxu0 0.0
      %5112 = vmatprep.subr.mxu0 0.0
      %5113 = vmatpush1.msra.mxu0 0.0
      %5114 = vmatprep.subr.mxu0 0.0
      %5115 = vmatpush1.msra.mxu0 0.0
      %5116 = vmatprep.subr.mxu0 0.0
      %5117 = vmatpush1.msra.mxu0 0.0
      %5118 = vmatprep.subr.mxu0 0.0
      %5119 = vmatpush1.msra.mxu0 0.0
      %5120 = vmatprep.subr.mxu0 0.0
      %5121 = vmatpush1.msra.mxu0 0.0
      %5122 = vmatprep.subr.mxu0 0.0
      %5123 = vmatpush1.msra.mxu0 0.0
      %5124 = vmatprep.subr.mxu0 0.0
      %5125 = vmatpush1.msra.mxu0 0.0
      %5126 = vmatprep.mubr.f32.mxu0 0.0
      %v5127 = vand.u32 %v4741, 4294901760
      %5128 = vmatmul.mubr.f32.gmra.mrb[0].mxu0 %v5127
      %v5129 = vpop.f32.mrb[0].mxu0
      %v5130 = vadd.f32 %v5052, %v5129
      %v5131 = vpop.f32.mrb[0].mxu0
      %v5132 = vadd.f32 %v5054, %v5131
      %5133 = vdwg.mxu0
      %v5134 = vand.u32 %v4736, 4294901760
      %5135 = vmatprep.subr.mxu0 %v5134
      %v5136 = vand.u32 %v4735, 4294901760
      %5137 = vmatpush1.msra.mxu0 %v5136
      %5138 = vmatprep.subr.mxu0 0.0
      %5139 = vmatpush1.msra.mxu0 0.0
      %5140 = vmatprep.subr.mxu0 0.0
      %5141 = vmatpush1.msra.mxu0 0.0
      %5142 = vmatprep.subr.mxu0 0.0
      %5143 = vmatpush1.msra.mxu0 0.0
      %5144 = vmatprep.subr.mxu0 0.0
      %5145 = vmatpush1.msra.mxu0 0.0
      %5146 = vmatprep.subr.mxu0 0.0
      %5147 = vmatpush1.msra.mxu0 0.0
      %5148 = vmatprep.subr.mxu0 0.0
      %5149 = vmatpush1.msra.mxu0 0.0
      %5150 = vmatprep.subr.mxu0 0.0
      %5151 = vmatpush1.msra.mxu0 0.0
      %5152 = vmatprep.subr.mxu0 0.0
      %5153 = vmatpush1.msra.mxu0 0.0
      %5154 = vmatprep.subr.mxu0 0.0
      %5155 = vmatpush1.msra.mxu0 0.0
      %5156 = vmatprep.subr.mxu0 0.0
      %5157 = vmatpush1.msra.mxu0 0.0
      %5158 = vmatprep.subr.mxu0 0.0
      %5159 = vmatpush1.msra.mxu0 0.0
      %5160 = vmatprep.subr.mxu0 0.0
      %5161 = vmatpush1.msra.mxu0 0.0
      %5162 = vmatprep.subr.mxu0 0.0
      %5163 = vmatpush1.msra.mxu0 0.0
      %5164 = vmatprep.subr.mxu0 0.0
      %5165 = vmatpush1.msra.mxu0 0.0
      %5166 = vmatprep.subr.mxu0 0.0
      %5167 = vmatpush1.msra.mxu0 0.0
      %5168 = vmatprep.subr.mxu0 0.0
      %5169 = vmatpush1.msra.mxu0 0.0
      %5170 = vmatprep.subr.mxu0 0.0
      %5171 = vmatpush1.msra.mxu0 0.0
      %5172 = vmatprep.subr.mxu0 0.0
      %5173 = vmatpush1.msra.mxu0 0.0
      %5174 = vmatprep.subr.mxu0 0.0
      %5175 = vmatpush1.msra.mxu0 0.0
      %5176 = vmatprep.subr.mxu0 0.0
      %5177 = vmatpush1.msra.mxu0 0.0
      %5178 = vmatprep.subr.mxu0 0.0
      %5179 = vmatpush1.msra.mxu0 0.0
      %5180 = vmatprep.subr.mxu0 0.0
      %5181 = vmatpush1.msra.mxu0 0.0
      %5182 = vmatprep.subr.mxu0 0.0
      %5183 = vmatpush1.msra.mxu0 0.0
      %5184 = vmatprep.subr.mxu0 0.0
      %5185 = vmatpush1.msra.mxu0 0.0
      %5186 = vmatprep.subr.mxu0 0.0
      %5187 = vmatpush1.msra.mxu0 0.0
      %5188 = vmatprep.subr.mxu0 0.0
      %5189 = vmatpush1.msra.mxu0 0.0
      %5190 = vmatprep.subr.mxu0 0.0
      %5191 = vmatpush1.msra.mxu0 0.0
      %5192 = vmatprep.subr.mxu0 0.0
      %5193 = vmatpush1.msra.mxu0 0.0
      %5194 = vmatprep.subr.mxu0 0.0
      %5195 = vmatpush1.msra.mxu0 0.0
      %5196 = vmatprep.subr.mxu0 0.0
      %5197 = vmatpush1.msra.mxu0 0.0
      %5198 = vmatprep.subr.mxu0 0.0
      %5199 = vmatpush1.msra.mxu0 0.0
      %5200 = vmatprep.mubr.f32.mxu0 0.0
      %v5201 = vand.u32 %v4741, 4294901760
      %5202 = vmatmul.mubr.f32.gmra.mrb[0].mxu0 %v5201
      %v5203 = vpop.f32.mrb[0].mxu0
      %v5204 = vadd.f32 %v5130, %v5203
      %v5205 = vpop.f32.mrb[0].mxu0
      %v5206 = vadd.f32 %v5132, %v5205
      %5207 = vdwg.mxu0
      %5211 = vrot.lane.b32.xlu0 %v4720, 17
      %v5212 = vpop.permute.xlu0 %5211
      %5213 = vrot.lane.b32.xlu0 %v4721, 17
      %v5214 = vpop.permute.xlu0 %5213
      %5215 = vrot.lane.b32.xlu0 %v4722, 17
      %v5216 = vpop.permute.xlu0 %5215
      %v5217 = vsel %vm756, %v5212, %v5214
      %v5218 = vsel %vm756, %v5214, %v5216
      %v5222 = vsel %vm4739, %v4723, 0
      %v5224 = vand.u32 %v5218, 4294901760
      %5225 = vmatprep.subr.mxu0 %v5224
      %v5226 = vand.u32 %v5217, 4294901760
      %5227 = vmatpush1.msra.mxu0 %v5226
      %5228 = vmatprep.subr.mxu0 0.0
      %5229 = vmatpush1.msra.mxu0 0.0
      %5230 = vmatprep.subr.mxu0 0.0
      %5231 = vmatpush1.msra.mxu0 0.0
      %5232 = vmatprep.subr.mxu0 0.0
      %5233 = vmatpush1.msra.mxu0 0.0
      %5234 = vmatprep.subr.mxu0 0.0
      %5235 = vmatpush1.msra.mxu0 0.0
      %5236 = vmatprep.subr.mxu0 0.0
      %5237 = vmatpush1.msra.mxu0 0.0
      %5238 = vmatprep.subr.mxu0 0.0
      %5239 = vmatpush1.msra.mxu0 0.0
      %5240 = vmatprep.subr.mxu0 0.0
      %5241 = vmatpush1.msra.mxu0 0.0
      %5242 = vmatprep.subr.mxu0 0.0
      %5243 = vmatpush1.msra.mxu0 0.0
      %5244 = vmatprep.subr.mxu0 0.0
      %5245 = vmatpush1.msra.mxu0 0.0
      %5246 = vmatprep.subr.mxu0 0.0
      %5247 = vmatpush1.msra.mxu0 0.0
      %5248 = vmatprep.subr.mxu0 0.0
      %5249 = vmatpush1.msra.mxu0 0.0
      %5250 = vmatprep.subr.mxu0 0.0
      %5251 = vmatpush1.msra.mxu0 0.0
      %5252 = vmatprep.subr.mxu0 0.0
      %5253 = vmatpush1.msra.mxu0 0.0
      %5254 = vmatprep.subr.mxu0 0.0
      %5255 = vmatpush1.msra.mxu0 0.0
      %5256 = vmatprep.subr.mxu0 0.0
      %5257 = vmatpush1.msra.mxu0 0.0
      %5258 = vmatprep.subr.mxu0 0.0
      %5259 = vmatpush1.msra.mxu0 0.0
      %5260 = vmatprep.subr.mxu0 0.0
      %5261 = vmatpush1.msra.mxu0 0.0
      %5262 = vmatprep.subr.mxu0 0.0
      %5263 = vmatpush1.msra.mxu0 0.0
      %5264 = vmatprep.subr.mxu0 0.0
      %5265 = vmatpush1.msra.mxu0 0.0
      %5266 = vmatprep.subr.mxu0 0.0
      %5267 = vmatpush1.msra.mxu0 0.0
      %5268 = vmatprep.subr.mxu0 0.0
      %5269 = vmatpush1.msra.mxu0 0.0
      %5270 = vmatprep.subr.mxu0 0.0
      %5271 = vmatpush1.msra.mxu0 0.0
      %5272 = vmatprep.subr.mxu0 0.0
      %5273 = vmatpush1.msra.mxu0 0.0
      %5274 = vmatprep.subr.mxu0 0.0
      %5275 = vmatpush1.msra.mxu0 0.0
      %5276 = vmatprep.subr.mxu0 0.0
      %5277 = vmatpush1.msra.mxu0 0.0
      %5278 = vmatprep.subr.mxu0 0.0
      %5279 = vmatpush1.msra.mxu0 0.0
      %5280 = vmatprep.subr.mxu0 0.0
      %5281 = vmatpush1.msra.mxu0 0.0
      %5282 = vmatprep.subr.mxu0 0.0
      %5283 = vmatpush1.msra.mxu0 0.0
      %5284 = vmatprep.subr.mxu0 0.0
      %5285 = vmatpush1.msra.mxu0 0.0
      %5286 = vmatprep.subr.mxu0 0.0
      %5287 = vmatpush1.msra.mxu0 0.0
      %5288 = vmatprep.subr.mxu0 0.0
      %5289 = vmatpush1.msra.mxu0 0.0
      %5290 = vmatprep.mubr.f32.mxu0 0.0
      %v5291 = vand.u32 %v5222, 4294901760
      %v5292 = vsub.f32 %v5222, %v5291
      %v5293 = vand.u32 %v5292, 4294901760
      %v5294 = vsub.f32 %v5292, %v5293
      %v5295 = vand.u32 %v5294, 4294901760
      %5296 = vmatmul.mubr.f32.gmra.mrb[0].mxu0 %v5295
      %v5297 = vpop.f32.mrb[0].mxu0
      %v5298 = vadd.f32 %v5204, %v5297
      %v5299 = vpop.f32.mrb[0].mxu0
      %v5300 = vadd.f32 %v5206, %v5299
      %5301 = vdwg.mxu0
      %v5302 = vand.u32 %v5218, 4294901760
      %v5303 = vsub.f32 %v5218, %v5302
      %v5304 = vand.u32 %v5303, 4294901760
      %v5305 = vsub.f32 %v5303, %v5304
      %v5306 = vand.u32 %v5305, 4294901760
      %5307 = vmatprep.subr.mxu0 %v5306
      %v5308 = vand.u32 %v5217, 4294901760
      %v5309 = vsub.f32 %v5217, %v5308
      %v5310 = vand.u32 %v5309, 4294901760
      %v5311 = vsub.f32 %v5309, %v5310
      %v5312 = vand.u32 %v5311, 4294901760
      %5313 = vmatpush1.msra.mxu0 %v5312
      %5314 = vmatprep.subr.mxu0 0.0
      %5315 = vmatpush1.msra.mxu0 0.0
      %5316 = vmatprep.subr.mxu0 0.0
      %5317 = vmatpush1.msra.mxu0 0.0
      %5318 = vmatprep.subr.mxu0 0.0
      %5319 = vmatpush1.msra.mxu0 0.0
      %5320 = vmatprep.subr.mxu0 0.0
      %5321 = vmatpush1.msra.mxu0 0.0
      %5322 = vmatprep.subr.mxu0 0.0
      %5323 = vmatpush1.msra.mxu0 0.0
      %5324 = vmatprep.subr.mxu0 0.0
      %5325 = vmatpush1.msra.mxu0 0.0
      %5326 = vmatprep.subr.mxu0 0.0
      %5327 = vmatpush1.msra.mxu0 0.0
      %5328 = vmatprep.subr.mxu0 0.0
      %5329 = vmatpush1.msra.mxu0 0.0
      %5330 = vmatprep.subr.mxu0 0.0
      %5331 = vmatpush1.msra.mxu0 0.0
      %5332 = vmatprep.subr.mxu0 0.0
      %5333 = vmatpush1.msra.mxu0 0.0
      %5334 = vmatprep.subr.mxu0 0.0
      %5335 = vmatpush1.msra.mxu0 0.0
      %5336 = vmatprep.subr.mxu0 0.0
      %5337 = vmatpush1.msra.mxu0 0.0
      %5338 = vmatprep.subr.mxu0 0.0
      %5339 = vmatpush1.msra.mxu0 0.0
      %5340 = vmatprep.subr.mxu0 0.0
      %5341 = vmatpush1.msra.mxu0 0.0
      %5342 = vmatprep.subr.mxu0 0.0
      %5343 = vmatpush1.msra.mxu0 0.0
      %5344 = vmatprep.subr.mxu0 0.0
      %5345 = vmatpush1.msra.mxu0 0.0
      %5346 = vmatprep.subr.mxu0 0.0
      %5347 = vmatpush1.msra.mxu0 0.0
      %5348 = vmatprep.subr.mxu0 0.0
      %5349 = vmatpush1.msra.mxu0 0.0
      %5350 = vmatprep.subr.mxu0 0.0
      %5351 = vmatpush1.msra.mxu0 0.0
      %5352 = vmatprep.subr.mxu0 0.0
      %5353 = vmatpush1.msra.mxu0 0.0
      %5354 = vmatprep.subr.mxu0 0.0
      %5355 = vmatpush1.msra.mxu0 0.0
      %5356 = vmatprep.subr.mxu0 0.0
      %5357 = vmatpush1.msra.mxu0 0.0
      %5358 = vmatprep.subr.mxu0 0.0
      %5359 = vmatpush1.msra.mxu0 0.0
      %5360 = vmatprep.subr.mxu0 0.0
      %5361 = vmatpush1.msra.mxu0 0.0
      %5362 = vmatprep.subr.mxu0 0.0
      %5363 = vmatpush1.msra.mxu0 0.0
      %5364 = vmatprep.subr.mxu0 0.0
      %5365 = vmatpush1.msra.mxu0 0.0
      %5366 = vmatprep.subr.mxu0 0.0
      %5367 = vmatpush1.msra.mxu0 0.0
      %5368 = vmatprep.subr.mxu0 0.0
      %5369 = vmatpush1.msra.mxu0 0.0
      %5370 = vmatprep.subr.mxu0 0.0
      %5371 = vmatpush1.msra.mxu0 0.0
      %5372 = vmatprep.subr.mxu0 0.0
      %5373 = vmatpush1.msra.mxu0 0.0
      %5374 = vmatprep.subr.mxu0 0.0
      %5375 = vmatpush1.msra.mxu0 0.0
      %5376 = vmatprep.mubr.f32.mxu0 0.0
      %v5377 = vand.u32 %v5222, 4294901760
      %5378 = vmatmul.mubr.f32.gmra.mrb[0].mxu0 %v5377
      %v5379 = vpop.f32.mrb[0].mxu0
      %v5380 = vadd.f32 %v5298, %v5379
      %v5381 = vpop.f32.mrb[0].mxu0
      %v5382 = vadd.f32 %v5300, %v5381
      %5383 = vdwg.mxu0
      %v5384 = vand.u32 %v5218, 4294901760
      %v5385 = vsub.f32 %v5218, %v5384
      %5386 = vmatprep.subr.mxu0 %v5385
      %v5387 = vand.u32 %v5217, 4294901760
      %v5388 = vsub.f32 %v5217, %v5387
      %5389 = vmatpush1.msra.mxu0 %v5388
      %5390 = vmatprep.subr.mxu0 0.0
      %5391 = vmatpush1.msra.mxu0 0.0
      %5392 = vmatprep.subr.mxu0 0.0
      %5393 = vmatpush1.msra.mxu0 0.0
      %5394 = vmatprep.subr.mxu0 0.0
      %5395 = vmatpush1.msra.mxu0 0.0
      %5396 = vmatprep.subr.mxu0 0.0
      %5397 = vmatpush1.msra.mxu0 0.0
      %5398 = vmatprep.subr.mxu0 0.0
      %5399 = vmatpush1.msra.mxu0 0.0
      %5400 = vmatprep.subr.mxu0 0.0
      %5401 = vmatpush1.msra.mxu0 0.0
      %5402 = vmatprep.subr.mxu0 0.0
      %5403 = vmatpush1.msra.mxu0 0.0
      %5404 = vmatprep.subr.mxu0 0.0
      %5405 = vmatpush1.msra.mxu0 0.0
      %5406 = vmatprep.subr.mxu0 0.0
      %5407 = vmatpush1.msra.mxu0 0.0
      %5408 = vmatprep.subr.mxu0 0.0
      %5409 = vmatpush1.msra.mxu0 0.0
      %5410 = vmatprep.subr.mxu0 0.0
      %5411 = vmatpush1.msra.mxu0 0.0
      %5412 = vmatprep.subr.mxu0 0.0
      %5413 = vmatpush1.msra.mxu0 0.0
      %5414 = vmatprep.subr.mxu0 0.0
      %5415 = vmatpush1.msra.mxu0 0.0
      %5416 = vmatprep.subr.mxu0 0.0
      %5417 = vmatpush1.msra.mxu0 0.0
      %5418 = vmatprep.subr.mxu0 0.0
      %5419 = vmatpush1.msra.mxu0 0.0
      %5420 = vmatprep.subr.mxu0 0.0
      %5421 = vmatpush1.msra.mxu0 0.0
      %5422 = vmatprep.subr.mxu0 0.0
      %5423 = vmatpush1.msra.mxu0 0.0
      %5424 = vmatprep.subr.mxu0 0.0
      %5425 = vmatpush1.msra.mxu0 0.0
      %5426 = vmatprep.subr.mxu0 0.0
      %5427 = vmatpush1.msra.mxu0 0.0
      %5428 = vmatprep.subr.mxu0 0.0
      %5429 = vmatpush1.msra.mxu0 0.0
      %5430 = vmatprep.subr.mxu0 0.0
      %5431 = vmatpush1.msra.mxu0 0.0
      %5432 = vmatprep.subr.mxu0 0.0
      %5433 = vmatpush1.msra.mxu0 0.0
      %5434 = vmatprep.subr.mxu0 0.0
      %5435 = vmatpush1.msra.mxu0 0.0
      %5436 = vmatprep.subr.mxu0 0.0
      %5437 = vmatpush1.msra.mxu0 0.0
      %5438 = vmatprep.subr.mxu0 0.0
      %5439 = vmatpush1.msra.mxu0 0.0
      %5440 = vmatprep.subr.mxu0 0.0
      %5441 = vmatpush1.msra.mxu0 0.0
      %5442 = vmatprep.subr.mxu0 0.0
      %5443 = vmatpush1.msra.mxu0 0.0
      %5444 = vmatprep.subr.mxu0 0.0
      %5445 = vmatpush1.msra.mxu0 0.0
      %5446 = vmatprep.subr.mxu0 0.0
      %5447 = vmatpush1.msra.mxu0 0.0
      %5448 = vmatprep.subr.mxu0 0.0
      %5449 = vmatpush1.msra.mxu0 0.0
      %5450 = vmatprep.subr.mxu0 0.0
      %5451 = vmatpush1.msra.mxu0 0.0
      %5452 = vmatprep.mubr.f32.mxu0 0.0
      %v5453 = vand.u32 %v5222, 4294901760
      %v5454 = vsub.f32 %v5222, %v5453
      %5455 = vmatmul.mubr.f32.gmra.mrb[0].mxu0 %v5454
      %v5456 = vpop.f32.mrb[0].mxu0
      %v5457 = vadd.f32 %v5380, %v5456
      %v5458 = vpop.f32.mrb[0].mxu0
      %v5459 = vadd.f32 %v5382, %v5458
      %5460 = vdwg.mxu0
      %v5461 = vand.u32 %v5218, 4294901760
      %5462 = vmatprep.subr.mxu0 %v5461
      %v5463 = vand.u32 %v5217, 4294901760
      %5464 = vmatpush1.msra.mxu0 %v5463
      %5465 = vmatprep.subr.mxu0 0.0
      %5466 = vmatpush1.msra.mxu0 0.0
      %5467 = vmatprep.subr.mxu0 0.0
      %5468 = vmatpush1.msra.mxu0 0.0
      %5469 = vmatprep.subr.mxu0 0.0
      %5470 = vmatpush1.msra.mxu0 0.0
      %5471 = vmatprep.subr.mxu0 0.0
      %5472 = vmatpush1.msra.mxu0 0.0
      %5473 = vmatprep.subr.mxu0 0.0
      %5474 = vmatpush1.msra.mxu0 0.0
      %5475 = vmatprep.subr.mxu0 0.0
      %5476 = vmatpush1.msra.mxu0 0.0
      %5477 = vmatprep.subr.mxu0 0.0
      %5478 = vmatpush1.msra.mxu0 0.0
      %5479 = vmatprep.subr.mxu0 0.0
      %5480 = vmatpush1.msra.mxu0 0.0
      %5481 = vmatprep.subr.mxu0 0.0
      %5482 = vmatpush1.msra.mxu0 0.0
      %5483 = vmatprep.subr.mxu0 0.0
      %5484 = vmatpush1.msra.mxu0 0.0
      %5485 = vmatprep.subr.mxu0 0.0
      %5486 = vmatpush1.msra.mxu0 0.0
      %5487 = vmatprep.subr.mxu0 0.0
      %5488 = vmatpush1.msra.mxu0 0.0
      %5489 = vmatprep.subr.mxu0 0.0
      %5490 = vmatpush1.msra.mxu0 0.0
      %5491 = vmatprep.subr.mxu0 0.0
      %5492 = vmatpush1.msra.mxu0 0.0
      %5493 = vmatprep.subr.mxu0 0.0
      %5494 = vmatpush1.msra.mxu0 0.0
      %5495 = vmatprep.subr.mxu0 0.0
      %5496 = vmatpush1.msra.mxu0 0.0
      %5497 = vmatprep.subr.mxu0 0.0
      %5498 = vmatpush1.msra.mxu0 0.0
      %5499 = vmatprep.subr.mxu0 0.0
      %5500 = vmatpush1.msra.mxu0 0.0
      %5501 = vmatprep.subr.mxu0 0.0
      %5502 = vmatpush1.msra.mxu0 0.0
      %5503 = vmatprep.subr.mxu0 0.0
      %5504 = vmatpush1.msra.mxu0 0.0
      %5505 = vmatprep.subr.mxu0 0.0
      %5506 = vmatpush1.msra.mxu0 0.0
      %5507 = vmatprep.subr.mxu0 0.0
      %5508 = vmatpush1.msra.mxu0 0.0
      %5509 = vmatprep.subr.mxu0 0.0
      %5510 = vmatpush1.msra.mxu0 0.0
      %5511 = vmatprep.subr.mxu0 0.0
      %5512 = vmatpush1.msra.mxu0 0.0
      %5513 = vmatprep.subr.mxu0 0.0
      %5514 = vmatpush1.msra.mxu0 0.0
      %5515 = vmatprep.subr.mxu0 0.0
      %5516 = vmatpush1.msra.mxu0 0.0
      %5517 = vmatprep.subr.mxu0 0.0
      %5518 = vmatpush1.msra.mxu0 0.0
      %5519 = vmatprep.subr.mxu0 0.0
      %5520 = vmatpush1.msra.mxu0 0.0
      %5521 = vmatprep.subr.mxu0 0.0
      %5522 = vmatpush1.msra.mxu0 0.0
      %5523 = vmatprep.subr.mxu0 0.0
      %5524 = vmatpush1.msra.mxu0 0.0
      %5525 = vmatprep.subr.mxu0 0.0
      %5526 = vmatpush1.msra.mxu0 0.0
      %5527 = vmatprep.mubr.f32.mxu0 0.0
      %v5528 = vand.u32 %v5222, 4294901760
      %v5529 = vsub.f32 %v5222, %v5528
      %v5530 = vand.u32 %v5529, 4294901760
      %5531 = vmatmul.mubr.f32.gmra.mrb[0].mxu0 %v5530
      %v5532 = vpop.f32.mrb[0].mxu0
      %v5533 = vadd.f32 %v5457, %v5532
      %v5534 = vpop.f32.mrb[0].mxu0
      %v5535 = vadd.f32 %v5459, %v5534
      %5536 = vdwg.mxu0
      %v5537 = vand.u32 %v5218, 4294901760
      %v5538 = vsub.f32 %v5218, %v5537
      %v5539 = vand.u32 %v5538, 4294901760
      %5540 = vmatprep.subr.mxu0 %v5539
      %v5541 = vand.u32 %v5217, 4294901760
      %v5542 = vsub.f32 %v5217, %v5541
      %v5543 = vand.u32 %v5542, 4294901760
      %5544 = vmatpush1.msra.mxu0 %v5543
      %5545 = vmatprep.subr.mxu0 0.0
      %5546 = vmatpush1.msra.mxu0 0.0
      %5547 = vmatprep.subr.mxu0 0.0
      %5548 = vmatpush1.msra.mxu0 0.0
      %5549 = vmatprep.subr.mxu0 0.0
      %5550 = vmatpush1.msra.mxu0 0.0
      %5551 = vmatprep.subr.mxu0 0.0
      %5552 = vmatpush1.msra.mxu0 0.0
      %5553 = vmatprep.subr.mxu0 0.0
      %5554 = vmatpush1.msra.mxu0 0.0
      %5555 = vmatprep.subr.mxu0 0.0
      %5556 = vmatpush1.msra.mxu0 0.0
      %5557 = vmatprep.subr.mxu0 0.0
      %5558 = vmatpush1.msra.mxu0 0.0
      %5559 = vmatprep.subr.mxu0 0.0
      %5560 = vmatpush1.msra.mxu0 0.0
      %5561 = vmatprep.subr.mxu0 0.0
      %5562 = vmatpush1.msra.mxu0 0.0
      %5563 = vmatprep.subr.mxu0 0.0
      %5564 = vmatpush1.msra.mxu0 0.0
      %5565 = vmatprep.subr.mxu0 0.0
      %5566 = vmatpush1.msra.mxu0 0.0
      %5567 = vmatprep.subr.mxu0 0.0
      %5568 = vmatpush1.msra.mxu0 0.0
      %5569 = vmatprep.subr.mxu0 0.0
      %5570 = vmatpush1.msra.mxu0 0.0
      %5571 = vmatprep.subr.mxu0 0.0
      %5572 = vmatpush1.msra.mxu0 0.0
      %5573 = vmatprep.subr.mxu0 0.0
      %5574 = vmatpush1.msra.mxu0 0.0
      %5575 = vmatprep.subr.mxu0 0.0
      %5576 = vmatpush1.msra.mxu0 0.0
      %5577 = vmatprep.subr.mxu0 0.0
      %5578 = vmatpush1.msra.mxu0 0.0
      %5579 = vmatprep.subr.mxu0 0.0
      %5580 = vmatpush1.msra.mxu0 0.0
      %5581 = vmatprep.subr.mxu0 0.0
      %5582 = vmatpush1.msra.mxu0 0.0
      %5583 = vmatprep.subr.mxu0 0.0
      %5584 = vmatpush1.msra.mxu0 0.0
      %5585 = vmatprep.subr.mxu0 0.0
      %5586 = vmatpush1.msra.mxu0 0.0
      %5587 = vmatprep.subr.mxu0 0.0
      %5588 = vmatpush1.msra.mxu0 0.0
      %5589 = vmatprep.subr.mxu0 0.0
      %5590 = vmatpush1.msra.mxu0 0.0
      %5591 = vmatprep.subr.mxu0 0.0
      %5592 = vmatpush1.msra.mxu0 0.0
      %5593 = vmatprep.subr.mxu0 0.0
      %5594 = vmatpush1.msra.mxu0 0.0
      %5595 = vmatprep.subr.mxu0 0.0
      %5596 = vmatpush1.msra.mxu0 0.0
      %5597 = vmatprep.subr.mxu0 0.0
      %5598 = vmatpush1.msra.mxu0 0.0
      %5599 = vmatprep.subr.mxu0 0.0
      %5600 = vmatpush1.msra.mxu0 0.0
      %5601 = vmatprep.subr.mxu0 0.0
      %5602 = vmatpush1.msra.mxu0 0.0
      %5603 = vmatprep.subr.mxu0 0.0
      %5604 = vmatpush1.msra.mxu0 0.0
      %5605 = vmatprep.subr.mxu0 0.0
      %5606 = vmatpush1.msra.mxu0 0.0
      %5607 = vmatprep.mubr.f32.mxu0 0.0
      %v5608 = vand.u32 %v5222, 4294901760
      %5609 = vmatmul.mubr.f32.gmra.mrb[0].mxu0 %v5608
      %v5610 = vpop.f32.mrb[0].mxu0
      %v5611 = vadd.f32 %v5533, %v5610
      %v5612 = vpop.f32.mrb[0].mxu0
      %v5613 = vadd.f32 %v5535, %v5612
      %5614 = vdwg.mxu0
      %v5615 = vand.u32 %v5218, 4294901760
      %5616 = vmatprep.subr.mxu0 %v5615
      %v5617 = vand.u32 %v5217, 4294901760
      %5618 = vmatpush1.msra.mxu0 %v5617
      %5619 = vmatprep.subr.mxu0 0.0
      %5620 = vmatpush1.msra.mxu0 0.0
      %5621 = vmatprep.subr.mxu0 0.0
      %5622 = vmatpush1.msra.mxu0 0.0
      %5623 = vmatprep.subr.mxu0 0.0
      %5624 = vmatpush1.msra.mxu0 0.0
      %5625 = vmatprep.subr.mxu0 0.0
      %5626 = vmatpush1.msra.mxu0 0.0
      %5627 = vmatprep.subr.mxu0 0.0
      %5628 = vmatpush1.msra.mxu0 0.0
      %5629 = vmatprep.subr.mxu0 0.0
      %5630 = vmatpush1.msra.mxu0 0.0
      %5631 = vmatprep.subr.mxu0 0.0
      %5632 = vmatpush1.msra.mxu0 0.0
      %5633 = vmatprep.subr.mxu0 0.0
      %5634 = vmatpush1.msra.mxu0 0.0
      %5635 = vmatprep.subr.mxu0 0.0
      %5636 = vmatpush1.msra.mxu0 0.0
      %5637 = vmatprep.subr.mxu0 0.0
      %5638 = vmatpush1.msra.mxu0 0.0
      %5639 = vmatprep.subr.mxu0 0.0
      %5640 = vmatpush1.msra.mxu0 0.0
      %5641 = vmatprep.subr.mxu0 0.0
      %5642 = vmatpush1.msra.mxu0 0.0
      %5643 = vmatprep.subr.mxu0 0.0
      %5644 = vmatpush1.msra.mxu0 0.0
      %5645 = vmatprep.subr.mxu0 0.0
      %5646 = vmatpush1.msra.mxu0 0.0
      %5647 = vmatprep.subr.mxu0 0.0
      %5648 = vmatpush1.msra.mxu0 0.0
      %5649 = vmatprep.subr.mxu0 0.0
      %5650 = vmatpush1.msra.mxu0 0.0
      %5651 = vmatprep.subr.mxu0 0.0
      %5652 = vmatpush1.msra.mxu0 0.0
      %5653 = vmatprep.subr.mxu0 0.0
      %5654 = vmatpush1.msra.mxu0 0.0
      %5655 = vmatprep.subr.mxu0 0.0
      %5656 = vmatpush1.msra.mxu0 0.0
      %5657 = vmatprep.subr.mxu0 0.0
      %5658 = vmatpush1.msra.mxu0 0.0
      %5659 = vmatprep.subr.mxu0 0.0
      %5660 = vmatpush1.msra.mxu0 0.0
      %5661 = vmatprep.subr.mxu0 0.0
      %5662 = vmatpush1.msra.mxu0 0.0
      %5663 = vmatprep.subr.mxu0 0.0
      %5664 = vmatpush1.msra.mxu0 0.0
      %5665 = vmatprep.subr.mxu0 0.0
      %5666 = vmatpush1.msra.mxu0 0.0
      %5667 = vmatprep.subr.mxu0 0.0
      %5668 = vmatpush1.msra.mxu0 0.0
      %5669 = vmatprep.subr.mxu0 0.0
      %5670 = vmatpush1.msra.mxu0 0.0
      %5671 = vmatprep.subr.mxu0 0.0
      %5672 = vmatpush1.msra.mxu0 0.0
      %5673 = vmatprep.subr.mxu0 0.0
      %5674 = vmatpush1.msra.mxu0 0.0
      %5675 = vmatprep.subr.mxu0 0.0
      %5676 = vmatpush1.msra.mxu0 0.0
      %5677 = vmatprep.subr.mxu0 0.0
      %5678 = vmatpush1.msra.mxu0 0.0
      %5679 = vmatprep.subr.mxu0 0.0
      %5680 = vmatpush1.msra.mxu0 0.0
      %5681 = vmatprep.mubr.f32.mxu0 0.0
      %v5682 = vand.u32 %v5222, 4294901760
      %5683 = vmatmul.mubr.f32.gmra.mrb[0].mxu0 %v5682
      %v5684 = vpop.f32.mrb[0].mxu0
      %v5685 = vadd.f32 %v5611, %v5684
      %v5686 = vpop.f32.mrb[0].mxu0
      %v5687 = vadd.f32 %v5613, %v5686
      %5688 = vdwg.mxu0
      %5689 = vrot.lane.b32.xlu0 %v235, 113
      %v5690 = vpop.permute.xlu0 %5689
      %5691 = vrot.lane.b32.xlu0 %v236, 113
      %v5692 = vpop.permute.xlu0 %5691
      %v5693 = vsel %vm1239, %v5690, %v5692
      %v5697 = vmul.f32 %v4709, %v5690
      %v5698 = vmul.f32 %v4710, %v5693
      %v5699 = vmul.f32 %v4711, %v5692
      %s5700 = scalar_lea.vmem %s2, 16
      %v5701 = vld [vmem:[%s5700] sm:$0xff]
      %5705 = vrot.lane.b32.xlu0 %v5697, 15
      %v5706 = vpop.permute.xlu0 %5705
      %5707 = vrot.lane.b32.xlu0 %v5698, 15
      %v5708 = vpop.permute.xlu0 %5707
      %5709 = vrot.lane.b32.xlu0 %v5699, 15
      %v5710 = vpop.permute.xlu0 %5709
      %v5711 = vsel %vm1256, %v5706, %v5708
      %v5712 = vsel %vm1256, %v5708, %v5710
      %v5716 = vsel %vm4739, %v5701, 0
      %v5718 = vand.u32 %v5712, 4294901760
      %5719 = vmatprep.subr.mxu0 %v5718
      %v5720 = vand.u32 %v5711, 4294901760
      %5721 = vmatpush1.msra.mxu0 %v5720
      %5722 = vmatprep.subr.mxu0 0.0
      %5723 = vmatpush1.msra.mxu0 0.0
      %5724 = vmatprep.subr.mxu0 0.0
      %5725 = vmatpush1.msra.mxu0 0.0
      %5726 = vmatprep.subr.mxu0 0.0
      %5727 = vmatpush1.msra.mxu0 0.0
      %5728 = vmatprep.subr.mxu0 0.0
      %5729 = vmatpush1.msra.mxu0 0.0
      %5730 = vmatprep.subr.mxu0 0.0
      %5731 = vmatpush1.msra.mxu0 0.0
      %5732 = vmatprep.subr.mxu0 0.0
      %5733 = vmatpush1.msra.mxu0 0.0
      %5734 = vmatprep.subr.mxu0 0.0
      %5735 = vmatpush1.msra.mxu0 0.0
      %5736 = vmatprep.subr.mxu0 0.0
      %5737 = vmatpush1.msra.mxu0 0.0
      %5738 = vmatprep.subr.mxu0 0.0
      %5739 = vmatpush1.msra.mxu0 0.0
      %5740 = vmatprep.subr.mxu0 0.0
      %5741 = vmatpush1.msra.mxu0 0.0
      %5742 = vmatprep.subr.mxu0 0.0
      %5743 = vmatpush1.msra.mxu0 0.0
      %5744 = vmatprep.subr.mxu0 0.0
      %5745 = vmatpush1.msra.mxu0 0.0
      %5746 = vmatprep.subr.mxu0 0.0
      %5747 = vmatpush1.msra.mxu0 0.0
      %5748 = vmatprep.subr.mxu0 0.0
      %5749 = vmatpush1.msra.mxu0 0.0
      %5750 = vmatprep.subr.mxu0 0.0
      %5751 = vmatpush1.msra.mxu0 0.0
      %5752 = vmatprep.subr.mxu0 0.0
      %5753 = vmatpush1.msra.mxu0 0.0
      %5754 = vmatprep.subr.mxu0 0.0
      %5755 = vmatpush1.msra.mxu0 0.0
      %5756 = vmatprep.subr.mxu0 0.0
      %5757 = vmatpush1.msra.mxu0 0.0
      %5758 = vmatprep.subr.mxu0 0.0
      %5759 = vmatpush1.msra.mxu0 0.0
      %5760 = vmatprep.subr.mxu0 0.0
      %5761 = vmatpush1.msra.mxu0 0.0
      %5762 = vmatprep.subr.mxu0 0.0
      %5763 = vmatpush1.msra.mxu0 0.0
      %5764 = vmatprep.subr.mxu0 0.0
      %5765 = vmatpush1.msra.mxu0 0.0
      %5766 = vmatprep.subr.mxu0 0.0
      %5767 = vmatpush1.msra.mxu0 0.0
      %5768 = vmatprep.subr.mxu0 0.0
      %5769 = vmatpush1.msra.mxu0 0.0
      %5770 = vmatprep.subr.mxu0 0.0
      %5771 = vmatpush1.msra.mxu0 0.0
      %5772 = vmatprep.subr.mxu0 0.0
      %5773 = vmatpush1.msra.mxu0 0.0
      %5774 = vmatprep.subr.mxu0 0.0
      %5775 = vmatpush1.msra.mxu0 0.0
      %5776 = vmatprep.subr.mxu0 0.0
      %5777 = vmatpush1.msra.mxu0 0.0
      %5778 = vmatprep.subr.mxu0 0.0
      %5779 = vmatpush1.msra.mxu0 0.0
      %5780 = vmatprep.subr.mxu0 0.0
      %5781 = vmatpush1.msra.mxu0 0.0
      %5782 = vmatprep.subr.mxu0 0.0
      %5783 = vmatpush1.msra.mxu0 0.0
      %5784 = vmatprep.mubr.f32.mxu0 0.0
      %v5785 = vand.u32 %v5716, 4294901760
      %v5786 = vsub.f32 %v5716, %v5785
      %v5787 = vand.u32 %v5786, 4294901760
      %v5788 = vsub.f32 %v5786, %v5787
      %v5789 = vand.u32 %v5788, 4294901760
      %5790 = vmatmul.mubr.f32.gmra.mrb[0].mxu0 %v5789
      %v5791 = vpop.f32.mrb[0].mxu0
      %v5792 = vadd.f32 0.0, %v5791
      %v5793 = vpop.f32.mrb[0].mxu0
      %v5794 = vadd.f32 0.0, %v5793
      %5795 = vdwg.mxu0
      %v5796 = vand.u32 %v5712, 4294901760
      %v5797 = vsub.f32 %v5712, %v5796
      %v5798 = vand.u32 %v5797, 4294901760
      %v5799 = vsub.f32 %v5797, %v5798
      %v5800 = vand.u32 %v5799, 4294901760
      %5801 = vmatprep.subr.mxu0 %v5800
      %v5802 = vand.u32 %v5711, 4294901760
      %v5803 = vsub.f32 %v5711, %v5802
      %v5804 = vand.u32 %v5803, 4294901760
      %v5805 = vsub.f32 %v5803, %v5804
      %v5806 = vand.u32 %v5805, 4294901760
      %5807 = vmatpush1.msra.mxu0 %v5806
      %5808 = vmatprep.subr.mxu0 0.0
      %5809 = vmatpush1.msra.mxu0 0.0
      %5810 = vmatprep.subr.mxu0 0.0
      %5811 = vmatpush1.msra.mxu0 0.0
      %5812 = vmatprep.subr.mxu0 0.0
      %5813 = vmatpush1.msra.mxu0 0.0
      %5814 = vmatprep.subr.mxu0 0.0
      %5815 = vmatpush1.msra.mxu0 0.0
      %5816 = vmatprep.subr.mxu0 0.0
      %5817 = vmatpush1.msra.mxu0 0.0
      %5818 = vmatprep.subr.mxu0 0.0
      %5819 = vmatpush1.msra.mxu0 0.0
      %5820 = vmatprep.subr.mxu0 0.0
      %5821 = vmatpush1.msra.mxu0 0.0
      %5822 = vmatprep.subr.mxu0 0.0
      %5823 = vmatpush1.msra.mxu0 0.0
      %5824 = vmatprep.subr.mxu0 0.0
      %5825 = vmatpush1.msra.mxu0 0.0
      %5826 = vmatprep.subr.mxu0 0.0
      %5827 = vmatpush1.msra.mxu0 0.0
      %5828 = vmatprep.subr.mxu0 0.0
      %5829 = vmatpush1.msra.mxu0 0.0
      %5830 = vmatprep.subr.mxu0 0.0
      %5831 = vmatpush1.msra.mxu0 0.0
      %5832 = vmatprep.subr.mxu0 0.0
      %5833 = vmatpush1.msra.mxu0 0.0
      %5834 = vmatprep.subr.mxu0 0.0
      %5835 = vmatpush1.msra.mxu0 0.0
      %5836 = vmatprep.subr.mxu0 0.0
      %5837 = vmatpush1.msra.mxu0 0.0
      %5838 = vmatprep.subr.mxu0 0.0
      %5839 = vmatpush1.msra.mxu0 0.0
      %5840 = vmatprep.subr.mxu0 0.0
      %5841 = vmatpush1.msra.mxu0 0.0
      %5842 = vmatprep.subr.mxu0 0.0
      %5843 = vmatpush1.msra.mxu0 0.0
      %5844 = vmatprep.subr.mxu0 0.0
      %5845 = vmatpush1.msra.mxu0 0.0
      %5846 = vmatprep.subr.mxu0 0.0
      %5847 = vmatpush1.msra.mxu0 0.0
      %5848 = vmatprep.subr.mxu0 0.0
      %5849 = vmatpush1.msra.mxu0 0.0
      %5850 = vmatprep.subr.mxu0 0.0
      %5851 = vmatpush1.msra.mxu0 0.0
      %5852 = vmatprep.subr.mxu0 0.0
      %5853 = vmatpush1.msra.mxu0 0.0
      %5854 = vmatprep.subr.mxu0 0.0
      %5855 = vmatpush1.msra.mxu0 0.0
      %5856 = vmatprep.subr.mxu0 0.0
      %5857 = vmatpush1.msra.mxu0 0.0
      %5858 = vmatprep.subr.mxu0 0.0
      %5859 = vmatpush1.msra.mxu0 0.0
      %5860 = vmatprep.subr.mxu0 0.0
      %5861 = vmatpush1.msra.mxu0 0.0
      %5862 = vmatprep.subr.mxu0 0.0
      %5863 = vmatpush1.msra.mxu0 0.0
      %5864 = vmatprep.subr.mxu0 0.0
      %5865 = vmatpush1.msra.mxu0 0.0
      %5866 = vmatprep.subr.mxu0 0.0
      %5867 = vmatpush1.msra.mxu0 0.0
      %5868 = vmatprep.subr.mxu0 0.0
      %5869 = vmatpush1.msra.mxu0 0.0
      %5870 = vmatprep.mubr.f32.mxu0 0.0
      %v5871 = vand.u32 %v5716, 4294901760
      %5872 = vmatmul.mubr.f32.gmra.mrb[0].mxu0 %v5871
      %v5873 = vpop.f32.mrb[0].mxu0
      %v5874 = vadd.f32 %v5792, %v5873
      %v5875 = vpop.f32.mrb[0].mxu0
      %v5876 = vadd.f32 %v5794, %v5875
      %5877 = vdwg.mxu0
      %v5878 = vand.u32 %v5712, 4294901760
      %v5879 = vsub.f32 %v5712, %v5878
      %5880 = vmatprep.subr.mxu0 %v5879
      %v5881 = vand.u32 %v5711, 4294901760
      %v5882 = vsub.f32 %v5711, %v5881
      %5883 = vmatpush1.msra.mxu0 %v5882
      %5884 = vmatprep.subr.mxu0 0.0
      %5885 = vmatpush1.msra.mxu0 0.0
      %5886 = vmatprep.subr.mxu0 0.0
      %5887 = vmatpush1.msra.mxu0 0.0
      %5888 = vmatprep.subr.mxu0 0.0
      %5889 = vmatpush1.msra.mxu0 0.0
      %5890 = vmatprep.subr.mxu0 0.0
      %5891 = vmatpush1.msra.mxu0 0.0
      %5892 = vmatprep.subr.mxu0 0.0
      %5893 = vmatpush1.msra.mxu0 0.0
      %5894 = vmatprep.subr.mxu0 0.0
      %5895 = vmatpush1.msra.mxu0 0.0
      %5896 = vmatprep.subr.mxu0 0.0
      %5897 = vmatpush1.msra.mxu0 0.0
      %5898 = vmatprep.subr.mxu0 0.0
      %5899 = vmatpush1.msra.mxu0 0.0
      %5900 = vmatprep.subr.mxu0 0.0
      %5901 = vmatpush1.msra.mxu0 0.0
      %5902 = vmatprep.subr.mxu0 0.0
      %5903 = vmatpush1.msra.mxu0 0.0
      %5904 = vmatprep.subr.mxu0 0.0
      %5905 = vmatpush1.msra.mxu0 0.0
      %5906 = vmatprep.subr.mxu0 0.0
      %5907 = vmatpush1.msra.mxu0 0.0
      %5908 = vmatprep.subr.mxu0 0.0
      %5909 = vmatpush1.msra.mxu0 0.0
      %5910 = vmatprep.subr.mxu0 0.0
      %5911 = vmatpush1.msra.mxu0 0.0
      %5912 = vmatprep.subr.mxu0 0.0
      %5913 = vmatpush1.msra.mxu0 0.0
      %5914 = vmatprep.subr.mxu0 0.0
      %5915 = vmatpush1.msra.mxu0 0.0
      %5916 = vmatprep.subr.mxu0 0.0
      %5917 = vmatpush1.msra.mxu0 0.0
      %5918 = vmatprep.subr.mxu0 0.0
      %5919 = vmatpush1.msra.mxu0 0.0
      %5920 = vmatprep.subr.mxu0 0.0
      %5921 = vmatpush1.msra.mxu0 0.0
      %5922 = vmatprep.subr.mxu0 0.0
      %5923 = vmatpush1.msra.mxu0 0.0
      %5924 = vmatprep.subr.mxu0 0.0
      %5925 = vmatpush1.msra.mxu0 0.0
      %5926 = vmatprep.subr.mxu0 0.0
      %5927 = vmatpush1.msra.mxu0 0.0
      %5928 = vmatprep.subr.mxu0 0.0
      %5929 = vmatpush1.msra.mxu0 0.0
      %5930 = vmatprep.subr.mxu0 0.0
      %5931 = vmatpush1.msra.mxu0 0.0
      %5932 = vmatprep.subr.mxu0 0.0
      %5933 = vmatpush1.msra.mxu0 0.0
      %5934 = vmatprep.subr.mxu0 0.0
      %5935 = vmatpush1.msra.mxu0 0.0
      %5936 = vmatprep.subr.mxu0 0.0
      %5937 = vmatpush1.msra.mxu0 0.0
      %5938 = vmatprep.subr.mxu0 0.0
      %5939 = vmatpush1.msra.mxu0 0.0
      %5940 = vmatprep.subr.mxu0 0.0
      %5941 = vmatpush1.msra.mxu0 0.0
      %5942 = vmatprep.subr.mxu0 0.0
      %5943 = vmatpush1.msra.mxu0 0.0
      %5944 = vmatprep.subr.mxu0 0.0
      %5945 = vmatpush1.msra.mxu0 0.0
      %5946 = vmatprep.mubr.f32.mxu0 0.0
      %v5947 = vand.u32 %v5716, 4294901760
      %v5948 = vsub.f32 %v5716, %v5947
      %5949 = vmatmul.mubr.f32.gmra.mrb[0].mxu0 %v5948
      %v5950 = vpop.f32.mrb[0].mxu0
      %v5951 = vadd.f32 %v5874, %v5950
      %v5952 = vpop.f32.mrb[0].mxu0
      %v5953 = vadd.f32 %v5876, %v5952
      %5954 = vdwg.mxu0
      %v5955 = vand.u32 %v5712, 4294901760
      %5956 = vmatprep.subr.mxu0 %v5955
      %v5957 = vand.u32 %v5711, 4294901760
      %5958 = vmatpush1.msra.mxu0 %v5957
      %5959 = vmatprep.subr.mxu0 0.0
      %5960 = vmatpush1.msra.mxu0 0.0
      %5961 = vmatprep.subr.mxu0 0.0
      %5962 = vmatpush1.msra.mxu0 0.0
      %5963 = vmatprep.subr.mxu0 0.0
      %5964 = vmatpush1.msra.mxu0 0.0
      %5965 = vmatprep.subr.mxu0 0.0
      %5966 = vmatpush1.msra.mxu0 0.0
      %5967 = vmatprep.subr.mxu0 0.0
      %5968 = vmatpush1.msra.mxu0 0.0
      %5969 = vmatprep.subr.mxu0 0.0
      %5970 = vmatpush1.msra.mxu0 0.0
      %5971 = vmatprep.subr.mxu0 0.0
      %5972 = vmatpush1.msra.mxu0 0.0
      %5973 = vmatprep.subr.mxu0 0.0
      %5974 = vmatpush1.msra.mxu0 0.0
      %5975 = vmatprep.subr.mxu0 0.0
      %5976 = vmatpush1.msra.mxu0 0.0
      %5977 = vmatprep.subr.mxu0 0.0
      %5978 = vmatpush1.msra.mxu0 0.0
      %5979 = vmatprep.subr.mxu0 0.0
      %5980 = vmatpush1.msra.mxu0 0.0
      %5981 = vmatprep.subr.mxu0 0.0
      %5982 = vmatpush1.msra.mxu0 0.0
      %5983 = vmatprep.subr.mxu0 0.0
      %5984 = vmatpush1.msra.mxu0 0.0
      %5985 = vmatprep.subr.mxu0 0.0
      %5986 = vmatpush1.msra.mxu0 0.0
      %5987 = vmatprep.subr.mxu0 0.0
      %5988 = vmatpush1.msra.mxu0 0.0
      %5989 = vmatprep.subr.mxu0 0.0
      %5990 = vmatpush1.msra.mxu0 0.0
      %5991 = vmatprep.subr.mxu0 0.0
      %5992 = vmatpush1.msra.mxu0 0.0
      %5993 = vmatprep.subr.mxu0 0.0
      %5994 = vmatpush1.msra.mxu0 0.0
      %5995 = vmatprep.subr.mxu0 0.0
      %5996 = vmatpush1.msra.mxu0 0.0
      %5997 = vmatprep.subr.mxu0 0.0
      %5998 = vmatpush1.msra.mxu0 0.0
      %5999 = vmatprep.subr.mxu0 0.0
      %6000 = vmatpush1.msra.mxu0 0.0
      %6001 = vmatprep.subr.mxu0 0.0
      %6002 = vmatpush1.msra.mxu0 0.0
      %6003 = vmatprep.subr.mxu0 0.0
      %6004 = vmatpush1.msra.mxu0 0.0
      %6005 = vmatprep.subr.mxu0 0.0
      %6006 = vmatpush1.msra.mxu0 0.0
      %6007 = vmatprep.subr.mxu0 0.0
      %6008 = vmatpush1.msra.mxu0 0.0
      %6009 = vmatprep.subr.mxu0 0.0
      %6010 = vmatpush1.msra.mxu0 0.0
      %6011 = vmatprep.subr.mxu0 0.0
      %6012 = vmatpush1.msra.mxu0 0.0
      %6013 = vmatprep.subr.mxu0 0.0
      %6014 = vmatpush1.msra.mxu0 0.0
      %6015 = vmatprep.subr.mxu0 0.0
      %6016 = vmatpush1.msra.mxu0 0.0
      %6017 = vmatprep.subr.mxu0 0.0
      %6018 = vmatpush1.msra.mxu0 0.0
      %6019 = vmatprep.subr.mxu0 0.0
      %6020 = vmatpush1.msra.mxu0 0.0
      %6021 = vmatprep.mubr.f32.mxu0 0.0
      %v6022 = vand.u32 %v5716, 4294901760
      %v6023 = vsub.f32 %v5716, %v6022
      %v6024 = vand.u32 %v6023, 4294901760
      %6025 = vmatmul.mubr.f32.gmra.mrb[0].mxu0 %v6024
      %v6026 = vpop.f32.mrb[0].mxu0
      %v6027 = vadd.f32 %v5951, %v6026
      %v6028 = vpop.f32.mrb[0].mxu0
      %v6029 = vadd.f32 %v5953, %v6028
      %6030 = vdwg.mxu0
      %v6031 = vand.u32 %v5712, 4294901760
      %v6032 = vsub.f32 %v5712, %v6031
      %v6033 = vand.u32 %v6032, 4294901760
      %6034 = vmatprep.subr.mxu0 %v6033
      %v6035 = vand.u32 %v5711, 4294901760
      %v6036 = vsub.f32 %v5711, %v6035
      %v6037 = vand.u32 %v6036, 4294901760
      %6038 = vmatpush1.msra.mxu0 %v6037
      %6039 = vmatprep.subr.mxu0 0.0
      %6040 = vmatpush1.msra.mxu0 0.0
      %6041 = vmatprep.subr.mxu0 0.0
      %6042 = vmatpush1.msra.mxu0 0.0
      %6043 = vmatprep.subr.mxu0 0.0
      %6044 = vmatpush1.msra.mxu0 0.0
      %6045 = vmatprep.subr.mxu0 0.0
      %6046 = vmatpush1.msra.mxu0 0.0
      %6047 = vmatprep.subr.mxu0 0.0
      %6048 = vmatpush1.msra.mxu0 0.0
      %6049 = vmatprep.subr.mxu0 0.0
      %6050 = vmatpush1.msra.mxu0 0.0
      %6051 = vmatprep.subr.mxu0 0.0
      %6052 = vmatpush1.msra.mxu0 0.0
      %6053 = vmatprep.subr.mxu0 0.0
      %6054 = vmatpush1.msra.mxu0 0.0
      %6055 = vmatprep.subr.mxu0 0.0
      %6056 = vmatpush1.msra.mxu0 0.0
      %6057 = vmatprep.subr.mxu0 0.0
      %6058 = vmatpush1.msra.mxu0 0.0
      %6059 = vmatprep.subr.mxu0 0.0
      %6060 = vmatpush1.msra.mxu0 0.0
      %6061 = vmatprep.subr.mxu0 0.0
      %6062 = vmatpush1.msra.mxu0 0.0
      %6063 = vmatprep.subr.mxu0 0.0
      %6064 = vmatpush1.msra.mxu0 0.0
      %6065 = vmatprep.subr.mxu0 0.0
      %6066 = vmatpush1.msra.mxu0 0.0
      %6067 = vmatprep.subr.mxu0 0.0
      %6068 = vmatpush1.msra.mxu0 0.0
      %6069 = vmatprep.subr.mxu0 0.0
      %6070 = vmatpush1.msra.mxu0 0.0
      %6071 = vmatprep.subr.mxu0 0.0
      %6072 = vmatpush1.msra.mxu0 0.0
      %6073 = vmatprep.subr.mxu0 0.0
      %6074 = vmatpush1.msra.mxu0 0.0
      %6075 = vmatprep.subr.mxu0 0.0
      %6076 = vmatpush1.msra.mxu0 0.0
      %6077 = vmatprep.subr.mxu0 0.0
      %6078 = vmatpush1.msra.mxu0 0.0
      %6079 = vmatprep.subr.mxu0 0.0
      %6080 = vmatpush1.msra.mxu0 0.0
      %6081 = vmatprep.subr.mxu0 0.0
      %6082 = vmatpush1.msra.mxu0 0.0
      %6083 = vmatprep.subr.mxu0 0.0
      %6084 = vmatpush1.msra.mxu0 0.0
      %6085 = vmatprep.subr.mxu0 0.0
      %6086 = vmatpush1.msra.mxu0 0.0
      %6087 = vmatprep.subr.mxu0 0.0
      %6088 = vmatpush1.msra.mxu0 0.0
      %6089 = vmatprep.subr.mxu0 0.0
      %6090 = vmatpush1.msra.mxu0 0.0
      %6091 = vmatprep.subr.mxu0 0.0
      %6092 = vmatpush1.msra.mxu0 0.0
      %6093 = vmatprep.subr.mxu0 0.0
      %6094 = vmatpush1.msra.mxu0 0.0
      %6095 = vmatprep.subr.mxu0 0.0
      %6096 = vmatpush1.msra.mxu0 0.0
      %6097 = vmatprep.subr.mxu0 0.0
      %6098 = vmatpush1.msra.mxu0 0.0
      %6099 = vmatprep.subr.mxu0 0.0
      %6100 = vmatpush1.msra.mxu0 0.0
      %6101 = vmatprep.mubr.f32.mxu0 0.0
      %v6102 = vand.u32 %v5716, 4294901760
      %6103 = vmatmul.mubr.f32.gmra.mrb[0].mxu0 %v6102
      %v6104 = vpop.f32.mrb[0].mxu0
      %v6105 = vadd.f32 %v6027, %v6104
      %v6106 = vpop.f32.mrb[0].mxu0
      %v6107 = vadd.f32 %v6029, %v6106
      %6108 = vdwg.mxu0
      %v6109 = vand.u32 %v5712, 4294901760
      %6110 = vmatprep.subr.mxu0 %v6109
      %v6111 = vand.u32 %v5711, 4294901760
      %6112 = vmatpush1.msra.mxu0 %v6111
      %6113 = vmatprep.subr.mxu0 0.0
      %6114 = vmatpush1.msra.mxu0 0.0
      %6115 = vmatprep.subr.mxu0 0.0
      %6116 = vmatpush1.msra.mxu0 0.0
      %6117 = vmatprep.subr.mxu0 0.0
      %6118 = vmatpush1.msra.mxu0 0.0
      %6119 = vmatprep.subr.mxu0 0.0
      %6120 = vmatpush1.msra.mxu0 0.0
      %6121 = vmatprep.subr.mxu0 0.0
      %6122 = vmatpush1.msra.mxu0 0.0
      %6123 = vmatprep.subr.mxu0 0.0
      %6124 = vmatpush1.msra.mxu0 0.0
      %6125 = vmatprep.subr.mxu0 0.0
      %6126 = vmatpush1.msra.mxu0 0.0
      %6127 = vmatprep.subr.mxu0 0.0
      %6128 = vmatpush1.msra.mxu0 0.0
      %6129 = vmatprep.subr.mxu0 0.0
      %6130 = vmatpush1.msra.mxu0 0.0
      %6131 = vmatprep.subr.mxu0 0.0
      %6132 = vmatpush1.msra.mxu0 0.0
      %6133 = vmatprep.subr.mxu0 0.0
      %6134 = vmatpush1.msra.mxu0 0.0
      %6135 = vmatprep.subr.mxu0 0.0
      %6136 = vmatpush1.msra.mxu0 0.0
      %6137 = vmatprep.subr.mxu0 0.0
      %6138 = vmatpush1.msra.mxu0 0.0
      %6139 = vmatprep.subr.mxu0 0.0
      %6140 = vmatpush1.msra.mxu0 0.0
      %6141 = vmatprep.subr.mxu0 0.0
      %6142 = vmatpush1.msra.mxu0 0.0
      %6143 = vmatprep.subr.mxu0 0.0
      %6144 = vmatpush1.msra.mxu0 0.0
      %6145 = vmatprep.subr.mxu0 0.0
      %6146 = vmatpush1.msra.mxu0 0.0
      %6147 = vmatprep.subr.mxu0 0.0
      %6148 = vmatpush1.msra.mxu0 0.0
      %6149 = vmatprep.subr.mxu0 0.0
      %6150 = vmatpush1.msra.mxu0 0.0
      %6151 = vmatprep.subr.mxu0 0.0
      %6152 = vmatpush1.msra.mxu0 0.0
      %6153 = vmatprep.subr.mxu0 0.0
      %6154 = vmatpush1.msra.mxu0 0.0
      %6155 = vmatprep.subr.mxu0 0.0
      %6156 = vmatpush1.msra.mxu0 0.0
      %6157 = vmatprep.subr.mxu0 0.0
      %6158 = vmatpush1.msra.mxu0 0.0
      %6159 = vmatprep.subr.mxu0 0.0
      %6160 = vmatpush1.msra.mxu0 0.0
      %6161 = vmatprep.subr.mxu0 0.0
      %6162 = vmatpush1.msra.mxu0 0.0
      %6163 = vmatprep.subr.mxu0 0.0
      %6164 = vmatpush1.msra.mxu0 0.0
      %6165 = vmatprep.subr.mxu0 0.0
      %6166 = vmatpush1.msra.mxu0 0.0
      %6167 = vmatprep.subr.mxu0 0.0
      %6168 = vmatpush1.msra.mxu0 0.0
      %6169 = vmatprep.subr.mxu0 0.0
      %6170 = vmatpush1.msra.mxu0 0.0
      %6171 = vmatprep.subr.mxu0 0.0
      %6172 = vmatpush1.msra.mxu0 0.0
      %6173 = vmatprep.subr.mxu0 0.0
      %6174 = vmatpush1.msra.mxu0 0.0
      %6175 = vmatprep.mubr.f32.mxu0 0.0
      %v6176 = vand.u32 %v5716, 4294901760
      %6177 = vmatmul.mubr.f32.gmra.mrb[0].mxu0 %v6176
      %v6178 = vpop.f32.mrb[0].mxu0
      %v6179 = vadd.f32 %v6105, %v6178
      %v6180 = vpop.f32.mrb[0].mxu0
      %v6181 = vadd.f32 %v6107, %v6180
      %6182 = vdwg.mxu0
      %v6183 = vadd.f32 %v5685, %v6179
      %v6184 = vadd.f32 %v5687, %v6181
      %6185 = vrot.lane.b32.xlu0 %v229, 127
      %v6186 = vpop.permute.xlu0 %6185
      %6187 = vrot.lane.b32.xlu0 %v230, 127
      %v6188 = vpop.permute.xlu0 %6187
      %v6189 = vsel %vm1738, %v6186, %v6188
      %v6193 = vmul.f32 %v4709, %v6186
      %v6194 = vmul.f32 %v4710, %v6189
      %v6195 = vmul.f32 %v4711, %v6188
      %s6196 = scalar_lea.vmem %s2, 24
      %v6197 = vld [vmem:[%s6196] sm:$0xff]
      %6201 = vrot.lane.b32.xlu0 %v6193, 1
      %v6202 = vpop.permute.xlu0 %6201
      %6203 = vrot.lane.b32.xlu0 %v6194, 1
      %v6204 = vpop.permute.xlu0 %6203
      %6205 = vrot.lane.b32.xlu0 %v6195, 1
      %v6206 = vpop.permute.xlu0 %6205
      %v6207 = vsel %vm1755, %v6202, %v6204
      %v6208 = vsel %vm1755, %v6204, %v6206
      %v6212 = vsel %vm4739, %v6197, 0
      %v6214 = vand.u32 %v6208, 4294901760
      %6215 = vmatprep.subr.mxu0 %v6214
      %v6216 = vand.u32 %v6207, 4294901760
      %6217 = vmatpush1.msra.mxu0 %v6216
      %6218 = vmatprep.subr.mxu0 0.0
      %6219 = vmatpush1.msra.mxu0 0.0
      %6220 = vmatprep.subr.mxu0 0.0
      %6221 = vmatpush1.msra.mxu0 0.0
      %6222 = vmatprep.subr.mxu0 0.0
      %6223 = vmatpush1.msra.mxu0 0.0
      %6224 = vmatprep.subr.mxu0 0.0
      %6225 = vmatpush1.msra.mxu0 0.0
      %6226 = vmatprep.subr.mxu0 0.0
      %6227 = vmatpush1.msra.mxu0 0.0
      %6228 = vmatprep.subr.mxu0 0.0
      %6229 = vmatpush1.msra.mxu0 0.0
      %6230 = vmatprep.subr.mxu0 0.0
      %6231 = vmatpush1.msra.mxu0 0.0
      %6232 = vmatprep.subr.mxu0 0.0
      %6233 = vmatpush1.msra.mxu0 0.0
      %6234 = vmatprep.subr.mxu0 0.0
      %6235 = vmatpush1.msra.mxu0 0.0
      %6236 = vmatprep.subr.mxu0 0.0
      %6237 = vmatpush1.msra.mxu0 0.0
      %6238 = vmatprep.subr.mxu0 0.0
      %6239 = vmatpush1.msra.mxu0 0.0
      %6240 = vmatprep.subr.mxu0 0.0
      %6241 = vmatpush1.msra.mxu0 0.0
      %6242 = vmatprep.subr.mxu0 0.0
      %6243 = vmatpush1.msra.mxu0 0.0
      %6244 = vmatprep.subr.mxu0 0.0
      %6245 = vmatpush1.msra.mxu0 0.0
      %6246 = vmatprep.subr.mxu0 0.0
      %6247 = vmatpush1.msra.mxu0 0.0
      %6248 = vmatprep.subr.mxu0 0.0
      %6249 = vmatpush1.msra.mxu0 0.0
      %6250 = vmatprep.subr.mxu0 0.0
      %6251 = vmatpush1.msra.mxu0 0.0
      %6252 = vmatprep.subr.mxu0 0.0
      %6253 = vmatpush1.msra.mxu0 0.0
      %6254 = vmatprep.subr.mxu0 0.0
      %6255 = vmatpush1.msra.mxu0 0.0
      %6256 = vmatprep.subr.mxu0 0.0
      %6257 = vmatpush1.msra.mxu0 0.0
      %6258 = vmatprep.subr.mxu0 0.0
      %6259 = vmatpush1.msra.mxu0 0.0
      %6260 = vmatprep.subr.mxu0 0.0
      %6261 = vmatpush1.msra.mxu0 0.0
      %6262 = vmatprep.subr.mxu0 0.0
      %6263 = vmatpush1.msra.mxu0 0.0
      %6264 = vmatprep.subr.mxu0 0.0
      %6265 = vmatpush1.msra.mxu0 0.0
      %6266 = vmatprep.subr.mxu0 0.0
      %6267 = vmatpush1.msra.mxu0 0.0
      %6268 = vmatprep.subr.mxu0 0.0
      %6269 = vmatpush1.msra.mxu0 0.0
      %6270 = vmatprep.subr.mxu0 0.0
      %6271 = vmatpush1.msra.mxu0 0.0
      %6272 = vmatprep.subr.mxu0 0.0
      %6273 = vmatpush1.msra.mxu0 0.0
      %6274 = vmatprep.subr.mxu0 0.0
      %6275 = vmatpush1.msra.mxu0 0.0
      %6276 = vmatprep.subr.mxu0 0.0
      %6277 = vmatpush1.msra.mxu0 0.0
      %6278 = vmatprep.subr.mxu0 0.0
      %6279 = vmatpush1.msra.mxu0 0.0
      %6280 = vmatprep.mubr.f32.mxu0 0.0
      %v6281 = vand.u32 %v6212, 4294901760
      %v6282 = vsub.f32 %v6212, %v6281
      %v6283 = vand.u32 %v6282, 4294901760
      %v6284 = vsub.f32 %v6282, %v6283
      %v6285 = vand.u32 %v6284, 4294901760
      %6286 = vmatmul.mubr.f32.gmra.mrb[0].mxu0 %v6285
      %v6287 = vpop.f32.mrb[0].mxu0
      %v6288 = vadd.f32 0.0, %v6287
      %v6289 = vpop.f32.mrb[0].mxu0
      %v6290 = vadd.f32 0.0, %v6289
      %6291 = vdwg.mxu0
      %v6292 = vand.u32 %v6208, 4294901760
      %v6293 = vsub.f32 %v6208, %v6292
      %v6294 = vand.u32 %v6293, 4294901760
      %v6295 = vsub.f32 %v6293, %v6294
      %v6296 = vand.u32 %v6295, 4294901760
      %6297 = vmatprep.subr.mxu0 %v6296
      %v6298 = vand.u32 %v6207, 4294901760
      %v6299 = vsub.f32 %v6207, %v6298
      %v6300 = vand.u32 %v6299, 4294901760
      %v6301 = vsub.f32 %v6299, %v6300
      %v6302 = vand.u32 %v6301, 4294901760
      %6303 = vmatpush1.msra.mxu0 %v6302
      %6304 = vmatprep.subr.mxu0 0.0
      %6305 = vmatpush1.msra.mxu0 0.0
      %6306 = vmatprep.subr.mxu0 0.0
      %6307 = vmatpush1.msra.mxu0 0.0
      %6308 = vmatprep.subr.mxu0 0.0
      %6309 = vmatpush1.msra.mxu0 0.0
      %6310 = vmatprep.subr.mxu0 0.0
      %6311 = vmatpush1.msra.mxu0 0.0
      %6312 = vmatprep.subr.mxu0 0.0
      %6313 = vmatpush1.msra.mxu0 0.0
      %6314 = vmatprep.subr.mxu0 0.0
      %6315 = vmatpush1.msra.mxu0 0.0
      %6316 = vmatprep.subr.mxu0 0.0
      %6317 = vmatpush1.msra.mxu0 0.0
      %6318 = vmatprep.subr.mxu0 0.0
      %6319 = vmatpush1.msra.mxu0 0.0
      %6320 = vmatprep.subr.mxu0 0.0
      %6321 = vmatpush1.msra.mxu0 0.0
      %6322 = vmatprep.subr.mxu0 0.0
      %6323 = vmatpush1.msra.mxu0 0.0
      %6324 = vmatprep.subr.mxu0 0.0
      %6325 = vmatpush1.msra.mxu0 0.0
      %6326 = vmatprep.subr.mxu0 0.0
      %6327 = vmatpush1.msra.mxu0 0.0
      %6328 = vmatprep.subr.mxu0 0.0
      %6329 = vmatpush1.msra.mxu0 0.0
      %6330 = vmatprep.subr.mxu0 0.0
      %6331 = vmatpush1.msra.mxu0 0.0
      %6332 = vmatprep.subr.mxu0 0.0
      %6333 = vmatpush1.msra.mxu0 0.0
      %6334 = vmatprep.subr.mxu0 0.0
      %6335 = vmatpush1.msra.mxu0 0.0
      %6336 = vmatprep.subr.mxu0 0.0
      %6337 = vmatpush1.msra.mxu0 0.0
      %6338 = vmatprep.subr.mxu0 0.0
      %6339 = vmatpush1.msra.mxu0 0.0
      %6340 = vmatprep.subr.mxu0 0.0
      %6341 = vmatpush1.msra.mxu0 0.0
      %6342 = vmatprep.subr.mxu0 0.0
      %6343 = vmatpush1.msra.mxu0 0.0
      %6344 = vmatprep.subr.mxu0 0.0
      %6345 = vmatpush1.msra.mxu0 0.0
      %6346 = vmatprep.subr.mxu0 0.0
      %6347 = vmatpush1.msra.mxu0 0.0
      %6348 = vmatprep.subr.mxu0 0.0
      %6349 = vmatpush1.msra.mxu0 0.0
      %6350 = vmatprep.subr.mxu0 0.0
      %6351 = vmatpush1.msra.mxu0 0.0
      %6352 = vmatprep.subr.mxu0 0.0
      %6353 = vmatpush1.msra.mxu0 0.0
      %6354 = vmatprep.subr.mxu0 0.0
      %6355 = vmatpush1.msra.mxu0 0.0
      %6356 = vmatprep.subr.mxu0 0.0
      %6357 = vmatpush1.msra.mxu0 0.0
      %6358 = vmatprep.subr.mxu0 0.0
      %6359 = vmatpush1.msra.mxu0 0.0
      %6360 = vmatprep.subr.mxu0 0.0
      %6361 = vmatpush1.msra.mxu0 0.0
      %6362 = vmatprep.subr.mxu0 0.0
      %6363 = vmatpush1.msra.mxu0 0.0
      %6364 = vmatprep.subr.mxu0 0.0
      %6365 = vmatpush1.msra.mxu0 0.0
      %6366 = vmatprep.mubr.f32.mxu0 0.0
      %v6367 = vand.u32 %v6212, 4294901760
      %6368 = vmatmul.mubr.f32.gmra.mrb[0].mxu0 %v6367
      %v6369 = vpop.f32.mrb[0].mxu0
      %v6370 = vadd.f32 %v6288, %v6369
      %v6371 = vpop.f32.mrb[0].mxu0
      %v6372 = vadd.f32 %v6290, %v6371
      %6373 = vdwg.mxu0
      %v6374 = vand.u32 %v6208, 4294901760
      %v6375 = vsub.f32 %v6208, %v6374
      %6376 = vmatprep.subr.mxu0 %v6375
      %v6377 = vand.u32 %v6207, 4294901760
      %v6378 = vsub.f32 %v6207, %v6377
      %6379 = vmatpush1.msra.mxu0 %v6378
      %6380 = vmatprep.subr.mxu0 0.0
      %6381 = vmatpush1.msra.mxu0 0.0
      %6382 = vmatprep.subr.mxu0 0.0
      %6383 = vmatpush1.msra.mxu0 0.0
      %6384 = vmatprep.subr.mxu0 0.0
      %6385 = vmatpush1.msra.mxu0 0.0
      %6386 = vmatprep.subr.mxu0 0.0
      %6387 = vmatpush1.msra.mxu0 0.0
      %6388 = vmatprep.subr.mxu0 0.0
      %6389 = vmatpush1.msra.mxu0 0.0
      %6390 = vmatprep.subr.mxu0 0.0
      %6391 = vmatpush1.msra.mxu0 0.0
      %6392 = vmatprep.subr.mxu0 0.0
      %6393 = vmatpush1.msra.mxu0 0.0
      %6394 = vmatprep.subr.mxu0 0.0
      %6395 = vmatpush1.msra.mxu0 0.0
      %6396 = vmatprep.subr.mxu0 0.0
      %6397 = vmatpush1.msra.mxu0 0.0
      %6398 = vmatprep.subr.mxu0 0.0
      %6399 = vmatpush1.msra.mxu0 0.0
      %6400 = vmatprep.subr.mxu0 0.0
      %6401 = vmatpush1.msra.mxu0 0.0
      %6402 = vmatprep.subr.mxu0 0.0
      %6403 = vmatpush1.msra.mxu0 0.0
      %6404 = vmatprep.subr.mxu0 0.0
      %6405 = vmatpush1.msra.mxu0 0.0
      %6406 = vmatprep.subr.mxu0 0.0
      %6407 = vmatpush1.msra.mxu0 0.0
      %6408 = vmatprep.subr.mxu0 0.0
      %6409 = vmatpush1.msra.mxu0 0.0
      %6410 = vmatprep.subr.mxu0 0.0
      %6411 = vmatpush1.msra.mxu0 0.0
      %6412 = vmatprep.subr.mxu0 0.0
      %6413 = vmatpush1.msra.mxu0 0.0
      %6414 = vmatprep.subr.mxu0 0.0
      %6415 = vmatpush1.msra.mxu0 0.0
      %6416 = vmatprep.subr.mxu0 0.0
      %6417 = vmatpush1.msra.mxu0 0.0
      %6418 = vmatprep.subr.mxu0 0.0
      %6419 = vmatpush1.msra.mxu0 0.0
      %6420 = vmatprep.subr.mxu0 0.0
      %6421 = vmatpush1.msra.mxu0 0.0
      %6422 = vmatprep.subr.mxu0 0.0
      %6423 = vmatpush1.msra.mxu0 0.0
      %6424 = vmatprep.subr.mxu0 0.0
      %6425 = vmatpush1.msra.mxu0 0.0
      %6426 = vmatprep.subr.mxu0 0.0
      %6427 = vmatpush1.msra.mxu0 0.0
      %6428 = vmatprep.subr.mxu0 0.0
      %6429 = vmatpush1.msra.mxu0 0.0
      %6430 = vmatprep.subr.mxu0 0.0
      %6431 = vmatpush1.msra.mxu0 0.0
      %6432 = vmatprep.subr.mxu0 0.0
      %6433 = vmatpush1.msra.mxu0 0.0
      %6434 = vmatprep.subr.mxu0 0.0
      %6435 = vmatpush1.msra.mxu0 0.0
      %6436 = vmatprep.subr.mxu0 0.0
      %6437 = vmatpush1.msra.mxu0 0.0
      %6438 = vmatprep.subr.mxu0 0.0
      %6439 = vmatpush1.msra.mxu0 0.0
      %6440 = vmatprep.subr.mxu0 0.0
      %6441 = vmatpush1.msra.mxu0 0.0
      %6442 = vmatprep.mubr.f32.mxu0 0.0
      %v6443 = vand.u32 %v6212, 4294901760
      %v6444 = vsub.f32 %v6212, %v6443
      %6445 = vmatmul.mubr.f32.gmra.mrb[0].mxu0 %v6444
      %v6446 = vpop.f32.mrb[0].mxu0
      %v6447 = vadd.f32 %v6370, %v6446
      %v6448 = vpop.f32.mrb[0].mxu0
      %v6449 = vadd.f32 %v6372, %v6448
      %6450 = vdwg.mxu0
      %v6451 = vand.u32 %v6208, 4294901760
      %6452 = vmatprep.subr.mxu0 %v6451
      %v6453 = vand.u32 %v6207, 4294901760
      %6454 = vmatpush1.msra.mxu0 %v6453
      %6455 = vmatprep.subr.mxu0 0.0
      %6456 = vmatpush1.msra.mxu0 0.0
      %6457 = vmatprep.subr.mxu0 0.0
      %6458 = vmatpush1.msra.mxu0 0.0
      %6459 = vmatprep.subr.mxu0 0.0
      %6460 = vmatpush1.msra.mxu0 0.0
      %6461 = vmatprep.subr.mxu0 0.0
      %6462 = vmatpush1.msra.mxu0 0.0
      %6463 = vmatprep.subr.mxu0 0.0
      %6464 = vmatpush1.msra.mxu0 0.0
      %6465 = vmatprep.subr.mxu0 0.0
      %6466 = vmatpush1.msra.mxu0 0.0
      %6467 = vmatprep.subr.mxu0 0.0
      %6468 = vmatpush1.msra.mxu0 0.0
      %6469 = vmatprep.subr.mxu0 0.0
      %6470 = vmatpush1.msra.mxu0 0.0
      %6471 = vmatprep.subr.mxu0 0.0
      %6472 = vmatpush1.msra.mxu0 0.0
      %6473 = vmatprep.subr.mxu0 0.0
      %6474 = vmatpush1.msra.mxu0 0.0
      %6475 = vmatprep.subr.mxu0 0.0
      %6476 = vmatpush1.msra.mxu0 0.0
      %6477 = vmatprep.subr.mxu0 0.0
      %6478 = vmatpush1.msra.mxu0 0.0
      %6479 = vmatprep.subr.mxu0 0.0
      %6480 = vmatpush1.msra.mxu0 0.0
      %6481 = vmatprep.subr.mxu0 0.0
      %6482 = vmatpush1.msra.mxu0 0.0
      %6483 = vmatprep.subr.mxu0 0.0
      %6484 = vmatpush1.msra.mxu0 0.0
      %6485 = vmatprep.subr.mxu0 0.0
      %6486 = vmatpush1.msra.mxu0 0.0
      %6487 = vmatprep.subr.mxu0 0.0
      %6488 = vmatpush1.msra.mxu0 0.0
      %6489 = vmatprep.subr.mxu0 0.0
      %6490 = vmatpush1.msra.mxu0 0.0
      %6491 = vmatprep.subr.mxu0 0.0
      %6492 = vmatpush1.msra.mxu0 0.0
      %6493 = vmatprep.subr.mxu0 0.0
      %6494 = vmatpush1.msra.mxu0 0.0
      %6495 = vmatprep.subr.mxu0 0.0
      %6496 = vmatpush1.msra.mxu0 0.0
      %6497 = vmatprep.subr.mxu0 0.0
      %6498 = vmatpush1.msra.mxu0 0.0
      %6499 = vmatprep.subr.mxu0 0.0
      %6500 = vmatpush1.msra.mxu0 0.0
      %6501 = vmatprep.subr.mxu0 0.0
      %6502 = vmatpush1.msra.mxu0 0.0
      %6503 = vmatprep.subr.mxu0 0.0
      %6504 = vmatpush1.msra.mxu0 0.0
      %6505 = vmatprep.subr.mxu0 0.0
      %6506 = vmatpush1.msra.mxu0 0.0
      %6507 = vmatprep.subr.mxu0 0.0
      %6508 = vmatpush1.msra.mxu0 0.0
      %6509 = vmatprep.subr.mxu0 0.0
      %6510 = vmatpush1.msra.mxu0 0.0
      %6511 = vmatprep.subr.mxu0 0.0
      %6512 = vmatpush1.msra.mxu0 0.0
      %6513 = vmatprep.subr.mxu0 0.0
      %6514 = vmatpush1.msra.mxu0 0.0
      %6515 = vmatprep.subr.mxu0 0.0
      %6516 = vmatpush1.msra.mxu0 0.0
      %6517 = vmatprep.mubr.f32.mxu0 0.0
      %v6518 = vand.u32 %v6212, 4294901760
      %v6519 = vsub.f32 %v6212, %v6518
      %v6520 = vand.u32 %v6519, 4294901760
      %6521 = vmatmul.mubr.f32.gmra.mrb[0].mxu0 %v6520
      %v6522 = vpop.f32.mrb[0].mxu0
      %v6523 = vadd.f32 %v6447, %v6522
      %v6524 = vpop.f32.mrb[0].mxu0
      %v6525 = vadd.f32 %v6449, %v6524
      %6526 = vdwg.mxu0
      %v6527 = vand.u32 %v6208, 4294901760
      %v6528 = vsub.f32 %v6208, %v6527
      %v6529 = vand.u32 %v6528, 4294901760
      %6530 = vmatprep.subr.mxu0 %v6529
      %v6531 = vand.u32 %v6207, 4294901760
      %v6532 = vsub.f32 %v6207, %v6531
      %v6533 = vand.u32 %v6532, 4294901760
      %6534 = vmatpush1.msra.mxu0 %v6533
      %6535 = vmatprep.subr.mxu0 0.0
      %6536 = vmatpush1.msra.mxu0 0.0
      %6537 = vmatprep.subr.mxu0 0.0
      %6538 = vmatpush1.msra.mxu0 0.0
      %6539 = vmatprep.subr.mxu0 0.0
      %6540 = vmatpush1.msra.mxu0 0.0
      %6541 = vmatprep.subr.mxu0 0.0
      %6542 = vmatpush1.msra.mxu0 0.0
      %6543 = vmatprep.subr.mxu0 0.0
      %6544 = vmatpush1.msra.mxu0 0.0
      %6545 = vmatprep.subr.mxu0 0.0
      %6546 = vmatpush1.msra.mxu0 0.0
      %6547 = vmatprep.subr.mxu0 0.0
      %6548 = vmatpush1.msra.mxu0 0.0
      %6549 = vmatprep.subr.mxu0 0.0
      %6550 = vmatpush1.msra.mxu0 0.0
      %6551 = vmatprep.subr.mxu0 0.0
      %6552 = vmatpush1.msra.mxu0 0.0
      %6553 = vmatprep.subr.mxu0 0.0
      %6554 = vmatpush1.msra.mxu0 0.0
      %6555 = vmatprep.subr.mxu0 0.0
      %6556 = vmatpush1.msra.mxu0 0.0
      %6557 = vmatprep.subr.mxu0 0.0
      %6558 = vmatpush1.msra.mxu0 0.0
      %6559 = vmatprep.subr.mxu0 0.0
      %6560 = vmatpush1.msra.mxu0 0.0
      %6561 = vmatprep.subr.mxu0 0.0
      %6562 = vmatpush1.msra.mxu0 0.0
      %6563 = vmatprep.subr.mxu0 0.0
      %6564 = vmatpush1.msra.mxu0 0.0
      %6565 = vmatprep.subr.mxu0 0.0
      %6566 = vmatpush1.msra.mxu0 0.0
      %6567 = vmatprep.subr.mxu0 0.0
      %6568 = vmatpush1.msra.mxu0 0.0
      %6569 = vmatprep.subr.mxu0 0.0
      %6570 = vmatpush1.msra.mxu0 0.0
      %6571 = vmatprep.subr.mxu0 0.0
      %6572 = vmatpush1.msra.mxu0 0.0
      %6573 = vmatprep.subr.mxu0 0.0
      %6574 = vmatpush1.msra.mxu0 0.0
      %6575 = vmatprep.subr.mxu0 0.0
      %6576 = vmatpush1.msra.mxu0 0.0
      %6577 = vmatprep.subr.mxu0 0.0
      %6578 = vmatpush1.msra.mxu0 0.0
      %6579 = vmatprep.subr.mxu0 0.0
      %6580 = vmatpush1.msra.mxu0 0.0
      %6581 = vmatprep.subr.mxu0 0.0
      %6582 = vmatpush1.msra.mxu0 0.0
      %6583 = vmatprep.subr.mxu0 0.0
      %6584 = vmatpush1.msra.mxu0 0.0
      %6585 = vmatprep.subr.mxu0 0.0
      %6586 = vmatpush1.msra.mxu0 0.0
      %6587 = vmatprep.subr.mxu0 0.0
      %6588 = vmatpush1.msra.mxu0 0.0
      %6589 = vmatprep.subr.mxu0 0.0
      %6590 = vmatpush1.msra.mxu0 0.0
      %6591 = vmatprep.subr.mxu0 0.0
      %6592 = vmatpush1.msra.mxu0 0.0
      %6593 = vmatprep.subr.mxu0 0.0
      %6594 = vmatpush1.msra.mxu0 0.0
      %6595 = vmatprep.subr.mxu0 0.0
      %6596 = vmatpush1.msra.mxu0 0.0
      %6597 = vmatprep.mubr.f32.mxu0 0.0
      %v6598 = vand.u32 %v6212, 4294901760
      %6599 = vmatmul.mubr.f32.gmra.mrb[0].mxu0 %v6598
      %v6600 = vpop.f32.mrb[0].mxu0
      %v6601 = vadd.f32 %v6523, %v6600
      %v6602 = vpop.f32.mrb[0].mxu0
      %v6603 = vadd.f32 %v6525, %v6602
      %6604 = vdwg.mxu0
      %v6605 = vand.u32 %v6208, 4294901760
      %6606 = vmatprep.subr.mxu0 %v6605
      %v6607 = vand.u32 %v6207, 4294901760
      %6608 = vmatpush1.msra.mxu0 %v6607
      %6609 = vmatprep.subr.mxu0 0.0
      %6610 = vmatpush1.msra.mxu0 0.0
      %6611 = vmatprep.subr.mxu0 0.0
      %6612 = vmatpush1.msra.mxu0 0.0
      %6613 = vmatprep.subr.mxu0 0.0
      %6614 = vmatpush1.msra.mxu0 0.0
      %6615 = vmatprep.subr.mxu0 0.0
      %6616 = vmatpush1.msra.mxu0 0.0
      %6617 = vmatprep.subr.mxu0 0.0
      %6618 = vmatpush1.msra.mxu0 0.0
      %6619 = vmatprep.subr.mxu0 0.0
      %6620 = vmatpush1.msra.mxu0 0.0
      %6621 = vmatprep.subr.mxu0 0.0
      %6622 = vmatpush1.msra.mxu0 0.0
      %6623 = vmatprep.subr.mxu0 0.0
      %6624 = vmatpush1.msra.mxu0 0.0
      %6625 = vmatprep.subr.mxu0 0.0
      %6626 = vmatpush1.msra.mxu0 0.0
      %6627 = vmatprep.subr.mxu0 0.0
      %6628 = vmatpush1.msra.mxu0 0.0
      %6629 = vmatprep.subr.mxu0 0.0
      %6630 = vmatpush1.msra.mxu0 0.0
      %6631 = vmatprep.subr.mxu0 0.0
      %6632 = vmatpush1.msra.mxu0 0.0
      %6633 = vmatprep.subr.mxu0 0.0
      %6634 = vmatpush1.msra.mxu0 0.0
      %6635 = vmatprep.subr.mxu0 0.0
      %6636 = vmatpush1.msra.mxu0 0.0
      %6637 = vmatprep.subr.mxu0 0.0
      %6638 = vmatpush1.msra.mxu0 0.0
      %6639 = vmatprep.subr.mxu0 0.0
      %6640 = vmatpush1.msra.mxu0 0.0
      %6641 = vmatprep.subr.mxu0 0.0
      %6642 = vmatpush1.msra.mxu0 0.0
      %6643 = vmatprep.subr.mxu0 0.0
      %6644 = vmatpush1.msra.mxu0 0.0
      %6645 = vmatprep.subr.mxu0 0.0
      %6646 = vmatpush1.msra.mxu0 0.0
      %6647 = vmatprep.subr.mxu0 0.0
      %6648 = vmatpush1.msra.mxu0 0.0
      %6649 = vmatprep.subr.mxu0 0.0
      %6650 = vmatpush1.msra.mxu0 0.0
      %6651 = vmatprep.subr.mxu0 0.0
      %6652 = vmatpush1.msra.mxu0 0.0
      %6653 = vmatprep.subr.mxu0 0.0
      %6654 = vmatpush1.msra.mxu0 0.0
      %6655 = vmatprep.subr.mxu0 0.0
      %6656 = vmatpush1.msra.mxu0 0.0
      %6657 = vmatprep.subr.mxu0 0.0
      %6658 = vmatpush1.msra.mxu0 0.0
      %6659 = vmatprep.subr.mxu0 0.0
      %6660 = vmatpush1.msra.mxu0 0.0
      %6661 = vmatprep.subr.mxu0 0.0
      %6662 = vmatpush1.msra.mxu0 0.0
      %6663 = vmatprep.subr.mxu0 0.0
      %6664 = vmatpush1.msra.mxu0 0.0
      %6665 = vmatprep.subr.mxu0 0.0
      %6666 = vmatpush1.msra.mxu0 0.0
      %6667 = vmatprep.subr.mxu0 0.0
      %6668 = vmatpush1.msra.mxu0 0.0
      %6669 = vmatprep.subr.mxu0 0.0
      %6670 = vmatpush1.msra.mxu0 0.0
      %6671 = vmatprep.mubr.f32.mxu0 0.0
      %v6672 = vand.u32 %v6212, 4294901760
      %6673 = vmatmul.mubr.f32.gmra.mrb[0].mxu0 %v6672
      %v6674 = vpop.f32.mrb[0].mxu0
      %v6675 = vadd.f32 %v6601, %v6674
      %v6676 = vpop.f32.mrb[0].mxu0
      %v6677 = vadd.f32 %v6603, %v6676
      %6678 = vdwg.mxu0
      %v6679 = vadd.f32 %v6183, %v6675
      %v6680 = vadd.f32 %v6184, %v6677
      %s6681 = scalar_lea.vmem %s2, 32
      %v6682 = vld [vmem:[%s6681] sm:$0xff]
      %v6684 = vsel %vm4739, %v6682, 0
      %v6686 = vand.u32 %v4711, 4294901760
      %6687 = vmatprep.subr.mxu0 %v6686
      %v6688 = vand.u32 %v4710, 4294901760
      %6689 = vmatpush1.msra.mxu0 %v6688
      %6690 = vmatprep.subr.mxu0 0.0
      %6691 = vmatpush1.msra.mxu0 0.0
      %6692 = vmatprep.subr.mxu0 0.0
      %6693 = vmatpush1.msra.mxu0 0.0
      %6694 = vmatprep.subr.mxu0 0.0
      %6695 = vmatpush1.msra.mxu0 0.0
      %6696 = vmatprep.subr.mxu0 0.0
      %6697 = vmatpush1.msra.mxu0 0.0
      %6698 = vmatprep.subr.mxu0 0.0
      %6699 = vmatpush1.msra.mxu0 0.0
      %6700 = vmatprep.subr.mxu0 0.0
      %6701 = vmatpush1.msra.mxu0 0.0
      %6702 = vmatprep.subr.mxu0 0.0
      %6703 = vmatpush1.msra.mxu0 0.0
      %6704 = vmatprep.subr.mxu0 0.0
      %6705 = vmatpush1.msra.mxu0 0.0
      %6706 = vmatprep.subr.mxu0 0.0
      %6707 = vmatpush1.msra.mxu0 0.0
      %6708 = vmatprep.subr.mxu0 0.0
      %6709 = vmatpush1.msra.mxu0 0.0
      %6710 = vmatprep.subr.mxu0 0.0
      %6711 = vmatpush1.msra.mxu0 0.0
      %6712 = vmatprep.subr.mxu0 0.0
      %6713 = vmatpush1.msra.mxu0 0.0
      %6714 = vmatprep.subr.mxu0 0.0
      %6715 = vmatpush1.msra.mxu0 0.0
      %6716 = vmatprep.subr.mxu0 0.0
      %6717 = vmatpush1.msra.mxu0 0.0
      %6718 = vmatprep.subr.mxu0 0.0
      %6719 = vmatpush1.msra.mxu0 0.0
      %6720 = vmatprep.subr.mxu0 0.0
      %6721 = vmatpush1.msra.mxu0 0.0
      %6722 = vmatprep.subr.mxu0 0.0
      %6723 = vmatpush1.msra.mxu0 0.0
      %6724 = vmatprep.subr.mxu0 0.0
      %6725 = vmatpush1.msra.mxu0 0.0
      %6726 = vmatprep.subr.mxu0 0.0
      %6727 = vmatpush1.msra.mxu0 0.0
      %6728 = vmatprep.subr.mxu0 0.0
      %6729 = vmatpush1.msra.mxu0 0.0
      %6730 = vmatprep.subr.mxu0 0.0
      %6731 = vmatpush1.msra.mxu0 0.0
      %6732 = vmatprep.subr.mxu0 0.0
      %6733 = vmatpush1.msra.mxu0 0.0
      %6734 = vmatprep.subr.mxu0 0.0
      %6735 = vmatpush1.msra.mxu0 0.0
      %6736 = vmatprep.subr.mxu0 0.0
      %6737 = vmatpush1.msra.mxu0 0.0
      %6738 = vmatprep.subr.mxu0 0.0
      %6739 = vmatpush1.msra.mxu0 0.0
      %6740 = vmatprep.subr.mxu0 0.0
      %6741 = vmatpush1.msra.mxu0 0.0
      %6742 = vmatprep.subr.mxu0 0.0
      %6743 = vmatpush1.msra.mxu0 0.0
      %6744 = vmatprep.subr.mxu0 0.0
      %6745 = vmatpush1.msra.mxu0 0.0
      %6746 = vmatprep.subr.mxu0 0.0
      %6747 = vmatpush1.msra.mxu0 0.0
      %6748 = vmatprep.subr.mxu0 0.0
      %6749 = vmatpush1.msra.mxu0 0.0
      %6750 = vmatprep.subr.mxu0 0.0
      %6751 = vmatpush1.msra.mxu0 0.0
      %6752 = vmatprep.mubr.f32.mxu0 0.0
      %v6753 = vand.u32 %v6684, 4294901760
      %v6754 = vsub.f32 %v6684, %v6753
      %v6755 = vand.u32 %v6754, 4294901760
      %v6756 = vsub.f32 %v6754, %v6755
      %v6757 = vand.u32 %v6756, 4294901760
      %6758 = vmatmul.mubr.f32.gmra.mrb[0].mxu0 %v6757
      %v6759 = vpop.f32.mrb[0].mxu0
      %v6760 = vadd.f32 0.0, %v6759
      %v6761 = vpop.f32.mrb[0].mxu0
      %v6762 = vadd.f32 0.0, %v6761
      %6763 = vdwg.mxu0
      %v6764 = vand.u32 %v4711, 4294901760
      %v6765 = vsub.f32 %v4711, %v6764
      %v6766 = vand.u32 %v6765, 4294901760
      %v6767 = vsub.f32 %v6765, %v6766
      %v6768 = vand.u32 %v6767, 4294901760
      %6769 = vmatprep.subr.mxu0 %v6768
      %v6770 = vand.u32 %v4710, 4294901760
      %v6771 = vsub.f32 %v4710, %v6770
      %v6772 = vand.u32 %v6771, 4294901760
      %v6773 = vsub.f32 %v6771, %v6772
      %v6774 = vand.u32 %v6773, 4294901760
      %6775 = vmatpush1.msra.mxu0 %v6774
      %6776 = vmatprep.subr.mxu0 0.0
      %6777 = vmatpush1.msra.mxu0 0.0
      %6778 = vmatprep.subr.mxu0 0.0
      %6779 = vmatpush1.msra.mxu0 0.0
      %6780 = vmatprep.subr.mxu0 0.0
      %6781 = vmatpush1.msra.mxu0 0.0
      %6782 = vmatprep.subr.mxu0 0.0
      %6783 = vmatpush1.msra.mxu0 0.0
      %6784 = vmatprep.subr.mxu0 0.0
      %6785 = vmatpush1.msra.mxu0 0.0
      %6786 = vmatprep.subr.mxu0 0.0
      %6787 = vmatpush1.msra.mxu0 0.0
      %6788 = vmatprep.subr.mxu0 0.0
      %6789 = vmatpush1.msra.mxu0 0.0
      %6790 = vmatprep.subr.mxu0 0.0
      %6791 = vmatpush1.msra.mxu0 0.0
      %6792 = vmatprep.subr.mxu0 0.0
      %6793 = vmatpush1.msra.mxu0 0.0
      %6794 = vmatprep.subr.mxu0 0.0
      %6795 = vmatpush1.msra.mxu0 0.0
      %6796 = vmatprep.subr.mxu0 0.0
      %6797 = vmatpush1.msra.mxu0 0.0
      %6798 = vmatprep.subr.mxu0 0.0
      %6799 = vmatpush1.msra.mxu0 0.0
      %6800 = vmatprep.subr.mxu0 0.0
      %6801 = vmatpush1.msra.mxu0 0.0
      %6802 = vmatprep.subr.mxu0 0.0
      %6803 = vmatpush1.msra.mxu0 0.0
      %6804 = vmatprep.subr.mxu0 0.0
      %6805 = vmatpush1.msra.mxu0 0.0
      %6806 = vmatprep.subr.mxu0 0.0
      %6807 = vmatpush1.msra.mxu0 0.0
      %6808 = vmatprep.subr.mxu0 0.0
      %6809 = vmatpush1.msra.mxu0 0.0
      %6810 = vmatprep.subr.mxu0 0.0
      %6811 = vmatpush1.msra.mxu0 0.0
      %6812 = vmatprep.subr.mxu0 0.0
      %6813 = vmatpush1.msra.mxu0 0.0
      %6814 = vmatprep.subr.mxu0 0.0
      %6815 = vmatpush1.msra.mxu0 0.0
      %6816 = vmatprep.subr.mxu0 0.0
      %6817 = vmatpush1.msra.mxu0 0.0
      %6818 = vmatprep.subr.mxu0 0.0
      %6819 = vmatpush1.msra.mxu0 0.0
      %6820 = vmatprep.subr.mxu0 0.0
      %6821 = vmatpush1.msra.mxu0 0.0
      %6822 = vmatprep.subr.mxu0 0.0
      %6823 = vmatpush1.msra.mxu0 0.0
      %6824 = vmatprep.subr.mxu0 0.0
      %6825 = vmatpush1.msra.mxu0 0.0
      %6826 = vmatprep.subr.mxu0 0.0
      %6827 = vmatpush1.msra.mxu0 0.0
      %6828 = vmatprep.subr.mxu0 0.0
      %6829 = vmatpush1.msra.mxu0 0.0
      %6830 = vmatprep.subr.mxu0 0.0
      %6831 = vmatpush1.msra.mxu0 0.0
      %6832 = vmatprep.subr.mxu0 0.0
      %6833 = vmatpush1.msra.mxu0 0.0
      %6834 = vmatprep.subr.mxu0 0.0
      %6835 = vmatpush1.msra.mxu0 0.0
      %6836 = vmatprep.subr.mxu0 0.0
      %6837 = vmatpush1.msra.mxu0 0.0
      %6838 = vmatprep.mubr.f32.mxu0 0.0
      %v6839 = vand.u32 %v6684, 4294901760
      %6840 = vmatmul.mubr.f32.gmra.mrb[0].mxu0 %v6839
      %v6841 = vpop.f32.mrb[0].mxu0
      %v6842 = vadd.f32 %v6760, %v6841
      %v6843 = vpop.f32.mrb[0].mxu0
      %v6844 = vadd.f32 %v6762, %v6843
      %6845 = vdwg.mxu0
      %v6846 = vand.u32 %v4711, 4294901760
      %v6847 = vsub.f32 %v4711, %v6846
      %6848 = vmatprep.subr.mxu0 %v6847
      %v6849 = vand.u32 %v4710, 4294901760
      %v6850 = vsub.f32 %v4710, %v6849
      %6851 = vmatpush1.msra.mxu0 %v6850
      %6852 = vmatprep.subr.mxu0 0.0
      %6853 = vmatpush1.msra.mxu0 0.0
      %6854 = vmatprep.subr.mxu0 0.0
      %6855 = vmatpush1.msra.mxu0 0.0
      %6856 = vmatprep.subr.mxu0 0.0
      %6857 = vmatpush1.msra.mxu0 0.0
      %6858 = vmatprep.subr.mxu0 0.0
      %6859 = vmatpush1.msra.mxu0 0.0
      %6860 = vmatprep.subr.mxu0 0.0
      %6861 = vmatpush1.msra.mxu0 0.0
      %6862 = vmatprep.subr.mxu0 0.0
      %6863 = vmatpush1.msra.mxu0 0.0
      %6864 = vmatprep.subr.mxu0 0.0
      %6865 = vmatpush1.msra.mxu0 0.0
      %6866 = vmatprep.subr.mxu0 0.0
      %6867 = vmatpush1.msra.mxu0 0.0
      %6868 = vmatprep.subr.mxu0 0.0
      %6869 = vmatpush1.msra.mxu0 0.0
      %6870 = vmatprep.subr.mxu0 0.0
      %6871 = vmatpush1.msra.mxu0 0.0
      %6872 = vmatprep.subr.mxu0 0.0
      %6873 = vmatpush1.msra.mxu0 0.0
      %6874 = vmatprep.subr.mxu0 0.0
      %6875 = vmatpush1.msra.mxu0 0.0
      %6876 = vmatprep.subr.mxu0 0.0
      %6877 = vmatpush1.msra.mxu0 0.0
      %6878 = vmatprep.subr.mxu0 0.0
      %6879 = vmatpush1.msra.mxu0 0.0
      %6880 = vmatprep.subr.mxu0 0.0
      %6881 = vmatpush1.msra.mxu0 0.0
      %6882 = vmatprep.subr.mxu0 0.0
      %6883 = vmatpush1.msra.mxu0 0.0
      %6884 = vmatprep.subr.mxu0 0.0
      %6885 = vmatpush1.msra.mxu0 0.0
      %6886 = vmatprep.subr.mxu0 0.0
      %6887 = vmatpush1.msra.mxu0 0.0
      %6888 = vmatprep.subr.mxu0 0.0
      %6889 = vmatpush1.msra.mxu0 0.0
      %6890 = vmatprep.subr.mxu0 0.0
      %6891 = vmatpush1.msra.mxu0 0.0
      %6892 = vmatprep.subr.mxu0 0.0
      %6893 = vmatpush1.msra.mxu0 0.0
      %6894 = vmatprep.subr.mxu0 0.0
      %6895 = vmatpush1.msra.mxu0 0.0
      %6896 = vmatprep.subr.mxu0 0.0
      %6897 = vmatpush1.msra.mxu0 0.0
      %6898 = vmatprep.subr.mxu0 0.0
      %6899 = vmatpush1.msra.mxu0 0.0
      %6900 = vmatprep.subr.mxu0 0.0
      %6901 = vmatpush1.msra.mxu0 0.0
      %6902 = vmatprep.subr.mxu0 0.0
      %6903 = vmatpush1.msra.mxu0 0.0
      %6904 = vmatprep.subr.mxu0 0.0
      %6905 = vmatpush1.msra.mxu0 0.0
      %6906 = vmatprep.subr.mxu0 0.0
      %6907 = vmatpush1.msra.mxu0 0.0
      %6908 = vmatprep.subr.mxu0 0.0
      %6909 = vmatpush1.msra.mxu0 0.0
      %6910 = vmatprep.subr.mxu0 0.0
      %6911 = vmatpush1.msra.mxu0 0.0
      %6912 = vmatprep.subr.mxu0 0.0
      %6913 = vmatpush1.msra.mxu0 0.0
      %6914 = vmatprep.mubr.f32.mxu0 0.0
      %v6915 = vand.u32 %v6684, 4294901760
      %v6916 = vsub.f32 %v6684, %v6915
      %6917 = vmatmul.mubr.f32.gmra.mrb[0].mxu0 %v6916
      %v6918 = vpop.f32.mrb[0].mxu0
      %v6919 = vadd.f32 %v6842, %v6918
      %v6920 = vpop.f32.mrb[0].mxu0
      %v6921 = vadd.f32 %v6844, %v6920
      %6922 = vdwg.mxu0
      %v6923 = vand.u32 %v4711, 4294901760
      %6924 = vmatprep.subr.mxu0 %v6923
      %v6925 = vand.u32 %v4710, 4294901760
      %6926 = vmatpush1.msra.mxu0 %v6925
      %6927 = vmatprep.subr.mxu0 0.0
      %6928 = vmatpush1.msra.mxu0 0.0
      %6929 = vmatprep.subr.mxu0 0.0
      %6930 = vmatpush1.msra.mxu0 0.0
      %6931 = vmatprep.subr.mxu0 0.0
      %6932 = vmatpush1.msra.mxu0 0.0
      %6933 = vmatprep.subr.mxu0 0.0
      %6934 = vmatpush1.msra.mxu0 0.0
      %6935 = vmatprep.subr.mxu0 0.0
      %6936 = vmatpush1.msra.mxu0 0.0
      %6937 = vmatprep.subr.mxu0 0.0
      %6938 = vmatpush1.msra.mxu0 0.0
      %6939 = vmatprep.subr.mxu0 0.0
      %6940 = vmatpush1.msra.mxu0 0.0
      %6941 = vmatprep.subr.mxu0 0.0
      %6942 = vmatpush1.msra.mxu0 0.0
      %6943 = vmatprep.subr.mxu0 0.0
      %6944 = vmatpush1.msra.mxu0 0.0
      %6945 = vmatprep.subr.mxu0 0.0
      %6946 = vmatpush1.msra.mxu0 0.0
      %6947 = vmatprep.subr.mxu0 0.0
      %6948 = vmatpush1.msra.mxu0 0.0
      %6949 = vmatprep.subr.mxu0 0.0
      %6950 = vmatpush1.msra.mxu0 0.0
      %6951 = vmatprep.subr.mxu0 0.0
      %6952 = vmatpush1.msra.mxu0 0.0
      %6953 = vmatprep.subr.mxu0 0.0
      %6954 = vmatpush1.msra.mxu0 0.0
      %6955 = vmatprep.subr.mxu0 0.0
      %6956 = vmatpush1.msra.mxu0 0.0
      %6957 = vmatprep.subr.mxu0 0.0
      %6958 = vmatpush1.msra.mxu0 0.0
      %6959 = vmatprep.subr.mxu0 0.0
      %6960 = vmatpush1.msra.mxu0 0.0
      %6961 = vmatprep.subr.mxu0 0.0
      %6962 = vmatpush1.msra.mxu0 0.0
      %6963 = vmatprep.subr.mxu0 0.0
      %6964 = vmatpush1.msra.mxu0 0.0
      %6965 = vmatprep.subr.mxu0 0.0
      %6966 = vmatpush1.msra.mxu0 0.0
      %6967 = vmatprep.subr.mxu0 0.0
      %6968 = vmatpush1.msra.mxu0 0.0
      %6969 = vmatprep.subr.mxu0 0.0
      %6970 = vmatpush1.msra.mxu0 0.0
      %6971 = vmatprep.subr.mxu0 0.0
      %6972 = vmatpush1.msra.mxu0 0.0
      %6973 = vmatprep.subr.mxu0 0.0
      %6974 = vmatpush1.msra.mxu0 0.0
      %6975 = vmatprep.subr.mxu0 0.0
      %6976 = vmatpush1.msra.mxu0 0.0
      %6977 = vmatprep.subr.mxu0 0.0
      %6978 = vmatpush1.msra.mxu0 0.0
      %6979 = vmatprep.subr.mxu0 0.0
      %6980 = vmatpush1.msra.mxu0 0.0
      %6981 = vmatprep.subr.mxu0 0.0
      %6982 = vmatpush1.msra.mxu0 0.0
      %6983 = vmatprep.subr.mxu0 0.0
      %6984 = vmatpush1.msra.mxu0 0.0
      %6985 = vmatprep.subr.mxu0 0.0
      %6986 = vmatpush1.msra.mxu0 0.0
      %6987 = vmatprep.subr.mxu0 0.0
      %6988 = vmatpush1.msra.mxu0 0.0
      %6989 = vmatprep.mubr.f32.mxu0 0.0
      %v6990 = vand.u32 %v6684, 4294901760
      %v6991 = vsub.f32 %v6684, %v6990
      %v6992 = vand.u32 %v6991, 4294901760
      %6993 = vmatmul.mubr.f32.gmra.mrb[0].mxu0 %v6992
      %v6994 = vpop.f32.mrb[0].mxu0
      %v6995 = vadd.f32 %v6919, %v6994
      %v6996 = vpop.f32.mrb[0].mxu0
      %v6997 = vadd.f32 %v6921, %v6996
      %6998 = vdwg.mxu0
      %v6999 = vand.u32 %v4711, 4294901760
      %v7000 = vsub.f32 %v4711, %v6999
      %v7001 = vand.u32 %v7000, 4294901760
      %7002 = vmatprep.subr.mxu0 %v7001
      %v7003 = vand.u32 %v4710, 4294901760
      %v7004 = vsub.f32 %v4710, %v7003
      %v7005 = vand.u32 %v7004, 4294901760
      %7006 = vmatpush1.msra.mxu0 %v7005
      %7007 = vmatprep.subr.mxu0 0.0
      %7008 = vmatpush1.msra.mxu0 0.0
      %7009 = vmatprep.subr.mxu0 0.0
      %7010 = vmatpush1.msra.mxu0 0.0
      %7011 = vmatprep.subr.mxu0 0.0
      %7012 = vmatpush1.msra.mxu0 0.0
      %7013 = vmatprep.subr.mxu0 0.0
      %7014 = vmatpush1.msra.mxu0 0.0
      %7015 = vmatprep.subr.mxu0 0.0
      %7016 = vmatpush1.msra.mxu0 0.0
      %7017 = vmatprep.subr.mxu0 0.0
      %7018 = vmatpush1.msra.mxu0 0.0
      %7019 = vmatprep.subr.mxu0 0.0
      %7020 = vmatpush1.msra.mxu0 0.0
      %7021 = vmatprep.subr.mxu0 0.0
      %7022 = vmatpush1.msra.mxu0 0.0
      %7023 = vmatprep.subr.mxu0 0.0
      %7024 = vmatpush1.msra.mxu0 0.0
      %7025 = vmatprep.subr.mxu0 0.0
      %7026 = vmatpush1.msra.mxu0 0.0
      %7027 = vmatprep.subr.mxu0 0.0
      %7028 = vmatpush1.msra.mxu0 0.0
      %7029 = vmatprep.subr.mxu0 0.0
      %7030 = vmatpush1.msra.mxu0 0.0
      %7031 = vmatprep.subr.mxu0 0.0
      %7032 = vmatpush1.msra.mxu0 0.0
      %7033 = vmatprep.subr.mxu0 0.0
      %7034 = vmatpush1.msra.mxu0 0.0
      %7035 = vmatprep.subr.mxu0 0.0
      %7036 = vmatpush1.msra.mxu0 0.0
      %7037 = vmatprep.subr.mxu0 0.0
      %7038 = vmatpush1.msra.mxu0 0.0
      %7039 = vmatprep.subr.mxu0 0.0
      %7040 = vmatpush1.msra.mxu0 0.0
      %7041 = vmatprep.subr.mxu0 0.0
      %7042 = vmatpush1.msra.mxu0 0.0
      %7043 = vmatprep.subr.mxu0 0.0
      %7044 = vmatpush1.msra.mxu0 0.0
      %7045 = vmatprep.subr.mxu0 0.0
      %7046 = vmatpush1.msra.mxu0 0.0
      %7047 = vmatprep.subr.mxu0 0.0
      %7048 = vmatpush1.msra.mxu0 0.0
      %7049 = vmatprep.subr.mxu0 0.0
      %7050 = vmatpush1.msra.mxu0 0.0
      %7051 = vmatprep.subr.mxu0 0.0
      %7052 = vmatpush1.msra.mxu0 0.0
      %7053 = vmatprep.subr.mxu0 0.0
      %7054 = vmatpush1.msra.mxu0 0.0
      %7055 = vmatprep.subr.mxu0 0.0
      %7056 = vmatpush1.msra.mxu0 0.0
      %7057 = vmatprep.subr.mxu0 0.0
      %7058 = vmatpush1.msra.mxu0 0.0
      %7059 = vmatprep.subr.mxu0 0.0
      %7060 = vmatpush1.msra.mxu0 0.0
      %7061 = vmatprep.subr.mxu0 0.0
      %7062 = vmatpush1.msra.mxu0 0.0
      %7063 = vmatprep.subr.mxu0 0.0
      %7064 = vmatpush1.msra.mxu0 0.0
      %7065 = vmatprep.subr.mxu0 0.0
      %7066 = vmatpush1.msra.mxu0 0.0
      %7067 = vmatprep.subr.mxu0 0.0
      %7068 = vmatpush1.msra.mxu0 0.0
      %7069 = vmatprep.mubr.f32.mxu0 0.0
      %v7070 = vand.u32 %v6684, 4294901760
      %7071 = vmatmul.mubr.f32.gmra.mrb[0].mxu0 %v7070
      %v7072 = vpop.f32.mrb[0].mxu0
      %v7073 = vadd.f32 %v6995, %v7072
      %v7074 = vpop.f32.mrb[0].mxu0
      %v7075 = vadd.f32 %v6997, %v7074
      %7076 = vdwg.mxu0
      %v7077 = vand.u32 %v4711, 4294901760
      %7078 = vmatprep.subr.mxu0 %v7077
      %v7079 = vand.u32 %v4710, 4294901760
      %7080 = vmatpush1.msra.mxu0 %v7079
      %7081 = vmatprep.subr.mxu0 0.0
      %7082 = vmatpush1.msra.mxu0 0.0
      %7083 = vmatprep.subr.mxu0 0.0
      %7084 = vmatpush1.msra.mxu0 0.0
      %7085 = vmatprep.subr.mxu0 0.0
      %7086 = vmatpush1.msra.mxu0 0.0
      %7087 = vmatprep.subr.mxu0 0.0
      %7088 = vmatpush1.msra.mxu0 0.0
      %7089 = vmatprep.subr.mxu0 0.0
      %7090 = vmatpush1.msra.mxu0 0.0
      %7091 = vmatprep.subr.mxu0 0.0
      %7092 = vmatpush1.msra.mxu0 0.0
      %7093 = vmatprep.subr.mxu0 0.0
      %7094 = vmatpush1.msra.mxu0 0.0
      %7095 = vmatprep.subr.mxu0 0.0
      %7096 = vmatpush1.msra.mxu0 0.0
      %7097 = vmatprep.subr.mxu0 0.0
      %7098 = vmatpush1.msra.mxu0 0.0
      %7099 = vmatprep.subr.mxu0 0.0
      %7100 = vmatpush1.msra.mxu0 0.0
      %7101 = vmatprep.subr.mxu0 0.0
      %7102 = vmatpush1.msra.mxu0 0.0
      %7103 = vmatprep.subr.mxu0 0.0
      %7104 = vmatpush1.msra.mxu0 0.0
      %7105 = vmatprep.subr.mxu0 0.0
      %7106 = vmatpush1.msra.mxu0 0.0
      %7107 = vmatprep.subr.mxu0 0.0
      %7108 = vmatpush1.msra.mxu0 0.0
      %7109 = vmatprep.subr.mxu0 0.0
      %7110 = vmatpush1.msra.mxu0 0.0
      %7111 = vmatprep.subr.mxu0 0.0
      %7112 = vmatpush1.msra.mxu0 0.0
      %7113 = vmatprep.subr.mxu0 0.0
      %7114 = vmatpush1.msra.mxu0 0.0
      %7115 = vmatprep.subr.mxu0 0.0
      %7116 = vmatpush1.msra.mxu0 0.0
      %7117 = vmatprep.subr.mxu0 0.0
      %7118 = vmatpush1.msra.mxu0 0.0
      %7119 = vmatprep.subr.mxu0 0.0
      %7120 = vmatpush1.msra.mxu0 0.0
      %7121 = vmatprep.subr.mxu0 0.0
      %7122 = vmatpush1.msra.mxu0 0.0
      %7123 = vmatprep.subr.mxu0 0.0
      %7124 = vmatpush1.msra.mxu0 0.0
      %7125 = vmatprep.subr.mxu0 0.0
      %7126 = vmatpush1.msra.mxu0 0.0
      %7127 = vmatprep.subr.mxu0 0.0
      %7128 = vmatpush1.msra.mxu0 0.0
      %7129 = vmatprep.subr.mxu0 0.0
      %7130 = vmatpush1.msra.mxu0 0.0
      %7131 = vmatprep.subr.mxu0 0.0
      %7132 = vmatpush1.msra.mxu0 0.0
      %7133 = vmatprep.subr.mxu0 0.0
      %7134 = vmatpush1.msra.mxu0 0.0
      %7135 = vmatprep.subr.mxu0 0.0
      %7136 = vmatpush1.msra.mxu0 0.0
      %7137 = vmatprep.subr.mxu0 0.0
      %7138 = vmatpush1.msra.mxu0 0.0
      %7139 = vmatprep.subr.mxu0 0.0
      %7140 = vmatpush1.msra.mxu0 0.0
      %7141 = vmatprep.subr.mxu0 0.0
      %7142 = vmatpush1.msra.mxu0 0.0
      %7143 = vmatprep.mubr.f32.mxu0 0.0
      %v7144 = vand.u32 %v6684, 4294901760
      %7145 = vmatmul.mubr.f32.gmra.mrb[0].mxu0 %v7144
      %v7146 = vpop.f32.mrb[0].mxu0
      %v7147 = vadd.f32 %v7073, %v7146
      %v7148 = vpop.f32.mrb[0].mxu0
      %v7149 = vadd.f32 %v7075, %v7148
      %7150 = vdwg.mxu0
      %v7151 = vadd.f32 %v6679, %v7147
      %v7152 = vadd.f32 %v6680, %v7149
      %v7153 = vld [vmem:[#allocation3 + $0x8] sm:$0xff]
      %v7154 = vld [vmem:[#allocation3 + $0x10] sm:$0xff]
      %v7155 = vld [vmem:[#allocation3 + $0x18] sm:$0xff]
      %7156 = vrot.lane.b32.xlu0 %v235, 1
      %v7157 = vpop.permute.xlu0 %7156
      %7158 = vrot.lane.b32.xlu0 %v236, 1
      %v7159 = vpop.permute.xlu0 %7158
      %v7160 = vsel %vm1755, %v7157, %v7159
      %v7164 = vmul.f32 %v7153, %v7157
      %v7165 = vmul.f32 %v7154, %v7160
      %v7166 = vmul.f32 %v7155, %v7159
      %s7167 = scalar_lea.vmem %s2, 40
      %v7168 = vld [vmem:[%s7167] sm:$0xff]
      %7172 = vrot.lane.b32.xlu0 %v7164, 127
      %v7173 = vpop.permute.xlu0 %7172
      %7174 = vrot.lane.b32.xlu0 %v7165, 127
      %v7175 = vpop.permute.xlu0 %7174
      %7176 = vrot.lane.b32.xlu0 %v7166, 127
      %v7177 = vpop.permute.xlu0 %7176
      %v7178 = vsel %vm1738, %v7173, %v7175
      %v7179 = vsel %vm1738, %v7175, %v7177
      %v7183 = vsel %vm4739, %v7168, 0
      %v7185 = vand.u32 %v7179, 4294901760
      %7186 = vmatprep.subr.mxu0 %v7185
      %v7187 = vand.u32 %v7178, 4294901760
      %7188 = vmatpush1.msra.mxu0 %v7187
      %7189 = vmatprep.subr.mxu0 0.0
      %7190 = vmatpush1.msra.mxu0 0.0
      %7191 = vmatprep.subr.mxu0 0.0
      %7192 = vmatpush1.msra.mxu0 0.0
      %7193 = vmatprep.subr.mxu0 0.0
      %7194 = vmatpush1.msra.mxu0 0.0
      %7195 = vmatprep.subr.mxu0 0.0
      %7196 = vmatpush1.msra.mxu0 0.0
      %7197 = vmatprep.subr.mxu0 0.0
      %7198 = vmatpush1.msra.mxu0 0.0
      %7199 = vmatprep.subr.mxu0 0.0
      %7200 = vmatpush1.msra.mxu0 0.0
      %7201 = vmatprep.subr.mxu0 0.0
      %7202 = vmatpush1.msra.mxu0 0.0
      %7203 = vmatprep.subr.mxu0 0.0
      %7204 = vmatpush1.msra.mxu0 0.0
      %7205 = vmatprep.subr.mxu0 0.0
      %7206 = vmatpush1.msra.mxu0 0.0
      %7207 = vmatprep.subr.mxu0 0.0
      %7208 = vmatpush1.msra.mxu0 0.0
      %7209 = vmatprep.subr.mxu0 0.0
      %7210 = vmatpush1.msra.mxu0 0.0
      %7211 = vmatprep.subr.mxu0 0.0
      %7212 = vmatpush1.msra.mxu0 0.0
      %7213 = vmatprep.subr.mxu0 0.0
      %7214 = vmatpush1.msra.mxu0 0.0
      %7215 = vmatprep.subr.mxu0 0.0
      %7216 = vmatpush1.msra.mxu0 0.0
      %7217 = vmatprep.subr.mxu0 0.0
      %7218 = vmatpush1.msra.mxu0 0.0
      %7219 = vmatprep.subr.mxu0 0.0
      %7220 = vmatpush1.msra.mxu0 0.0
      %7221 = vmatprep.subr.mxu0 0.0
      %7222 = vmatpush1.msra.mxu0 0.0
      %7223 = vmatprep.subr.mxu0 0.0
      %7224 = vmatpush1.msra.mxu0 0.0
      %7225 = vmatprep.subr.mxu0 0.0
      %7226 = vmatpush1.msra.mxu0 0.0
      %7227 = vmatprep.subr.mxu0 0.0
      %7228 = vmatpush1.msra.mxu0 0.0
      %7229 = vmatprep.subr.mxu0 0.0
      %7230 = vmatpush1.msra.mxu0 0.0
      %7231 = vmatprep.subr.mxu0 0.0
      %7232 = vmatpush1.msra.mxu0 0.0
      %7233 = vmatprep.subr.mxu0 0.0
      %7234 = vmatpush1.msra.mxu0 0.0
      %7235 = vmatprep.subr.mxu0 0.0
      %7236 = vmatpush1.msra.mxu0 0.0
      %7237 = vmatprep.subr.mxu0 0.0
      %7238 = vmatpush1.msra.mxu0 0.0
      %7239 = vmatprep.subr.mxu0 0.0
      %7240 = vmatpush1.msra.mxu0 0.0
      %7241 = vmatprep.subr.mxu0 0.0
      %7242 = vmatpush1.msra.mxu0 0.0
      %7243 = vmatprep.subr.mxu0 0.0
      %7244 = vmatpush1.msra.mxu0 0.0
      %7245 = vmatprep.subr.mxu0 0.0
      %7246 = vmatpush1.msra.mxu0 0.0
      %7247 = vmatprep.subr.mxu0 0.0
      %7248 = vmatpush1.msra.mxu0 0.0
      %7249 = vmatprep.subr.mxu0 0.0
      %7250 = vmatpush1.msra.mxu0 0.0
      %7251 = vmatprep.mubr.f32.mxu0 0.0
      %v7252 = vand.u32 %v7183, 4294901760
      %v7253 = vsub.f32 %v7183, %v7252
      %v7254 = vand.u32 %v7253, 4294901760
      %v7255 = vsub.f32 %v7253, %v7254
      %v7256 = vand.u32 %v7255, 4294901760
      %7257 = vmatmul.mubr.f32.gmra.mrb[0].mxu0 %v7256
      %v7258 = vpop.f32.mrb[0].mxu0
      %v7259 = vadd.f32 0.0, %v7258
      %v7260 = vpop.f32.mrb[0].mxu0
      %v7261 = vadd.f32 0.0, %v7260
      %7262 = vdwg.mxu0
      %v7263 = vand.u32 %v7179, 4294901760
      %v7264 = vsub.f32 %v7179, %v7263
      %v7265 = vand.u32 %v7264, 4294901760
      %v7266 = vsub.f32 %v7264, %v7265
      %v7267 = vand.u32 %v7266, 4294901760
      %7268 = vmatprep.subr.mxu0 %v7267
      %v7269 = vand.u32 %v7178, 4294901760
      %v7270 = vsub.f32 %v7178, %v7269
      %v7271 = vand.u32 %v7270, 4294901760
      %v7272 = vsub.f32 %v7270, %v7271
      %v7273 = vand.u32 %v7272, 4294901760
      %7274 = vmatpush1.msra.mxu0 %v7273
      %7275 = vmatprep.subr.mxu0 0.0
      %7276 = vmatpush1.msra.mxu0 0.0
      %7277 = vmatprep.subr.mxu0 0.0
      %7278 = vmatpush1.msra.mxu0 0.0
      %7279 = vmatprep.subr.mxu0 0.0
      %7280 = vmatpush1.msra.mxu0 0.0
      %7281 = vmatprep.subr.mxu0 0.0
      %7282 = vmatpush1.msra.mxu0 0.0
      %7283 = vmatprep.subr.mxu0 0.0
      %7284 = vmatpush1.msra.mxu0 0.0
      %7285 = vmatprep.subr.mxu0 0.0
      %7286 = vmatpush1.msra.mxu0 0.0
      %7287 = vmatprep.subr.mxu0 0.0
      %7288 = vmatpush1.msra.mxu0 0.0
      %7289 = vmatprep.subr.mxu0 0.0
      %7290 = vmatpush1.msra.mxu0 0.0
      %7291 = vmatprep.subr.mxu0 0.0
      %7292 = vmatpush1.msra.mxu0 0.0
      %7293 = vmatprep.subr.mxu0 0.0
      %7294 = vmatpush1.msra.mxu0 0.0
      %7295 = vmatprep.subr.mxu0 0.0
      %7296 = vmatpush1.msra.mxu0 0.0
      %7297 = vmatprep.subr.mxu0 0.0
      %7298 = vmatpush1.msra.mxu0 0.0
      %7299 = vmatprep.subr.mxu0 0.0
      %7300 = vmatpush1.msra.mxu0 0.0
      %7301 = vmatprep.subr.mxu0 0.0
      %7302 = vmatpush1.msra.mxu0 0.0
      %7303 = vmatprep.subr.mxu0 0.0
      %7304 = vmatpush1.msra.mxu0 0.0
      %7305 = vmatprep.subr.mxu0 0.0
      %7306 = vmatpush1.msra.mxu0 0.0
      %7307 = vmatprep.subr.mxu0 0.0
      %7308 = vmatpush1.msra.mxu0 0.0
      %7309 = vmatprep.subr.mxu0 0.0
      %7310 = vmatpush1.msra.mxu0 0.0
      %7311 = vmatprep.subr.mxu0 0.0
      %7312 = vmatpush1.msra.mxu0 0.0
      %7313 = vmatprep.subr.mxu0 0.0
      %7314 = vmatpush1.msra.mxu0 0.0
      %7315 = vmatprep.subr.mxu0 0.0
      %7316 = vmatpush1.msra.mxu0 0.0
      %7317 = vmatprep.subr.mxu0 0.0
      %7318 = vmatpush1.msra.mxu0 0.0
      %7319 = vmatprep.subr.mxu0 0.0
      %7320 = vmatpush1.msra.mxu0 0.0
      %7321 = vmatprep.subr.mxu0 0.0
      %7322 = vmatpush1.msra.mxu0 0.0
      %7323 = vmatprep.subr.mxu0 0.0
      %7324 = vmatpush1.msra.mxu0 0.0
      %7325 = vmatprep.subr.mxu0 0.0
      %7326 = vmatpush1.msra.mxu0 0.0
      %7327 = vmatprep.subr.mxu0 0.0
      %7328 = vmatpush1.msra.mxu0 0.0
      %7329 = vmatprep.subr.mxu0 0.0
      %7330 = vmatpush1.msra.mxu0 0.0
      %7331 = vmatprep.subr.mxu0 0.0
      %7332 = vmatpush1.msra.mxu0 0.0
      %7333 = vmatprep.subr.mxu0 0.0
      %7334 = vmatpush1.msra.mxu0 0.0
      %7335 = vmatprep.subr.mxu0 0.0
      %7336 = vmatpush1.msra.mxu0 0.0
      %7337 = vmatprep.mubr.f32.mxu0 0.0
      %v7338 = vand.u32 %v7183, 4294901760
      %7339 = vmatmul.mubr.f32.gmra.mrb[0].mxu0 %v7338
      %v7340 = vpop.f32.mrb[0].mxu0
      %v7341 = vadd.f32 %v7259, %v7340
      %v7342 = vpop.f32.mrb[0].mxu0
      %v7343 = vadd.f32 %v7261, %v7342
      %7344 = vdwg.mxu0
      %v7345 = vand.u32 %v7179, 4294901760
      %v7346 = vsub.f32 %v7179, %v7345
      %7347 = vmatprep.subr.mxu0 %v7346
      %v7348 = vand.u32 %v7178, 4294901760
      %v7349 = vsub.f32 %v7178, %v7348
      %7350 = vmatpush1.msra.mxu0 %v7349
      %7351 = vmatprep.subr.mxu0 0.0
      %7352 = vmatpush1.msra.mxu0 0.0
      %7353 = vmatprep.subr.mxu0 0.0
      %7354 = vmatpush1.msra.mxu0 0.0
      %7355 = vmatprep.subr.mxu0 0.0
      %7356 = vmatpush1.msra.mxu0 0.0
      %7357 = vmatprep.subr.mxu0 0.0
      %7358 = vmatpush1.msra.mxu0 0.0
      %7359 = vmatprep.subr.mxu0 0.0
      %7360 = vmatpush1.msra.mxu0 0.0
      %7361 = vmatprep.subr.mxu0 0.0
      %7362 = vmatpush1.msra.mxu0 0.0
      %7363 = vmatprep.subr.mxu0 0.0
      %7364 = vmatpush1.msra.mxu0 0.0
      %7365 = vmatprep.subr.mxu0 0.0
      %7366 = vmatpush1.msra.mxu0 0.0
      %7367 = vmatprep.subr.mxu0 0.0
      %7368 = vmatpush1.msra.mxu0 0.0
      %7369 = vmatprep.subr.mxu0 0.0
      %7370 = vmatpush1.msra.mxu0 0.0
      %7371 = vmatprep.subr.mxu0 0.0
      %7372 = vmatpush1.msra.mxu0 0.0
      %7373 = vmatprep.subr.mxu0 0.0
      %7374 = vmatpush1.msra.mxu0 0.0
      %7375 = vmatprep.subr.mxu0 0.0
      %7376 = vmatpush1.msra.mxu0 0.0
      %7377 = vmatprep.subr.mxu0 0.0
      %7378 = vmatpush1.msra.mxu0 0.0
      %7379 = vmatprep.subr.mxu0 0.0
      %7380 = vmatpush1.msra.mxu0 0.0
      %7381 = vmatprep.subr.mxu0 0.0
      %7382 = vmatpush1.msra.mxu0 0.0
      %7383 = vmatprep.subr.mxu0 0.0
      %7384 = vmatpush1.msra.mxu0 0.0
      %7385 = vmatprep.subr.mxu0 0.0
      %7386 = vmatpush1.msra.mxu0 0.0
      %7387 = vmatprep.subr.mxu0 0.0
      %7388 = vmatpush1.msra.mxu0 0.0
      %7389 = vmatprep.subr.mxu0 0.0
      %7390 = vmatpush1.msra.mxu0 0.0
      %7391 = vmatprep.subr.mxu0 0.0
      %7392 = vmatpush1.msra.mxu0 0.0
      %7393 = vmatprep.subr.mxu0 0.0
      %7394 = vmatpush1.msra.mxu0 0.0
      %7395 = vmatprep.subr.mxu0 0.0
      %7396 = vmatpush1.msra.mxu0 0.0
      %7397 = vmatprep.subr.mxu0 0.0
      %7398 = vmatpush1.msra.mxu0 0.0
      %7399 = vmatprep.subr.mxu0 0.0
      %7400 = vmatpush1.msra.mxu0 0.0
      %7401 = vmatprep.subr.mxu0 0.0
      %7402 = vmatpush1.msra.mxu0 0.0
      %7403 = vmatprep.subr.mxu0 0.0
      %7404 = vmatpush1.msra.mxu0 0.0
      %7405 = vmatprep.subr.mxu0 0.0
      %7406 = vmatpush1.msra.mxu0 0.0
      %7407 = vmatprep.subr.mxu0 0.0
      %7408 = vmatpush1.msra.mxu0 0.0
      %7409 = vmatprep.subr.mxu0 0.0
      %7410 = vmatpush1.msra.mxu0 0.0
      %7411 = vmatprep.subr.mxu0 0.0
      %7412 = vmatpush1.msra.mxu0 0.0
      %7413 = vmatprep.mubr.f32.mxu0 0.0
      %v7414 = vand.u32 %v7183, 4294901760
      %v7415 = vsub.f32 %v7183, %v7414
      %7416 = vmatmul.mubr.f32.gmra.mrb[0].mxu0 %v7415
      %v7417 = vpop.f32.mrb[0].mxu0
      %v7418 = vadd.f32 %v7341, %v7417
      %v7419 = vpop.f32.mrb[0].mxu0
      %v7420 = vadd.f32 %v7343, %v7419
      %7421 = vdwg.mxu0
      %v7422 = vand.u32 %v7179, 4294901760
      %7423 = vmatprep.subr.mxu0 %v7422
      %v7424 = vand.u32 %v7178, 4294901760
      %7425 = vmatpush1.msra.mxu0 %v7424
      %7426 = vmatprep.subr.mxu0 0.0
      %7427 = vmatpush1.msra.mxu0 0.0
      %7428 = vmatprep.subr.mxu0 0.0
      %7429 = vmatpush1.msra.mxu0 0.0
      %7430 = vmatprep.subr.mxu0 0.0
      %7431 = vmatpush1.msra.mxu0 0.0
      %7432 = vmatprep.subr.mxu0 0.0
      %7433 = vmatpush1.msra.mxu0 0.0
      %7434 = vmatprep.subr.mxu0 0.0
      %7435 = vmatpush1.msra.mxu0 0.0
      %7436 = vmatprep.subr.mxu0 0.0
      %7437 = vmatpush1.msra.mxu0 0.0
      %7438 = vmatprep.subr.mxu0 0.0
      %7439 = vmatpush1.msra.mxu0 0.0
      %7440 = vmatprep.subr.mxu0 0.0
      %7441 = vmatpush1.msra.mxu0 0.0
      %7442 = vmatprep.subr.mxu0 0.0
      %7443 = vmatpush1.msra.mxu0 0.0
      %7444 = vmatprep.subr.mxu0 0.0
      %7445 = vmatpush1.msra.mxu0 0.0
      %7446 = vmatprep.subr.mxu0 0.0
      %7447 = vmatpush1.msra.mxu0 0.0
      %7448 = vmatprep.subr.mxu0 0.0
      %7449 = vmatpush1.msra.mxu0 0.0
      %7450 = vmatprep.subr.mxu0 0.0
      %7451 = vmatpush1.msra.mxu0 0.0
      %7452 = vmatprep.subr.mxu0 0.0
      %7453 = vmatpush1.msra.mxu0 0.0
      %7454 = vmatprep.subr.mxu0 0.0
      %7455 = vmatpush1.msra.mxu0 0.0
      %7456 = vmatprep.subr.mxu0 0.0
      %7457 = vmatpush1.msra.mxu0 0.0
      %7458 = vmatprep.subr.mxu0 0.0
      %7459 = vmatpush1.msra.mxu0 0.0
      %7460 = vmatprep.subr.mxu0 0.0
      %7461 = vmatpush1.msra.mxu0 0.0
      %7462 = vmatprep.subr.mxu0 0.0
      %7463 = vmatpush1.msra.mxu0 0.0
      %7464 = vmatprep.subr.mxu0 0.0
      %7465 = vmatpush1.msra.mxu0 0.0
      %7466 = vmatprep.subr.mxu0 0.0
      %7467 = vmatpush1.msra.mxu0 0.0
      %7468 = vmatprep.subr.mxu0 0.0
      %7469 = vmatpush1.msra.mxu0 0.0
      %7470 = vmatprep.subr.mxu0 0.0
      %7471 = vmatpush1.msra.mxu0 0.0
      %7472 = vmatprep.subr.mxu0 0.0
      %7473 = vmatpush1.msra.mxu0 0.0
      %7474 = vmatprep.subr.mxu0 0.0
      %7475 = vmatpush1.msra.mxu0 0.0
      %7476 = vmatprep.subr.mxu0 0.0
      %7477 = vmatpush1.msra.mxu0 0.0
      %7478 = vmatprep.subr.mxu0 0.0
      %7479 = vmatpush1.msra.mxu0 0.0
      %7480 = vmatprep.subr.mxu0 0.0
      %7481 = vmatpush1.msra.mxu0 0.0
      %7482 = vmatprep.subr.mxu0 0.0
      %7483 = vmatpush1.msra.mxu0 0.0
      %7484 = vmatprep.subr.mxu0 0.0
      %7485 = vmatpush1.msra.mxu0 0.0
      %7486 = vmatprep.subr.mxu0 0.0
      %7487 = vmatpush1.msra.mxu0 0.0
      %7488 = vmatprep.mubr.f32.mxu0 0.0
      %v7489 = vand.u32 %v7183, 4294901760
      %v7490 = vsub.f32 %v7183, %v7489
      %v7491 = vand.u32 %v7490, 4294901760
      %7492 = vmatmul.mubr.f32.gmra.mrb[0].mxu0 %v7491
      %v7493 = vpop.f32.mrb[0].mxu0
      %v7494 = vadd.f32 %v7418, %v7493
      %v7495 = vpop.f32.mrb[0].mxu0
      %v7496 = vadd.f32 %v7420, %v7495
      %7497 = vdwg.mxu0
      %v7498 = vand.u32 %v7179, 4294901760
      %v7499 = vsub.f32 %v7179, %v7498
      %v7500 = vand.u32 %v7499, 4294901760
      %7501 = vmatprep.subr.mxu0 %v7500
      %v7502 = vand.u32 %v7178, 4294901760
      %v7503 = vsub.f32 %v7178, %v7502
      %v7504 = vand.u32 %v7503, 4294901760
      %7505 = vmatpush1.msra.mxu0 %v7504
      %7506 = vmatprep.subr.mxu0 0.0
      %7507 = vmatpush1.msra.mxu0 0.0
      %7508 = vmatprep.subr.mxu0 0.0
      %7509 = vmatpush1.msra.mxu0 0.0
      %7510 = vmatprep.subr.mxu0 0.0
      %7511 = vmatpush1.msra.mxu0 0.0
      %7512 = vmatprep.subr.mxu0 0.0
      %7513 = vmatpush1.msra.mxu0 0.0
      %7514 = vmatprep.subr.mxu0 0.0
      %7515 = vmatpush1.msra.mxu0 0.0
      %7516 = vmatprep.subr.mxu0 0.0
      %7517 = vmatpush1.msra.mxu0 0.0
      %7518 = vmatprep.subr.mxu0 0.0
      %7519 = vmatpush1.msra.mxu0 0.0
      %7520 = vmatprep.subr.mxu0 0.0
      %7521 = vmatpush1.msra.mxu0 0.0
      %7522 = vmatprep.subr.mxu0 0.0
      %7523 = vmatpush1.msra.mxu0 0.0
      %7524 = vmatprep.subr.mxu0 0.0
      %7525 = vmatpush1.msra.mxu0 0.0
      %7526 = vmatprep.subr.mxu0 0.0
      %7527 = vmatpush1.msra.mxu0 0.0
      %7528 = vmatprep.subr.mxu0 0.0
      %7529 = vmatpush1.msra.mxu0 0.0
      %7530 = vmatprep.subr.mxu0 0.0
      %7531 = vmatpush1.msra.mxu0 0.0
      %7532 = vmatprep.subr.mxu0 0.0
      %7533 = vmatpush1.msra.mxu0 0.0
      %7534 = vmatprep.subr.mxu0 0.0
      %7535 = vmatpush1.msra.mxu0 0.0
      %7536 = vmatprep.subr.mxu0 0.0
      %7537 = vmatpush1.msra.mxu0 0.0
      %7538 = vmatprep.subr.mxu0 0.0
      %7539 = vmatpush1.msra.mxu0 0.0
      %7540 = vmatprep.subr.mxu0 0.0
      %7541 = vmatpush1.msra.mxu0 0.0
      %7542 = vmatprep.subr.mxu0 0.0
      %7543 = vmatpush1.msra.mxu0 0.0
      %7544 = vmatprep.subr.mxu0 0.0
      %7545 = vmatpush1.msra.mxu0 0.0
      %7546 = vmatprep.subr.mxu0 0.0
      %7547 = vmatpush1.msra.mxu0 0.0
      %7548 = vmatprep.subr.mxu0 0.0
      %7549 = vmatpush1.msra.mxu0 0.0
      %7550 = vmatprep.subr.mxu0 0.0
      %7551 = vmatpush1.msra.mxu0 0.0
      %7552 = vmatprep.subr.mxu0 0.0
      %7553 = vmatpush1.msra.mxu0 0.0
      %7554 = vmatprep.subr.mxu0 0.0
      %7555 = vmatpush1.msra.mxu0 0.0
      %7556 = vmatprep.subr.mxu0 0.0
      %7557 = vmatpush1.msra.mxu0 0.0
      %7558 = vmatprep.subr.mxu0 0.0
      %7559 = vmatpush1.msra.mxu0 0.0
      %7560 = vmatprep.subr.mxu0 0.0
      %7561 = vmatpush1.msra.mxu0 0.0
      %7562 = vmatprep.subr.mxu0 0.0
      %7563 = vmatpush1.msra.mxu0 0.0
      %7564 = vmatprep.subr.mxu0 0.0
      %7565 = vmatpush1.msra.mxu0 0.0
      %7566 = vmatprep.subr.mxu0 0.0
      %7567 = vmatpush1.msra.mxu0 0.0
      %7568 = vmatprep.mubr.f32.mxu0 0.0
      %v7569 = vand.u32 %v7183, 4294901760
      %7570 = vmatmul.mubr.f32.gmra.mrb[0].mxu0 %v7569
      %v7571 = vpop.f32.mrb[0].mxu0
      %v7572 = vadd.f32 %v7494, %v7571
      %v7573 = vpop.f32.mrb[0].mxu0
      %v7574 = vadd.f32 %v7496, %v7573
      %7575 = vdwg.mxu0
      %v7576 = vand.u32 %v7179, 4294901760
      %7577 = vmatprep.subr.mxu0 %v7576
      %v7578 = vand.u32 %v7178, 4294901760
      %7579 = vmatpush1.msra.mxu0 %v7578
      %7580 = vmatprep.subr.mxu0 0.0
      %7581 = vmatpush1.msra.mxu0 0.0
      %7582 = vmatprep.subr.mxu0 0.0
      %7583 = vmatpush1.msra.mxu0 0.0
      %7584 = vmatprep.subr.mxu0 0.0
      %7585 = vmatpush1.msra.mxu0 0.0
      %7586 = vmatprep.subr.mxu0 0.0
      %7587 = vmatpush1.msra.mxu0 0.0
      %7588 = vmatprep.subr.mxu0 0.0
      %7589 = vmatpush1.msra.mxu0 0.0
      %7590 = vmatprep.subr.mxu0 0.0
      %7591 = vmatpush1.msra.mxu0 0.0
      %7592 = vmatprep.subr.mxu0 0.0
      %7593 = vmatpush1.msra.mxu0 0.0
      %7594 = vmatprep.subr.mxu0 0.0
      %7595 = vmatpush1.msra.mxu0 0.0
      %7596 = vmatprep.subr.mxu0 0.0
      %7597 = vmatpush1.msra.mxu0 0.0
      %7598 = vmatprep.subr.mxu0 0.0
      %7599 = vmatpush1.msra.mxu0 0.0
      %7600 = vmatprep.subr.mxu0 0.0
      %7601 = vmatpush1.msra.mxu0 0.0
      %7602 = vmatprep.subr.mxu0 0.0
      %7603 = vmatpush1.msra.mxu0 0.0
      %7604 = vmatprep.subr.mxu0 0.0
      %7605 = vmatpush1.msra.mxu0 0.0
      %7606 = vmatprep.subr.mxu0 0.0
      %7607 = vmatpush1.msra.mxu0 0.0
      %7608 = vmatprep.subr.mxu0 0.0
      %7609 = vmatpush1.msra.mxu0 0.0
      %7610 = vmatprep.subr.mxu0 0.0
      %7611 = vmatpush1.msra.mxu0 0.0
      %7612 = vmatprep.subr.mxu0 0.0
      %7613 = vmatpush1.msra.mxu0 0.0
      %7614 = vmatprep.subr.mxu0 0.0
      %7615 = vmatpush1.msra.mxu0 0.0
      %7616 = vmatprep.subr.mxu0 0.0
      %7617 = vmatpush1.msra.mxu0 0.0
      %7618 = vmatprep.subr.mxu0 0.0
      %7619 = vmatpush1.msra.mxu0 0.0
      %7620 = vmatprep.subr.mxu0 0.0
      %7621 = vmatpush1.msra.mxu0 0.0
      %7622 = vmatprep.subr.mxu0 0.0
      %7623 = vmatpush1.msra.mxu0 0.0
      %7624 = vmatprep.subr.mxu0 0.0
      %7625 = vmatpush1.msra.mxu0 0.0
      %7626 = vmatprep.subr.mxu0 0.0
      %7627 = vmatpush1.msra.mxu0 0.0
      %7628 = vmatprep.subr.mxu0 0.0
      %7629 = vmatpush1.msra.mxu0 0.0
      %7630 = vmatprep.subr.mxu0 0.0
      %7631 = vmatpush1.msra.mxu0 0.0
      %7632 = vmatprep.subr.mxu0 0.0
      %7633 = vmatpush1.msra.mxu0 0.0
      %7634 = vmatprep.subr.mxu0 0.0
      %7635 = vmatpush1.msra.mxu0 0.0
      %7636 = vmatprep.subr.mxu0 0.0
      %7637 = vmatpush1.msra.mxu0 0.0
      %7638 = vmatprep.subr.mxu0 0.0
      %7639 = vmatpush1.msra.mxu0 0.0
      %7640 = vmatprep.subr.mxu0 0.0
      %7641 = vmatpush1.msra.mxu0 0.0
      %7642 = vmatprep.mubr.f32.mxu0 0.0
      %v7643 = vand.u32 %v7183, 4294901760
      %7644 = vmatmul.mubr.f32.gmra.mrb[0].mxu0 %v7643
      %v7645 = vpop.f32.mrb[0].mxu0
      %v7646 = vadd.f32 %v7572, %v7645
      %v7647 = vpop.f32.mrb[0].mxu0
      %v7648 = vadd.f32 %v7574, %v7647
      %7649 = vdwg.mxu0
      %v7650 = vadd.f32 %v7151, %v7646
      %v7651 = vadd.f32 %v7152, %v7648
      %7652 = vrot.lane.b32.xlu0 %v229, 15
      %v7653 = vpop.permute.xlu0 %7652
      %7654 = vrot.lane.b32.xlu0 %v230, 15
      %v7655 = vpop.permute.xlu0 %7654
      %v7656 = vsel %vm1256, %v7653, %v7655
      %v7660 = vmul.f32 %v7153, %v7653
      %v7661 = vmul.f32 %v7154, %v7656
      %v7662 = vmul.f32 %v7155, %v7655
      %s7663 = scalar_lea.vmem %s2, 48
      %v7664 = vld [vmem:[%s7663] sm:$0xff]
      %7668 = vrot.lane.b32.xlu0 %v7660, 113
      %v7669 = vpop.permute.xlu0 %7668
      %7670 = vrot.lane.b32.xlu0 %v7661, 113
      %v7671 = vpop.permute.xlu0 %7670
      %7672 = vrot.lane.b32.xlu0 %v7662, 113
      %v7673 = vpop.permute.xlu0 %7672
      %v7674 = vsel %vm1239, %v7669, %v7671
      %v7675 = vsel %vm1239, %v7671, %v7673
      %v7679 = vsel %vm4739, %v7664, 0
      %v7681 = vand.u32 %v7675, 4294901760
      %7682 = vmatprep.subr.mxu0 %v7681
      %v7683 = vand.u32 %v7674, 4294901760
      %7684 = vmatpush1.msra.mxu0 %v7683
      %7685 = vmatprep.subr.mxu0 0.0
      %7686 = vmatpush1.msra.mxu0 0.0
      %7687 = vmatprep.subr.mxu0 0.0
      %7688 = vmatpush1.msra.mxu0 0.0
      %7689 = vmatprep.subr.mxu0 0.0
      %7690 = vmatpush1.msra.mxu0 0.0
      %7691 = vmatprep.subr.mxu0 0.0
      %7692 = vmatpush1.msra.mxu0 0.0
      %7693 = vmatprep.subr.mxu0 0.0
      %7694 = vmatpush1.msra.mxu0 0.0
      %7695 = vmatprep.subr.mxu0 0.0
      %7696 = vmatpush1.msra.mxu0 0.0
      %7697 = vmatprep.subr.mxu0 0.0
      %7698 = vmatpush1.msra.mxu0 0.0
      %7699 = vmatprep.subr.mxu0 0.0
      %7700 = vmatpush1.msra.mxu0 0.0
      %7701 = vmatprep.subr.mxu0 0.0
      %7702 = vmatpush1.msra.mxu0 0.0
      %7703 = vmatprep.subr.mxu0 0.0
      %7704 = vmatpush1.msra.mxu0 0.0
      %7705 = vmatprep.subr.mxu0 0.0
      %7706 = vmatpush1.msra.mxu0 0.0
      %7707 = vmatprep.subr.mxu0 0.0
      %7708 = vmatpush1.msra.mxu0 0.0
      %7709 = vmatprep.subr.mxu0 0.0
      %7710 = vmatpush1.msra.mxu0 0.0
      %7711 = vmatprep.subr.mxu0 0.0
      %7712 = vmatpush1.msra.mxu0 0.0
      %7713 = vmatprep.subr.mxu0 0.0
      %7714 = vmatpush1.msra.mxu0 0.0
      %7715 = vmatprep.subr.mxu0 0.0
      %7716 = vmatpush1.msra.mxu0 0.0
      %7717 = vmatprep.subr.mxu0 0.0
      %7718 = vmatpush1.msra.mxu0 0.0
      %7719 = vmatprep.subr.mxu0 0.0
      %7720 = vmatpush1.msra.mxu0 0.0
      %7721 = vmatprep.subr.mxu0 0.0
      %7722 = vmatpush1.msra.mxu0 0.0
      %7723 = vmatprep.subr.mxu0 0.0
      %7724 = vmatpush1.msra.mxu0 0.0
      %7725 = vmatprep.subr.mxu0 0.0
      %7726 = vmatpush1.msra.mxu0 0.0
      %7727 = vmatprep.subr.mxu0 0.0
      %7728 = vmatpush1.msra.mxu0 0.0
      %7729 = vmatprep.subr.mxu0 0.0
      %7730 = vmatpush1.msra.mxu0 0.0
      %7731 = vmatprep.subr.mxu0 0.0
      %7732 = vmatpush1.msra.mxu0 0.0
      %7733 = vmatprep.subr.mxu0 0.0
      %7734 = vmatpush1.msra.mxu0 0.0
      %7735 = vmatprep.subr.mxu0 0.0
      %7736 = vmatpush1.msra.mxu0 0.0
      %7737 = vmatprep.subr.mxu0 0.0
      %7738 = vmatpush1.msra.mxu0 0.0
      %7739 = vmatprep.subr.mxu0 0.0
      %7740 = vmatpush1.msra.mxu0 0.0
      %7741 = vmatprep.subr.mxu0 0.0
      %7742 = vmatpush1.msra.mxu0 0.0
      %7743 = vmatprep.subr.mxu0 0.0
      %7744 = vmatpush1.msra.mxu0 0.0
      %7745 = vmatprep.subr.mxu0 0.0
      %7746 = vmatpush1.msra.mxu0 0.0
      %7747 = vmatprep.mubr.f32.mxu0 0.0
      %v7748 = vand.u32 %v7679, 4294901760
      %v7749 = vsub.f32 %v7679, %v7748
      %v7750 = vand.u32 %v7749, 4294901760
      %v7751 = vsub.f32 %v7749, %v7750
      %v7752 = vand.u32 %v7751, 4294901760
      %7753 = vmatmul.mubr.f32.gmra.mrb[0].mxu0 %v7752
      %v7754 = vpop.f32.mrb[0].mxu0
      %v7755 = vadd.f32 0.0, %v7754
      %v7756 = vpop.f32.mrb[0].mxu0
      %v7757 = vadd.f32 0.0, %v7756
      %7758 = vdwg.mxu0
      %v7759 = vand.u32 %v7675, 4294901760
      %v7760 = vsub.f32 %v7675, %v7759
      %v7761 = vand.u32 %v7760, 4294901760
      %v7762 = vsub.f32 %v7760, %v7761
      %v7763 = vand.u32 %v7762, 4294901760
      %7764 = vmatprep.subr.mxu0 %v7763
      %v7765 = vand.u32 %v7674, 4294901760
      %v7766 = vsub.f32 %v7674, %v7765
      %v7767 = vand.u32 %v7766, 4294901760
      %v7768 = vsub.f32 %v7766, %v7767
      %v7769 = vand.u32 %v7768, 4294901760
      %7770 = vmatpush1.msra.mxu0 %v7769
      %7771 = vmatprep.subr.mxu0 0.0
      %7772 = vmatpush1.msra.mxu0 0.0
      %7773 = vmatprep.subr.mxu0 0.0
      %7774 = vmatpush1.msra.mxu0 0.0
      %7775 = vmatprep.subr.mxu0 0.0
      %7776 = vmatpush1.msra.mxu0 0.0
      %7777 = vmatprep.subr.mxu0 0.0
      %7778 = vmatpush1.msra.mxu0 0.0
      %7779 = vmatprep.subr.mxu0 0.0
      %7780 = vmatpush1.msra.mxu0 0.0
      %7781 = vmatprep.subr.mxu0 0.0
      %7782 = vmatpush1.msra.mxu0 0.0
      %7783 = vmatprep.subr.mxu0 0.0
      %7784 = vmatpush1.msra.mxu0 0.0
      %7785 = vmatprep.subr.mxu0 0.0
      %7786 = vmatpush1.msra.mxu0 0.0
      %7787 = vmatprep.subr.mxu0 0.0
      %7788 = vmatpush1.msra.mxu0 0.0
      %7789 = vmatprep.subr.mxu0 0.0
      %7790 = vmatpush1.msra.mxu0 0.0
      %7791 = vmatprep.subr.mxu0 0.0
      %7792 = vmatpush1.msra.mxu0 0.0
      %7793 = vmatprep.subr.mxu0 0.0
      %7794 = vmatpush1.msra.mxu0 0.0
      %7795 = vmatprep.subr.mxu0 0.0
      %7796 = vmatpush1.msra.mxu0 0.0
      %7797 = vmatprep.subr.mxu0 0.0
      %7798 = vmatpush1.msra.mxu0 0.0
      %7799 = vmatprep.subr.mxu0 0.0
      %7800 = vmatpush1.msra.mxu0 0.0
      %7801 = vmatprep.subr.mxu0 0.0
      %7802 = vmatpush1.msra.mxu0 0.0
      %7803 = vmatprep.subr.mxu0 0.0
      %7804 = vmatpush1.msra.mxu0 0.0
      %7805 = vmatprep.subr.mxu0 0.0
      %7806 = vmatpush1.msra.mxu0 0.0
      %7807 = vmatprep.subr.mxu0 0.0
      %7808 = vmatpush1.msra.mxu0 0.0
      %7809 = vmatprep.subr.mxu0 0.0
      %7810 = vmatpush1.msra.mxu0 0.0
      %7811 = vmatprep.subr.mxu0 0.0
      %7812 = vmatpush1.msra.mxu0 0.0
      %7813 = vmatprep.subr.mxu0 0.0
      %7814 = vmatpush1.msra.mxu0 0.0
      %7815 = vmatprep.subr.mxu0 0.0
      %7816 = vmatpush1.msra.mxu0 0.0
      %7817 = vmatprep.subr.mxu0 0.0
      %7818 = vmatpush1.msra.mxu0 0.0
      %7819 = vmatprep.subr.mxu0 0.0
      %7820 = vmatpush1.msra.mxu0 0.0
      %7821 = vmatprep.subr.mxu0 0.0
      %7822 = vmatpush1.msra.mxu0 0.0
      %7823 = vmatprep.subr.mxu0 0.0
      %7824 = vmatpush1.msra.mxu0 0.0
      %7825 = vmatprep.subr.mxu0 0.0
      %7826 = vmatpush1.msra.mxu0 0.0
      %7827 = vmatprep.subr.mxu0 0.0
      %7828 = vmatpush1.msra.mxu0 0.0
      %7829 = vmatprep.subr.mxu0 0.0
      %7830 = vmatpush1.msra.mxu0 0.0
      %7831 = vmatprep.subr.mxu0 0.0
      %7832 = vmatpush1.msra.mxu0 0.0
      %7833 = vmatprep.mubr.f32.mxu0 0.0
      %v7834 = vand.u32 %v7679, 4294901760
      %7835 = vmatmul.mubr.f32.gmra.mrb[0].mxu0 %v7834
      %v7836 = vpop.f32.mrb[0].mxu0
      %v7837 = vadd.f32 %v7755, %v7836
      %v7838 = vpop.f32.mrb[0].mxu0
      %v7839 = vadd.f32 %v7757, %v7838
      %7840 = vdwg.mxu0
      %v7841 = vand.u32 %v7675, 4294901760
      %v7842 = vsub.f32 %v7675, %v7841
      %7843 = vmatprep.subr.mxu0 %v7842
      %v7844 = vand.u32 %v7674, 4294901760
      %v7845 = vsub.f32 %v7674, %v7844
      %7846 = vmatpush1.msra.mxu0 %v7845
      %7847 = vmatprep.subr.mxu0 0.0
      %7848 = vmatpush1.msra.mxu0 0.0
      %7849 = vmatprep.subr.mxu0 0.0
      %7850 = vmatpush1.msra.mxu0 0.0
      %7851 = vmatprep.subr.mxu0 0.0
      %7852 = vmatpush1.msra.mxu0 0.0
      %7853 = vmatprep.subr.mxu0 0.0
      %7854 = vmatpush1.msra.mxu0 0.0
      %7855 = vmatprep.subr.mxu0 0.0
      %7856 = vmatpush1.msra.mxu0 0.0
      %7857 = vmatprep.subr.mxu0 0.0
      %7858 = vmatpush1.msra.mxu0 0.0
      %7859 = vmatprep.subr.mxu0 0.0
      %7860 = vmatpush1.msra.mxu0 0.0
      %7861 = vmatprep.subr.mxu0 0.0
      %7862 = vmatpush1.msra.mxu0 0.0
      %7863 = vmatprep.subr.mxu0 0.0
      %7864 = vmatpush1.msra.mxu0 0.0
      %7865 = vmatprep.subr.mxu0 0.0
      %7866 = vmatpush1.msra.mxu0 0.0
      %7867 = vmatprep.subr.mxu0 0.0
      %7868 = vmatpush1.msra.mxu0 0.0
      %7869 = vmatprep.subr.mxu0 0.0
      %7870 = vmatpush1.msra.mxu0 0.0
      %7871 = vmatprep.subr.mxu0 0.0
      %7872 = vmatpush1.msra.mxu0 0.0
      %7873 = vmatprep.subr.mxu0 0.0
      %7874 = vmatpush1.msra.mxu0 0.0
      %7875 = vmatprep.subr.mxu0 0.0
      %7876 = vmatpush1.msra.mxu0 0.0
      %7877 = vmatprep.subr.mxu0 0.0
      %7878 = vmatpush1.msra.mxu0 0.0
      %7879 = vmatprep.subr.mxu0 0.0
      %7880 = vmatpush1.msra.mxu0 0.0
      %7881 = vmatprep.subr.mxu0 0.0
      %7882 = vmatpush1.msra.mxu0 0.0
      %7883 = vmatprep.subr.mxu0 0.0
      %7884 = vmatpush1.msra.mxu0 0.0
      %7885 = vmatprep.subr.mxu0 0.0
      %7886 = vmatpush1.msra.mxu0 0.0
      %7887 = vmatprep.subr.mxu0 0.0
      %7888 = vmatpush1.msra.mxu0 0.0
      %7889 = vmatprep.subr.mxu0 0.0
      %7890 = vmatpush1.msra.mxu0 0.0
      %7891 = vmatprep.subr.mxu0 0.0
      %7892 = vmatpush1.msra.mxu0 0.0
      %7893 = vmatprep.subr.mxu0 0.0
      %7894 = vmatpush1.msra.mxu0 0.0
      %7895 = vmatprep.subr.mxu0 0.0
      %7896 = vmatpush1.msra.mxu0 0.0
      %7897 = vmatprep.subr.mxu0 0.0
      %7898 = vmatpush1.msra.mxu0 0.0
      %7899 = vmatprep.subr.mxu0 0.0
      %7900 = vmatpush1.msra.mxu0 0.0
      %7901 = vmatprep.subr.mxu0 0.0
      %7902 = vmatpush1.msra.mxu0 0.0
      %7903 = vmatprep.subr.mxu0 0.0
      %7904 = vmatpush1.msra.mxu0 0.0
      %7905 = vmatprep.subr.mxu0 0.0
      %7906 = vmatpush1.msra.mxu0 0.0
      %7907 = vmatprep.subr.mxu0 0.0
      %7908 = vmatpush1.msra.mxu0 0.0
      %7909 = vmatprep.mubr.f32.mxu0 0.0
      %v7910 = vand.u32 %v7679, 4294901760
      %v7911 = vsub.f32 %v7679, %v7910
      %7912 = vmatmul.mubr.f32.gmra.mrb[0].mxu0 %v7911
      %v7913 = vpop.f32.mrb[0].mxu0
      %v7914 = vadd.f32 %v7837, %v7913
      %v7915 = vpop.f32.mrb[0].mxu0
      %v7916 = vadd.f32 %v7839, %v7915
      %7917 = vdwg.mxu0
      %v7918 = vand.u32 %v7675, 4294901760
      %7919 = vmatprep.subr.mxu0 %v7918
      %v7920 = vand.u32 %v7674, 4294901760
      %7921 = vmatpush1.msra.mxu0 %v7920
      %7922 = vmatprep.subr.mxu0 0.0
      %7923 = vmatpush1.msra.mxu0 0.0
      %7924 = vmatprep.subr.mxu0 0.0
      %7925 = vmatpush1.msra.mxu0 0.0
      %7926 = vmatprep.subr.mxu0 0.0
      %7927 = vmatpush1.msra.mxu0 0.0
      %7928 = vmatprep.subr.mxu0 0.0
      %7929 = vmatpush1.msra.mxu0 0.0
      %7930 = vmatprep.subr.mxu0 0.0
      %7931 = vmatpush1.msra.mxu0 0.0
      %7932 = vmatprep.subr.mxu0 0.0
      %7933 = vmatpush1.msra.mxu0 0.0
      %7934 = vmatprep.subr.mxu0 0.0
      %7935 = vmatpush1.msra.mxu0 0.0
      %7936 = vmatprep.subr.mxu0 0.0
      %7937 = vmatpush1.msra.mxu0 0.0
      %7938 = vmatprep.subr.mxu0 0.0
      %7939 = vmatpush1.msra.mxu0 0.0
      %7940 = vmatprep.subr.mxu0 0.0
      %7941 = vmatpush1.msra.mxu0 0.0
      %7942 = vmatprep.subr.mxu0 0.0
      %7943 = vmatpush1.msra.mxu0 0.0
      %7944 = vmatprep.subr.mxu0 0.0
      %7945 = vmatpush1.msra.mxu0 0.0
      %7946 = vmatprep.subr.mxu0 0.0
      %7947 = vmatpush1.msra.mxu0 0.0
      %7948 = vmatprep.subr.mxu0 0.0
      %7949 = vmatpush1.msra.mxu0 0.0
      %7950 = vmatprep.subr.mxu0 0.0
      %7951 = vmatpush1.msra.mxu0 0.0
      %7952 = vmatprep.subr.mxu0 0.0
      %7953 = vmatpush1.msra.mxu0 0.0
      %7954 = vmatprep.subr.mxu0 0.0
      %7955 = vmatpush1.msra.mxu0 0.0
      %7956 = vmatprep.subr.mxu0 0.0
      %7957 = vmatpush1.msra.mxu0 0.0
      %7958 = vmatprep.subr.mxu0 0.0
      %7959 = vmatpush1.msra.mxu0 0.0
      %7960 = vmatprep.subr.mxu0 0.0
      %7961 = vmatpush1.msra.mxu0 0.0
      %7962 = vmatprep.subr.mxu0 0.0
      %7963 = vmatpush1.msra.mxu0 0.0
      %7964 = vmatprep.subr.mxu0 0.0
      %7965 = vmatpush1.msra.mxu0 0.0
      %7966 = vmatprep.subr.mxu0 0.0
      %7967 = vmatpush1.msra.mxu0 0.0
      %7968 = vmatprep.subr.mxu0 0.0
      %7969 = vmatpush1.msra.mxu0 0.0
      %7970 = vmatprep.subr.mxu0 0.0
      %7971 = vmatpush1.msra.mxu0 0.0
      %7972 = vmatprep.subr.mxu0 0.0
      %7973 = vmatpush1.msra.mxu0 0.0
      %7974 = vmatprep.subr.mxu0 0.0
      %7975 = vmatpush1.msra.mxu0 0.0
      %7976 = vmatprep.subr.mxu0 0.0
      %7977 = vmatpush1.msra.mxu0 0.0
      %7978 = vmatprep.subr.mxu0 0.0
      %7979 = vmatpush1.msra.mxu0 0.0
      %7980 = vmatprep.subr.mxu0 0.0
      %7981 = vmatpush1.msra.mxu0 0.0
      %7982 = vmatprep.subr.mxu0 0.0
      %7983 = vmatpush1.msra.mxu0 0.0
      %7984 = vmatprep.mubr.f32.mxu0 0.0
      %v7985 = vand.u32 %v7679, 4294901760
      %v7986 = vsub.f32 %v7679, %v7985
      %v7987 = vand.u32 %v7986, 4294901760
      %7988 = vmatmul.mubr.f32.gmra.mrb[0].mxu0 %v7987
      %v7989 = vpop.f32.mrb[0].mxu0
      %v7990 = vadd.f32 %v7914, %v7989
      %v7991 = vpop.f32.mrb[0].mxu0
      %v7992 = vadd.f32 %v7916, %v7991
      %7993 = vdwg.mxu0
      %v7994 = vand.u32 %v7675, 4294901760
      %v7995 = vsub.f32 %v7675, %v7994
      %v7996 = vand.u32 %v7995, 4294901760
      %7997 = vmatprep.subr.mxu0 %v7996
      %v7998 = vand.u32 %v7674, 4294901760
      %v7999 = vsub.f32 %v7674, %v7998
      %v8000 = vand.u32 %v7999, 4294901760
      %8001 = vmatpush1.msra.mxu0 %v8000
      %8002 = vmatprep.subr.mxu0 0.0
      %8003 = vmatpush1.msra.mxu0 0.0
      %8004 = vmatprep.subr.mxu0 0.0
      %8005 = vmatpush1.msra.mxu0 0.0
      %8006 = vmatprep.subr.mxu0 0.0
      %8007 = vmatpush1.msra.mxu0 0.0
      %8008 = vmatprep.subr.mxu0 0.0
      %8009 = vmatpush1.msra.mxu0 0.0
      %8010 = vmatprep.subr.mxu0 0.0
      %8011 = vmatpush1.msra.mxu0 0.0
      %8012 = vmatprep.subr.mxu0 0.0
      %8013 = vmatpush1.msra.mxu0 0.0
      %8014 = vmatprep.subr.mxu0 0.0
      %8015 = vmatpush1.msra.mxu0 0.0
      %8016 = vmatprep.subr.mxu0 0.0
      %8017 = vmatpush1.msra.mxu0 0.0
      %8018 = vmatprep.subr.mxu0 0.0
      %8019 = vmatpush1.msra.mxu0 0.0
      %8020 = vmatprep.subr.mxu0 0.0
      %8021 = vmatpush1.msra.mxu0 0.0
      %8022 = vmatprep.subr.mxu0 0.0
      %8023 = vmatpush1.msra.mxu0 0.0
      %8024 = vmatprep.subr.mxu0 0.0
      %8025 = vmatpush1.msra.mxu0 0.0
      %8026 = vmatprep.subr.mxu0 0.0
      %8027 = vmatpush1.msra.mxu0 0.0
      %8028 = vmatprep.subr.mxu0 0.0
      %8029 = vmatpush1.msra.mxu0 0.0
      %8030 = vmatprep.subr.mxu0 0.0
      %8031 = vmatpush1.msra.mxu0 0.0
      %8032 = vmatprep.subr.mxu0 0.0
      %8033 = vmatpush1.msra.mxu0 0.0
      %8034 = vmatprep.subr.mxu0 0.0
      %8035 = vmatpush1.msra.mxu0 0.0
      %8036 = vmatprep.subr.mxu0 0.0
      %8037 = vmatpush1.msra.mxu0 0.0
      %8038 = vmatprep.subr.mxu0 0.0
      %8039 = vmatpush1.msra.mxu0 0.0
      %8040 = vmatprep.subr.mxu0 0.0
      %8041 = vmatpush1.msra.mxu0 0.0
      %8042 = vmatprep.subr.mxu0 0.0
      %8043 = vmatpush1.msra.mxu0 0.0
      %8044 = vmatprep.subr.mxu0 0.0
      %8045 = vmatpush1.msra.mxu0 0.0
      %8046 = vmatprep.subr.mxu0 0.0
      %8047 = vmatpush1.msra.mxu0 0.0
      %8048 = vmatprep.subr.mxu0 0.0
      %8049 = vmatpush1.msra.mxu0 0.0
      %8050 = vmatprep.subr.mxu0 0.0
      %8051 = vmatpush1.msra.mxu0 0.0
      %8052 = vmatprep.subr.mxu0 0.0
      %8053 = vmatpush1.msra.mxu0 0.0
      %8054 = vmatprep.subr.mxu0 0.0
      %8055 = vmatpush1.msra.mxu0 0.0
      %8056 = vmatprep.subr.mxu0 0.0
      %8057 = vmatpush1.msra.mxu0 0.0
      %8058 = vmatprep.subr.mxu0 0.0
      %8059 = vmatpush1.msra.mxu0 0.0
      %8060 = vmatprep.subr.mxu0 0.0
      %8061 = vmatpush1.msra.mxu0 0.0
      %8062 = vmatprep.subr.mxu0 0.0
      %8063 = vmatpush1.msra.mxu0 0.0
      %8064 = vmatprep.mubr.f32.mxu0 0.0
      %v8065 = vand.u32 %v7679, 4294901760
      %8066 = vmatmul.mubr.f32.gmra.mrb[0].mxu0 %v8065
      %v8067 = vpop.f32.mrb[0].mxu0
      %v8068 = vadd.f32 %v7990, %v8067
      %v8069 = vpop.f32.mrb[0].mxu0
      %v8070 = vadd.f32 %v7992, %v8069
      %8071 = vdwg.mxu0
      %v8072 = vand.u32 %v7675, 4294901760
      %8073 = vmatprep.subr.mxu0 %v8072
      %v8074 = vand.u32 %v7674, 4294901760
      %8075 = vmatpush1.msra.mxu0 %v8074
      %8076 = vmatprep.subr.mxu0 0.0
      %8077 = vmatpush1.msra.mxu0 0.0
      %8078 = vmatprep.subr.mxu0 0.0
      %8079 = vmatpush1.msra.mxu0 0.0
      %8080 = vmatprep.subr.mxu0 0.0
      %8081 = vmatpush1.msra.mxu0 0.0
      %8082 = vmatprep.subr.mxu0 0.0
      %8083 = vmatpush1.msra.mxu0 0.0
      %8084 = vmatprep.subr.mxu0 0.0
      %8085 = vmatpush1.msra.mxu0 0.0
      %8086 = vmatprep.subr.mxu0 0.0
      %8087 = vmatpush1.msra.mxu0 0.0
      %8088 = vmatprep.subr.mxu0 0.0
      %8089 = vmatpush1.msra.mxu0 0.0
      %8090 = vmatprep.subr.mxu0 0.0
      %8091 = vmatpush1.msra.mxu0 0.0
      %8092 = vmatprep.subr.mxu0 0.0
      %8093 = vmatpush1.msra.mxu0 0.0
      %8094 = vmatprep.subr.mxu0 0.0
      %8095 = vmatpush1.msra.mxu0 0.0
      %8096 = vmatprep.subr.mxu0 0.0
      %8097 = vmatpush1.msra.mxu0 0.0
      %8098 = vmatprep.subr.mxu0 0.0
      %8099 = vmatpush1.msra.mxu0 0.0
      %8100 = vmatprep.subr.mxu0 0.0
      %8101 = vmatpush1.msra.mxu0 0.0
      %8102 = vmatprep.subr.mxu0 0.0
      %8103 = vmatpush1.msra.mxu0 0.0
      %8104 = vmatprep.subr.mxu0 0.0
      %8105 = vmatpush1.msra.mxu0 0.0
      %8106 = vmatprep.subr.mxu0 0.0
      %8107 = vmatpush1.msra.mxu0 0.0
      %8108 = vmatprep.subr.mxu0 0.0
      %8109 = vmatpush1.msra.mxu0 0.0
      %8110 = vmatprep.subr.mxu0 0.0
      %8111 = vmatpush1.msra.mxu0 0.0
      %8112 = vmatprep.subr.mxu0 0.0
      %8113 = vmatpush1.msra.mxu0 0.0
      %8114 = vmatprep.subr.mxu0 0.0
      %8115 = vmatpush1.msra.mxu0 0.0
      %8116 = vmatprep.subr.mxu0 0.0
      %8117 = vmatpush1.msra.mxu0 0.0
      %8118 = vmatprep.subr.mxu0 0.0
      %8119 = vmatpush1.msra.mxu0 0.0
      %8120 = vmatprep.subr.mxu0 0.0
      %8121 = vmatpush1.msra.mxu0 0.0
      %8122 = vmatprep.subr.mxu0 0.0
      %8123 = vmatpush1.msra.mxu0 0.0
      %8124 = vmatprep.subr.mxu0 0.0
      %8125 = vmatpush1.msra.mxu0 0.0
      %8126 = vmatprep.subr.mxu0 0.0
      %8127 = vmatpush1.msra.mxu0 0.0
      %8128 = vmatprep.subr.mxu0 0.0
      %8129 = vmatpush1.msra.mxu0 0.0
      %8130 = vmatprep.subr.mxu0 0.0
      %8131 = vmatpush1.msra.mxu0 0.0
      %8132 = vmatprep.subr.mxu0 0.0
      %8133 = vmatpush1.msra.mxu0 0.0
      %8134 = vmatprep.subr.mxu0 0.0
      %8135 = vmatpush1.msra.mxu0 0.0
      %8136 = vmatprep.subr.mxu0 0.0
      %8137 = vmatpush1.msra.mxu0 0.0
      %8138 = vmatprep.mubr.f32.mxu0 0.0
      %v8139 = vand.u32 %v7679, 4294901760
      %8140 = vmatmul.mubr.f32.gmra.mrb[0].mxu0 %v8139
      %v8141 = vpop.f32.mrb[0].mxu0
      %v8142 = vadd.f32 %v8068, %v8141
      %v8143 = vpop.f32.mrb[0].mxu0
      %v8144 = vadd.f32 %v8070, %v8143
      %8145 = vdwg.mxu0
      %v8146 = vadd.f32 %v7650, %v8142
      %v8147 = vadd.f32 %v7651, %v8144
      %s8148 = scalar_lea.vmem %s2, 56
      %v8149 = vld [vmem:[%s8148] sm:$0xff]
      %8153 = vrot.lane.b32.xlu0 %v7153, 112
      %v8154 = vpop.permute.xlu0 %8153
      %8155 = vrot.lane.b32.xlu0 %v7154, 112
      %v8156 = vpop.permute.xlu0 %8155
      %8157 = vrot.lane.b32.xlu0 %v7155, 112
      %v8158 = vpop.permute.xlu0 %8157
      %v8159 = vsel %vm3718, %v8154, %v8156
      %v8160 = vsel %vm3718, %v8156, %v8158
      %v8164 = vsel %vm4739, %v8149, 0
      %v8166 = vand.u32 %v8160, 4294901760
      %8167 = vmatprep.subr.mxu0 %v8166
      %v8168 = vand.u32 %v8159, 4294901760
      %8169 = vmatpush1.msra.mxu0 %v8168
      %8170 = vmatprep.subr.mxu0 0.0
      %8171 = vmatpush1.msra.mxu0 0.0
      %8172 = vmatprep.subr.mxu0 0.0
      %8173 = vmatpush1.msra.mxu0 0.0
      %8174 = vmatprep.subr.mxu0 0.0
      %8175 = vmatpush1.msra.mxu0 0.0
      %8176 = vmatprep.subr.mxu0 0.0
      %8177 = vmatpush1.msra.mxu0 0.0
      %8178 = vmatprep.subr.mxu0 0.0
      %8179 = vmatpush1.msra.mxu0 0.0
      %8180 = vmatprep.subr.mxu0 0.0
      %8181 = vmatpush1.msra.mxu0 0.0
      %8182 = vmatprep.subr.mxu0 0.0
      %8183 = vmatpush1.msra.mxu0 0.0
      %8184 = vmatprep.subr.mxu0 0.0
      %8185 = vmatpush1.msra.mxu0 0.0
      %8186 = vmatprep.subr.mxu0 0.0
      %8187 = vmatpush1.msra.mxu0 0.0
      %8188 = vmatprep.subr.mxu0 0.0
      %8189 = vmatpush1.msra.mxu0 0.0
      %8190 = vmatprep.subr.mxu0 0.0
      %8191 = vmatpush1.msra.mxu0 0.0
      %8192 = vmatprep.subr.mxu0 0.0
      %8193 = vmatpush1.msra.mxu0 0.0
      %8194 = vmatprep.subr.mxu0 0.0
      %8195 = vmatpush1.msra.mxu0 0.0
      %8196 = vmatprep.subr.mxu0 0.0
      %8197 = vmatpush1.msra.mxu0 0.0
      %8198 = vmatprep.subr.mxu0 0.0
      %8199 = vmatpush1.msra.mxu0 0.0
      %8200 = vmatprep.subr.mxu0 0.0
      %8201 = vmatpush1.msra.mxu0 0.0
      %8202 = vmatprep.subr.mxu0 0.0
      %8203 = vmatpush1.msra.mxu0 0.0
      %8204 = vmatprep.subr.mxu0 0.0
      %8205 = vmatpush1.msra.mxu0 0.0
      %8206 = vmatprep.subr.mxu0 0.0
      %8207 = vmatpush1.msra.mxu0 0.0
      %8208 = vmatprep.subr.mxu0 0.0
      %8209 = vmatpush1.msra.mxu0 0.0
      %8210 = vmatprep.subr.mxu0 0.0
      %8211 = vmatpush1.msra.mxu0 0.0
      %8212 = vmatprep.subr.mxu0 0.0
      %8213 = vmatpush1.msra.mxu0 0.0
      %8214 = vmatprep.subr.mxu0 0.0
      %8215 = vmatpush1.msra.mxu0 0.0
      %8216 = vmatprep.subr.mxu0 0.0
      %8217 = vmatpush1.msra.mxu0 0.0
      %8218 = vmatprep.subr.mxu0 0.0
      %8219 = vmatpush1.msra.mxu0 0.0
      %8220 = vmatprep.subr.mxu0 0.0
      %8221 = vmatpush1.msra.mxu0 0.0
      %8222 = vmatprep.subr.mxu0 0.0
      %8223 = vmatpush1.msra.mxu0 0.0
      %8224 = vmatprep.subr.mxu0 0.0
      %8225 = vmatpush1.msra.mxu0 0.0
      %8226 = vmatprep.subr.mxu0 0.0
      %8227 = vmatpush1.msra.mxu0 0.0
      %8228 = vmatprep.subr.mxu0 0.0
      %8229 = vmatpush1.msra.mxu0 0.0
      %8230 = vmatprep.subr.mxu0 0.0
      %8231 = vmatpush1.msra.mxu0 0.0
      %8232 = vmatprep.mubr.f32.mxu0 0.0
      %v8233 = vand.u32 %v8164, 4294901760
      %v8234 = vsub.f32 %v8164, %v8233
      %v8235 = vand.u32 %v8234, 4294901760
      %v8236 = vsub.f32 %v8234, %v8235
      %v8237 = vand.u32 %v8236, 4294901760
      %8238 = vmatmul.mubr.f32.gmra.mrb[0].mxu0 %v8237
      %v8239 = vpop.f32.mrb[0].mxu0
      %v8240 = vadd.f32 0.0, %v8239
      %v8241 = vpop.f32.mrb[0].mxu0
      %v8242 = vadd.f32 0.0, %v8241
      %8243 = vdwg.mxu0
      %v8244 = vand.u32 %v8160, 4294901760
      %v8245 = vsub.f32 %v8160, %v8244
      %v8246 = vand.u32 %v8245, 4294901760
      %v8247 = vsub.f32 %v8245, %v8246
      %v8248 = vand.u32 %v8247, 4294901760
      %8249 = vmatprep.subr.mxu0 %v8248
      %v8250 = vand.u32 %v8159, 4294901760
      %v8251 = vsub.f32 %v8159, %v8250
      %v8252 = vand.u32 %v8251, 4294901760
      %v8253 = vsub.f32 %v8251, %v8252
      %v8254 = vand.u32 %v8253, 4294901760
      %8255 = vmatpush1.msra.mxu0 %v8254
      %8256 = vmatprep.subr.mxu0 0.0
      %8257 = vmatpush1.msra.mxu0 0.0
      %8258 = vmatprep.subr.mxu0 0.0
      %8259 = vmatpush1.msra.mxu0 0.0
      %8260 = vmatprep.subr.mxu0 0.0
      %8261 = vmatpush1.msra.mxu0 0.0
      %8262 = vmatprep.subr.mxu0 0.0
      %8263 = vmatpush1.msra.mxu0 0.0
      %8264 = vmatprep.subr.mxu0 0.0
      %8265 = vmatpush1.msra.mxu0 0.0
      %8266 = vmatprep.subr.mxu0 0.0
      %8267 = vmatpush1.msra.mxu0 0.0
      %8268 = vmatprep.subr.mxu0 0.0
      %8269 = vmatpush1.msra.mxu0 0.0
      %8270 = vmatprep.subr.mxu0 0.0
      %8271 = vmatpush1.msra.mxu0 0.0
      %8272 = vmatprep.subr.mxu0 0.0
      %8273 = vmatpush1.msra.mxu0 0.0
      %8274 = vmatprep.subr.mxu0 0.0
      %8275 = vmatpush1.msra.mxu0 0.0
      %8276 = vmatprep.subr.mxu0 0.0
      %8277 = vmatpush1.msra.mxu0 0.0
      %8278 = vmatprep.subr.mxu0 0.0
      %8279 = vmatpush1.msra.mxu0 0.0
      %8280 = vmatprep.subr.mxu0 0.0
      %8281 = vmatpush1.msra.mxu0 0.0
      %8282 = vmatprep.subr.mxu0 0.0
      %8283 = vmatpush1.msra.mxu0 0.0
      %8284 = vmatprep.subr.mxu0 0.0
      %8285 = vmatpush1.msra.mxu0 0.0
      %8286 = vmatprep.subr.mxu0 0.0
      %8287 = vmatpush1.msra.mxu0 0.0
      %8288 = vmatprep.subr.mxu0 0.0
      %8289 = vmatpush1.msra.mxu0 0.0
      %8290 = vmatprep.subr.mxu0 0.0
      %8291 = vmatpush1.msra.mxu0 0.0
      %8292 = vmatprep.subr.mxu0 0.0
      %8293 = vmatpush1.msra.mxu0 0.0
      %8294 = vmatprep.subr.mxu0 0.0
      %8295 = vmatpush1.msra.mxu0 0.0
      %8296 = vmatprep.subr.mxu0 0.0
      %8297 = vmatpush1.msra.mxu0 0.0
      %8298 = vmatprep.subr.mxu0 0.0
      %8299 = vmatpush1.msra.mxu0 0.0
      %8300 = vmatprep.subr.mxu0 0.0
      %8301 = vmatpush1.msra.mxu0 0.0
      %8302 = vmatprep.subr.mxu0 0.0
      %8303 = vmatpush1.msra.mxu0 0.0
      %8304 = vmatprep.subr.mxu0 0.0
      %8305 = vmatpush1.msra.mxu0 0.0
      %8306 = vmatprep.subr.mxu0 0.0
      %8307 = vmatpush1.msra.mxu0 0.0
      %8308 = vmatprep.subr.mxu0 0.0
      %8309 = vmatpush1.msra.mxu0 0.0
      %8310 = vmatprep.subr.mxu0 0.0
      %8311 = vmatpush1.msra.mxu0 0.0
      %8312 = vmatprep.subr.mxu0 0.0
      %8313 = vmatpush1.msra.mxu0 0.0
      %8314 = vmatprep.subr.mxu0 0.0
      %8315 = vmatpush1.msra.mxu0 0.0
      %8316 = vmatprep.subr.mxu0 0.0
      %8317 = vmatpush1.msra.mxu0 0.0
      %8318 = vmatprep.mubr.f32.mxu0 0.0
      %v8319 = vand.u32 %v8164, 4294901760
      %8320 = vmatmul.mubr.f32.gmra.mrb[0].mxu0 %v8319
      %v8321 = vpop.f32.mrb[0].mxu0
      %v8322 = vadd.f32 %v8240, %v8321
      %v8323 = vpop.f32.mrb[0].mxu0
      %v8324 = vadd.f32 %v8242, %v8323
      %8325 = vdwg.mxu0
      %v8326 = vand.u32 %v8160, 4294901760
      %v8327 = vsub.f32 %v8160, %v8326
      %8328 = vmatprep.subr.mxu0 %v8327
      %v8329 = vand.u32 %v8159, 4294901760
      %v8330 = vsub.f32 %v8159, %v8329
      %8331 = vmatpush1.msra.mxu0 %v8330
      %8332 = vmatprep.subr.mxu0 0.0
      %8333 = vmatpush1.msra.mxu0 0.0
      %8334 = vmatprep.subr.mxu0 0.0
      %8335 = vmatpush1.msra.mxu0 0.0
      %8336 = vmatprep.subr.mxu0 0.0
      %8337 = vmatpush1.msra.mxu0 0.0
      %8338 = vmatprep.subr.mxu0 0.0
      %8339 = vmatpush1.msra.mxu0 0.0
      %8340 = vmatprep.subr.mxu0 0.0
      %8341 = vmatpush1.msra.mxu0 0.0
      %8342 = vmatprep.subr.mxu0 0.0
      %8343 = vmatpush1.msra.mxu0 0.0
      %8344 = vmatprep.subr.mxu0 0.0
      %8345 = vmatpush1.msra.mxu0 0.0
      %8346 = vmatprep.subr.mxu0 0.0
      %8347 = vmatpush1.msra.mxu0 0.0
      %8348 = vmatprep.subr.mxu0 0.0
      %8349 = vmatpush1.msra.mxu0 0.0
      %8350 = vmatprep.subr.mxu0 0.0
      %8351 = vmatpush1.msra.mxu0 0.0
      %8352 = vmatprep.subr.mxu0 0.0
      %8353 = vmatpush1.msra.mxu0 0.0
      %8354 = vmatprep.subr.mxu0 0.0
      %8355 = vmatpush1.msra.mxu0 0.0
      %8356 = vmatprep.subr.mxu0 0.0
      %8357 = vmatpush1.msra.mxu0 0.0
      %8358 = vmatprep.subr.mxu0 0.0
      %8359 = vmatpush1.msra.mxu0 0.0
      %8360 = vmatprep.subr.mxu0 0.0
      %8361 = vmatpush1.msra.mxu0 0.0
      %8362 = vmatprep.subr.mxu0 0.0
      %8363 = vmatpush1.msra.mxu0 0.0
      %8364 = vmatprep.subr.mxu0 0.0
      %8365 = vmatpush1.msra.mxu0 0.0
      %8366 = vmatprep.subr.mxu0 0.0
      %8367 = vmatpush1.msra.mxu0 0.0
      %8368 = vmatprep.subr.mxu0 0.0
      %8369 = vmatpush1.msra.mxu0 0.0
      %8370 = vmatprep.subr.mxu0 0.0
      %8371 = vmatpush1.msra.mxu0 0.0
      %8372 = vmatprep.subr.mxu0 0.0
      %8373 = vmatpush1.msra.mxu0 0.0
      %8374 = vmatprep.subr.mxu0 0.0
      %8375 = vmatpush1.msra.mxu0 0.0
      %8376 = vmatprep.subr.mxu0 0.0
      %8377 = vmatpush1.msra.mxu0 0.0
      %8378 = vmatprep.subr.mxu0 0.0
      %8379 = vmatpush1.msra.mxu0 0.0
      %8380 = vmatprep.subr.mxu0 0.0
      %8381 = vmatpush1.msra.mxu0 0.0
      %8382 = vmatprep.subr.mxu0 0.0
      %8383 = vmatpush1.msra.mxu0 0.0
      %8384 = vmatprep.subr.mxu0 0.0
      %8385 = vmatpush1.msra.mxu0 0.0
      %8386 = vmatprep.subr.mxu0 0.0
      %8387 = vmatpush1.msra.mxu0 0.0
      %8388 = vmatprep.subr.mxu0 0.0
      %8389 = vmatpush1.msra.mxu0 0.0
      %8390 = vmatprep.subr.mxu0 0.0
      %8391 = vmatpush1.msra.mxu0 0.0
      %8392 = vmatprep.subr.mxu0 0.0
      %8393 = vmatpush1.msra.mxu0 0.0
      %8394 = vmatprep.mubr.f32.mxu0 0.0
      %v8395 = vand.u32 %v8164, 4294901760
      %v8396 = vsub.f32 %v8164, %v8395
      %8397 = vmatmul.mubr.f32.gmra.mrb[0].mxu0 %v8396
      %v8398 = vpop.f32.mrb[0].mxu0
      %v8399 = vadd.f32 %v8322, %v8398
      %v8400 = vpop.f32.mrb[0].mxu0
      %v8401 = vadd.f32 %v8324, %v8400
      %8402 = vdwg.mxu0
      %v8403 = vand.u32 %v8160, 4294901760
      %8404 = vmatprep.subr.mxu0 %v8403
      %v8405 = vand.u32 %v8159, 4294901760
      %8406 = vmatpush1.msra.mxu0 %v8405
      %8407 = vmatprep.subr.mxu0 0.0
      %8408 = vmatpush1.msra.mxu0 0.0
      %8409 = vmatprep.subr.mxu0 0.0
      %8410 = vmatpush1.msra.mxu0 0.0
      %8411 = vmatprep.subr.mxu0 0.0
      %8412 = vmatpush1.msra.mxu0 0.0
      %8413 = vmatprep.subr.mxu0 0.0
      %8414 = vmatpush1.msra.mxu0 0.0
      %8415 = vmatprep.subr.mxu0 0.0
      %8416 = vmatpush1.msra.mxu0 0.0
      %8417 = vmatprep.subr.mxu0 0.0
      %8418 = vmatpush1.msra.mxu0 0.0
      %8419 = vmatprep.subr.mxu0 0.0
      %8420 = vmatpush1.msra.mxu0 0.0
      %8421 = vmatprep.subr.mxu0 0.0
      %8422 = vmatpush1.msra.mxu0 0.0
      %8423 = vmatprep.subr.mxu0 0.0
      %8424 = vmatpush1.msra.mxu0 0.0
      %8425 = vmatprep.subr.mxu0 0.0
      %8426 = vmatpush1.msra.mxu0 0.0
      %8427 = vmatprep.subr.mxu0 0.0
      %8428 = vmatpush1.msra.mxu0 0.0
      %8429 = vmatprep.subr.mxu0 0.0
      %8430 = vmatpush1.msra.mxu0 0.0
      %8431 = vmatprep.subr.mxu0 0.0
      %8432 = vmatpush1.msra.mxu0 0.0
      %8433 = vmatprep.subr.mxu0 0.0
      %8434 = vmatpush1.msra.mxu0 0.0
      %8435 = vmatprep.subr.mxu0 0.0
      %8436 = vmatpush1.msra.mxu0 0.0
      %8437 = vmatprep.subr.mxu0 0.0
      %8438 = vmatpush1.msra.mxu0 0.0
      %8439 = vmatprep.subr.mxu0 0.0
      %8440 = vmatpush1.msra.mxu0 0.0
      %8441 = vmatprep.subr.mxu0 0.0
      %8442 = vmatpush1.msra.mxu0 0.0
      %8443 = vmatprep.subr.mxu0 0.0
      %8444 = vmatpush1.msra.mxu0 0.0
      %8445 = vmatprep.subr.mxu0 0.0
      %8446 = vmatpush1.msra.mxu0 0.0
      %8447 = vmatprep.subr.mxu0 0.0
      %8448 = vmatpush1.msra.mxu0 0.0
      %8449 = vmatprep.subr.mxu0 0.0
      %8450 = vmatpush1.msra.mxu0 0.0
      %8451 = vmatprep.subr.mxu0 0.0
      %8452 = vmatpush1.msra.mxu0 0.0
      %8453 = vmatprep.subr.mxu0 0.0
      %8454 = vmatpush1.msra.mxu0 0.0
      %8455 = vmatprep.subr.mxu0 0.0
      %8456 = vmatpush1.msra.mxu0 0.0
      %8457 = vmatprep.subr.mxu0 0.0
      %8458 = vmatpush1.msra.mxu0 0.0
      %8459 = vmatprep.subr.mxu0 0.0
      %8460 = vmatpush1.msra.mxu0 0.0
      %8461 = vmatprep.subr.mxu0 0.0
      %8462 = vmatpush1.msra.mxu0 0.0
      %8463 = vmatprep.subr.mxu0 0.0
      %8464 = vmatpush1.msra.mxu0 0.0
      %8465 = vmatprep.subr.mxu0 0.0
      %8466 = vmatpush1.msra.mxu0 0.0
      %8467 = vmatprep.subr.mxu0 0.0
      %8468 = vmatpush1.msra.mxu0 0.0
      %8469 = vmatprep.mubr.f32.mxu0 0.0
      %v8470 = vand.u32 %v8164, 4294901760
      %v8471 = vsub.f32 %v8164, %v8470
      %v8472 = vand.u32 %v8471, 4294901760
      %8473 = vmatmul.mubr.f32.gmra.mrb[0].mxu0 %v8472
      %v8474 = vpop.f32.mrb[0].mxu0
      %v8475 = vadd.f32 %v8399, %v8474
      %v8476 = vpop.f32.mrb[0].mxu0
      %v8477 = vadd.f32 %v8401, %v8476
      %8478 = vdwg.mxu0
      %v8479 = vand.u32 %v8160, 4294901760
      %v8480 = vsub.f32 %v8160, %v8479
      %v8481 = vand.u32 %v8480, 4294901760
      %8482 = vmatprep.subr.mxu0 %v8481
      %v8483 = vand.u32 %v8159, 4294901760
      %v8484 = vsub.f32 %v8159, %v8483
      %v8485 = vand.u32 %v8484, 4294901760
      %8486 = vmatpush1.msra.mxu0 %v8485
      %8487 = vmatprep.subr.mxu0 0.0
      %8488 = vmatpush1.msra.mxu0 0.0
      %8489 = vmatprep.subr.mxu0 0.0
      %8490 = vmatpush1.msra.mxu0 0.0
      %8491 = vmatprep.subr.mxu0 0.0
      %8492 = vmatpush1.msra.mxu0 0.0
      %8493 = vmatprep.subr.mxu0 0.0
      %8494 = vmatpush1.msra.mxu0 0.0
      %8495 = vmatprep.subr.mxu0 0.0
      %8496 = vmatpush1.msra.mxu0 0.0
      %8497 = vmatprep.subr.mxu0 0.0
      %8498 = vmatpush1.msra.mxu0 0.0
      %8499 = vmatprep.subr.mxu0 0.0
      %8500 = vmatpush1.msra.mxu0 0.0
      %8501 = vmatprep.subr.mxu0 0.0
      %8502 = vmatpush1.msra.mxu0 0.0
      %8503 = vmatprep.subr.mxu0 0.0
      %8504 = vmatpush1.msra.mxu0 0.0
      %8505 = vmatprep.subr.mxu0 0.0
      %8506 = vmatpush1.msra.mxu0 0.0
      %8507 = vmatprep.subr.mxu0 0.0
      %8508 = vmatpush1.msra.mxu0 0.0
      %8509 = vmatprep.subr.mxu0 0.0
      %8510 = vmatpush1.msra.mxu0 0.0
      %8511 = vmatprep.subr.mxu0 0.0
      %8512 = vmatpush1.msra.mxu0 0.0
      %8513 = vmatprep.subr.mxu0 0.0
      %8514 = vmatpush1.msra.mxu0 0.0
      %8515 = vmatprep.subr.mxu0 0.0
      %8516 = vmatpush1.msra.mxu0 0.0
      %8517 = vmatprep.subr.mxu0 0.0
      %8518 = vmatpush1.msra.mxu0 0.0
      %8519 = vmatprep.subr.mxu0 0.0
      %8520 = vmatpush1.msra.mxu0 0.0
      %8521 = vmatprep.subr.mxu0 0.0
      %8522 = vmatpush1.msra.mxu0 0.0
      %8523 = vmatprep.subr.mxu0 0.0
      %8524 = vmatpush1.msra.mxu0 0.0
      %8525 = vmatprep.subr.mxu0 0.0
      %8526 = vmatpush1.msra.mxu0 0.0
      %8527 = vmatprep.subr.mxu0 0.0
      %8528 = vmatpush1.msra.mxu0 0.0
      %8529 = vmatprep.subr.mxu0 0.0
      %8530 = vmatpush1.msra.mxu0 0.0
      %8531 = vmatprep.subr.mxu0 0.0
      %8532 = vmatpush1.msra.mxu0 0.0
      %8533 = vmatprep.subr.mxu0 0.0
      %8534 = vmatpush1.msra.mxu0 0.0
      %8535 = vmatprep.subr.mxu0 0.0
      %8536 = vmatpush1.msra.mxu0 0.0
      %8537 = vmatprep.subr.mxu0 0.0
      %8538 = vmatpush1.msra.mxu0 0.0
      %8539 = vmatprep.subr.mxu0 0.0
      %8540 = vmatpush1.msra.mxu0 0.0
      %8541 = vmatprep.subr.mxu0 0.0
      %8542 = vmatpush1.msra.mxu0 0.0
      %8543 = vmatprep.subr.mxu0 0.0
      %8544 = vmatpush1.msra.mxu0 0.0
      %8545 = vmatprep.subr.mxu0 0.0
      %8546 = vmatpush1.msra.mxu0 0.0
      %8547 = vmatprep.subr.mxu0 0.0
      %8548 = vmatpush1.msra.mxu0 0.0
      %8549 = vmatprep.mubr.f32.mxu0 0.0
      %v8550 = vand.u32 %v8164, 4294901760
      %8551 = vmatmul.mubr.f32.gmra.mrb[0].mxu0 %v8550
      %v8552 = vpop.f32.mrb[0].mxu0
      %v8553 = vadd.f32 %v8475, %v8552
      %v8554 = vpop.f32.mrb[0].mxu0
      %v8555 = vadd.f32 %v8477, %v8554
      %8556 = vdwg.mxu0
      %v8557 = vand.u32 %v8160, 4294901760
      %8558 = vmatprep.subr.mxu0 %v8557
      %v8559 = vand.u32 %v8159, 4294901760
      %8560 = vmatpush1.msra.mxu0 %v8559
      %8561 = vmatprep.subr.mxu0 0.0
      %8562 = vmatpush1.msra.mxu0 0.0
      %8563 = vmatprep.subr.mxu0 0.0
      %8564 = vmatpush1.msra.mxu0 0.0
      %8565 = vmatprep.subr.mxu0 0.0
      %8566 = vmatpush1.msra.mxu0 0.0
      %8567 = vmatprep.subr.mxu0 0.0
      %8568 = vmatpush1.msra.mxu0 0.0
      %8569 = vmatprep.subr.mxu0 0.0
      %8570 = vmatpush1.msra.mxu0 0.0
      %8571 = vmatprep.subr.mxu0 0.0
      %8572 = vmatpush1.msra.mxu0 0.0
      %8573 = vmatprep.subr.mxu0 0.0
      %8574 = vmatpush1.msra.mxu0 0.0
      %8575 = vmatprep.subr.mxu0 0.0
      %8576 = vmatpush1.msra.mxu0 0.0
      %8577 = vmatprep.subr.mxu0 0.0
      %8578 = vmatpush1.msra.mxu0 0.0
      %8579 = vmatprep.subr.mxu0 0.0
      %8580 = vmatpush1.msra.mxu0 0.0
      %8581 = vmatprep.subr.mxu0 0.0
      %8582 = vmatpush1.msra.mxu0 0.0
      %8583 = vmatprep.subr.mxu0 0.0
      %8584 = vmatpush1.msra.mxu0 0.0
      %8585 = vmatprep.subr.mxu0 0.0
      %8586 = vmatpush1.msra.mxu0 0.0
      %8587 = vmatprep.subr.mxu0 0.0
      %8588 = vmatpush1.msra.mxu0 0.0
      %8589 = vmatprep.subr.mxu0 0.0
      %8590 = vmatpush1.msra.mxu0 0.0
      %8591 = vmatprep.subr.mxu0 0.0
      %8592 = vmatpush1.msra.mxu0 0.0
      %8593 = vmatprep.subr.mxu0 0.0
      %8594 = vmatpush1.msra.mxu0 0.0
      %8595 = vmatprep.subr.mxu0 0.0
      %8596 = vmatpush1.msra.mxu0 0.0
      %8597 = vmatprep.subr.mxu0 0.0
      %8598 = vmatpush1.msra.mxu0 0.0
      %8599 = vmatprep.subr.mxu0 0.0
      %8600 = vmatpush1.msra.mxu0 0.0
      %8601 = vmatprep.subr.mxu0 0.0
      %8602 = vmatpush1.msra.mxu0 0.0
      %8603 = vmatprep.subr.mxu0 0.0
      %8604 = vmatpush1.msra.mxu0 0.0
      %8605 = vmatprep.subr.mxu0 0.0
      %8606 = vmatpush1.msra.mxu0 0.0
      %8607 = vmatprep.subr.mxu0 0.0
      %8608 = vmatpush1.msra.mxu0 0.0
      %8609 = vmatprep.subr.mxu0 0.0
      %8610 = vmatpush1.msra.mxu0 0.0
      %8611 = vmatprep.subr.mxu0 0.0
      %8612 = vmatpush1.msra.mxu0 0.0
      %8613 = vmatprep.subr.mxu0 0.0
      %8614 = vmatpush1.msra.mxu0 0.0
      %8615 = vmatprep.subr.mxu0 0.0
      %8616 = vmatpush1.msra.mxu0 0.0
      %8617 = vmatprep.subr.mxu0 0.0
      %8618 = vmatpush1.msra.mxu0 0.0
      %8619 = vmatprep.subr.mxu0 0.0
      %8620 = vmatpush1.msra.mxu0 0.0
      %8621 = vmatprep.subr.mxu0 0.0
      %8622 = vmatpush1.msra.mxu0 0.0
      %8623 = vmatprep.mubr.f32.mxu0 0.0
      %v8624 = vand.u32 %v8164, 4294901760
      %8625 = vmatmul.mubr.f32.gmra.mrb[0].mxu0 %v8624
      %v8626 = vpop.f32.mrb[0].mxu0
      %v8627 = vadd.f32 %v8553, %v8626
      %v8628 = vpop.f32.mrb[0].mxu0
      %v8629 = vadd.f32 %v8555, %v8628
      %8630 = vdwg.mxu0
      %v8631 = vadd.f32 %v8146, %v8627
      %v8632 = vadd.f32 %v8147, %v8629
      %8633 = vrot.lane.b32.xlu0 %v235, 17
      %v8634 = vpop.permute.xlu0 %8633
      %8635 = vrot.lane.b32.xlu0 %v236, 17
      %v8636 = vpop.permute.xlu0 %8635
      %v8637 = vsel %vm756, %v8634, %v8636
      %v8641 = vmul.f32 %v7153, %v8634
      %v8642 = vmul.f32 %v7154, %v8637
      %v8643 = vmul.f32 %v7155, %v8636
      %s8644 = scalar_lea.vmem %s2, 64
      %v8645 = vld [vmem:[%s8644] sm:$0xff]
      %8649 = vrot.lane.b32.xlu0 %v8641, 111
      %v8650 = vpop.permute.xlu0 %8649
      %8651 = vrot.lane.b32.xlu0 %v8642, 111
      %v8652 = vpop.permute.xlu0 %8651
      %8653 = vrot.lane.b32.xlu0 %v8643, 111
      %v8654 = vpop.permute.xlu0 %8653
      %v8655 = vsel %vm253, %v8650, %v8652
      %v8656 = vsel %vm253, %v8652, %v8654
      %v8660 = vsel %vm4739, %v8645, 0
      %v8662 = vand.u32 %v8656, 4294901760
      %8663 = vmatprep.subr.mxu0 %v8662
      %v8664 = vand.u32 %v8655, 4294901760
      %8665 = vmatpush1.msra.mxu0 %v8664
      %8666 = vmatprep.subr.mxu0 0.0
      %8667 = vmatpush1.msra.mxu0 0.0
      %8668 = vmatprep.subr.mxu0 0.0
      %8669 = vmatpush1.msra.mxu0 0.0
      %8670 = vmatprep.subr.mxu0 0.0
      %8671 = vmatpush1.msra.mxu0 0.0
      %8672 = vmatprep.subr.mxu0 0.0
      %8673 = vmatpush1.msra.mxu0 0.0
      %8674 = vmatprep.subr.mxu0 0.0
      %8675 = vmatpush1.msra.mxu0 0.0
      %8676 = vmatprep.subr.mxu0 0.0
      %8677 = vmatpush1.msra.mxu0 0.0
      %8678 = vmatprep.subr.mxu0 0.0
      %8679 = vmatpush1.msra.mxu0 0.0
      %8680 = vmatprep.subr.mxu0 0.0
      %8681 = vmatpush1.msra.mxu0 0.0
      %8682 = vmatprep.subr.mxu0 0.0
      %8683 = vmatpush1.msra.mxu0 0.0
      %8684 = vmatprep.subr.mxu0 0.0
      %8685 = vmatpush1.msra.mxu0 0.0
      %8686 = vmatprep.subr.mxu0 0.0
      %8687 = vmatpush1.msra.mxu0 0.0
      %8688 = vmatprep.subr.mxu0 0.0
      %8689 = vmatpush1.msra.mxu0 0.0
      %8690 = vmatprep.subr.mxu0 0.0
      %8691 = vmatpush1.msra.mxu0 0.0
      %8692 = vmatprep.subr.mxu0 0.0
      %8693 = vmatpush1.msra.mxu0 0.0
      %8694 = vmatprep.subr.mxu0 0.0
      %8695 = vmatpush1.msra.mxu0 0.0
      %8696 = vmatprep.subr.mxu0 0.0
      %8697 = vmatpush1.msra.mxu0 0.0
      %8698 = vmatprep.subr.mxu0 0.0
      %8699 = vmatpush1.msra.mxu0 0.0
      %8700 = vmatprep.subr.mxu0 0.0
      %8701 = vmatpush1.msra.mxu0 0.0
      %8702 = vmatprep.subr.mxu0 0.0
      %8703 = vmatpush1.msra.mxu0 0.0
      %8704 = vmatprep.subr.mxu0 0.0
      %8705 = vmatpush1.msra.mxu0 0.0
      %8706 = vmatprep.subr.mxu0 0.0
      %8707 = vmatpush1.msra.mxu0 0.0
      %8708 = vmatprep.subr.mxu0 0.0
      %8709 = vmatpush1.msra.mxu0 0.0
      %8710 = vmatprep.subr.mxu0 0.0
      %8711 = vmatpush1.msra.mxu0 0.0
      %8712 = vmatprep.subr.mxu0 0.0
      %8713 = vmatpush1.msra.mxu0 0.0
      %8714 = vmatprep.subr.mxu0 0.0
      %8715 = vmatpush1.msra.mxu0 0.0
      %8716 = vmatprep.subr.mxu0 0.0
      %8717 = vmatpush1.msra.mxu0 0.0
      %8718 = vmatprep.subr.mxu0 0.0
      %8719 = vmatpush1.msra.mxu0 0.0
      %8720 = vmatprep.subr.mxu0 0.0
      %8721 = vmatpush1.msra.mxu0 0.0
      %8722 = vmatprep.subr.mxu0 0.0
      %8723 = vmatpush1.msra.mxu0 0.0
      %8724 = vmatprep.subr.mxu0 0.0
      %8725 = vmatpush1.msra.mxu0 0.0
      %8726 = vmatprep.subr.mxu0 0.0
      %8727 = vmatpush1.msra.mxu0 0.0
      %8728 = vmatprep.mubr.f32.mxu0 0.0
      %v8729 = vand.u32 %v8660, 4294901760
      %v8730 = vsub.f32 %v8660, %v8729
      %v8731 = vand.u32 %v8730, 4294901760
      %v8732 = vsub.f32 %v8730, %v8731
      %v8733 = vand.u32 %v8732, 4294901760
      %8734 = vmatmul.mubr.f32.gmra.mrb[0].mxu0 %v8733
      %v8735 = vpop.f32.mrb[0].mxu0
      %v8736 = vadd.f32 0.0, %v8735
      %v8737 = vpop.f32.mrb[0].mxu0
      %v8738 = vadd.f32 0.0, %v8737
      %8739 = vdwg.mxu0
      %v8740 = vand.u32 %v8656, 4294901760
      %v8741 = vsub.f32 %v8656, %v8740
      %v8742 = vand.u32 %v8741, 4294901760
      %v8743 = vsub.f32 %v8741, %v8742
      %v8744 = vand.u32 %v8743, 4294901760
      %8745 = vmatprep.subr.mxu0 %v8744
      %v8746 = vand.u32 %v8655, 4294901760
      %v8747 = vsub.f32 %v8655, %v8746
      %v8748 = vand.u32 %v8747, 4294901760
      %v8749 = vsub.f32 %v8747, %v8748
      %v8750 = vand.u32 %v8749, 4294901760
      %8751 = vmatpush1.msra.mxu0 %v8750
      %8752 = vmatprep.subr.mxu0 0.0
      %8753 = vmatpush1.msra.mxu0 0.0
      %8754 = vmatprep.subr.mxu0 0.0
      %8755 = vmatpush1.msra.mxu0 0.0
      %8756 = vmatprep.subr.mxu0 0.0
      %8757 = vmatpush1.msra.mxu0 0.0
      %8758 = vmatprep.subr.mxu0 0.0
      %8759 = vmatpush1.msra.mxu0 0.0
      %8760 = vmatprep.subr.mxu0 0.0
      %8761 = vmatpush1.msra.mxu0 0.0
      %8762 = vmatprep.subr.mxu0 0.0
      %8763 = vmatpush1.msra.mxu0 0.0
      %8764 = vmatprep.subr.mxu0 0.0
      %8765 = vmatpush1.msra.mxu0 0.0
      %8766 = vmatprep.subr.mxu0 0.0
      %8767 = vmatpush1.msra.mxu0 0.0
      %8768 = vmatprep.subr.mxu0 0.0
      %8769 = vmatpush1.msra.mxu0 0.0
      %8770 = vmatprep.subr.mxu0 0.0
      %8771 = vmatpush1.msra.mxu0 0.0
      %8772 = vmatprep.subr.mxu0 0.0
      %8773 = vmatpush1.msra.mxu0 0.0
      %8774 = vmatprep.subr.mxu0 0.0
      %8775 = vmatpush1.msra.mxu0 0.0
      %8776 = vmatprep.subr.mxu0 0.0
      %8777 = vmatpush1.msra.mxu0 0.0
      %8778 = vmatprep.subr.mxu0 0.0
      %8779 = vmatpush1.msra.mxu0 0.0
      %8780 = vmatprep.subr.mxu0 0.0
      %8781 = vmatpush1.msra.mxu0 0.0
      %8782 = vmatprep.subr.mxu0 0.0
      %8783 = vmatpush1.msra.mxu0 0.0
      %8784 = vmatprep.subr.mxu0 0.0
      %8785 = vmatpush1.msra.mxu0 0.0
      %8786 = vmatprep.subr.mxu0 0.0
      %8787 = vmatpush1.msra.mxu0 0.0
      %8788 = vmatprep.subr.mxu0 0.0
      %8789 = vmatpush1.msra.mxu0 0.0
      %8790 = vmatprep.subr.mxu0 0.0
      %8791 = vmatpush1.msra.mxu0 0.0
      %8792 = vmatprep.subr.mxu0 0.0
      %8793 = vmatpush1.msra.mxu0 0.0
      %8794 = vmatprep.subr.mxu0 0.0
      %8795 = vmatpush1.msra.mxu0 0.0
      %8796 = vmatprep.subr.mxu0 0.0
      %8797 = vmatpush1.msra.mxu0 0.0
      %8798 = vmatprep.subr.mxu0 0.0
      %8799 = vmatpush1.msra.mxu0 0.0
      %8800 = vmatprep.subr.mxu0 0.0
      %8801 = vmatpush1.msra.mxu0 0.0
      %8802 = vmatprep.subr.mxu0 0.0
      %8803 = vmatpush1.msra.mxu0 0.0
      %8804 = vmatprep.subr.mxu0 0.0
      %8805 = vmatpush1.msra.mxu0 0.0
      %8806 = vmatprep.subr.mxu0 0.0
      %8807 = vmatpush1.msra.mxu0 0.0
      %8808 = vmatprep.subr.mxu0 0.0
      %8809 = vmatpush1.msra.mxu0 0.0
      %8810 = vmatprep.subr.mxu0 0.0
      %8811 = vmatpush1.msra.mxu0 0.0
      %8812 = vmatprep.subr.mxu0 0.0
      %8813 = vmatpush1.msra.mxu0 0.0
      %8814 = vmatprep.mubr.f32.mxu0 0.0
      %v8815 = vand.u32 %v8660, 4294901760
      %8816 = vmatmul.mubr.f32.gmra.mrb[0].mxu0 %v8815
      %v8817 = vpop.f32.mrb[0].mxu0
      %v8818 = vadd.f32 %v8736, %v8817
      %v8819 = vpop.f32.mrb[0].mxu0
      %v8820 = vadd.f32 %v8738, %v8819
      %8821 = vdwg.mxu0
      %v8822 = vand.u32 %v8656, 4294901760
      %v8823 = vsub.f32 %v8656, %v8822
      %8824 = vmatprep.subr.mxu0 %v8823
      %v8825 = vand.u32 %v8655, 4294901760
      %v8826 = vsub.f32 %v8655, %v8825
      %8827 = vmatpush1.msra.mxu0 %v8826
      %8828 = vmatprep.subr.mxu0 0.0
      %8829 = vmatpush1.msra.mxu0 0.0
      %8830 = vmatprep.subr.mxu0 0.0
      %8831 = vmatpush1.msra.mxu0 0.0
      %8832 = vmatprep.subr.mxu0 0.0
      %8833 = vmatpush1.msra.mxu0 0.0
      %8834 = vmatprep.subr.mxu0 0.0
      %8835 = vmatpush1.msra.mxu0 0.0
      %8836 = vmatprep.subr.mxu0 0.0
      %8837 = vmatpush1.msra.mxu0 0.0
      %8838 = vmatprep.subr.mxu0 0.0
      %8839 = vmatpush1.msra.mxu0 0.0
      %8840 = vmatprep.subr.mxu0 0.0
      %8841 = vmatpush1.msra.mxu0 0.0
      %8842 = vmatprep.subr.mxu0 0.0
      %8843 = vmatpush1.msra.mxu0 0.0
      %8844 = vmatprep.subr.mxu0 0.0
      %8845 = vmatpush1.msra.mxu0 0.0
      %8846 = vmatprep.subr.mxu0 0.0
      %8847 = vmatpush1.msra.mxu0 0.0
      %8848 = vmatprep.subr.mxu0 0.0
      %8849 = vmatpush1.msra.mxu0 0.0
      %8850 = vmatprep.subr.mxu0 0.0
      %8851 = vmatpush1.msra.mxu0 0.0
      %8852 = vmatprep.subr.mxu0 0.0
      %8853 = vmatpush1.msra.mxu0 0.0
      %8854 = vmatprep.subr.mxu0 0.0
      %8855 = vmatpush1.msra.mxu0 0.0
      %8856 = vmatprep.subr.mxu0 0.0
      %8857 = vmatpush1.msra.mxu0 0.0
      %8858 = vmatprep.subr.mxu0 0.0
      %8859 = vmatpush1.msra.mxu0 0.0
      %8860 = vmatprep.subr.mxu0 0.0
      %8861 = vmatpush1.msra.mxu0 0.0
      %8862 = vmatprep.subr.mxu0 0.0
      %8863 = vmatpush1.msra.mxu0 0.0
      %8864 = vmatprep.subr.mxu0 0.0
      %8865 = vmatpush1.msra.mxu0 0.0
      %8866 = vmatprep.subr.mxu0 0.0
      %8867 = vmatpush1.msra.mxu0 0.0
      %8868 = vmatprep.subr.mxu0 0.0
      %8869 = vmatpush1.msra.mxu0 0.0
      %8870 = vmatprep.subr.mxu0 0.0
      %8871 = vmatpush1.msra.mxu0 0.0
      %8872 = vmatprep.subr.mxu0 0.0
      %8873 = vmatpush1.msra.mxu0 0.0
      %8874 = vmatprep.subr.mxu0 0.0
      %8875 = vmatpush1.msra.mxu0 0.0
      %8876 = vmatprep.subr.mxu0 0.0
      %8877 = vmatpush1.msra.mxu0 0.0
      %8878 = vmatprep.subr.mxu0 0.0
      %8879 = vmatpush1.msra.mxu0 0.0
      %8880 = vmatprep.subr.mxu0 0.0
      %8881 = vmatpush1.msra.mxu0 0.0
      %8882 = vmatprep.subr.mxu0 0.0
      %8883 = vmatpush1.msra.mxu0 0.0
      %8884 = vmatprep.subr.mxu0 0.0
      %8885 = vmatpush1.msra.mxu0 0.0
      %8886 = vmatprep.subr.mxu0 0.0
      %8887 = vmatpush1.msra.mxu0 0.0
      %8888 = vmatprep.subr.mxu0 0.0
      %8889 = vmatpush1.msra.mxu0 0.0
      %8890 = vmatprep.mubr.f32.mxu0 0.0
      %v8891 = vand.u32 %v8660, 4294901760
      %v8892 = vsub.f32 %v8660, %v8891
      %8893 = vmatmul.mubr.f32.gmra.mrb[0].mxu0 %v8892
      %v8894 = vpop.f32.mrb[0].mxu0
      %v8895 = vadd.f32 %v8818, %v8894
      %v8896 = vpop.f32.mrb[0].mxu0
      %v8897 = vadd.f32 %v8820, %v8896
      %8898 = vdwg.mxu0
      %v8899 = vand.u32 %v8656, 4294901760
      %8900 = vmatprep.subr.mxu0 %v8899
      %v8901 = vand.u32 %v8655, 4294901760
      %8902 = vmatpush1.msra.mxu0 %v8901
      %8903 = vmatprep.subr.mxu0 0.0
      %8904 = vmatpush1.msra.mxu0 0.0
      %8905 = vmatprep.subr.mxu0 0.0
      %8906 = vmatpush1.msra.mxu0 0.0
      %8907 = vmatprep.subr.mxu0 0.0
      %8908 = vmatpush1.msra.mxu0 0.0
      %8909 = vmatprep.subr.mxu0 0.0
      %8910 = vmatpush1.msra.mxu0 0.0
      %8911 = vmatprep.subr.mxu0 0.0
      %8912 = vmatpush1.msra.mxu0 0.0
      %8913 = vmatprep.subr.mxu0 0.0
      %8914 = vmatpush1.msra.mxu0 0.0
      %8915 = vmatprep.subr.mxu0 0.0
      %8916 = vmatpush1.msra.mxu0 0.0
      %8917 = vmatprep.subr.mxu0 0.0
      %8918 = vmatpush1.msra.mxu0 0.0
      %8919 = vmatprep.subr.mxu0 0.0
      %8920 = vmatpush1.msra.mxu0 0.0
      %8921 = vmatprep.subr.mxu0 0.0
      %8922 = vmatpush1.msra.mxu0 0.0
      %8923 = vmatprep.subr.mxu0 0.0
      %8924 = vmatpush1.msra.mxu0 0.0
      %8925 = vmatprep.subr.mxu0 0.0
      %8926 = vmatpush1.msra.mxu0 0.0
      %8927 = vmatprep.subr.mxu0 0.0
      %8928 = vmatpush1.msra.mxu0 0.0
      %8929 = vmatprep.subr.mxu0 0.0
      %8930 = vmatpush1.msra.mxu0 0.0
      %8931 = vmatprep.subr.mxu0 0.0
      %8932 = vmatpush1.msra.mxu0 0.0
      %8933 = vmatprep.subr.mxu0 0.0
      %8934 = vmatpush1.msra.mxu0 0.0
      %8935 = vmatprep.subr.mxu0 0.0
      %8936 = vmatpush1.msra.mxu0 0.0
      %8937 = vmatprep.subr.mxu0 0.0
      %8938 = vmatpush1.msra.mxu0 0.0
      %8939 = vmatprep.subr.mxu0 0.0
      %8940 = vmatpush1.msra.mxu0 0.0
      %8941 = vmatprep.subr.mxu0 0.0
      %8942 = vmatpush1.msra.mxu0 0.0
      %8943 = vmatprep.subr.mxu0 0.0
      %8944 = vmatpush1.msra.mxu0 0.0
      %8945 = vmatprep.subr.mxu0 0.0
      %8946 = vmatpush1.msra.mxu0 0.0
      %8947 = vmatprep.subr.mxu0 0.0
      %8948 = vmatpush1.msra.mxu0 0.0
      %8949 = vmatprep.subr.mxu0 0.0
      %8950 = vmatpush1.msra.mxu0 0.0
      %8951 = vmatprep.subr.mxu0 0.0
      %8952 = vmatpush1.msra.mxu0 0.0
      %8953 = vmatprep.subr.mxu0 0.0
      %8954 = vmatpush1.msra.mxu0 0.0
      %8955 = vmatprep.subr.mxu0 0.0
      %8956 = vmatpush1.msra.mxu0 0.0
      %8957 = vmatprep.subr.mxu0 0.0
      %8958 = vmatpush1.msra.mxu0 0.0
      %8959 = vmatprep.subr.mxu0 0.0
      %8960 = vmatpush1.msra.mxu0 0.0
      %8961 = vmatprep.subr.mxu0 0.0
      %8962 = vmatpush1.msra.mxu0 0.0
      %8963 = vmatprep.subr.mxu0 0.0
      %8964 = vmatpush1.msra.mxu0 0.0
      %8965 = vmatprep.mubr.f32.mxu0 0.0
      %v8966 = vand.u32 %v8660, 4294901760
      %v8967 = vsub.f32 %v8660, %v8966
      %v8968 = vand.u32 %v8967, 4294901760
      %8969 = vmatmul.mubr.f32.gmra.mrb[0].mxu0 %v8968
      %v8970 = vpop.f32.mrb[0].mxu0
      %v8971 = vadd.f32 %v8895, %v8970
      %v8972 = vpop.f32.mrb[0].mxu0
      %v8973 = vadd.f32 %v8897, %v8972
      %8974 = vdwg.mxu0
      %v8975 = vand.u32 %v8656, 4294901760
      %v8976 = vsub.f32 %v8656, %v8975
      %v8977 = vand.u32 %v8976, 4294901760
      %8978 = vmatprep.subr.mxu0 %v8977
      %v8979 = vand.u32 %v8655, 4294901760
      %v8980 = vsub.f32 %v8655, %v8979
      %v8981 = vand.u32 %v8980, 4294901760
      %8982 = vmatpush1.msra.mxu0 %v8981
      %8983 = vmatprep.subr.mxu0 0.0
      %8984 = vmatpush1.msra.mxu0 0.0
      %8985 = vmatprep.subr.mxu0 0.0
      %8986 = vmatpush1.msra.mxu0 0.0
      %8987 = vmatprep.subr.mxu0 0.0
      %8988 = vmatpush1.msra.mxu0 0.0
      %8989 = vmatprep.subr.mxu0 0.0
      %8990 = vmatpush1.msra.mxu0 0.0
      %8991 = vmatprep.subr.mxu0 0.0
      %8992 = vmatpush1.msra.mxu0 0.0
      %8993 = vmatprep.subr.mxu0 0.0
      %8994 = vmatpush1.msra.mxu0 0.0
      %8995 = vmatprep.subr.mxu0 0.0
      %8996 = vmatpush1.msra.mxu0 0.0
      %8997 = vmatprep.subr.mxu0 0.0
      %8998 = vmatpush1.msra.mxu0 0.0
      %8999 = vmatprep.subr.mxu0 0.0
      %9000 = vmatpush1.msra.mxu0 0.0
      %9001 = vmatprep.subr.mxu0 0.0
      %9002 = vmatpush1.msra.mxu0 0.0
      %9003 = vmatprep.subr.mxu0 0.0
      %9004 = vmatpush1.msra.mxu0 0.0
      %9005 = vmatprep.subr.mxu0 0.0
      %9006 = vmatpush1.msra.mxu0 0.0
      %9007 = vmatprep.subr.mxu0 0.0
      %9008 = vmatpush1.msra.mxu0 0.0
      %9009 = vmatprep.subr.mxu0 0.0
      %9010 = vmatpush1.msra.mxu0 0.0
      %9011 = vmatprep.subr.mxu0 0.0
      %9012 = vmatpush1.msra.mxu0 0.0
      %9013 = vmatprep.subr.mxu0 0.0
      %9014 = vmatpush1.msra.mxu0 0.0
      %9015 = vmatprep.subr.mxu0 0.0
      %9016 = vmatpush1.msra.mxu0 0.0
      %9017 = vmatprep.subr.mxu0 0.0
      %9018 = vmatpush1.msra.mxu0 0.0
      %9019 = vmatprep.subr.mxu0 0.0
      %9020 = vmatpush1.msra.mxu0 0.0
      %9021 = vmatprep.subr.mxu0 0.0
      %9022 = vmatpush1.msra.mxu0 0.0
      %9023 = vmatprep.subr.mxu0 0.0
      %9024 = vmatpush1.msra.mxu0 0.0
      %9025 = vmatprep.subr.mxu0 0.0
      %9026 = vmatpush1.msra.mxu0 0.0
      %9027 = vmatprep.subr.mxu0 0.0
      %9028 = vmatpush1.msra.mxu0 0.0
      %9029 = vmatprep.subr.mxu0 0.0
      %9030 = vmatpush1.msra.mxu0 0.0
      %9031 = vmatprep.subr.mxu0 0.0
      %9032 = vmatpush1.msra.mxu0 0.0
      %9033 = vmatprep.subr.mxu0 0.0
      %9034 = vmatpush1.msra.mxu0 0.0
      %9035 = vmatprep.subr.mxu0 0.0
      %9036 = vmatpush1.msra.mxu0 0.0
      %9037 = vmatprep.subr.mxu0 0.0
      %9038 = vmatpush1.msra.mxu0 0.0
      %9039 = vmatprep.subr.mxu0 0.0
      %9040 = vmatpush1.msra.mxu0 0.0
      %9041 = vmatprep.subr.mxu0 0.0
      %9042 = vmatpush1.msra.mxu0 0.0
      %9043 = vmatprep.subr.mxu0 0.0
      %9044 = vmatpush1.msra.mxu0 0.0
      %9045 = vmatprep.mubr.f32.mxu0 0.0
      %v9046 = vand.u32 %v8660, 4294901760
      %9047 = vmatmul.mubr.f32.gmra.mrb[0].mxu0 %v9046
      %v9048 = vpop.f32.mrb[0].mxu0
      %v9049 = vadd.f32 %v8971, %v9048
      %v9050 = vpop.f32.mrb[0].mxu0
      %v9051 = vadd.f32 %v8973, %v9050
      %9052 = vdwg.mxu0
      %v9053 = vand.u32 %v8656, 4294901760
      %9054 = vmatprep.subr.mxu0 %v9053
      %v9055 = vand.u32 %v8655, 4294901760
      %9056 = vmatpush1.msra.mxu0 %v9055
      %9057 = vmatprep.subr.mxu0 0.0
      %9058 = vmatpush1.msra.mxu0 0.0
      %9059 = vmatprep.subr.mxu0 0.0
      %9060 = vmatpush1.msra.mxu0 0.0
      %9061 = vmatprep.subr.mxu0 0.0
      %9062 = vmatpush1.msra.mxu0 0.0
      %9063 = vmatprep.subr.mxu0 0.0
      %9064 = vmatpush1.msra.mxu0 0.0
      %9065 = vmatprep.subr.mxu0 0.0
      %9066 = vmatpush1.msra.mxu0 0.0
      %9067 = vmatprep.subr.mxu0 0.0
      %9068 = vmatpush1.msra.mxu0 0.0
      %9069 = vmatprep.subr.mxu0 0.0
      %9070 = vmatpush1.msra.mxu0 0.0
      %9071 = vmatprep.subr.mxu0 0.0
      %9072 = vmatpush1.msra.mxu0 0.0
      %9073 = vmatprep.subr.mxu0 0.0
      %9074 = vmatpush1.msra.mxu0 0.0
      %9075 = vmatprep.subr.mxu0 0.0
      %9076 = vmatpush1.msra.mxu0 0.0
      %9077 = vmatprep.subr.mxu0 0.0
      %9078 = vmatpush1.msra.mxu0 0.0
      %9079 = vmatprep.subr.mxu0 0.0
      %9080 = vmatpush1.msra.mxu0 0.0
      %9081 = vmatprep.subr.mxu0 0.0
      %9082 = vmatpush1.msra.mxu0 0.0
      %9083 = vmatprep.subr.mxu0 0.0
      %9084 = vmatpush1.msra.mxu0 0.0
      %9085 = vmatprep.subr.mxu0 0.0
      %9086 = vmatpush1.msra.mxu0 0.0
      %9087 = vmatprep.subr.mxu0 0.0
      %9088 = vmatpush1.msra.mxu0 0.0
      %9089 = vmatprep.subr.mxu0 0.0
      %9090 = vmatpush1.msra.mxu0 0.0
      %9091 = vmatprep.subr.mxu0 0.0
      %9092 = vmatpush1.msra.mxu0 0.0
      %9093 = vmatprep.subr.mxu0 0.0
      %9094 = vmatpush1.msra.mxu0 0.0
      %9095 = vmatprep.subr.mxu0 0.0
      %9096 = vmatpush1.msra.mxu0 0.0
      %9097 = vmatprep.subr.mxu0 0.0
      %9098 = vmatpush1.msra.mxu0 0.0
      %9099 = vmatprep.subr.mxu0 0.0
      %9100 = vmatpush1.msra.mxu0 0.0
      %9101 = vmatprep.subr.mxu0 0.0
      %9102 = vmatpush1.msra.mxu0 0.0
      %9103 = vmatprep.subr.mxu0 0.0
      %9104 = vmatpush1.msra.mxu0 0.0
      %9105 = vmatprep.subr.mxu0 0.0
      %9106 = vmatpush1.msra.mxu0 0.0
      %9107 = vmatprep.subr.mxu0 0.0
      %9108 = vmatpush1.msra.mxu0 0.0
      %9109 = vmatprep.subr.mxu0 0.0
      %9110 = vmatpush1.msra.mxu0 0.0
      %9111 = vmatprep.subr.mxu0 0.0
      %9112 = vmatpush1.msra.mxu0 0.0
      %9113 = vmatprep.subr.mxu0 0.0
      %9114 = vmatpush1.msra.mxu0 0.0
      %9115 = vmatprep.subr.mxu0 0.0
      %9116 = vmatpush1.msra.mxu0 0.0
      %9117 = vmatprep.subr.mxu0 0.0
      %9118 = vmatpush1.msra.mxu0 0.0
      %9119 = vmatprep.mubr.f32.mxu0 0.0
      %v9120 = vand.u32 %v8660, 4294901760
      %9121 = vmatmul.mubr.f32.gmra.mrb[0].mxu0 %v9120
      %v9122 = vpop.f32.mrb[0].mxu0
      %v9123 = vadd.f32 %v9049, %v9122
      %v9124 = vpop.f32.mrb[0].mxu0
      %v9125 = vadd.f32 %v9051, %v9124
      %9126 = vdwg.mxu0
      %v9127 = vadd.f32 %v8631, %v9123
      %v9128 = vadd.f32 %v8632, %v9125
      %9130 = vset.pattern.permute.xlu0 0
      %9131 = vperm.xlu0 %9130, %v4708
      %v9132 = vpop.permute.xlu0 %9131
      %v9134 = vadd.f32 %v9127, %v9132
      %v9135 = vadd.f32 %v9128, %v9132
      %v9136 = vmax.f32 %v9134, 0.0
      %v9137 = vmax.f32 %v9135, 0.0
      %9138 = vst [vmem:[%s197] sm:$0xff] %v9136
      %9139 = vst [vmem:[%s197 + $0x8] sm:$0xff] %v9137
      %p9140 = scmp.lt.s32.totalorder %s15, 1
      %s9141 = scalar_select %p9140, %s15, 1
      %s9142 = smul.addr %s9141, 2
      %s9143 = smul.addr %s9142, 8
      %s9144 = scalar_lea.vmem %s4, %s9143
      // Predicated region
      $region37: #{conv_block_forward.1} parent=35 // pred_check
        %p9145 = pneg %p122
      $region38: #{conv_block_forward.1} parent=35 // pred_check_branch
        %9147 = sbr.rel (%p9145) target = $region40
      $region39: #{conv_block_forward.1} parent=35 // pred_region
        _
      $region40: #{conv_block_forward.1} parent=35 // pred_fallthru
        _
    $region36: #{conv_block_forward.1} parent=5 // pred_fallthru
      _
    %p9148 = scmp.le.s32.totalorder 2, %s10
    // Predicated region
    $region41: #{conv_block_forward.1} parent=5 // pred_check
      %p9149 = pneg %p9148
    $region42: #{conv_block_forward.1} parent=5 // pred_check_branch
      %9151 = sbr.rel (%p9149) target = $region44
    $region43: #{conv_block_forward.1} parent=5 // pred_region
      %s9152 = ssub.s32 %s10, 2
      // Predicated region
      $region45: #{conv_block_forward.1} parent=43 // pred_check
        %p9153 = pneg %p128
      $region46: #{conv_block_forward.1} parent=43 // pred_check_branch
        %9155 = sbr.rel (%p9153) target = $region48
      $region47: #{conv_block_forward.1} parent=43 // pred_region
        %p9156 = scmp.lt.s32.totalorder %s16, 1
        %s9157 = scalar_select %p9156, %s16, 1
        %s9158 = smul.addr %s9157, 2
        %s9159 = smul.addr %s9158, 8
        %s9160 = scalar_lea.vmem %s4, %s9159
      $region48: #{conv_block_forward.1} parent=43 // pred_fallthru
        _
    $region44: #{conv_block_forward.1} parent=5 // pred_fallthru
      _
  $region6: #{conv_block_forward.1} parent=0 // loop_footer
    %s14 = sadd.s32 1, %s10
  $region7: #{conv_block_forward.1} parent=0 // loop_footer_branch
    %9 = sbr.rel target = $region3
  $region8: #{conv_block_forward.1} parent=0 // loop_exit
    _

</llo_original>
